<compile_context>
chip_gen: v7x
topology: tpu7x:2x2x1
jax: 0.10.0
libtpu: 0.0.40
codegen_flags: <defaults>
</compile_context>

<pallas_src>
import jax
import jax.numpy as jnp
from jax.experimental import pallas as pl
from jax.experimental.pallas import tpu as pltpu

# ----------------------------- config (small) -------------------------------
BATCH = 2
H = W = 8
BACKBONE_CH = 16        # original: 2048
FEAT_CH = 32            # original: 256 (self.feat_channels)
HIDDEN = 32             # transformer.d_model (original: 256)
NUM_CLASSES = 8         # original: 91
NUM_QUERIES = 8         # original: 100
NUM_DEC_LAYERS = 2      # original: 6
STACKED_CONVS = 3

LANE = 128                         # lane-dense channel padding for all conv data
HEAD_COLS = NUM_CLASSES + 1 + 4    # logits (9) | boxes (4) inside the 128-wide slab


# ----------------------------- helpers ---------------------------------------
def _cost(flops, transcendentals, operands, out_bytes):
    nbytes = int(sum(int(a.size) * a.dtype.itemsize for a in operands)) + int(out_bytes)
    return pl.CostEstimate(flops=int(flops), transcendentals=int(transcendentals),
                           bytes_accessed=nbytes)


# ----------------------------- fused kernel ----------------------------------
def _detr_kernel(src_ref, pos_ref, pw_ref, pb_ref, qe_ref,
                 dw_ref, db_ref, hdw_ref, hdb_ref,
                 bw1_ref, bb1_ref, bw2_ref, bb2_ref,
                 cws_ref, cbs_ref, cwf_ref, cbf_ref,
                 heads_ref, maps_ref, pbuf_ref):
    # One grid step == one batch element.
    src = src_ref[0]                                             # (HW, 128), ch zero-padded

    # ---------------- token path (input_proj + transformer + heads) ----------
    # input_proj: 1x1 conv == per-pixel matmul (K padded 16->128 with zero rows).
    proj = jnp.dot(src, pw_ref[...], preferred_element_type=jnp.float32) + pb_ref[...]

    # TODO(synk): backbone and transformer are injected submodules whose internals
    # are not given; the transformer is replaced by a deterministic surrogate
    # (mean-pooled memory + query embeddings + relu linears) producing hs tokens.
    mem = jnp.mean(proj + pos_ref[0], axis=0, keepdims=True)     # (1, HIDDEN)
    tok = qe_ref[...] + mem                                      # (Q, HIDDEN)
    for l in range(NUM_DEC_LAYERS):
        tok = jnp.maximum(
            jnp.dot(tok, dw_ref[l], preferred_element_type=jnp.float32) + db_ref[l], 0.0)

    # fused class head + first bbox-MLP layer: single MXU matmul on hs[-1].
    y = jnp.dot(tok, hdw_ref[...], preferred_element_type=jnp.float32) + hdb_ref[...]
    logits = y[:, :NUM_CLASSES + 1]                              # (Q, 9) no activation
    x = jnp.maximum(y[:, NUM_CLASSES + 1:], 0.0)                 # (Q, HIDDEN) relu
    x = jnp.maximum(
        jnp.dot(x, bw1_ref[...], preferred_element_type=jnp.float32) + bb1_ref[...], 0.0)
    boxes = jax.nn.sigmoid(
        jnp.dot(x, bw2_ref[...], preferred_element_type=jnp.float32) + bb2_ref[...])

    # single lane-dense (Q, 128) store: cols [:9]=logits, [9:13]=boxes, rest zero.
    pad = jnp.zeros((NUM_QUERIES, LANE - HEAD_COLS), jnp.float32)
    heads_ref[0] = jnp.concatenate([logits, boxes, pad], axis=-1)

    # ---------------- fused anchor conv trunk (cls | reg stacks) -------------
    # SAME padding lives in a zero halo VMEM buffer; only the interior is rewritten
    # per layer, so the border stays zero. Lane-dense last dim (128).
    pbuf_ref[...] = jnp.zeros(pbuf_ref.shape, pbuf_ref.dtype)
    pbuf_ref[1:H + 1, 1:W + 1, :] = src.reshape(H, W, LANE)

    def im2col():
        # 9 shifted views concatenated lane-aligned -> one (HW, 9*128) bf16 operand.
        xp = pbuf_ref[...]
        taps = [xp[dy:dy + H, dx:dx + W, :].reshape(H * W, LANE)
                for dy in range(3) for dx in range(3)]
        return jnp.concatenate(taps, axis=-1).astype(jnp.bfloat16)

    for l in range(1 + STACKED_CONVS):
        feat = jnp.maximum(
            jnp.dot(im2col(), cws_ref[l], preferred_element_type=jnp.float32) + cbs_ref[l],
            0.0)
        pbuf_ref[1:H + 1, 1:W + 1, :] = feat.reshape(H, W, LANE)

    # final fused layer: cols [:8] cls logits (no relu), [8:12] reg (relu, as in the
    # PyTorch spec where reg_convs ends with ReLU), [12:128] zero padding.
    fin = jnp.dot(im2col(), cwf_ref[...], preferred_element_type=jnp.float32) + cbf_ref[...]
    col = jax.lax.broadcasted_iota(jnp.int32, fin.shape, 1)
    fin = jnp.where(col >= NUM_CLASSES, jnp.maximum(fin, 0.0), fin)
    maps_ref[0] = fin                                            # (HW, 128) lane-dense


def detr_fused(src_p, pos, f):
    b = src_p.shape[0]
    hw = H * W
    operands = (
        src_p, pos,
        f["proj_w"], f["proj_b"], f["query_embed"],
        f["dec_w"], f["dec_b"],
        f["head_w"], f["head_b"],
        f["bbox_w1"], f["bbox_b1"], f["bbox_w2"], f["bbox_b2"],
        f["conv_wstk"], f["conv_bstk"], f["conv_wfin"], f["conv_bfin"],
    )

    def batch_spec(shape):
        shape = tuple(int(d) for d in shape)
        blk = (1,) + shape[1:]
        nrest = len(shape) - 1
        return pl.BlockSpec(blk, lambda i, nrest=nrest: (i,) + (0,) * nrest)

    def full_spec(shape):
        shape = tuple(int(d) for d in shape)
        zeros = (0,) * len(shape)
        return pl.BlockSpec(shape, lambda i, zeros=zeros: zeros)

    in_specs = ([batch_spec(src_p.shape), batch_spec(pos.shape)]
                + [full_spec(a.shape) for a in operands[2:]])
    out_shape = (jax.ShapeDtypeStruct((b, NUM_QUERIES, LANE), jnp.float32),
                 jax.ShapeDtypeStruct((b, hw, LANE), jnp.float32))
    out_specs = (batch_spec((b, NUM_QUERIES, LANE)), batch_spec((b, hw, LANE)))

    flops_per_b = (2 * hw * LANE * HIDDEN
                   + NUM_DEC_LAYERS * 2 * NUM_QUERIES * HIDDEN * HIDDEN
                   + 2 * NUM_QUERIES * HIDDEN * (NUM_CLASSES + 1 + HIDDEN)
                   + 2 * NUM_QUERIES * HIDDEN * HIDDEN
                   + 2 * NUM_QUERIES * HIDDEN * 4
                   + (2 + STACKED_CONVS) * 2 * hw * 9 * LANE * LANE)
    out_bytes = b * (NUM_QUERIES + hw) * LANE * 4

    return pl.pallas_call(
        _detr_kernel,
        out_shape=out_shape,
        grid=(b,),
        in_specs=in_specs,
        out_specs=out_specs,
        scratch_shapes=[pltpu.VMEM((H + 2, W + 2, LANE), jnp.float32)],
        compiler_params=pltpu.CompilerParams(dimension_semantics=("parallel",)),
        cost_estimate=_cost(b * flops_per_b, b * NUM_QUERIES * 4, operands, out_bytes),
    )(*operands)


# ----------------------------- parameters -----------------------------------
def _init(key, shape, scale=0.05):
    return scale * jax.random.normal(key, shape, jnp.float32)


def fuse_params(p):
    """Build mathematically-equivalent fused / lane-padded tensors for the kernel."""
    f = {}
    # input_proj padded to 128 input rows (src channels beyond BACKBONE_CH are zero).
    f["proj_w"] = jnp.zeros((LANE, HIDDEN), jnp.float32).at[:BACKBONE_CH].set(p["input_proj_w"])
    f["proj_b"] = p["input_proj_b"].reshape(1, HIDDEN)
    f["query_embed"] = p["query_embed"]
    f["dec_w"] = jnp.stack(p["dec_w"])                                   # (L, H, H)
    f["dec_b"] = jnp.stack([x.reshape(1, -1) for x in p["dec_b"]])       # (L, 1, H)

    # fused class head + first bbox-MLP layer along N.
    f["head_w"] = jnp.concatenate([p["class_w"], p["bbox_w"][0]], axis=1)        # (H, 9+H)
    f["head_b"] = jnp.concatenate([p["class_b"], p["bbox_b"][0]]).reshape(1, -1)
    f["bbox_w1"] = p["bbox_w"][1]
    f["bbox_b1"] = p["bbox_b"][1].reshape(1, -1)
    f["bbox_w2"] = p["bbox_w"][2]
    f["bbox_b2"] = p["bbox_b"][2].reshape(1, -1)

    # conv trunk: cls and reg stacks fused into one lane-padded (128-ch) trunk,
    # im2col weight layout (9*128, Cout=128). Zero padding keeps branches independent.
    def pack_w(cw, rw, cls_in0, reg_in0, cls_out, reg_out):
        w = jnp.zeros((3, 3, LANE, LANE), jnp.float32)
        w = w.at[:, :, cls_in0:cls_in0 + cw.shape[2], cls_out[0]:cls_out[1]].set(cw)
        w = w.at[:, :, reg_in0:reg_in0 + rw.shape[2], reg_out[0]:reg_out[1]].set(rw)
        return w.reshape(9 * LANE, LANE)

    def pack_b(cb, rb, cls_out, reg_out):
        bb = jnp.zeros((1, LANE), jnp.float32)
        bb = bb.at[0, cls_out[0]:cls_out[1]].set(cb)
        bb = bb.at[0, reg_out[0]:reg_out[1]].set(rb)
        return bb

    cls_cols, reg_cols = (0, FEAT_CH), (FEAT_CH, 2 * FEAT_CH)
    wstk = [pack_w(p["cls_w"][0], p["reg_w"][0], 0, 0, cls_cols, reg_cols)]
    bstk = [pack_b(p["cls_b"][0], p["reg_b"][0], cls_cols, reg_cols)]
    for i in range(1, 1 + STACKED_CONVS):
        wstk.append(pack_w(p["cls_w"][i], p["reg_w"][i], 0, FEAT_CH, cls_cols, reg_cols))
        bstk.append(pack_b(p["cls_b"][i], p["reg_b"][i], cls_cols, reg_cols))
    f["conv_wstk"] = jnp.stack(wstk).astype(jnp.bfloat16)        # (4, 1152, 128) bf16
    f["conv_bstk"] = jnp.stack(bstk)                             # (4, 1, 128)  f32
    f["conv_wfin"] = pack_w(p["cls_w"][-1], p["reg_w"][-1], 0, FEAT_CH,
                            (0, NUM_CLASSES), (NUM_CLASSES, NUM_CLASSES + 4)
                            ).astype(jnp.bfloat16)               # (1152, 128) bf16
    f["conv_bfin"] = pack_b(p["cls_b"][-1], p["reg_b"][-1],
                            (0, NUM_CLASSES), (NUM_CLASSES, NUM_CLASSES + 4))
    return f


def make_params(key):
    keys = jax.random.split(key, 64)
    ki = iter(keys)
    p = {}
    # input_proj: Conv2d(backbone_ch, hidden, kernel_size=1) == per-pixel linear
    p["input_proj_w"] = _init(next(ki), (BACKBONE_CH, HIDDEN))
    p["input_proj_b"] = _init(next(ki), (HIDDEN,))
    # query_embed: nn.Embedding(num_queries, hidden)
    p["query_embed"] = _init(next(ki), (NUM_QUERIES, HIDDEN))
    # class_embed: Linear(hidden, num_classes + 1)
    p["class_w"] = _init(next(ki), (HIDDEN, NUM_CLASSES + 1))
    p["class_b"] = _init(next(ki), (NUM_CLASSES + 1,))
    # bbox_embed: MLP(hidden, hidden, 4, num_layers=3)
    dims = [HIDDEN, HIDDEN, HIDDEN, 4]
    p["bbox_w"] = [_init(next(ki), (dims[i], dims[i + 1])) for i in range(3)]
    p["bbox_b"] = [_init(next(ki), (dims[i + 1],)) for i in range(3)]
    # transformer surrogate decoder weights (see TODO in kernel)
    p["dec_w"] = [_init(next(ki), (HIDDEN, HIDDEN)) for _ in range(NUM_DEC_LAYERS)]
    p["dec_b"] = [_init(next(ki), (HIDDEN,)) for _ in range(NUM_DEC_LAYERS)]
    # cls_convs / reg_convs stacks (conv3x3, padding=1), HWIO layout
    cls_io = ([(BACKBONE_CH, FEAT_CH)] + [(FEAT_CH, FEAT_CH)] * STACKED_CONVS
              + [(FEAT_CH, NUM_CLASSES)])
    reg_io = ([(BACKBONE_CH, FEAT_CH)] + [(FEAT_CH, FEAT_CH)] * STACKED_CONVS
              + [(FEAT_CH, 4)])
    p["cls_w"] = [_init(next(ki), (3, 3, cin, cout)) for cin, cout in cls_io]
    p["cls_b"] = [_init(next(ki), (cout,)) for _, cout in cls_io]
    p["reg_w"] = [_init(next(ki), (3, 3, cin, cout)) for cin, cout in reg_io]
    p["reg_b"] = [_init(next(ki), (cout,)) for _, cout in reg_io]
    return fuse_params(p)


# ----------------------------- forward ---------------------------------------
def detr_forward(params, src_nchw, mask, pos_nchw):
    """src/pos come in NCHW like PyTorch; the kernel runs channels-last."""
    b, cb, hh, ww = src_nchw.shape
    # channels-last, flattened spatial, lane-padded to 128 channels.
    src = jnp.transpose(src_nchw, (0, 2, 3, 1)).reshape(b, hh * ww, cb)
    src = jnp.pad(src, ((0, 0), (0, 0), (0, LANE - cb)))
    pos = jnp.transpose(pos_nchw, (0, 2, 3, 1)).reshape(b, hh * ww, HIDDEN)

    heads, maps = detr_fused(src, pos, params)

    logits = heads[:, :, :NUM_CLASSES + 1]
    boxes = heads[:, :, NUM_CLASSES + 1:NUM_CLASSES + 1 + 4]
    maps = maps.reshape(b, hh, ww, LANE)
    cls_map = jnp.transpose(maps[..., :NUM_CLASSES], (0, 3, 1, 2))
    box_map = jnp.transpose(maps[..., NUM_CLASSES:NUM_CLASSES + 4], (0, 3, 1, 2))

    return {
        "pred_logits": logits,
        "pred_boxes": boxes,
        "anchor_point_map": (cls_map, box_map, mask),
    }


# ----------------------------- main ------------------------------------------
if __name__ == "__main__":
    key = jax.random.PRNGKey(0)
    kp, ksrc, kpos = jax.random.split(key, 3)
    params = make_params(kp)

    src = jax.random.normal(ksrc, (BATCH, BACKBONE_CH, H, W), jnp.float32)
    pos = jax.random.normal(kpos, (BATCH, HIDDEN, H, W), jnp.float32)
    mask = jnp.zeros((BATCH, H, W), dtype=jnp.bool_)

    out = jax.jit(detr_forward)(params, src, mask, pos)
    jax.block_until_ready(out)

    assert out["pred_logits"].shape == (BATCH, NUM_QUERIES, NUM_CLASSES + 1)
    assert out["pred_boxes"].shape == (BATCH, NUM_QUERIES, 4)
    cls_map, box_map, out_mask = out["anchor_point_map"]
    assert cls_map.shape == (BATCH, NUM_CLASSES, H, W)
    assert box_map.shape == (BATCH, 4, H, W)
    assert out_mask.shape == (BATCH, H, W)
    assert bool(jnp.all(jnp.isfinite(out["pred_boxes"])))
    print("KERNEL_OK")
</pallas_src>

<mosaic_0001>
module attributes {stable_mosaic.version = 11 : i64} {
  func.func @_detr_kernel(%arg0: i32, %arg1: memref<1x64x128xf32, #tpu.memory_space<vmem>>, %arg2: memref<1x64x32xf32, #tpu.memory_space<vmem>>, %arg3: memref<128x32xf32, #tpu.memory_space<vmem>>, %arg4: memref<1x32xf32, #tpu.memory_space<vmem>>, %arg5: memref<8x32xf32, #tpu.memory_space<vmem>>, %arg6: memref<2x32x32xf32, #tpu.memory_space<vmem>>, %arg7: memref<2x1x32xf32, #tpu.memory_space<vmem>>, %arg8: memref<32x41xf32, #tpu.memory_space<vmem>>, %arg9: memref<1x41xf32, #tpu.memory_space<vmem>>, %arg10: memref<32x32xf32, #tpu.memory_space<vmem>>, %arg11: memref<1x32xf32, #tpu.memory_space<vmem>>, %arg12: memref<32x4xf32, #tpu.memory_space<vmem>>, %arg13: memref<1x4xf32, #tpu.memory_space<vmem>>, %arg14: memref<4x1152x128xbf16, #tpu.memory_space<vmem>>, %arg15: memref<4x1x128xf32, #tpu.memory_space<vmem>>, %arg16: memref<1152x128xbf16, #tpu.memory_space<vmem>>, %arg17: memref<1x128xf32, #tpu.memory_space<vmem>>, %arg18: memref<1x8x128xf32, #tpu.memory_space<vmem>>, %arg19: memref<1x64x128xf32, #tpu.memory_space<vmem>>, %arg20: memref<10x10x128xf32, #tpu.memory_space<vmem>>) attributes {dimension_semantics = [#tpu.dimension_semantics<parallel>], iteration_bounds = array<i64: 2>, scalar_prefetch = 0 : i64, scratch_operands = 1 : i64, tpu.core_type = #tpu.core_type<tc>, window_params = [{transform_indices = @transform_0, window_bounds = array<i64: 1, 64, 128>}, {transform_indices = @transform_1, window_bounds = array<i64: 1, 64, 32>}, {pipeline_mode = #tpu.pipeline_mode<synchronous>, transform_indices = @transform_2, window_bounds = array<i64: 128, 32>}, {pipeline_mode = #tpu.pipeline_mode<synchronous>, transform_indices = @transform_3, window_bounds = array<i64: 1, 32>}, {pipeline_mode = #tpu.pipeline_mode<synchronous>, transform_indices = @transform_4, window_bounds = array<i64: 8, 32>}, {pipeline_mode = #tpu.pipeline_mode<synchronous>, transform_indices = @transform_5, window_bounds = array<i64: 2, 32, 32>}, {pipeline_mode = #tpu.pipeline_mode<synchronous>, transform_indices = @transform_6, window_bounds = array<i64: 2, 1, 32>}, {pipeline_mode = #tpu.pipeline_mode<synchronous>, transform_indices = @transform_7, window_bounds = array<i64: 32, 41>}, {pipeline_mode = #tpu.pipeline_mode<synchronous>, transform_indices = @transform_8, window_bounds = array<i64: 1, 41>}, {pipeline_mode = #tpu.pipeline_mode<synchronous>, transform_indices = @transform_9, window_bounds = array<i64: 32, 32>}, {pipeline_mode = #tpu.pipeline_mode<synchronous>, transform_indices = @transform_10, window_bounds = array<i64: 1, 32>}, {pipeline_mode = #tpu.pipeline_mode<synchronous>, transform_indices = @transform_11, window_bounds = array<i64: 32, 4>}, {pipeline_mode = #tpu.pipeline_mode<synchronous>, transform_indices = @transform_12, window_bounds = array<i64: 1, 4>}, {pipeline_mode = #tpu.pipeline_mode<synchronous>, transform_indices = @transform_13, window_bounds = array<i64: 4, 1152, 128>}, {pipeline_mode = #tpu.pipeline_mode<synchronous>, transform_indices = @transform_14, window_bounds = array<i64: 4, 1, 128>}, {pipeline_mode = #tpu.pipeline_mode<synchronous>, transform_indices = @transform_15, window_bounds = array<i64: 1152, 128>}, {pipeline_mode = #tpu.pipeline_mode<synchronous>, transform_indices = @transform_16, window_bounds = array<i64: 1, 128>}, {transform_indices = @transform_17, window_bounds = array<i64: 1, 8, 128>}, {transform_indices = @transform_18, window_bounds = array<i64: 1, 64, 128>}]} {
    %c0 = arith.constant 0 : index
    %c0_0 = arith.constant 0 : index
    %c0_1 = arith.constant 0 : index
    %0 = vector.load %arg1[%c0, %c0_0, %c0_1] : memref<1x64x128xf32, #tpu.memory_space<vmem>>, vector<1x64x128xf32>
    %1 = vector.shape_cast %0 : vector<1x64x128xf32> to vector<64x128xf32>
    %c0_2 = arith.constant 0 : index
    %c0_3 = arith.constant 0 : index
    %2 = vector.load %arg3[%c0_2, %c0_3] : memref<128x32xf32, #tpu.memory_space<vmem>>, vector<128x32xf32>
    %cst = arith.constant dense<0.000000e+00> : vector<64x32xf32>
    %3 = tpu.matmul %1, %2, %cst {dimension_numbers = #tpu.dot_dimension_numbers<[1], [0], [0], [1], [0, 0, 1, 1], [], []>} : vector<64x128xf32>, vector<128x32xf32>, vector<64x32xf32> -> vector<64x32xf32>
    %c0_4 = arith.constant 0 : index
    %c0_5 = arith.constant 0 : index
    %4 = vector.load %arg4[%c0_4, %c0_5] : memref<1x32xf32, #tpu.memory_space<vmem>>, vector<1x32xf32>
    %5 = vector.broadcast %4 : vector<1x32xf32> to vector<64x32xf32>
    %6 = arith.addf %3, %5 : vector<64x32xf32>
    %c0_6 = arith.constant 0 : index
    %c0_7 = arith.constant 0 : index
    %c0_8 = arith.constant 0 : index
    %7 = vector.load %arg2[%c0_6, %c0_7, %c0_8] : memref<1x64x32xf32, #tpu.memory_space<vmem>>, vector<1x64x32xf32>
    %8 = vector.shape_cast %7 : vector<1x64x32xf32> to vector<64x32xf32>
    %9 = arith.addf %6, %8 : vector<64x32xf32>
    %cst_9 = arith.constant dense<0.000000e+00> : vector<32xf32>
    %10 = vector.multi_reduction <add>, %9, %cst_9 [0] : vector<64x32xf32> to vector<32xf32>
    %11 = vector.shape_cast %10 : vector<32xf32> to vector<1x32xf32>
    %cst_10 = arith.constant 6.400000e+01 : f32
    %12 = vector.broadcast %cst_10 : f32 to vector<1x32xf32>
    %13 = arith.divf %11, %12 : vector<1x32xf32>
    %c0_11 = arith.constant 0 : index
    %c0_12 = arith.constant 0 : index
    %14 = vector.load %arg5[%c0_11, %c0_12] : memref<8x32xf32, #tpu.memory_space<vmem>>, vector<8x32xf32>
    %15 = vector.broadcast %13 : vector<1x32xf32> to vector<8x32xf32>
    %16 = arith.addf %14, %15 : vector<8x32xf32>
    %c0_13 = arith.constant 0 : index
    %c0_14 = arith.constant 0 : index
    %c0_15 = arith.constant 0 : index
    %17 = vector.load %arg6[%c0_13, %c0_14, %c0_15] : memref<2x32x32xf32, #tpu.memory_space<vmem>>, vector<1x32x32xf32>
    %18 = vector.shape_cast %17 : vector<1x32x32xf32> to vector<32x32xf32>
    %cst_16 = arith.constant dense<0.000000e+00> : vector<8x32xf32>
    %19 = tpu.matmul %16, %18, %cst_16 {dimension_numbers = #tpu.dot_dimension_numbers<[1], [0], [0], [1], [0, 0, 1, 1], [], []>} : vector<8x32xf32>, vector<32x32xf32>, vector<8x32xf32> -> vector<8x32xf32>
    %c0_17 = arith.constant 0 : index
    %c0_18 = arith.constant 0 : index
    %c0_19 = arith.constant 0 : index
    %20 = vector.load %arg7[%c0_17, %c0_18, %c0_19] : memref<2x1x32xf32, #tpu.memory_space<vmem>>, vector<1x1x32xf32>
    %21 = vector.shape_cast %20 : vector<1x1x32xf32> to vector<1x32xf32>
    %22 = vector.broadcast %21 : vector<1x32xf32> to vector<8x32xf32>
    %23 = arith.addf %19, %22 : vector<8x32xf32>
    %cst_20 = arith.constant 0.000000e+00 : f32
    %24 = vector.broadcast %cst_20 : f32 to vector<8x32xf32>
    %25 = arith.maximumf %23, %24 : vector<8x32xf32>
    %c1 = arith.constant 1 : index
    %c0_21 = arith.constant 0 : index
    %c0_22 = arith.constant 0 : index
    %26 = vector.load %arg6[%c1, %c0_21, %c0_22] : memref<2x32x32xf32, #tpu.memory_space<vmem>>, vector<1x32x32xf32>
    %27 = vector.shape_cast %26 : vector<1x32x32xf32> to vector<32x32xf32>
    %cst_23 = arith.constant dense<0.000000e+00> : vector<8x32xf32>
    %28 = tpu.matmul %25, %27, %cst_23 {dimension_numbers = #tpu.dot_dimension_numbers<[1], [0], [0], [1], [0, 0, 1, 1], [], []>} : vector<8x32xf32>, vector<32x32xf32>, vector<8x32xf32> -> vector<8x32xf32>
    %c1_24 = arith.constant 1 : index
    %c0_25 = arith.constant 0 : index
    %c0_26 = arith.constant 0 : index
    %29 = vector.load %arg7[%c1_24, %c0_25, %c0_26] : memref<2x1x32xf32, #tpu.memory_space<vmem>>, vector<1x1x32xf32>
    %30 = vector.shape_cast %29 : vector<1x1x32xf32> to vector<1x32xf32>
    %31 = vector.broadcast %30 : vector<1x32xf32> to vector<8x32xf32>
    %32 = arith.addf %28, %31 : vector<8x32xf32>
    %cst_27 = arith.constant 0.000000e+00 : f32
    %33 = vector.broadcast %cst_27 : f32 to vector<8x32xf32>
    %34 = arith.maximumf %32, %33 : vector<8x32xf32>
    %c0_28 = arith.constant 0 : index
    %c0_29 = arith.constant 0 : index
    %35 = vector.load %arg8[%c0_28, %c0_29] : memref<32x41xf32, #tpu.memory_space<vmem>>, vector<32x41xf32>
    %cst_30 = arith.constant dense<0.000000e+00> : vector<8x41xf32>
    %36 = tpu.matmul %34, %35, %cst_30 {dimension_numbers = #tpu.dot_dimension_numbers<[1], [0], [0], [1], [0, 0, 1, 1], [], []>} : vector<8x32xf32>, vector<32x41xf32>, vector<8x41xf32> -> vector<8x41xf32>
    %c0_31 = arith.constant 0 : index
    %c0_32 = arith.constant 0 : index
    %37 = vector.load %arg9[%c0_31, %c0_32] : memref<1x41xf32, #tpu.memory_space<vmem>>, vector<1x41xf32>
    %38 = vector.broadcast %37 : vector<1x41xf32> to vector<8x41xf32>
    %39 = arith.addf %36, %38 : vector<8x41xf32>
    %40 = vector.extract_strided_slice %39 {offsets = [0, 0], sizes = [8, 9], strides = [1, 1]} : vector<8x41xf32> to vector<8x9xf32>
    %41 = vector.extract_strided_slice %39 {offsets = [0, 9], sizes = [8, 32], strides = [1, 1]} : vector<8x41xf32> to vector<8x32xf32>
    %cst_33 = arith.constant 0.000000e+00 : f32
    %42 = vector.broadcast %cst_33 : f32 to vector<8x32xf32>
    %43 = arith.maximumf %41, %42 : vector<8x32xf32>
    %c0_34 = arith.constant 0 : index
    %c0_35 = arith.constant 0 : index
    %44 = vector.load %arg10[%c0_34, %c0_35] : memref<32x32xf32, #tpu.memory_space<vmem>>, vector<32x32xf32>
    %cst_36 = arith.constant dense<0.000000e+00> : vector<8x32xf32>
    %45 = tpu.matmul %43, %44, %cst_36 {dimension_numbers = #tpu.dot_dimension_numbers<[1], [0], [0], [1], [0, 0, 1, 1], [], []>} : vector<8x32xf32>, vector<32x32xf32>, vector<8x32xf32> -> vector<8x32xf32>
    %c0_37 = arith.constant 0 : index
    %c0_38 = arith.constant 0 : index
    %46 = vector.load %arg11[%c0_37, %c0_38] : memref<1x32xf32, #tpu.memory_space<vmem>>, vector<1x32xf32>
    %47 = vector.broadcast %46 : vector<1x32xf32> to vector<8x32xf32>
    %48 = arith.addf %45, %47 : vector<8x32xf32>
    %cst_39 = arith.constant 0.000000e+00 : f32
    %49 = vector.broadcast %cst_39 : f32 to vector<8x32xf32>
    %50 = arith.maximumf %48, %49 : vector<8x32xf32>
    %c0_40 = arith.constant 0 : index
    %c0_41 = arith.constant 0 : index
    %51 = vector.load %arg12[%c0_40, %c0_41] : memref<32x4xf32, #tpu.memory_space<vmem>>, vector<32x4xf32>
    %cst_42 = arith.constant dense<0.000000e+00> : vector<8x4xf32>
    %52 = tpu.matmul %50, %51, %cst_42 {dimension_numbers = #tpu.dot_dimension_numbers<[1], [0], [0], [1], [0, 0, 1, 1], [], []>} : vector<8x32xf32>, vector<32x4xf32>, vector<8x4xf32> -> vector<8x4xf32>
    %c0_43 = arith.constant 0 : index
    %c0_44 = arith.constant 0 : index
    %53 = vector.load %arg13[%c0_43, %c0_44] : memref<1x4xf32, #tpu.memory_space<vmem>>, vector<1x4xf32>
    %54 = vector.broadcast %53 : vector<1x4xf32> to vector<8x4xf32>
    %55 = arith.addf %52, %54 : vector<8x4xf32>
    %56 = arith.negf %55 : vector<8x4xf32>
    %57 = math.exp %56 : vector<8x4xf32>
    %cst_45 = arith.constant 1.000000e+00 : f32
    %58 = vector.broadcast %cst_45 : f32 to vector<8x4xf32>
    %59 = arith.addf %58, %57 : vector<8x4xf32>
    %60 = arith.divf %58, %59 : vector<8x4xf32>
    %cst_46 = arith.constant 0.000000e+00 : f32
    %61 = vector.broadcast %cst_46 : f32 to vector<8x115xf32>
    %62 = tpu.concatenate %40, %60, %61 in 1 : vector<8x9xf32>, vector<8x4xf32>, vector<8x115xf32> -> vector<8x128xf32>
    %c0_47 = arith.constant 0 : index
    %c0_48 = arith.constant 0 : index
    %c0_49 = arith.constant 0 : index
    %63 = vector.load %arg18[%c0_47, %c0_48, %c0_49] : memref<1x8x128xf32, #tpu.memory_space<vmem>>, vector<1x8x128xf32>
    %64 = vector.shape_cast %63 : vector<1x8x128xf32> to vector<8x128xf32>
    %65 = vector.shape_cast %62 : vector<8x128xf32> to vector<1x8x128xf32>
    tpu.vector_store %arg18[%c0_47, %c0_48, %c0_49], %65 {strides = array<i32>} : memref<1x8x128xf32, #tpu.memory_space<vmem>>, vector<1x8x128xf32>,
    %cst_50 = arith.constant 0.000000e+00 : f32
    %66 = vector.broadcast %cst_50 : f32 to vector<10x10x128xf32>
    %c0_51 = arith.constant 0 : index
    %c0_52 = arith.constant 0 : index
    %c0_53 = arith.constant 0 : index
    %67 = vector.load %arg20[%c0_51, %c0_52, %c0_53] : memref<10x10x128xf32, #tpu.memory_space<vmem>>, vector<10x10x128xf32>
    tpu.vector_store %arg20[%c0_51, %c0_52, %c0_53], %66 {strides = array<i32>} : memref<10x10x128xf32, #tpu.memory_space<vmem>>, vector<10x10x128xf32>,
    %68 = vector.shape_cast %1 : vector<64x128xf32> to vector<8x8x128xf32>
    %c1_54 = arith.constant 1 : index
    %c1_55 = arith.constant 1 : index
    %c0_56 = arith.constant 0 : index
    %69 = vector.load %arg20[%c1_54, %c1_55, %c0_56] : memref<10x10x128xf32, #tpu.memory_space<vmem>>, vector<8x8x128xf32>
    tpu.vector_store %arg20[%c1_54, %c1_55, %c0_56], %68 {strides = array<i32>} : memref<10x10x128xf32, #tpu.memory_space<vmem>>, vector<8x8x128xf32>,
    %c0_57 = arith.constant 0 : index
    %c0_58 = arith.constant 0 : index
    %c0_59 = arith.constant 0 : index
    %70 = vector.load %arg20[%c0_57, %c0_58, %c0_59] : memref<10x10x128xf32, #tpu.memory_space<vmem>>, vector<10x10x128xf32>
    %71 = vector.extract_strided_slice %70 {offsets = [0, 0, 0], sizes = [8, 8, 128], strides = [1, 1, 1]} : vector<10x10x128xf32> to vector<8x8x128xf32>
    %72 = vector.shape_cast %71 : vector<8x8x128xf32> to vector<64x128xf32>
    %73 = vector.extract_strided_slice %70 {offsets = [0, 1, 0], sizes = [8, 8, 128], strides = [1, 1, 1]} : vector<10x10x128xf32> to vector<8x8x128xf32>
    %74 = vector.shape_cast %73 : vector<8x8x128xf32> to vector<64x128xf32>
    %75 = vector.extract_strided_slice %70 {offsets = [0, 2, 0], sizes = [8, 8, 128], strides = [1, 1, 1]} : vector<10x10x128xf32> to vector<8x8x128xf32>
    %76 = vector.shape_cast %75 : vector<8x8x128xf32> to vector<64x128xf32>
    %77 = vector.extract_strided_slice %70 {offsets = [1, 0, 0], sizes = [8, 8, 128], strides = [1, 1, 1]} : vector<10x10x128xf32> to vector<8x8x128xf32>
    %78 = vector.shape_cast %77 : vector<8x8x128xf32> to vector<64x128xf32>
    %79 = vector.extract_strided_slice %70 {offsets = [1, 1, 0], sizes = [8, 8, 128], strides = [1, 1, 1]} : vector<10x10x128xf32> to vector<8x8x128xf32>
    %80 = vector.shape_cast %79 : vector<8x8x128xf32> to vector<64x128xf32>
    %81 = vector.extract_strided_slice %70 {offsets = [1, 2, 0], sizes = [8, 8, 128], strides = [1, 1, 1]} : vector<10x10x128xf32> to vector<8x8x128xf32>
    %82 = vector.shape_cast %81 : vector<8x8x128xf32> to vector<64x128xf32>
    %83 = vector.extract_strided_slice %70 {offsets = [2, 0, 0], sizes = [8, 8, 128], strides = [1, 1, 1]} : vector<10x10x128xf32> to vector<8x8x128xf32>
    %84 = vector.shape_cast %83 : vector<8x8x128xf32> to vector<64x128xf32>
    %85 = vector.extract_strided_slice %70 {offsets = [2, 1, 0], sizes = [8, 8, 128], strides = [1, 1, 1]} : vector<10x10x128xf32> to vector<8x8x128xf32>
    %86 = vector.shape_cast %85 : vector<8x8x128xf32> to vector<64x128xf32>
    %87 = vector.extract_strided_slice %70 {offsets = [2, 2, 0], sizes = [8, 8, 128], strides = [1, 1, 1]} : vector<10x10x128xf32> to vector<8x8x128xf32>
    %88 = vector.shape_cast %87 : vector<8x8x128xf32> to vector<64x128xf32>
    %89 = tpu.concatenate %72, %74, %76, %78, %80, %82, %84, %86, %88 in 1 : vector<64x128xf32>, vector<64x128xf32>, vector<64x128xf32>, vector<64x128xf32>, vector<64x128xf32>, vector<64x128xf32>, vector<64x128xf32>, vector<64x128xf32>, vector<64x128xf32> -> vector<64x1152xf32>
    %90 = arith.truncf %89 : vector<64x1152xf32> to vector<64x1152xbf16>
    %c0_60 = arith.constant 0 : index
    %c0_61 = arith.constant 0 : index
    %c0_62 = arith.constant 0 : index
    %91 = vector.load %arg14[%c0_60, %c0_61, %c0_62] : memref<4x1152x128xbf16, #tpu.memory_space<vmem>>, vector<1x1152x128xbf16>
    %92 = vector.shape_cast %91 : vector<1x1152x128xbf16> to vector<1152x128xbf16>
    %cst_63 = arith.constant dense<0.000000e+00> : vector<64x128xf32>
    %93 = tpu.matmul %90, %92, %cst_63 {dimension_numbers = #tpu.dot_dimension_numbers<[1], [0], [0], [1], [0, 0, 1, 1], [], []>} : vector<64x1152xbf16>, vector<1152x128xbf16>, vector<64x128xf32> -> vector<64x128xf32>
    %c0_64 = arith.constant 0 : index
    %c0_65 = arith.constant 0 : index
    %c0_66 = arith.constant 0 : index
    %94 = vector.load %arg15[%c0_64, %c0_65, %c0_66] : memref<4x1x128xf32, #tpu.memory_space<vmem>>, vector<1x1x128xf32>
    %95 = vector.shape_cast %94 : vector<1x1x128xf32> to vector<1x128xf32>
    %96 = vector.broadcast %95 : vector<1x128xf32> to vector<64x128xf32>
    %97 = arith.addf %93, %96 : vector<64x128xf32>
    %cst_67 = arith.constant 0.000000e+00 : f32
    %98 = vector.broadcast %cst_67 : f32 to vector<64x128xf32>
    %99 = arith.maximumf %97, %98 : vector<64x128xf32>
    %100 = vector.shape_cast %99 : vector<64x128xf32> to vector<8x8x128xf32>
    %c1_68 = arith.constant 1 : index
    %c1_69 = arith.constant 1 : index
    %c0_70 = arith.constant 0 : index
    %101 = vector.load %arg20[%c1_68, %c1_69, %c0_70] : memref<10x10x128xf32, #tpu.memory_space<vmem>>, vector<8x8x128xf32>
    tpu.vector_store %arg20[%c1_68, %c1_69, %c0_70], %100 {strides = array<i32>} : memref<10x10x128xf32, #tpu.memory_space<vmem>>, vector<8x8x128xf32>,
    %c0_71 = arith.constant 0 : index
    %c0_72 = arith.constant 0 : index
    %c0_73 = arith.constant 0 : index
    %102 = vector.load %arg20[%c0_71, %c0_72, %c0_73] : memref<10x10x128xf32, #tpu.memory_space<vmem>>, vector<10x10x128xf32>
    %103 = vector.extract_strided_slice %102 {offsets = [0, 0, 0], sizes = [8, 8, 128], strides = [1, 1, 1]} : vector<10x10x128xf32> to vector<8x8x128xf32>
    %104 = vector.shape_cast %103 : vector<8x8x128xf32> to vector<64x128xf32>
    %105 = vector.extract_strided_slice %102 {offsets = [0, 1, 0], sizes = [8, 8, 128], strides = [1, 1, 1]} : vector<10x10x128xf32> to vector<8x8x128xf32>
    %106 = vector.shape_cast %105 : vector<8x8x128xf32> to vector<64x128xf32>
    %107 = vector.extract_strided_slice %102 {offsets = [0, 2, 0], sizes = [8, 8, 128], strides = [1, 1, 1]} : vector<10x10x128xf32> to vector<8x8x128xf32>
    %108 = vector.shape_cast %107 : vector<8x8x128xf32> to vector<64x128xf32>
    %109 = vector.extract_strided_slice %102 {offsets = [1, 0, 0], sizes = [8, 8, 128], strides = [1, 1, 1]} : vector<10x10x128xf32> to vector<8x8x128xf32>
    %110 = vector.shape_cast %109 : vector<8x8x128xf32> to vector<64x128xf32>
    %111 = vector.extract_strided_slice %102 {offsets = [1, 1, 0], sizes = [8, 8, 128], strides = [1, 1, 1]} : vector<10x10x128xf32> to vector<8x8x128xf32>
    %112 = vector.shape_cast %111 : vector<8x8x128xf32> to vector<64x128xf32>
    %113 = vector.extract_strided_slice %102 {offsets = [1, 2, 0], sizes = [8, 8, 128], strides = [1, 1, 1]} : vector<10x10x128xf32> to vector<8x8x128xf32>
    %114 = vector.shape_cast %113 : vector<8x8x128xf32> to vector<64x128xf32>
    %115 = vector.extract_strided_slice %102 {offsets = [2, 0, 0], sizes = [8, 8, 128], strides = [1, 1, 1]} : vector<10x10x128xf32> to vector<8x8x128xf32>
    %116 = vector.shape_cast %115 : vector<8x8x128xf32> to vector<64x128xf32>
    %117 = vector.extract_strided_slice %102 {offsets = [2, 1, 0], sizes = [8, 8, 128], strides = [1, 1, 1]} : vector<10x10x128xf32> to vector<8x8x128xf32>
    %118 = vector.shape_cast %117 : vector<8x8x128xf32> to vector<64x128xf32>
    %119 = vector.extract_strided_slice %102 {offsets = [2, 2, 0], sizes = [8, 8, 128], strides = [1, 1, 1]} : vector<10x10x128xf32> to vector<8x8x128xf32>
    %120 = vector.shape_cast %119 : vector<8x8x128xf32> to vector<64x128xf32>
    %121 = tpu.concatenate %104, %106, %108, %110, %112, %114, %116, %118, %120 in 1 : vector<64x128xf32>, vector<64x128xf32>, vector<64x128xf32>, vector<64x128xf32>, vector<64x128xf32>, vector<64x128xf32>, vector<64x128xf32>, vector<64x128xf32>, vector<64x128xf32> -> vector<64x1152xf32>
    %122 = arith.truncf %121 : vector<64x1152xf32> to vector<64x1152xbf16>
    %c1_74 = arith.constant 1 : index
    %c0_75 = arith.constant 0 : index
    %c0_76 = arith.constant 0 : index
    %123 = vector.load %arg14[%c1_74, %c0_75, %c0_76] : memref<4x1152x128xbf16, #tpu.memory_space<vmem>>, vector<1x1152x128xbf16>
    %124 = vector.shape_cast %123 : vector<1x1152x128xbf16> to vector<1152x128xbf16>
    %cst_77 = arith.constant dense<0.000000e+00> : vector<64x128xf32>
    %125 = tpu.matmul %122, %124, %cst_77 {dimension_numbers = #tpu.dot_dimension_numbers<[1], [0], [0], [1], [0, 0, 1, 1], [], []>} : vector<64x1152xbf16>, vector<1152x128xbf16>, vector<64x128xf32> -> vector<64x128xf32>
    %c1_78 = arith.constant 1 : index
    %c0_79 = arith.constant 0 : index
    %c0_80 = arith.constant 0 : index
    %126 = vector.load %arg15[%c1_78, %c0_79, %c0_80] : memref<4x1x128xf32, #tpu.memory_space<vmem>>, vector<1x1x128xf32>
    %127 = vector.shape_cast %126 : vector<1x1x128xf32> to vector<1x128xf32>
    %128 = vector.broadcast %127 : vector<1x128xf32> to vector<64x128xf32>
    %129 = arith.addf %125, %128 : vector<64x128xf32>
    %cst_81 = arith.constant 0.000000e+00 : f32
    %130 = vector.broadcast %cst_81 : f32 to vector<64x128xf32>
    %131 = arith.maximumf %129, %130 : vector<64x128xf32>
    %132 = vector.shape_cast %131 : vector<64x128xf32> to vector<8x8x128xf32>
    %c1_82 = arith.constant 1 : index
    %c1_83 = arith.constant 1 : index
    %c0_84 = arith.constant 0 : index
    %133 = vector.load %arg20[%c1_82, %c1_83, %c0_84] : memref<10x10x128xf32, #tpu.memory_space<vmem>>, vector<8x8x128xf32>
    tpu.vector_store %arg20[%c1_82, %c1_83, %c0_84], %132 {strides = array<i32>} : memref<10x10x128xf32, #tpu.memory_space<vmem>>, vector<8x8x128xf32>,
    %c0_85 = arith.constant 0 : index
    %c0_86 = arith.constant 0 : index
    %c0_87 = arith.constant 0 : index
    %134 = vector.load %arg20[%c0_85, %c0_86, %c0_87] : memref<10x10x128xf32, #tpu.memory_space<vmem>>, vector<10x10x128xf32>
    %135 = vector.extract_strided_slice %134 {offsets = [0, 0, 0], sizes = [8, 8, 128], strides = [1, 1, 1]} : vector<10x10x128xf32> to vector<8x8x128xf32>
    %136 = vector.shape_cast %135 : vector<8x8x128xf32> to vector<64x128xf32>
    %137 = vector.extract_strided_slice %134 {offsets = [0, 1, 0], sizes = [8, 8, 128], strides = [1, 1, 1]} : vector<10x10x128xf32> to vector<8x8x128xf32>
    %138 = vector.shape_cast %137 : vector<8x8x128xf32> to vector<64x128xf32>
    %139 = vector.extract_strided_slice %134 {offsets = [0, 2, 0], sizes = [8, 8, 128], strides = [1, 1, 1]} : vector<10x10x128xf32> to vector<8x8x128xf32>
    %140 = vector.shape_cast %139 : vector<8x8x128xf32> to vector<64x128xf32>
    %141 = vector.extract_strided_slice %134 {offsets = [1, 0, 0], sizes = [8, 8, 128], strides = [1, 1, 1]} : vector<10x10x128xf32> to vector<8x8x128xf32>
    %142 = vector.shape_cast %141 : vector<8x8x128xf32> to vector<64x128xf32>
    %143 = vector.extract_strided_slice %134 {offsets = [1, 1, 0], sizes = [8, 8, 128], strides = [1, 1, 1]} : vector<10x10x128xf32> to vector<8x8x128xf32>
    %144 = vector.shape_cast %143 : vector<8x8x128xf32> to vector<64x128xf32>
    %145 = vector.extract_strided_slice %134 {offsets = [1, 2, 0], sizes = [8, 8, 128], strides = [1, 1, 1]} : vector<10x10x128xf32> to vector<8x8x128xf32>
    %146 = vector.shape_cast %145 : vector<8x8x128xf32> to vector<64x128xf32>
    %147 = vector.extract_strided_slice %134 {offsets = [2, 0, 0], sizes = [8, 8, 128], strides = [1, 1, 1]} : vector<10x10x128xf32> to vector<8x8x128xf32>
    %148 = vector.shape_cast %147 : vector<8x8x128xf32> to vector<64x128xf32>
    %149 = vector.extract_strided_slice %134 {offsets = [2, 1, 0], sizes = [8, 8, 128], strides = [1, 1, 1]} : vector<10x10x128xf32> to vector<8x8x128xf32>
    %150 = vector.shape_cast %149 : vector<8x8x128xf32> to vector<64x128xf32>
    %151 = vector.extract_strided_slice %134 {offsets = [2, 2, 0], sizes = [8, 8, 128], strides = [1, 1, 1]} : vector<10x10x128xf32> to vector<8x8x128xf32>
    %152 = vector.shape_cast %151 : vector<8x8x128xf32> to vector<64x128xf32>
    %153 = tpu.concatenate %136, %138, %140, %142, %144, %146, %148, %150, %152 in 1 : vector<64x128xf32>, vector<64x128xf32>, vector<64x128xf32>, vector<64x128xf32>, vector<64x128xf32>, vector<64x128xf32>, vector<64x128xf32>, vector<64x128xf32>, vector<64x128xf32> -> vector<64x1152xf32>
    %154 = arith.truncf %153 : vector<64x1152xf32> to vector<64x1152xbf16>
    %c2 = arith.constant 2 : index
    %c0_88 = arith.constant 0 : index
    %c0_89 = arith.constant 0 : index
    %155 = vector.load %arg14[%c2, %c0_88, %c0_89] : memref<4x1152x128xbf16, #tpu.memory_space<vmem>>, vector<1x1152x128xbf16>
    %156 = vector.shape_cast %155 : vector<1x1152x128xbf16> to vector<1152x128xbf16>
    %cst_90 = arith.constant dense<0.000000e+00> : vector<64x128xf32>
    %157 = tpu.matmul %154, %156, %cst_90 {dimension_numbers = #tpu.dot_dimension_numbers<[1], [0], [0], [1], [0, 0, 1, 1], [], []>} : vector<64x1152xbf16>, vector<1152x128xbf16>, vector<64x128xf32> -> vector<64x128xf32>
    %c2_91 = arith.constant 2 : index
    %c0_92 = arith.constant 0 : index
    %c0_93 = arith.constant 0 : index
    %158 = vector.load %arg15[%c2_91, %c0_92, %c0_93] : memref<4x1x128xf32, #tpu.memory_space<vmem>>, vector<1x1x128xf32>
    %159 = vector.shape_cast %158 : vector<1x1x128xf32> to vector<1x128xf32>
    %160 = vector.broadcast %159 : vector<1x128xf32> to vector<64x128xf32>
    %161 = arith.addf %157, %160 : vector<64x128xf32>
    %cst_94 = arith.constant 0.000000e+00 : f32
    %162 = vector.broadcast %cst_94 : f32 to vector<64x128xf32>
    %163 = arith.maximumf %161, %162 : vector<64x128xf32>
    %164 = vector.shape_cast %163 : vector<64x128xf32> to vector<8x8x128xf32>
    %c1_95 = arith.constant 1 : index
    %c1_96 = arith.constant 1 : index
    %c0_97 = arith.constant 0 : index
    %165 = vector.load %arg20[%c1_95, %c1_96, %c0_97] : memref<10x10x128xf32, #tpu.memory_space<vmem>>, vector<8x8x128xf32>
    tpu.vector_store %arg20[%c1_95, %c1_96, %c0_97], %164 {strides = array<i32>} : memref<10x10x128xf32, #tpu.memory_space<vmem>>, vector<8x8x128xf32>,
    %c0_98 = arith.constant 0 : index
    %c0_99 = arith.constant 0 : index
    %c0_100 = arith.constant 0 : index
    %166 = vector.load %arg20[%c0_98, %c0_99, %c0_100] : memref<10x10x128xf32, #tpu.memory_space<vmem>>, vector<10x10x128xf32>
    %167 = vector.extract_strided_slice %166 {offsets = [0, 0, 0], sizes = [8, 8, 128], strides = [1, 1, 1]} : vector<10x10x128xf32> to vector<8x8x128xf32>
    %168 = vector.shape_cast %167 : vector<8x8x128xf32> to vector<64x128xf32>
    %169 = vector.extract_strided_slice %166 {offsets = [0, 1, 0], sizes = [8, 8, 128], strides = [1, 1, 1]} : vector<10x10x128xf32> to vector<8x8x128xf32>
    %170 = vector.shape_cast %169 : vector<8x8x128xf32> to vector<64x128xf32>
    %171 = vector.extract_strided_slice %166 {offsets = [0, 2, 0], sizes = [8, 8, 128], strides = [1, 1, 1]} : vector<10x10x128xf32> to vector<8x8x128xf32>
    %172 = vector.shape_cast %171 : vector<8x8x128xf32> to vector<64x128xf32>
    %173 = vector.extract_strided_slice %166 {offsets = [1, 0, 0], sizes = [8, 8, 128], strides = [1, 1, 1]} : vector<10x10x128xf32> to vector<8x8x128xf32>
    %174 = vector.shape_cast %173 : vector<8x8x128xf32> to vector<64x128xf32>
    %175 = vector.extract_strided_slice %166 {offsets = [1, 1, 0], sizes = [8, 8, 128], strides = [1, 1, 1]} : vector<10x10x128xf32> to vector<8x8x128xf32>
    %176 = vector.shape_cast %175 : vector<8x8x128xf32> to vector<64x128xf32>
    %177 = vector.extract_strided_slice %166 {offsets = [1, 2, 0], sizes = [8, 8, 128], strides = [1, 1, 1]} : vector<10x10x128xf32> to vector<8x8x128xf32>
    %178 = vector.shape_cast %177 : vector<8x8x128xf32> to vector<64x128xf32>
    %179 = vector.extract_strided_slice %166 {offsets = [2, 0, 0], sizes = [8, 8, 128], strides = [1, 1, 1]} : vector<10x10x128xf32> to vector<8x8x128xf32>
    %180 = vector.shape_cast %179 : vector<8x8x128xf32> to vector<64x128xf32>
    %181 = vector.extract_strided_slice %166 {offsets = [2, 1, 0], sizes = [8, 8, 128], strides = [1, 1, 1]} : vector<10x10x128xf32> to vector<8x8x128xf32>
    %182 = vector.shape_cast %181 : vector<8x8x128xf32> to vector<64x128xf32>
    %183 = vector.extract_strided_slice %166 {offsets = [2, 2, 0], sizes = [8, 8, 128], strides = [1, 1, 1]} : vector<10x10x128xf32> to vector<8x8x128xf32>
    %184 = vector.shape_cast %183 : vector<8x8x128xf32> to vector<64x128xf32>
    %185 = tpu.concatenate %168, %170, %172, %174, %176, %178, %180, %182, %184 in 1 : vector<64x128xf32>, vector<64x128xf32>, vector<64x128xf32>, vector<64x128xf32>, vector<64x128xf32>, vector<64x128xf32>, vector<64x128xf32>, vector<64x128xf32>, vector<64x128xf32> -> vector<64x1152xf32>
    %186 = arith.truncf %185 : vector<64x1152xf32> to vector<64x1152xbf16>
    %c3 = arith.constant 3 : index
    %c0_101 = arith.constant 0 : index
    %c0_102 = arith.constant 0 : index
    %187 = vector.load %arg14[%c3, %c0_101, %c0_102] : memref<4x1152x128xbf16, #tpu.memory_space<vmem>>, vector<1x1152x128xbf16>
    %188 = vector.shape_cast %187 : vector<1x1152x128xbf16> to vector<1152x128xbf16>
    %cst_103 = arith.constant dense<0.000000e+00> : vector<64x128xf32>
    %189 = tpu.matmul %186, %188, %cst_103 {dimension_numbers = #tpu.dot_dimension_numbers<[1], [0], [0], [1], [0, 0, 1, 1], [], []>} : vector<64x1152xbf16>, vector<1152x128xbf16>, vector<64x128xf32> -> vector<64x128xf32>
    %c3_104 = arith.constant 3 : index
    %c0_105 = arith.constant 0 : index
    %c0_106 = arith.constant 0 : index
    %190 = vector.load %arg15[%c3_104, %c0_105, %c0_106] : memref<4x1x128xf32, #tpu.memory_space<vmem>>, vector<1x1x128xf32>
    %191 = vector.shape_cast %190 : vector<1x1x128xf32> to vector<1x128xf32>
    %192 = vector.broadcast %191 : vector<1x128xf32> to vector<64x128xf32>
    %193 = arith.addf %189, %192 : vector<64x128xf32>
    %cst_107 = arith.constant 0.000000e+00 : f32
    %194 = vector.broadcast %cst_107 : f32 to vector<64x128xf32>
    %195 = arith.maximumf %193, %194 : vector<64x128xf32>
    %196 = vector.shape_cast %195 : vector<64x128xf32> to vector<8x8x128xf32>
    %c1_108 = arith.constant 1 : index
    %c1_109 = arith.constant 1 : index
    %c0_110 = arith.constant 0 : index
    %197 = vector.load %arg20[%c1_108, %c1_109, %c0_110] : memref<10x10x128xf32, #tpu.memory_space<vmem>>, vector<8x8x128xf32>
    tpu.vector_store %arg20[%c1_108, %c1_109, %c0_110], %196 {strides = array<i32>} : memref<10x10x128xf32, #tpu.memory_space<vmem>>, vector<8x8x128xf32>,
    %c0_111 = arith.constant 0 : index
    %c0_112 = arith.constant 0 : index
    %c0_113 = arith.constant 0 : index
    %198 = vector.load %arg20[%c0_111, %c0_112, %c0_113] : memref<10x10x128xf32, #tpu.memory_space<vmem>>, vector<10x10x128xf32>
    %199 = vector.extract_strided_slice %198 {offsets = [0, 0, 0], sizes = [8, 8, 128], strides = [1, 1, 1]} : vector<10x10x128xf32> to vector<8x8x128xf32>
    %200 = vector.shape_cast %199 : vector<8x8x128xf32> to vector<64x128xf32>
    %201 = vector.extract_strided_slice %198 {offsets = [0, 1, 0], sizes = [8, 8, 128], strides = [1, 1, 1]} : vector<10x10x128xf32> to vector<8x8x128xf32>
    %202 = vector.shape_cast %201 : vector<8x8x128xf32> to vector<64x128xf32>
    %203 = vector.extract_strided_slice %198 {offsets = [0, 2, 0], sizes = [8, 8, 128], strides = [1, 1, 1]} : vector<10x10x128xf32> to vector<8x8x128xf32>
    %204 = vector.shape_cast %203 : vector<8x8x128xf32> to vector<64x128xf32>
    %205 = vector.extract_strided_slice %198 {offsets = [1, 0, 0], sizes = [8, 8, 128], strides = [1, 1, 1]} : vector<10x10x128xf32> to vector<8x8x128xf32>
    %206 = vector.shape_cast %205 : vector<8x8x128xf32> to vector<64x128xf32>
    %207 = vector.extract_strided_slice %198 {offsets = [1, 1, 0], sizes = [8, 8, 128], strides = [1, 1, 1]} : vector<10x10x128xf32> to vector<8x8x128xf32>
    %208 = vector.shape_cast %207 : vector<8x8x128xf32> to vector<64x128xf32>
    %209 = vector.extract_strided_slice %198 {offsets = [1, 2, 0], sizes = [8, 8, 128], strides = [1, 1, 1]} : vector<10x10x128xf32> to vector<8x8x128xf32>
    %210 = vector.shape_cast %209 : vector<8x8x128xf32> to vector<64x128xf32>
    %211 = vector.extract_strided_slice %198 {offsets = [2, 0, 0], sizes = [8, 8, 128], strides = [1, 1, 1]} : vector<10x10x128xf32> to vector<8x8x128xf32>
    %212 = vector.shape_cast %211 : vector<8x8x128xf32> to vector<64x128xf32>
    %213 = vector.extract_strided_slice %198 {offsets = [2, 1, 0], sizes = [8, 8, 128], strides = [1, 1, 1]} : vector<10x10x128xf32> to vector<8x8x128xf32>
    %214 = vector.shape_cast %213 : vector<8x8x128xf32> to vector<64x128xf32>
    %215 = vector.extract_strided_slice %198 {offsets = [2, 2, 0], sizes = [8, 8, 128], strides = [1, 1, 1]} : vector<10x10x128xf32> to vector<8x8x128xf32>
    %216 = vector.shape_cast %215 : vector<8x8x128xf32> to vector<64x128xf32>
    %217 = tpu.concatenate %200, %202, %204, %206, %208, %210, %212, %214, %216 in 1 : vector<64x128xf32>, vector<64x128xf32>, vector<64x128xf32>, vector<64x128xf32>, vector<64x128xf32>, vector<64x128xf32>, vector<64x128xf32>, vector<64x128xf32>, vector<64x128xf32> -> vector<64x1152xf32>
    %218 = arith.truncf %217 : vector<64x1152xf32> to vector<64x1152xbf16>
    %c0_114 = arith.constant 0 : index
    %c0_115 = arith.constant 0 : index
    %219 = vector.load %arg16[%c0_114, %c0_115] : memref<1152x128xbf16, #tpu.memory_space<vmem>>, vector<1152x128xbf16>
    %cst_116 = arith.constant dense<0.000000e+00> : vector<64x128xf32>
    %220 = tpu.matmul %218, %219, %cst_116 {dimension_numbers = #tpu.dot_dimension_numbers<[1], [0], [0], [1], [0, 0, 1, 1], [], []>} : vector<64x1152xbf16>, vector<1152x128xbf16>, vector<64x128xf32> -> vector<64x128xf32>
    %c0_117 = arith.constant 0 : index
    %c0_118 = arith.constant 0 : index
    %221 = vector.load %arg17[%c0_117, %c0_118] : memref<1x128xf32, #tpu.memory_space<vmem>>, vector<1x128xf32>
    %222 = vector.broadcast %221 : vector<1x128xf32> to vector<64x128xf32>
    %223 = arith.addf %220, %222 : vector<64x128xf32>
    %224 = tpu.iota {dimensions = array<i32: 1>} : vector<64x128xi32>
    %c8_i32 = arith.constant 8 : i32
    %225 = vector.broadcast %c8_i32 : i32 to vector<64x128xi32>
    %226 = arith.cmpi sge, %224, %225 : vector<64x128xi32>
    %cst_119 = arith.constant 0.000000e+00 : f32
    %227 = vector.broadcast %cst_119 : f32 to vector<64x128xf32>
    %228 = arith.maximumf %223, %227 : vector<64x128xf32>
    %229 = arith.select %226, %228, %223 : vector<64x128xi1>, vector<64x128xf32>
    %c0_120 = arith.constant 0 : index
    %c0_121 = arith.constant 0 : index
    %c0_122 = arith.constant 0 : index
    %230 = vector.load %arg19[%c0_120, %c0_121, %c0_122] : memref<1x64x128xf32, #tpu.memory_space<vmem>>, vector<1x64x128xf32>
    %231 = vector.shape_cast %230 : vector<1x64x128xf32> to vector<64x128xf32>
    %232 = vector.shape_cast %229 : vector<64x128xf32> to vector<1x64x128xf32>
    tpu.vector_store %arg19[%c0_120, %c0_121, %c0_122], %232 {strides = array<i32>} : memref<1x64x128xf32, #tpu.memory_space<vmem>>, vector<1x64x128xf32>,
    return
  }
  func.func @transform_0(%arg0: i32) -> (i32, i32, i32) {
    %c0_i32 = arith.constant 0 : i32
    %c0_i32_0 = arith.constant 0 : i32
    %c0_i32_1 = arith.constant 0 : i32
    return %arg0, %c0_i32, %c0_i32_0 : i32, i32, i32
  }
  func.func @transform_1(%arg0: i32) -> (i32, i32, i32) {
    %c0_i32 = arith.constant 0 : i32
    %c0_i32_0 = arith.constant 0 : i32
    %c0_i32_1 = arith.constant 0 : i32
    return %arg0, %c0_i32, %c0_i32_0 : i32, i32, i32
  }
  func.func @transform_2(%arg0: i32) -> (i32, i32) {
    %c0_i32 = arith.constant 0 : i32
    %c0_i32_0 = arith.constant 0 : i32
    %c0_i32_1 = arith.constant 0 : i32
    return %c0_i32, %c0_i32_0 : i32, i32
  }
  func.func @transform_3(%arg0: i32) -> (i32, i32) {
    %c0_i32 = arith.constant 0 : i32
    %c0_i32_0 = arith.constant 0 : i32
    %c0_i32_1 = arith.constant 0 : i32
    return %c0_i32, %c0_i32_0 : i32, i32
  }
  func.func @transform_4(%arg0: i32) -> (i32, i32) {
    %c0_i32 = arith.constant 0 : i32
    %c0_i32_0 = arith.constant 0 : i32
    %c0_i32_1 = arith.constant 0 : i32
    return %c0_i32, %c0_i32_0 : i32, i32
  }
  func.func @transform_5(%arg0: i32) -> (i32, i32, i32) {
    %c0_i32 = arith.constant 0 : i32
    %c0_i32_0 = arith.constant 0 : i32
    %c0_i32_1 = arith.constant 0 : i32
    %c0_i32_2 = arith.constant 0 : i32
    return %c0_i32, %c0_i32_0, %c0_i32_1 : i32, i32, i32
  }
  func.func @transform_6(%arg0: i32) -> (i32, i32, i32) {
    %c0_i32 = arith.constant 0 : i32
    %c0_i32_0 = arith.constant 0 : i32
    %c0_i32_1 = arith.constant 0 : i32
    %c0_i32_2 = arith.constant 0 : i32
    return %c0_i32, %c0_i32_0, %c0_i32_1 : i32, i32, i32
  }
  func.func @transform_7(%arg0: i32) -> (i32, i32) {
    %c0_i32 = arith.constant 0 : i32
    %c0_i32_0 = arith.constant 0 : i32
    %c0_i32_1 = arith.constant 0 : i32
    return %c0_i32, %c0_i32_0 : i32, i32
  }
  func.func @transform_8(%arg0: i32) -> (i32, i32) {
    %c0_i32 = arith.constant 0 : i32
    %c0_i32_0 = arith.constant 0 : i32
    %c0_i32_1 = arith.constant 0 : i32
    return %c0_i32, %c0_i32_0 : i32, i32
  }
  func.func @transform_9(%arg0: i32) -> (i32, i32) {
    %c0_i32 = arith.constant 0 : i32
    %c0_i32_0 = arith.constant 0 : i32
    %c0_i32_1 = arith.constant 0 : i32
    return %c0_i32, %c0_i32_0 : i32, i32
  }
  func.func @transform_10(%arg0: i32) -> (i32, i32) {
    %c0_i32 = arith.constant 0 : i32
    %c0_i32_0 = arith.constant 0 : i32
    %c0_i32_1 = arith.constant 0 : i32
    return %c0_i32, %c0_i32_0 : i32, i32
  }
  func.func @transform_11(%arg0: i32) -> (i32, i32) {
    %c0_i32 = arith.constant 0 : i32
    %c0_i32_0 = arith.constant 0 : i32
    %c0_i32_1 = arith.constant 0 : i32
    return %c0_i32, %c0_i32_0 : i32, i32
  }
  func.func @transform_12(%arg0: i32) -> (i32, i32) {
    %c0_i32 = arith.constant 0 : i32
    %c0_i32_0 = arith.constant 0 : i32
    %c0_i32_1 = arith.constant 0 : i32
    return %c0_i32, %c0_i32_0 : i32, i32
  }
  func.func @transform_13(%arg0: i32) -> (i32, i32, i32) {
    %c0_i32 = arith.constant 0 : i32
    %c0_i32_0 = arith.constant 0 : i32
    %c0_i32_1 = arith.constant 0 : i32
    %c0_i32_2 = arith.constant 0 : i32
    return %c0_i32, %c0_i32_0, %c0_i32_1 : i32, i32, i32
  }
  func.func @transform_14(%arg0: i32) -> (i32, i32, i32) {
    %c0_i32 = arith.constant 0 : i32
    %c0_i32_0 = arith.constant 0 : i32
    %c0_i32_1 = arith.constant 0 : i32
    %c0_i32_2 = arith.constant 0 : i32
    return %c0_i32, %c0_i32_0, %c0_i32_1 : i32, i32, i32
  }
  func.func @transform_15(%arg0: i32) -> (i32, i32) {
    %c0_i32 = arith.constant 0 : i32
    %c0_i32_0 = arith.constant 0 : i32
    %c0_i32_1 = arith.constant 0 : i32
    return %c0_i32, %c0_i32_0 : i32, i32
  }
  func.func @transform_16(%arg0: i32) -> (i32, i32) {
    %c0_i32 = arith.constant 0 : i32
    %c0_i32_0 = arith.constant 0 : i32
    %c0_i32_1 = arith.constant 0 : i32
    return %c0_i32, %c0_i32_0 : i32, i32
  }
  func.func @transform_17(%arg0: i32) -> (i32, i32, i32) {
    %c0_i32 = arith.constant 0 : i32
    %c0_i32_0 = arith.constant 0 : i32
    %c0_i32_1 = arith.constant 0 : i32
    return %arg0, %c0_i32, %c0_i32_0 : i32, i32, i32
  }
  func.func @transform_18(%arg0: i32) -> (i32, i32, i32) {
    %c0_i32 = arith.constant 0 : i32
    %c0_i32_0 = arith.constant 0 : i32
    %c0_i32_1 = arith.constant 0 : i32
    return %arg0, %c0_i32, %c0_i32_0 : i32, i32, i32
  }
}

</mosaic_0001>

<llo_original>
// kernel: detr_forward.1
$region0: #{detr_forward.1}
  #allocation0 [shape = 'u32[]', space=smem, size = 0x4, offset = 0x4, fixed_abs, tag = 'smem constant byte address 0x4 - core index']
  #allocation1 [shape = 'u32[144,128]{1,0:T(1,128)}', space=vmem, size = 0x12000, scoped, tag = 'internal scratch']
  #allocation2 [shape = 'f32[10,10,128]{2,1,0:T(8,128)}', space=vmem, size = 0x14000, scoped, tag = 'scratch operand']
  %s0 = inlined_call_operand.vmem [shape: f32[2,64,128], index: 0, kind: input, shape index: {}]
  %s1 = inlined_call_operand.hbm [shape: f32[2,64,32], index: 1, kind: input, shape index: {}]
  %s2 = inlined_call_operand.vmem [shape: f32[128,32], index: 2, kind: input, shape index: {}]
  %s3 = inlined_call_operand.hbm [shape: f32[1,32], index: 3, kind: input, shape index: {}]
  %s4 = inlined_call_operand.hbm [shape: f32[8,32], index: 4, kind: input, shape index: {}]
  %s5 = inlined_call_operand.hbm [shape: f32[2,32,32], index: 5, kind: input, shape index: {}]
  %s6 = inlined_call_operand.hbm [shape: f32[2,1,32], index: 6, kind: input, shape index: {}]
  %s7 = inlined_call_operand.hbm [shape: f32[32,41], index: 7, kind: input, shape index: {}]
  %s8 = inlined_call_operand.hbm [shape: f32[1,41], index: 8, kind: input, shape index: {}]
  %s9 = inlined_call_operand.hbm [shape: f32[32,32], index: 9, kind: input, shape index: {}]
  %s10 = inlined_call_operand.hbm [shape: f32[1,32], index: 10, kind: input, shape index: {}]
  %s11 = inlined_call_operand.vmem [shape: f32[32,4], index: 11, kind: input, shape index: {}]
  %s12 = inlined_call_operand.hbm [shape: f32[1,4], index: 12, kind: input, shape index: {}]
  %s13 = inlined_call_operand.hbm [shape: bf16[4,1152,128], index: 13, kind: input, shape index: {}]
  %s14 = inlined_call_operand.hbm [shape: f32[4,1,128], index: 14, kind: input, shape index: {}]
  %s15 = inlined_call_operand.hbm [shape: bf16[1152,128], index: 15, kind: input, shape index: {}]
  %s16 = inlined_call_operand.hbm [shape: f32[1,128], index: 16, kind: input, shape index: {}]
  %s17 = inlined_call_operand.vmem [shape: f32[2,8,128], index: 17, kind: output, shape index: {0}]
  %s18 = inlined_call_operand.vmem [shape: f32[2,64,128], index: 18, kind: output, shape index: {1}]
  %19 = xla_tuple %s17, %s18
  %s20 = sld [smem:[#allocation0]]
  $region165: #{detr_forward.1} parent=0
    _
  %s22 = ssub.s32 1, %s20
  %s23 = scalar_select 0, %s22, %s20
  $region1: #{detr_forward.1} parent=0
    #allocation3 [shape = 'u8[65536]{0}', space=vmem, size = 0x10000, scoped, tag = 'input window, operand 1']
    #allocation4 [shape = 's32[2]{0}', space=sflag, size = 0x8, scoped, tag = 'scoped memory for detr_forward.1']
    #allocation5 [shape = 'u8[512]{0}', space=vmem, size = 0x400, scoped, tag = 'input window, operand 3, single buffered']
    #allocation6 [shape = 's32[1]{0}', space=sflag, size = 0x4, scoped, tag = 'scoped memory for detr_forward.1']
    #allocation7 [shape = 'u8[4096]{0}', space=vmem, size = 0x1000, scoped, tag = 'input window, operand 4, single buffered']
    #allocation8 [shape = 'u8[32768]{0}', space=vmem, size = 0x8000, scoped, tag = 'input window, operand 5, single buffered']
    #allocation9 [shape = 's32[1]{0}', space=sflag, size = 0x4, scoped, tag = 'scoped memory for detr_forward.1']
    #allocation10 [shape = 'u8[1024]{0}', space=vmem, size = 0x400, scoped, tag = 'input window, operand 6, single buffered']
    #allocation11 [shape = 'u8[16384]{0}', space=vmem, size = 0x4000, scoped, tag = 'input window, operand 7, single buffered']
    #allocation12 [shape = 's32[1]{0}', space=sflag, size = 0x4, scoped, tag = 'scoped memory for detr_forward.1']
    #allocation13 [shape = 'u8[512]{0}', space=vmem, size = 0x400, scoped, tag = 'input window, operand 8, single buffered']
    #allocation14 [shape = 'u8[16384]{0}', space=vmem, size = 0x4000, scoped, tag = 'input window, operand 9, single buffered']
    #allocation15 [shape = 's32[1]{0}', space=sflag, size = 0x4, scoped, tag = 'scoped memory for detr_forward.1']
    #allocation16 [shape = 'u8[512]{0}', space=vmem, size = 0x400, scoped, tag = 'input window, operand 10, single buffered']
    #allocation17 [shape = 'u8[512]{0}', space=vmem, size = 0x400, scoped, tag = 'input window, operand 12, single buffered']
    #allocation18 [shape = 's32[1]{0}', space=sflag, size = 0x4, scoped, tag = 'scoped memory for detr_forward.1']
    #allocation19 [shape = 'u8[1179648]{0}', space=vmem, size = 0x120000, scoped, tag = 'input window, operand 13, single buffered']
    #allocation20 [shape = 'u8[2048]{0}', space=vmem, size = 0x800, scoped, tag = 'input window, operand 14, single buffered']
    #allocation21 [shape = 's32[1]{0}', space=sflag, size = 0x4, scoped, tag = 'scoped memory for detr_forward.1']
    #allocation22 [shape = 'u8[294912]{0}', space=vmem, size = 0x48000, scoped, tag = 'input window, operand 15, single buffered']
    #allocation23 [shape = 'u8[512]{0}', space=vmem, size = 0x400, scoped, tag = 'input window, operand 16, single buffered']
    #allocation24 [shape = 's32[1]{0}', space=sflag, size = 0x4, scoped, tag = 'scoped memory for detr_forward.1']
    %24 = vsyncpa [#allocation4], 0
    %s25 = scalar_lea.sflag [#allocation4], 1
    %26 = vsyncpa %s25, 0
    %27 = vsyncpa [#allocation6], 0
    %28 = vsyncpa [#allocation9], 0
    %29 = vsyncpa [#allocation12], 0
    %30 = vsyncpa [#allocation15], 0
    %31 = vsyncpa [#allocation18], 0
    %32 = vsyncpa [#allocation21], 0
    %33 = vsyncpa [#allocation24], 0
    loop: start=0, step=1, limit=4
    $region2: #{detr_forward.1} parent=1 // loop_pre_header
      _
    $region3: #{detr_forward.1} parent=1 // loop_header
      %s35 = sphi 0, %s39
      %p36 = scmp.ge.s32.totalorder %s35, 4
      %s45 = sphi 0, %s47
      %s48 = sphi 0, %s45
      %s49 = sphi 0, %s48
      %s65 = sphi 0, %s49
      %s71 = sphi 0, %s73
      %s74 = sphi 0, %s71
      %s75 = sphi 0, %s74
      %s91 = sphi 0, %s75
      %s95 = sphi 0, %s95
      %s97 = sphi 0, %s95
      %s98 = sphi 0, %s97
      %s112 = sphi 0, %s98
      %s116 = sphi 0, %s116
      %s118 = sphi 0, %s116
      %s119 = sphi 0, %s118
      %s133 = sphi 0, %s119
      %s137 = sphi 0, %s137
      %s139 = sphi 0, %s137
      %s140 = sphi 0, %s139
      %s154 = sphi 0, %s140
      %s158 = sphi 0, %s158
      %s160 = sphi 0, %s158
      %s161 = sphi 0, %s160
      %s175 = sphi 0, %s161
      %s179 = sphi 0, %s179
      %s181 = sphi 0, %s179
      %s182 = sphi 0, %s181
      %s196 = sphi 0, %s182
      %s200 = sphi 0, %s200
      %s202 = sphi 0, %s200
      %s203 = sphi 0, %s202
      %s217 = sphi 0, %s203
      %s221 = sphi 0, %s221
      %s223 = sphi 0, %s221
      %s224 = sphi 0, %s223
      %s238 = sphi 0, %s224
      %s242 = sphi 0, %s242
      %s244 = sphi 0, %s242
      %s245 = sphi 0, %s244
      %s259 = sphi 0, %s245
      %s263 = sphi 0, %s263
      %s265 = sphi 0, %s263
      %s266 = sphi 0, %s265
      %s280 = sphi 0, %s266
      %s284 = sphi 0, %s284
      %s286 = sphi 0, %s284
      %s287 = sphi 0, %s286
      %s301 = sphi 0, %s287
      %s305 = sphi 0, %s305
      %s307 = sphi 0, %s305
      %s308 = sphi 0, %s307
      %s322 = sphi 0, %s308
      %s326 = sphi 0, %s326
      %s328 = sphi 0, %s326
      %s329 = sphi 0, %s328
      %s343 = sphi 0, %s329
      %s347 = sphi 0, %s347
      %s349 = sphi 0, %s347
      %s350 = sphi 0, %s349
      %s364 = sphi 0, %s350
      %s368 = sphi 0, %s368
      %s370 = sphi 0, %s368
      %s371 = sphi 0, %s370
      %s385 = sphi 0, %s371
      %s389 = sphi 0, %s389
      %s391 = sphi 0, %s389
      %s392 = sphi 0, %s391
      %s406 = sphi 0, %s392
      %s412 = sphi 0, %s414
      %s415 = sphi 0, %s412
      %s416 = sphi 0, %s415
      %s432 = sphi 0, %s416
      %s438 = sphi 0, %s440
      %s441 = sphi 0, %s438
      %s442 = sphi 0, %s441
      %s458 = sphi 0, %s442
    $region4: #{detr_forward.1} parent=1 // loop_header_branch
      %38 = sbr.rel (%p36) target = $region8
    $region5: #{detr_forward.1} parent=1 // loop_body
      %s40 = ssub.s32 %s35, 1
      %s41 = ssub.s32 %s35, 2
      %s42 = sadd.s32 %s35, 1
      %s43 = ssub.s32 %s35, %s42
      %p44 = scmp.eq.s32.totalorder %s43, 0
      %s46 = sadd.s32 %s45, 1
      %s47 = scalar_select %p44, %s45, %s46
      %p50 = pneg %p44
      %p51 = scmp.eq.s32.totalorder %s35, 1
      %p52 = por %p50, %p51
      %p53 = scmp.ne.s32.totalorder %s45, %s48
      %p54 = scmp.eq.s32.totalorder %s35, 0
      %p55 = por %p53, %p54
      %p56 = scmp.ne.s32.totalorder %s45, %s48
      %p57 = scmp.eq.s32.totalorder %s40, 1
      %p58 = por %p56, %p57
      %p59 = scmp.ne.s32.totalorder %s48, %s49
      %p60 = scmp.eq.s32.totalorder %s40, 0
      %p61 = por %p59, %p60
      %p62 = scmp.ne.s32.totalorder %s48, %s49
      %p63 = scmp.eq.s32.totalorder %s41, 1
      %p64 = por %p62, %p63
      %p66 = scmp.ne.s32.totalorder %s49, %s65
      %p67 = scmp.eq.s32.totalorder %s41, 0
      %p68 = por %p66, %p67
      %s69 = ssub.s32 %s35, %s42
      %p70 = scmp.eq.s32.totalorder %s69, 0
      %s72 = sadd.s32 %s71, 1
      %s73 = scalar_select %p70, %s71, %s72
      %p76 = pneg %p70
      %p77 = scmp.eq.s32.totalorder %s35, 1
      %p78 = por %p76, %p77
      %p79 = scmp.ne.s32.totalorder %s71, %s74
      %p80 = scmp.eq.s32.totalorder %s35, 0
      %p81 = por %p79, %p80
      %p82 = scmp.ne.s32.totalorder %s71, %s74
      %p83 = scmp.eq.s32.totalorder %s40, 1
      %p84 = por %p82, %p83
      %p85 = scmp.ne.s32.totalorder %s74, %s75
      %p86 = scmp.eq.s32.totalorder %s40, 0
      %p87 = por %p85, %p86
      %p88 = scmp.ne.s32.totalorder %s74, %s75
      %p89 = scmp.eq.s32.totalorder %s41, 1
      %p90 = por %p88, %p89
      %p92 = scmp.ne.s32.totalorder %s75, %s91
      %p93 = scmp.eq.s32.totalorder %s41, 0
      %p94 = por %p92, %p93
      %s96 = sadd.s32 %s95, 1
      %p99 = scmp.eq.s32.totalorder %s35, 1
      %p100 = scmp.ne.s32.totalorder %s95, %s97
      %p101 = scmp.eq.s32.totalorder %s35, 0
      %p102 = por %p100, %p101
      %p103 = scmp.ne.s32.totalorder %s95, %s97
      %p104 = scmp.eq.s32.totalorder %s40, 1
      %p105 = por %p103, %p104
      %p106 = scmp.ne.s32.totalorder %s97, %s98
      %p107 = scmp.eq.s32.totalorder %s40, 0
      %p108 = por %p106, %p107
      %p109 = scmp.ne.s32.totalorder %s97, %s98
      %p110 = scmp.eq.s32.totalorder %s41, 1
      %p111 = por %p109, %p110
      %p113 = scmp.ne.s32.totalorder %s98, %s112
      %p114 = scmp.eq.s32.totalorder %s41, 0
      %p115 = por %p113, %p114
      %s117 = sadd.s32 %s116, 1
      %p120 = scmp.eq.s32.totalorder %s35, 1
      %p121 = scmp.ne.s32.totalorder %s116, %s118
      %p122 = scmp.eq.s32.totalorder %s35, 0
      %p123 = por %p121, %p122
      %p124 = scmp.ne.s32.totalorder %s116, %s118
      %p125 = scmp.eq.s32.totalorder %s40, 1
      %p126 = por %p124, %p125
      %p127 = scmp.ne.s32.totalorder %s118, %s119
      %p128 = scmp.eq.s32.totalorder %s40, 0
      %p129 = por %p127, %p128
      %p130 = scmp.ne.s32.totalorder %s118, %s119
      %p131 = scmp.eq.s32.totalorder %s41, 1
      %p132 = por %p130, %p131
      %p134 = scmp.ne.s32.totalorder %s119, %s133
      %p135 = scmp.eq.s32.totalorder %s41, 0
      %p136 = por %p134, %p135
      %s138 = sadd.s32 %s137, 1
      %p141 = scmp.eq.s32.totalorder %s35, 1
      %p142 = scmp.ne.s32.totalorder %s137, %s139
      %p143 = scmp.eq.s32.totalorder %s35, 0
      %p144 = por %p142, %p143
      %p145 = scmp.ne.s32.totalorder %s137, %s139
      %p146 = scmp.eq.s32.totalorder %s40, 1
      %p147 = por %p145, %p146
      %p148 = scmp.ne.s32.totalorder %s139, %s140
      %p149 = scmp.eq.s32.totalorder %s40, 0
      %p150 = por %p148, %p149
      %p151 = scmp.ne.s32.totalorder %s139, %s140
      %p152 = scmp.eq.s32.totalorder %s41, 1
      %p153 = por %p151, %p152
      %p155 = scmp.ne.s32.totalorder %s140, %s154
      %p156 = scmp.eq.s32.totalorder %s41, 0
      %p157 = por %p155, %p156
      %s159 = sadd.s32 %s158, 1
      %p162 = scmp.eq.s32.totalorder %s35, 1
      %p163 = scmp.ne.s32.totalorder %s158, %s160
      %p164 = scmp.eq.s32.totalorder %s35, 0
      %p165 = por %p163, %p164
      %p166 = scmp.ne.s32.totalorder %s158, %s160
      %p167 = scmp.eq.s32.totalorder %s40, 1
      %p168 = por %p166, %p167
      %p169 = scmp.ne.s32.totalorder %s160, %s161
      %p170 = scmp.eq.s32.totalorder %s40, 0
      %p171 = por %p169, %p170
      %p172 = scmp.ne.s32.totalorder %s160, %s161
      %p173 = scmp.eq.s32.totalorder %s41, 1
      %p174 = por %p172, %p173
      %p176 = scmp.ne.s32.totalorder %s161, %s175
      %p177 = scmp.eq.s32.totalorder %s41, 0
      %p178 = por %p176, %p177
      %s180 = sadd.s32 %s179, 1
      %p183 = scmp.eq.s32.totalorder %s35, 1
      %p184 = scmp.ne.s32.totalorder %s179, %s181
      %p185 = scmp.eq.s32.totalorder %s35, 0
      %p186 = por %p184, %p185
      %p187 = scmp.ne.s32.totalorder %s179, %s181
      %p188 = scmp.eq.s32.totalorder %s40, 1
      %p189 = por %p187, %p188
      %p190 = scmp.ne.s32.totalorder %s181, %s182
      %p191 = scmp.eq.s32.totalorder %s40, 0
      %p192 = por %p190, %p191
      %p193 = scmp.ne.s32.totalorder %s181, %s182
      %p194 = scmp.eq.s32.totalorder %s41, 1
      %p195 = por %p193, %p194
      %p197 = scmp.ne.s32.totalorder %s182, %s196
      %p198 = scmp.eq.s32.totalorder %s41, 0
      %p199 = por %p197, %p198
      %s201 = sadd.s32 %s200, 1
      %p204 = scmp.eq.s32.totalorder %s35, 1
      %p205 = scmp.ne.s32.totalorder %s200, %s202
      %p206 = scmp.eq.s32.totalorder %s35, 0
      %p207 = por %p205, %p206
      %p208 = scmp.ne.s32.totalorder %s200, %s202
      %p209 = scmp.eq.s32.totalorder %s40, 1
      %p210 = por %p208, %p209
      %p211 = scmp.ne.s32.totalorder %s202, %s203
      %p212 = scmp.eq.s32.totalorder %s40, 0
      %p213 = por %p211, %p212
      %p214 = scmp.ne.s32.totalorder %s202, %s203
      %p215 = scmp.eq.s32.totalorder %s41, 1
      %p216 = por %p214, %p215
      %p218 = scmp.ne.s32.totalorder %s203, %s217
      %p219 = scmp.eq.s32.totalorder %s41, 0
      %p220 = por %p218, %p219
      %s222 = sadd.s32 %s221, 1
      %p225 = scmp.eq.s32.totalorder %s35, 1
      %p226 = scmp.ne.s32.totalorder %s221, %s223
      %p227 = scmp.eq.s32.totalorder %s35, 0
      %p228 = por %p226, %p227
      %p229 = scmp.ne.s32.totalorder %s221, %s223
      %p230 = scmp.eq.s32.totalorder %s40, 1
      %p231 = por %p229, %p230
      %p232 = scmp.ne.s32.totalorder %s223, %s224
      %p233 = scmp.eq.s32.totalorder %s40, 0
      %p234 = por %p232, %p233
      %p235 = scmp.ne.s32.totalorder %s223, %s224
      %p236 = scmp.eq.s32.totalorder %s41, 1
      %p237 = por %p235, %p236
      %p239 = scmp.ne.s32.totalorder %s224, %s238
      %p240 = scmp.eq.s32.totalorder %s41, 0
      %p241 = por %p239, %p240
      %s243 = sadd.s32 %s242, 1
      %p246 = scmp.eq.s32.totalorder %s35, 1
      %p247 = scmp.ne.s32.totalorder %s242, %s244
      %p248 = scmp.eq.s32.totalorder %s35, 0
      %p249 = por %p247, %p248
      %p250 = scmp.ne.s32.totalorder %s242, %s244
      %p251 = scmp.eq.s32.totalorder %s40, 1
      %p252 = por %p250, %p251
      %p253 = scmp.ne.s32.totalorder %s244, %s245
      %p254 = scmp.eq.s32.totalorder %s40, 0
      %p255 = por %p253, %p254
      %p256 = scmp.ne.s32.totalorder %s244, %s245
      %p257 = scmp.eq.s32.totalorder %s41, 1
      %p258 = por %p256, %p257
      %p260 = scmp.ne.s32.totalorder %s245, %s259
      %p261 = scmp.eq.s32.totalorder %s41, 0
      %p262 = por %p260, %p261
      %s264 = sadd.s32 %s263, 1
      %p267 = scmp.eq.s32.totalorder %s35, 1
      %p268 = scmp.ne.s32.totalorder %s263, %s265
      %p269 = scmp.eq.s32.totalorder %s35, 0
      %p270 = por %p268, %p269
      %p271 = scmp.ne.s32.totalorder %s263, %s265
      %p272 = scmp.eq.s32.totalorder %s40, 1
      %p273 = por %p271, %p272
      %p274 = scmp.ne.s32.totalorder %s265, %s266
      %p275 = scmp.eq.s32.totalorder %s40, 0
      %p276 = por %p274, %p275
      %p277 = scmp.ne.s32.totalorder %s265, %s266
      %p278 = scmp.eq.s32.totalorder %s41, 1
      %p279 = por %p277, %p278
      %p281 = scmp.ne.s32.totalorder %s266, %s280
      %p282 = scmp.eq.s32.totalorder %s41, 0
      %p283 = por %p281, %p282
      %s285 = sadd.s32 %s284, 1
      %p288 = scmp.eq.s32.totalorder %s35, 1
      %p289 = scmp.ne.s32.totalorder %s284, %s286
      %p290 = scmp.eq.s32.totalorder %s35, 0
      %p291 = por %p289, %p290
      %p292 = scmp.ne.s32.totalorder %s284, %s286
      %p293 = scmp.eq.s32.totalorder %s40, 1
      %p294 = por %p292, %p293
      %p295 = scmp.ne.s32.totalorder %s286, %s287
      %p296 = scmp.eq.s32.totalorder %s40, 0
      %p297 = por %p295, %p296
      %p298 = scmp.ne.s32.totalorder %s286, %s287
      %p299 = scmp.eq.s32.totalorder %s41, 1
      %p300 = por %p298, %p299
      %p302 = scmp.ne.s32.totalorder %s287, %s301
      %p303 = scmp.eq.s32.totalorder %s41, 0
      %p304 = por %p302, %p303
      %s306 = sadd.s32 %s305, 1
      %p309 = scmp.eq.s32.totalorder %s35, 1
      %p310 = scmp.ne.s32.totalorder %s305, %s307
      %p311 = scmp.eq.s32.totalorder %s35, 0
      %p312 = por %p310, %p311
      %p313 = scmp.ne.s32.totalorder %s305, %s307
      %p314 = scmp.eq.s32.totalorder %s40, 1
      %p315 = por %p313, %p314
      %p316 = scmp.ne.s32.totalorder %s307, %s308
      %p317 = scmp.eq.s32.totalorder %s40, 0
      %p318 = por %p316, %p317
      %p319 = scmp.ne.s32.totalorder %s307, %s308
      %p320 = scmp.eq.s32.totalorder %s41, 1
      %p321 = por %p319, %p320
      %p323 = scmp.ne.s32.totalorder %s308, %s322
      %p324 = scmp.eq.s32.totalorder %s41, 0
      %p325 = por %p323, %p324
      %s327 = sadd.s32 %s326, 1
      %p330 = scmp.eq.s32.totalorder %s35, 1
      %p331 = scmp.ne.s32.totalorder %s326, %s328
      %p332 = scmp.eq.s32.totalorder %s35, 0
      %p333 = por %p331, %p332
      %p334 = scmp.ne.s32.totalorder %s326, %s328
      %p335 = scmp.eq.s32.totalorder %s40, 1
      %p336 = por %p334, %p335
      %p337 = scmp.ne.s32.totalorder %s328, %s329
      %p338 = scmp.eq.s32.totalorder %s40, 0
      %p339 = por %p337, %p338
      %p340 = scmp.ne.s32.totalorder %s328, %s329
      %p341 = scmp.eq.s32.totalorder %s41, 1
      %p342 = por %p340, %p341
      %p344 = scmp.ne.s32.totalorder %s329, %s343
      %p345 = scmp.eq.s32.totalorder %s41, 0
      %p346 = por %p344, %p345
      %s348 = sadd.s32 %s347, 1
      %p351 = scmp.eq.s32.totalorder %s35, 1
      %p352 = scmp.ne.s32.totalorder %s347, %s349
      %p353 = scmp.eq.s32.totalorder %s35, 0
      %p354 = por %p352, %p353
      %p355 = scmp.ne.s32.totalorder %s347, %s349
      %p356 = scmp.eq.s32.totalorder %s40, 1
      %p357 = por %p355, %p356
      %p358 = scmp.ne.s32.totalorder %s349, %s350
      %p359 = scmp.eq.s32.totalorder %s40, 0
      %p360 = por %p358, %p359
      %p361 = scmp.ne.s32.totalorder %s349, %s350
      %p362 = scmp.eq.s32.totalorder %s41, 1
      %p363 = por %p361, %p362
      %p365 = scmp.ne.s32.totalorder %s350, %s364
      %p366 = scmp.eq.s32.totalorder %s41, 0
      %p367 = por %p365, %p366
      %s369 = sadd.s32 %s368, 1
      %p372 = scmp.eq.s32.totalorder %s35, 1
      %p373 = scmp.ne.s32.totalorder %s368, %s370
      %p374 = scmp.eq.s32.totalorder %s35, 0
      %p375 = por %p373, %p374
      %p376 = scmp.ne.s32.totalorder %s368, %s370
      %p377 = scmp.eq.s32.totalorder %s40, 1
      %p378 = por %p376, %p377
      %p379 = scmp.ne.s32.totalorder %s370, %s371
      %p380 = scmp.eq.s32.totalorder %s40, 0
      %p381 = por %p379, %p380
      %p382 = scmp.ne.s32.totalorder %s370, %s371
      %p383 = scmp.eq.s32.totalorder %s41, 1
      %p384 = por %p382, %p383
      %p386 = scmp.ne.s32.totalorder %s371, %s385
      %p387 = scmp.eq.s32.totalorder %s41, 0
      %p388 = por %p386, %p387
      %s390 = sadd.s32 %s389, 1
      %p393 = scmp.eq.s32.totalorder %s35, 1
      %p394 = scmp.ne.s32.totalorder %s389, %s391
      %p395 = scmp.eq.s32.totalorder %s35, 0
      %p396 = por %p394, %p395
      %p397 = scmp.ne.s32.totalorder %s389, %s391
      %p398 = scmp.eq.s32.totalorder %s40, 1
      %p399 = por %p397, %p398
      %p400 = scmp.ne.s32.totalorder %s391, %s392
      %p401 = scmp.eq.s32.totalorder %s40, 0
      %p402 = por %p400, %p401
      %p403 = scmp.ne.s32.totalorder %s391, %s392
      %p404 = scmp.eq.s32.totalorder %s41, 1
      %p405 = por %p403, %p404
      %p407 = scmp.ne.s32.totalorder %s392, %s406
      %p408 = scmp.eq.s32.totalorder %s41, 0
      %p409 = por %p407, %p408
      %s410 = ssub.s32 %s35, %s42
      %p411 = scmp.eq.s32.totalorder %s410, 0
      %s413 = sadd.s32 %s412, 1
      %s414 = scalar_select %p411, %s412, %s413
      %p417 = pneg %p411
      %p418 = scmp.eq.s32.totalorder %s35, 1
      %p419 = por %p417, %p418
      %p420 = scmp.ne.s32.totalorder %s412, %s415
      %p421 = scmp.eq.s32.totalorder %s35, 0
      %p422 = por %p420, %p421
      %p423 = scmp.ne.s32.totalorder %s412, %s415
      %p424 = scmp.eq.s32.totalorder %s40, 1
      %p425 = por %p423, %p424
      %p426 = scmp.ne.s32.totalorder %s415, %s416
      %p427 = scmp.eq.s32.totalorder %s40, 0
      %p428 = por %p426, %p427
      %p429 = scmp.ne.s32.totalorder %s415, %s416
      %p430 = scmp.eq.s32.totalorder %s41, 1
      %p431 = por %p429, %p430
      %p433 = scmp.ne.s32.totalorder %s416, %s432
      %p434 = scmp.eq.s32.totalorder %s41, 0
      %p435 = por %p433, %p434
      %s436 = ssub.s32 %s35, %s42
      %p437 = scmp.eq.s32.totalorder %s436, 0
      %s439 = sadd.s32 %s438, 1
      %s440 = scalar_select %p437, %s438, %s439
      %p443 = pneg %p437
      %p444 = scmp.eq.s32.totalorder %s35, 1
      %p445 = por %p443, %p444
      %p446 = scmp.ne.s32.totalorder %s438, %s441
      %p447 = scmp.eq.s32.totalorder %s35, 0
      %p448 = por %p446, %p447
      %p449 = scmp.ne.s32.totalorder %s438, %s441
      %p450 = scmp.eq.s32.totalorder %s40, 1
      %p451 = por %p449, %p450
      %p452 = scmp.ne.s32.totalorder %s441, %s442
      %p453 = scmp.eq.s32.totalorder %s40, 0
      %p454 = por %p452, %p453
      %p455 = scmp.ne.s32.totalorder %s441, %s442
      %p456 = scmp.eq.s32.totalorder %s41, 1
      %p457 = por %p455, %p456
      %p459 = scmp.ne.s32.totalorder %s442, %s458
      %p460 = scmp.eq.s32.totalorder %s41, 0
      %p461 = por %p459, %p460
      %p462 = scmp.le.s32.totalorder 1, %s35
      %p463 = scmp.lt.s32.totalorder %s35, 3
      %p464 = pnand %p462, %p463
      %p465 = pneg %p464
      // Predicated region
      $region9: #{detr_forward.1} parent=5 // pred_check
        _
      $region10: #{detr_forward.1} parent=5 // pred_check_branch
        %467 = sbr.rel (%p464) target = $region12
      $region11: #{detr_forward.1} parent=5 // pred_region
        %s468 = ssub.s32 %s35, 1
        // Predicated region
        $region13: #{detr_forward.1} parent=11 // pred_check
          %p469 = pneg %p108
        $region14: #{detr_forward.1} parent=11 // pred_check_branch
          %471 = sbr.rel (%p469) target = $region16
        $region15: #{detr_forward.1} parent=11 // pred_region
          _
        $region16: #{detr_forward.1} parent=11 // pred_fallthru
          _
        // Predicated region
        $region17: #{detr_forward.1} parent=11 // pred_check
          %p472 = pneg %p129
        $region18: #{detr_forward.1} parent=11 // pred_check_branch
          %474 = sbr.rel (%p472) target = $region20
        $region19: #{detr_forward.1} parent=11 // pred_region
          %s476 = ssub.s32 16, 16
          %477 = vsyncadd [#allocation6], %s476
          %s479 = sshll.u32 [#allocation5], 4
          %s480 = int_to_ptr.vmem [resolvable:$true] %s479
          %482 = dma.hbm_to_vmem [thread:$0]  %s3, 16, %s480, [#allocation6]
        $region20: #{detr_forward.1} parent=11 // pred_fallthru
          _
        // Predicated region
        $region21: #{detr_forward.1} parent=11 // pred_check
          %p483 = pneg %p150
        $region22: #{detr_forward.1} parent=11 // pred_check_branch
          %485 = sbr.rel (%p483) target = $region24
        $region23: #{detr_forward.1} parent=11 // pred_region
          %s487 = ssub.s32 128, 128
          %488 = vsyncadd [#allocation6], %s487
          %s490 = sshll.u32 [#allocation7], 4
          %s491 = int_to_ptr.vmem [resolvable:$true] %s490
          %493 = dma.hbm_to_vmem [thread:$0]  %s4, 128, %s491, [#allocation6]
        $region24: #{detr_forward.1} parent=11 // pred_fallthru
          _
        // Predicated region
        $region25: #{detr_forward.1} parent=11 // pred_check
          %p494 = pneg %p171
        $region26: #{detr_forward.1} parent=11 // pred_check_branch
          %496 = sbr.rel (%p494) target = $region28
        $region27: #{detr_forward.1} parent=11 // pred_region
          %s498 = ssub.s32 1024, 1024
          %499 = vsyncadd [#allocation9], %s498
          %s500 = sshll.u32 [#allocation8], 4
          %s501 = int_to_ptr.vmem [resolvable:$true] %s500
          %506 = dma.hbm_to_vmem [thread:$0]  %s5, 1024, %s501, [#allocation9], 128, 128, 8
        $region28: #{detr_forward.1} parent=11 // pred_fallthru
          _
        // Predicated region
        $region29: #{detr_forward.1} parent=11 // pred_check
          %p507 = pneg %p192
        $region30: #{detr_forward.1} parent=11 // pred_check_branch
          %509 = sbr.rel (%p507) target = $region32
        $region31: #{detr_forward.1} parent=11 // pred_region
          %s511 = ssub.s32 32, 32
          %512 = vsyncadd [#allocation9], %s511
          %s513 = sshll.u32 [#allocation10], 4
          %s514 = int_to_ptr.vmem [resolvable:$true] %s513
          %519 = dma.hbm_to_vmem [thread:$0]  %s6, 32, %s514, [#allocation9], 16, 16, 1
        $region32: #{detr_forward.1} parent=11 // pred_fallthru
          _
        // Predicated region
        $region33: #{detr_forward.1} parent=11 // pred_check
          %p520 = pneg %p213
        $region34: #{detr_forward.1} parent=11 // pred_check_branch
          %522 = sbr.rel (%p520) target = $region36
        $region35: #{detr_forward.1} parent=11 // pred_region
          %s524 = ssub.s32 512, 512
          %525 = vsyncadd [#allocation12], %s524
          %s526 = sshll.u32 [#allocation11], 4
          %s527 = int_to_ptr.vmem [resolvable:$true] %s526
          %532 = dma.hbm_to_vmem [thread:$0]  %s7, 512, %s527, [#allocation12], 128, 128, 8
        $region36: #{detr_forward.1} parent=11 // pred_fallthru
          _
        // Predicated region
        $region37: #{detr_forward.1} parent=11 // pred_check
          %p533 = pneg %p234
        $region38: #{detr_forward.1} parent=11 // pred_check_branch
          %535 = sbr.rel (%p533) target = $region40
        $region39: #{detr_forward.1} parent=11 // pred_region
          %s537 = ssub.s32 16, 16
          %538 = vsyncadd [#allocation12], %s537
          %s540 = sshll.u32 [#allocation13], 4
          %s541 = int_to_ptr.vmem [resolvable:$true] %s540
          %543 = dma.hbm_to_vmem [thread:$0]  %s8, 16, %s541, [#allocation12]
        $region40: #{detr_forward.1} parent=11 // pred_fallthru
          _
        // Predicated region
        $region41: #{detr_forward.1} parent=11 // pred_check
          %p544 = pneg %p255
        $region42: #{detr_forward.1} parent=11 // pred_check_branch
          %546 = sbr.rel (%p544) target = $region44
        $region43: #{detr_forward.1} parent=11 // pred_region
          %s548 = ssub.s32 512, 512
          %549 = vsyncadd [#allocation15], %s548
          %s550 = sshll.u32 [#allocation14], 4
          %s551 = int_to_ptr.vmem [resolvable:$true] %s550
          %556 = dma.hbm_to_vmem [thread:$0]  %s9, 512, %s551, [#allocation15], 128, 128, 8
        $region44: #{detr_forward.1} parent=11 // pred_fallthru
          _
        // Predicated region
        $region45: #{detr_forward.1} parent=11 // pred_check
          %p557 = pneg %p276
        $region46: #{detr_forward.1} parent=11 // pred_check_branch
          %559 = sbr.rel (%p557) target = $region48
        $region47: #{detr_forward.1} parent=11 // pred_region
          %s561 = ssub.s32 16, 16
          %562 = vsyncadd [#allocation15], %s561
          %s564 = sshll.u32 [#allocation16], 4
          %s565 = int_to_ptr.vmem [resolvable:$true] %s564
          %567 = dma.hbm_to_vmem [thread:$0]  %s10, 16, %s565, [#allocation15]
        $region48: #{detr_forward.1} parent=11 // pred_fallthru
          _
        // Predicated region
        $region49: #{detr_forward.1} parent=11 // pred_check
          %p568 = pneg %p297
        $region50: #{detr_forward.1} parent=11 // pred_check_branch
          %570 = sbr.rel (%p568) target = $region52
        $region51: #{detr_forward.1} parent=11 // pred_region
          _
        $region52: #{detr_forward.1} parent=11 // pred_fallthru
          _
        // Predicated region
        $region53: #{detr_forward.1} parent=11 // pred_check
          %p571 = pneg %p318
        $region54: #{detr_forward.1} parent=11 // pred_check_branch
          %573 = sbr.rel (%p571) target = $region56
        $region55: #{detr_forward.1} parent=11 // pred_region
          %s575 = ssub.s32 16, 16
          %576 = vsyncadd [#allocation18], %s575
          %s578 = sshll.u32 [#allocation17], 4
          %s579 = int_to_ptr.vmem [resolvable:$true] %s578
          %581 = dma.hbm_to_vmem [thread:$0]  %s12, 16, %s579, [#allocation18]
        $region56: #{detr_forward.1} parent=11 // pred_fallthru
          _
        // Predicated region
        $region57: #{detr_forward.1} parent=11 // pred_check
          %p582 = pneg %p339
        $region58: #{detr_forward.1} parent=11 // pred_check_branch
          %584 = sbr.rel (%p582) target = $region60
        $region59: #{detr_forward.1} parent=11 // pred_region
          %s586 = ssub.s32 36864, 36864
          %587 = vsyncadd [#allocation18], %s586
          %s588 = sshll.u32 [#allocation19], 4
          %s589 = int_to_ptr.vmem [resolvable:$true] %s588
          %594 = dma.hbm_to_vmem [thread:$0]  %s13, 36864, %s589, [#allocation18], 64, 64, 4
        $region60: #{detr_forward.1} parent=11 // pred_fallthru
          _
        // Predicated region
        $region61: #{detr_forward.1} parent=11 // pred_check
          %p595 = pneg %p360
        $region62: #{detr_forward.1} parent=11 // pred_check_branch
          %597 = sbr.rel (%p595) target = $region64
        $region63: #{detr_forward.1} parent=11 // pred_region
          %s599 = ssub.s32 64, 64
          %600 = vsyncadd [#allocation21], %s599
          %s601 = sshll.u32 [#allocation20], 4
          %s602 = int_to_ptr.vmem [resolvable:$true] %s601
          %607 = dma.hbm_to_vmem [thread:$0]  %s14, 64, %s602, [#allocation21], 16, 16, 1
        $region64: #{detr_forward.1} parent=11 // pred_fallthru
          _
        // Predicated region
        $region65: #{detr_forward.1} parent=11 // pred_check
          %p608 = pneg %p381
        $region66: #{detr_forward.1} parent=11 // pred_check_branch
          %610 = sbr.rel (%p608) target = $region68
        $region67: #{detr_forward.1} parent=11 // pred_region
          %s612 = ssub.s32 9216, 9216
          %613 = vsyncadd [#allocation21], %s612
          %s614 = sshll.u32 [#allocation22], 4
          %s615 = int_to_ptr.vmem [resolvable:$true] %s614
          %620 = dma.hbm_to_vmem [thread:$0]  %s15, 9216, %s615, [#allocation21], 64, 64, 4
        $region68: #{detr_forward.1} parent=11 // pred_fallthru
          _
        // Predicated region
        $region69: #{detr_forward.1} parent=11 // pred_check
          %p621 = pneg %p402
        $region70: #{detr_forward.1} parent=11 // pred_check_branch
          %623 = sbr.rel (%p621) target = $region72
        $region71: #{detr_forward.1} parent=11 // pred_region
          %s625 = ssub.s32 16, 16
          %626 = vsyncadd [#allocation24], %s625
          %s628 = sshll.u32 [#allocation23], 4
          %s629 = int_to_ptr.vmem [resolvable:$true] %s628
          %631 = dma.hbm_to_vmem [thread:$0]  %s16, 16, %s629, [#allocation24]
        $region72: #{detr_forward.1} parent=11 // pred_fallthru
          _
      $region12: #{detr_forward.1} parent=5 // pred_fallthru
        _
      %p632 = scmp.lt.s32.totalorder %s35, 2
      // Predicated region
      $region73: #{detr_forward.1} parent=5 // pred_check
        %p633 = pneg %p632
      $region74: #{detr_forward.1} parent=5 // pred_check_branch
        %635 = sbr.rel (%p633) target = $region76
      $region75: #{detr_forward.1} parent=5 // pred_region
        // Predicated region
        $region77: #{detr_forward.1} parent=75 // pred_check
          %p636 = pneg %p55
        $region78: #{detr_forward.1} parent=75 // pred_check_branch
          %638 = sbr.rel (%p636) target = $region80
        $region79: #{detr_forward.1} parent=75 // pred_region
          %p639 = scmp.lt.s32.totalorder %s35, 1
          %s640 = scalar_select %p639, %s35, 1
          %s641 = smul.addr %s640, 8
          %s642 = smul.addr %s641, 8
          %s643 = scalar_lea.vmem %s0, %s642
        $region80: #{detr_forward.1} parent=75 // pred_fallthru
          _
        // Predicated region
        $region81: #{detr_forward.1} parent=75 // pred_check
          %p644 = pneg %p81
        $region82: #{detr_forward.1} parent=75 // pred_check_branch
          %646 = sbr.rel (%p644) target = $region84
        $region83: #{detr_forward.1} parent=75 // pred_region
          %s647 = sand.u32 %s71, 1
          %s648 = scalar_lea.sflag [#allocation4], %s647
          %s649 = sand.u32 %s71, 1
          %s650 = smul.addr %s649, 64
          %s651 = scalar_lea.vmem [#allocation3], %s650
          %s653 = ssub.s32 1024, 1024
          %654 = vsyncadd %s648, %s653
          %s655 = smul.addr %s35, 8
          %s656 = smul.addr %s655, 128
          %s657 = scalar_lea.hbm %s1, %s656
          %s658 = sshll.u32 %s651, 4
          %s659 = int_to_ptr.vmem [resolvable:$true] %s658
          %664 = dma.hbm_to_vmem [thread:$0]  %s657, 1024, %s659, %s648, 128, 128, 8
        $region84: #{detr_forward.1} parent=75 // pred_fallthru
          _
      $region76: #{detr_forward.1} parent=5 // pred_fallthru
        _
      %p665 = scmp.le.s32.totalorder 1, %s35
      %p666 = scmp.lt.s32.totalorder %s35, 3
      %p667 = pnand %p665, %p666
      %p668 = pneg %p667
      // Predicated region
      $region85: #{detr_forward.1} parent=5 // pred_check
        _
      $region86: #{detr_forward.1} parent=5 // pred_check_branch
        %670 = sbr.rel (%p667) target = $region88
      $region87: #{detr_forward.1} parent=5 // pred_region
        %s671 = ssub.s32 %s35, 1
        %s672 = sand.u32 %s74, 1
        %s673 = scalar_lea.sflag [#allocation4], %s672
        %s674 = sand.u32 %s74, 1
        %s675 = smul.addr %s674, 64
        %s676 = scalar_lea.vmem [#allocation3], %s675
        // Predicated region
        $region89: #{detr_forward.1} parent=87 // pred_check
          %p677 = pneg %p87
        $region90: #{detr_forward.1} parent=87 // pred_check_branch
          %679 = sbr.rel (%p677) target = $region92
        $region91: #{detr_forward.1} parent=87 // pred_region
          %680 = dma.done %s673, 1024
        $region92: #{detr_forward.1} parent=87 // pred_fallthru
          _
        // Predicated region
        $region93: #{detr_forward.1} parent=87 // pred_check
          %p681 = pneg %p129
        $region94: #{detr_forward.1} parent=87 // pred_check_branch
          %683 = sbr.rel (%p681) target = $region96
        $region95: #{detr_forward.1} parent=87 // pred_region
          %684 = dma.done [#allocation6], 16
        $region96: #{detr_forward.1} parent=87 // pred_fallthru
          _
        // Predicated region
        $region97: #{detr_forward.1} parent=87 // pred_check
          %p685 = pneg %p150
        $region98: #{detr_forward.1} parent=87 // pred_check_branch
          %687 = sbr.rel (%p685) target = $region100
        $region99: #{detr_forward.1} parent=87 // pred_region
          %688 = dma.done [#allocation6], 128
        $region100: #{detr_forward.1} parent=87 // pred_fallthru
          _
        // Predicated region
        $region101: #{detr_forward.1} parent=87 // pred_check
          %p689 = pneg %p171
        $region102: #{detr_forward.1} parent=87 // pred_check_branch
          %691 = sbr.rel (%p689) target = $region104
        $region103: #{detr_forward.1} parent=87 // pred_region
          %692 = dma.done [#allocation9], 1024
        $region104: #{detr_forward.1} parent=87 // pred_fallthru
          _
        // Predicated region
        $region105: #{detr_forward.1} parent=87 // pred_check
          %p693 = pneg %p192
        $region106: #{detr_forward.1} parent=87 // pred_check_branch
          %695 = sbr.rel (%p693) target = $region108
        $region107: #{detr_forward.1} parent=87 // pred_region
          %696 = dma.done [#allocation9], 32
        $region108: #{detr_forward.1} parent=87 // pred_fallthru
          _
        // Predicated region
        $region109: #{detr_forward.1} parent=87 // pred_check
          %p697 = pneg %p213
        $region110: #{detr_forward.1} parent=87 // pred_check_branch
          %699 = sbr.rel (%p697) target = $region112
        $region111: #{detr_forward.1} parent=87 // pred_region
          %700 = dma.done [#allocation12], 512
        $region112: #{detr_forward.1} parent=87 // pred_fallthru
          _
        // Predicated region
        $region113: #{detr_forward.1} parent=87 // pred_check
          %p701 = pneg %p234
        $region114: #{detr_forward.1} parent=87 // pred_check_branch
          %703 = sbr.rel (%p701) target = $region116
        $region115: #{detr_forward.1} parent=87 // pred_region
          %704 = dma.done [#allocation12], 16
        $region116: #{detr_forward.1} parent=87 // pred_fallthru
          _
        // Predicated region
        $region117: #{detr_forward.1} parent=87 // pred_check
          %p705 = pneg %p255
        $region118: #{detr_forward.1} parent=87 // pred_check_branch
          %707 = sbr.rel (%p705) target = $region120
        $region119: #{detr_forward.1} parent=87 // pred_region
          %708 = dma.done [#allocation15], 512
        $region120: #{detr_forward.1} parent=87 // pred_fallthru
          _
        // Predicated region
        $region121: #{detr_forward.1} parent=87 // pred_check
          %p709 = pneg %p276
        $region122: #{detr_forward.1} parent=87 // pred_check_branch
          %711 = sbr.rel (%p709) target = $region124
        $region123: #{detr_forward.1} parent=87 // pred_region
          %712 = dma.done [#allocation15], 16
        $region124: #{detr_forward.1} parent=87 // pred_fallthru
          _
        // Predicated region
        $region125: #{detr_forward.1} parent=87 // pred_check
          %p713 = pneg %p318
        $region126: #{detr_forward.1} parent=87 // pred_check_branch
          %715 = sbr.rel (%p713) target = $region128
        $region127: #{detr_forward.1} parent=87 // pred_region
          %716 = dma.done [#allocation18], 16
        $region128: #{detr_forward.1} parent=87 // pred_fallthru
          _
        // Predicated region
        $region129: #{detr_forward.1} parent=87 // pred_check
          %p717 = pneg %p339
        $region130: #{detr_forward.1} parent=87 // pred_check_branch
          %719 = sbr.rel (%p717) target = $region132
        $region131: #{detr_forward.1} parent=87 // pred_region
          %720 = dma.done [#allocation18], 36864
        $region132: #{detr_forward.1} parent=87 // pred_fallthru
          _
        // Predicated region
        $region133: #{detr_forward.1} parent=87 // pred_check
          %p721 = pneg %p360
        $region134: #{detr_forward.1} parent=87 // pred_check_branch
          %723 = sbr.rel (%p721) target = $region136
        $region135: #{detr_forward.1} parent=87 // pred_region
          %724 = dma.done [#allocation21], 64
        $region136: #{detr_forward.1} parent=87 // pred_fallthru
          _
        // Predicated region
        $region137: #{detr_forward.1} parent=87 // pred_check
          %p725 = pneg %p381
        $region138: #{detr_forward.1} parent=87 // pred_check_branch
          %727 = sbr.rel (%p725) target = $region140
        $region139: #{detr_forward.1} parent=87 // pred_region
          %728 = dma.done [#allocation21], 9216
        $region140: #{detr_forward.1} parent=87 // pred_fallthru
          _
        // Predicated region
        $region141: #{detr_forward.1} parent=87 // pred_check
          %p729 = pneg %p402
        $region142: #{detr_forward.1} parent=87 // pred_check_branch
          %731 = sbr.rel (%p729) target = $region144
        $region143: #{detr_forward.1} parent=87 // pred_region
          %732 = dma.done [#allocation24], 16
        $region144: #{detr_forward.1} parent=87 // pred_fallthru
          _
        %p733 = scmp.lt.s32.totalorder %s40, 1
        %s734 = scalar_select %p733, %s40, 1
        %s735 = smul.addr %s734, 8
        %s736 = smul.addr %s735, 8
        %s737 = scalar_lea.vmem %s0, %s736
        %p738 = pneg %p61
        %p739 = pneg %p58
        %s740 = sand.u32 %s74, 1
        %s741 = scalar_lea.sflag [#allocation4], %s740
        %s742 = sand.u32 %s74, 1
        %s743 = smul.addr %s742, 64
        %s744 = scalar_lea.vmem [#allocation3], %s743
        %p745 = pneg %p87
        %p746 = pneg %p84
        %p747 = pneg %p108
        %p748 = pneg %p105
        %p749 = pneg %p129
        %p750 = pneg %p126
        %p751 = pneg %p150
        %p752 = pneg %p147
        %p753 = pneg %p171
        %p754 = pneg %p168
        %p755 = pneg %p192
        %p756 = pneg %p189
        %p757 = pneg %p213
        %p758 = pneg %p210
        %p759 = pneg %p234
        %p760 = pneg %p231
        %p761 = pneg %p255
        %p762 = pneg %p252
        %p763 = pneg %p276
        %p764 = pneg %p273
        %p765 = pneg %p297
        %p766 = pneg %p294
        %p767 = pneg %p318
        %p768 = pneg %p315
        %p769 = pneg %p339
        %p770 = pneg %p336
        %p771 = pneg %p360
        %p772 = pneg %p357
        %p773 = pneg %p381
        %p774 = pneg %p378
        %p775 = pneg %p402
        %p776 = pneg %p399
        %p777 = pneg %p428
        %p778 = pneg %p425
        %p779 = scmp.lt.s32.totalorder %s40, 1
        %s780 = scalar_select %p779, %s40, 1
        %s781 = smul.addr %s780, 8
        %s782 = scalar_lea.vmem %s17, %s781
        %p783 = pneg %p454
        %p784 = pneg %p451
        %p785 = scmp.lt.s32.totalorder %s40, 1
        %s786 = scalar_select %p785, %s40, 1
        %s787 = smul.addr %s786, 8
        %s788 = smul.addr %s787, 8
        %s789 = scalar_lea.vmem %s18, %s788
        %p790 = scmp.lt.s32.totalorder %s40, 1
        %s791 = scalar_select %p790, %s40, 1
        %s792 = smul.addr %s791, 8
        %s793 = smul.addr %s792, 8
        %s794 = scalar_lea.vmem %s0, %s793
        %p795 = scmp.lt.s32.totalorder %s40, 1
        %s796 = scalar_select %p795, %s40, 1
        %s797 = smul.addr %s796, 8
        %s798 = scalar_lea.vmem %s17, %s797
        %p799 = scmp.lt.s32.totalorder %s40, 1
        %s800 = scalar_select %p799, %s40, 1
        %s801 = smul.addr %s800, 8
        %s802 = smul.addr %s801, 8
        %s803 = scalar_lea.vmem %s18, %s802
        %v805 = vld [vmem:[%s794] sm:$0xff]
        %v806 = vld [vmem:[%s794 + $0x8] sm:$0xff]
        %v807 = vld [vmem:[%s794 + $0x10] sm:$0xff]
        %v808 = vld [vmem:[%s794 + $0x18] sm:$0xff]
        %v809 = vld [vmem:[%s794 + $0x20] sm:$0xff]
        %v810 = vld [vmem:[%s794 + $0x28] sm:$0xff]
        %v811 = vld [vmem:[%s794 + $0x30] sm:$0xff]
        %v812 = vld [vmem:[%s794 + $0x38] sm:$0xff]
        %v813 = vld [vmem:[%s2] sm:$0xff]
        %v814 = vld [vmem:[%s2 + $0x8] sm:$0xff]
        %v815 = vld [vmem:[%s2 + $0x10] sm:$0xff]
        %v816 = vld [vmem:[%s2 + $0x18] sm:$0xff]
        %v817 = vld [vmem:[%s2 + $0x20] sm:$0xff]
        %v818 = vld [vmem:[%s2 + $0x28] sm:$0xff]
        %v819 = vld [vmem:[%s2 + $0x30] sm:$0xff]
        %v820 = vld [vmem:[%s2 + $0x38] sm:$0xff]
        %v821 = vld [vmem:[%s2 + $0x40] sm:$0xff]
        %v822 = vld [vmem:[%s2 + $0x48] sm:$0xff]
        %v823 = vld [vmem:[%s2 + $0x50] sm:$0xff]
        %v824 = vld [vmem:[%s2 + $0x58] sm:$0xff]
        %v825 = vld [vmem:[%s2 + $0x60] sm:$0xff]
        %v826 = vld [vmem:[%s2 + $0x68] sm:$0xff]
        %v827 = vld [vmem:[%s2 + $0x70] sm:$0xff]
        %v828 = vld [vmem:[%s2 + $0x78] sm:$0xff]
        %v829 = vld [vmem:[#allocation5] sm:$0x1]
        %v831 = vlaneseq
        %v832 = vshrl.u32 %v831, 7
        %v833 = vsub.s32 0, %v832
        %v834 = vrot.slane %v829, %v833
        %836 = vmatprep.subr.mxu0 0.0
        %837 = vmatpush1.msra.mxu0 %v813
        %838 = vmatprep.subr.mxu0 0.0
        %839 = vmatpush1.msra.mxu0 %v814
        %840 = vmatprep.subr.mxu0 0.0
        %841 = vmatpush1.msra.mxu0 %v815
        %842 = vmatprep.subr.mxu0 0.0
        %843 = vmatpush1.msra.mxu0 %v816
        %844 = vmatprep.subr.mxu0 0.0
        %845 = vmatpush1.msra.mxu0 %v817
        %846 = vmatprep.subr.mxu0 0.0
        %847 = vmatpush1.msra.mxu0 %v818
        %848 = vmatprep.subr.mxu0 0.0
        %849 = vmatpush1.msra.mxu0 %v819
        %850 = vmatprep.subr.mxu0 0.0
        %851 = vmatpush1.msra.mxu0 %v820
        %852 = vmatprep.subr.mxu0 0.0
        %853 = vmatpush1.msra.mxu0 %v821
        %854 = vmatprep.subr.mxu0 0.0
        %855 = vmatpush1.msra.mxu0 %v822
        %856 = vmatprep.subr.mxu0 0.0
        %857 = vmatpush1.msra.mxu0 %v823
        %858 = vmatprep.subr.mxu0 0.0
        %859 = vmatpush1.msra.mxu0 %v824
        %860 = vmatprep.subr.mxu0 0.0
        %861 = vmatpush1.msra.mxu0 %v825
        %862 = vmatprep.subr.mxu0 0.0
        %863 = vmatpush1.msra.mxu0 %v826
        %864 = vmatprep.subr.mxu0 0.0
        %865 = vmatpush1.msra.mxu0 %v827
        %866 = vmatprep.subr.mxu0 0.0
        %867 = vmatpush1.msra.mxu0 %v828
        %868 = vmatprep.subr.mxu0 0.0
        %869 = vmatpush1.msra.mxu0 0.0
        %870 = vmatprep.subr.mxu0 0.0
        %871 = vmatpush1.msra.mxu0 0.0
        %872 = vmatprep.subr.mxu0 0.0
        %873 = vmatpush1.msra.mxu0 0.0
        %874 = vmatprep.subr.mxu0 0.0
        %875 = vmatpush1.msra.mxu0 0.0
        %876 = vmatprep.subr.mxu0 0.0
        %877 = vmatpush1.msra.mxu0 0.0
        %878 = vmatprep.subr.mxu0 0.0
        %879 = vmatpush1.msra.mxu0 0.0
        %880 = vmatprep.subr.mxu0 0.0
        %881 = vmatpush1.msra.mxu0 0.0
        %882 = vmatprep.subr.mxu0 0.0
        %883 = vmatpush1.msra.mxu0 0.0
        %884 = vmatprep.subr.mxu0 0.0
        %885 = vmatpush1.msra.mxu0 0.0
        %886 = vmatprep.subr.mxu0 0.0
        %887 = vmatpush1.msra.mxu0 0.0
        %888 = vmatprep.subr.mxu0 0.0
        %889 = vmatpush1.msra.mxu0 0.0
        %890 = vmatprep.subr.mxu0 0.0
        %891 = vmatpush1.msra.mxu0 0.0
        %892 = vmatprep.subr.mxu0 0.0
        %893 = vmatpush1.msra.mxu0 0.0
        %894 = vmatprep.subr.mxu0 0.0
        %895 = vmatpush1.msra.mxu0 0.0
        %896 = vmatprep.subr.mxu0 0.0
        %897 = vmatpush1.msra.mxu0 0.0
        %898 = vmatprep.subr.mxu0 0.0
        %899 = vmatpush1.msra.mxu0 0.0
        %900 = vmatprep.mubr.f32.mxu0 0.0
        %901 = vmatmul.mubr.f32.gmra.mrb[0].mxu0 %v805
        %v902 = vpop.f32.mrb[0].mxu0
        %v903 = vadd.f32 %v834, %v902
        %v904 = vpop.f32.mrb[0].mxu0
        %905 = vmatprep.mubr.f32.mxu0 0.0
        %906 = vmatmul.mubr.f32.gmra.mrb[0].mxu0 %v806
        %v907 = vpop.f32.mrb[0].mxu0
        %v908 = vadd.f32 %v834, %v907
        %v909 = vpop.f32.mrb[0].mxu0
        %910 = vmatprep.mubr.f32.mxu0 0.0
        %911 = vmatmul.mubr.f32.gmra.mrb[0].mxu0 %v807
        %v912 = vpop.f32.mrb[0].mxu0
        %v913 = vadd.f32 %v834, %v912
        %v914 = vpop.f32.mrb[0].mxu0
        %915 = vmatprep.mubr.f32.mxu0 0.0
        %916 = vmatmul.mubr.f32.gmra.mrb[0].mxu0 %v808
        %v917 = vpop.f32.mrb[0].mxu0
        %v918 = vadd.f32 %v834, %v917
        %v919 = vpop.f32.mrb[0].mxu0
        %920 = vmatprep.mubr.f32.mxu0 0.0
        %921 = vmatmul.mubr.f32.gmra.mrb[0].mxu0 %v809
        %v922 = vpop.f32.mrb[0].mxu0
        %v923 = vadd.f32 %v834, %v922
        %v924 = vpop.f32.mrb[0].mxu0
        %925 = vmatprep.mubr.f32.mxu0 0.0
        %926 = vmatmul.mubr.f32.gmra.mrb[0].mxu0 %v810
        %v927 = vpop.f32.mrb[0].mxu0
        %v928 = vadd.f32 %v834, %v927
        %v929 = vpop.f32.mrb[0].mxu0
        %930 = vmatprep.mubr.f32.mxu0 0.0
        %931 = vmatmul.mubr.f32.gmra.mrb[0].mxu0 %v811
        %v932 = vpop.f32.mrb[0].mxu0
        %v933 = vadd.f32 %v834, %v932
        %v934 = vpop.f32.mrb[0].mxu0
        %935 = vmatprep.mubr.f32.mxu0 0.0
        %936 = vmatmul.mubr.f32.gmra.mrb[0].mxu0 %v812
        %v937 = vpop.f32.mrb[0].mxu0
        %v938 = vadd.f32 %v834, %v937
        %v939 = vpop.f32.mrb[0].mxu0
        %940 = vdwg.mxu0
        %v941 = vld [vmem:[%s676] sm:$0xff]
        %v942 = vld [vmem:[%s676 + $0x8] sm:$0xff]
        %v943 = vld [vmem:[%s676 + $0x10] sm:$0xff]
        %v944 = vld [vmem:[%s676 + $0x18] sm:$0xff]
        %v945 = vld [vmem:[%s676 + $0x20] sm:$0xff]
        %v946 = vld [vmem:[%s676 + $0x28] sm:$0xff]
        %v947 = vld [vmem:[%s676 + $0x30] sm:$0xff]
        %v948 = vld [vmem:[%s676 + $0x38] sm:$0xff]
        %v949 = vadd.f32 %v903, %v941
        %v950 = vadd.f32 %v908, %v942
        %v951 = vadd.f32 %v913, %v943
        %v952 = vadd.f32 %v918, %v944
        %v953 = vadd.f32 %v923, %v945
        %v954 = vadd.f32 %v928, %v946
        %v955 = vadd.f32 %v933, %v947
        %v956 = vadd.f32 %v938, %v948
        %vm957 = vcmask 261120
        %v958 = vsel %vm957, %v949, 0.0
        %v959 = vsel %vm957, %v950, 0.0
        %v960 = vadd.f32 %v958, %v959
        %v961 = vsel %vm957, %v951, 0.0
        %v962 = vadd.f32 %v960, %v961
        %v963 = vsel %vm957, %v952, 0.0
        %v964 = vadd.f32 %v962, %v963
        %v965 = vsel %vm957, %v953, 0.0
        %v966 = vadd.f32 %v964, %v965
        %v967 = vsel %vm957, %v954, 0.0
        %v968 = vadd.f32 %v966, %v967
        %v969 = vsel %vm957, %v955, 0.0
        %v970 = vadd.f32 %v968, %v969
        %v971 = vsel %vm957, %v956, 0.0
        %v972 = vadd.f32 %v970, %v971
        %v973 = vrot.slane %v972, 4
        %v974 = vadd.f32 %v972, %v973
        %v975 = vrot.slane %v974, 2
        %v976 = vadd.f32 %v974, %v975
        %v977 = vrot.slane %v976, 1
        %v978 = vadd.f32 %v976, %v977
        %v979 = vrcp.pop 64.0
        %v980 = vmul.f32 %v978, %v979
        %v981 = vld [vmem:[#allocation7] sm:$0xff]
        %v982 = vadd.f32 %v981, %v980
        %v983 = vld [vmem:[#allocation8] sm:$0xff]
        %v984 = vld [vmem:[#allocation8 + $0x8] sm:$0xff]
        %v985 = vld [vmem:[#allocation8 + $0x10] sm:$0xff]
        %v986 = vld [vmem:[#allocation8 + $0x18] sm:$0xff]
        %v987 = vld [vmem:[#allocation10] sm:$0x1]
        %v989 = vlaneseq
        %v990 = vshrl.u32 %v989, 7
        %v991 = vsub.s32 0, %v990
        %v992 = vrot.slane %v987, %v991
        %v995 = vsel %vm957, %v982, 0
        %997 = vmatprep.subr.mxu0 0.0
        %998 = vmatpush1.msra.mxu0 %v983
        %999 = vmatprep.subr.mxu0 0.0
        %1000 = vmatpush1.msra.mxu0 %v984
        %1001 = vmatprep.subr.mxu0 0.0
        %1002 = vmatpush1.msra.mxu0 %v985
        %1003 = vmatprep.subr.mxu0 0.0
        %1004 = vmatpush1.msra.mxu0 %v986
        %1005 = vmatprep.subr.mxu0 0.0
        %1006 = vmatpush1.msra.mxu0 0.0
        %1007 = vmatprep.subr.mxu0 0.0
        %1008 = vmatpush1.msra.mxu0 0.0
        %1009 = vmatprep.subr.mxu0 0.0
        %1010 = vmatpush1.msra.mxu0 0.0
        %1011 = vmatprep.subr.mxu0 0.0
        %1012 = vmatpush1.msra.mxu0 0.0
        %1013 = vmatprep.subr.mxu0 0.0
        %1014 = vmatpush1.msra.mxu0 0.0
        %1015 = vmatprep.subr.mxu0 0.0
        %1016 = vmatpush1.msra.mxu0 0.0
        %1017 = vmatprep.subr.mxu0 0.0
        %1018 = vmatpush1.msra.mxu0 0.0
        %1019 = vmatprep.subr.mxu0 0.0
        %1020 = vmatpush1.msra.mxu0 0.0
        %1021 = vmatprep.subr.mxu0 0.0
        %1022 = vmatpush1.msra.mxu0 0.0
        %1023 = vmatprep.subr.mxu0 0.0
        %1024 = vmatpush1.msra.mxu0 0.0
        %1025 = vmatprep.subr.mxu0 0.0
        %1026 = vmatpush1.msra.mxu0 0.0
        %1027 = vmatprep.subr.mxu0 0.0
        %1028 = vmatpush1.msra.mxu0 0.0
        %1029 = vmatprep.subr.mxu0 0.0
        %1030 = vmatpush1.msra.mxu0 0.0
        %1031 = vmatprep.subr.mxu0 0.0
        %1032 = vmatpush1.msra.mxu0 0.0
        %1033 = vmatprep.subr.mxu0 0.0
        %1034 = vmatpush1.msra.mxu0 0.0
        %1035 = vmatprep.subr.mxu0 0.0
        %1036 = vmatpush1.msra.mxu0 0.0
        %1037 = vmatprep.subr.mxu0 0.0
        %1038 = vmatpush1.msra.mxu0 0.0
        %1039 = vmatprep.subr.mxu0 0.0
        %1040 = vmatpush1.msra.mxu0 0.0
        %1041 = vmatprep.subr.mxu0 0.0
        %1042 = vmatpush1.msra.mxu0 0.0
        %1043 = vmatprep.subr.mxu0 0.0
        %1044 = vmatpush1.msra.mxu0 0.0
        %1045 = vmatprep.subr.mxu0 0.0
        %1046 = vmatpush1.msra.mxu0 0.0
        %1047 = vmatprep.subr.mxu0 0.0
        %1048 = vmatpush1.msra.mxu0 0.0
        %1049 = vmatprep.subr.mxu0 0.0
        %1050 = vmatpush1.msra.mxu0 0.0
        %1051 = vmatprep.subr.mxu0 0.0
        %1052 = vmatpush1.msra.mxu0 0.0
        %1053 = vmatprep.subr.mxu0 0.0
        %1054 = vmatpush1.msra.mxu0 0.0
        %1055 = vmatprep.subr.mxu0 0.0
        %1056 = vmatpush1.msra.mxu0 0.0
        %1057 = vmatprep.subr.mxu0 0.0
        %1058 = vmatpush1.msra.mxu0 0.0
        %1059 = vmatprep.subr.mxu0 0.0
        %1060 = vmatpush1.msra.mxu0 0.0
        %1061 = vmatprep.mubr.f32.mxu0 0.0
        %1062 = vmatmul.mubr.f32.gmra.mrb[0].mxu0 %v995
        %v1063 = vpop.f32.mrb[0].mxu0
        %v1064 = vadd.f32 %v992, %v1063
        %v1065 = vpop.f32.mrb[0].mxu0
        %1066 = vdwg.mxu0
        %v1067 = vmax.f32 %v1064, 0.0
        %s1068 = scalar_lea.vmem [#allocation8], 32
        %v1069 = vld [vmem:[%s1068] sm:$0xff]
        %v1070 = vld [vmem:[%s1068 + $0x8] sm:$0xff]
        %v1071 = vld [vmem:[%s1068 + $0x10] sm:$0xff]
        %v1072 = vld [vmem:[%s1068 + $0x18] sm:$0xff]
        %s1073 = scalar_lea.vmem [#allocation10], 1
        %v1074 = vld [vmem:[%s1073] sm:$0x1]
        %v1076 = vlaneseq
        %v1077 = vshrl.u32 %v1076, 7
        %v1078 = vsub.s32 0, %v1077
        %v1079 = vrot.slane %v1074, %v1078
        %v1082 = vsel %vm957, %v1067, 0
        %1084 = vmatprep.subr.mxu0 0.0
        %1085 = vmatpush1.msra.mxu0 %v1069
        %1086 = vmatprep.subr.mxu0 0.0
        %1087 = vmatpush1.msra.mxu0 %v1070
        %1088 = vmatprep.subr.mxu0 0.0
        %1089 = vmatpush1.msra.mxu0 %v1071
        %1090 = vmatprep.subr.mxu0 0.0
        %1091 = vmatpush1.msra.mxu0 %v1072
        %1092 = vmatprep.subr.mxu0 0.0
        %1093 = vmatpush1.msra.mxu0 0.0
        %1094 = vmatprep.subr.mxu0 0.0
        %1095 = vmatpush1.msra.mxu0 0.0
        %1096 = vmatprep.subr.mxu0 0.0
        %1097 = vmatpush1.msra.mxu0 0.0
        %1098 = vmatprep.subr.mxu0 0.0
        %1099 = vmatpush1.msra.mxu0 0.0
        %1100 = vmatprep.subr.mxu0 0.0
        %1101 = vmatpush1.msra.mxu0 0.0
        %1102 = vmatprep.subr.mxu0 0.0
        %1103 = vmatpush1.msra.mxu0 0.0
        %1104 = vmatprep.subr.mxu0 0.0
        %1105 = vmatpush1.msra.mxu0 0.0
        %1106 = vmatprep.subr.mxu0 0.0
        %1107 = vmatpush1.msra.mxu0 0.0
        %1108 = vmatprep.subr.mxu0 0.0
        %1109 = vmatpush1.msra.mxu0 0.0
        %1110 = vmatprep.subr.mxu0 0.0
        %1111 = vmatpush1.msra.mxu0 0.0
        %1112 = vmatprep.subr.mxu0 0.0
        %1113 = vmatpush1.msra.mxu0 0.0
        %1114 = vmatprep.subr.mxu0 0.0
        %1115 = vmatpush1.msra.mxu0 0.0
        %1116 = vmatprep.subr.mxu0 0.0
        %1117 = vmatpush1.msra.mxu0 0.0
        %1118 = vmatprep.subr.mxu0 0.0
        %1119 = vmatpush1.msra.mxu0 0.0
        %1120 = vmatprep.subr.mxu0 0.0
        %1121 = vmatpush1.msra.mxu0 0.0
        %1122 = vmatprep.subr.mxu0 0.0
        %1123 = vmatpush1.msra.mxu0 0.0
        %1124 = vmatprep.subr.mxu0 0.0
        %1125 = vmatpush1.msra.mxu0 0.0
        %1126 = vmatprep.subr.mxu0 0.0
        %1127 = vmatpush1.msra.mxu0 0.0
        %1128 = vmatprep.subr.mxu0 0.0
        %1129 = vmatpush1.msra.mxu0 0.0
        %1130 = vmatprep.subr.mxu0 0.0
        %1131 = vmatpush1.msra.mxu0 0.0
        %1132 = vmatprep.subr.mxu0 0.0
        %1133 = vmatpush1.msra.mxu0 0.0
        %1134 = vmatprep.subr.mxu0 0.0
        %1135 = vmatpush1.msra.mxu0 0.0
        %1136 = vmatprep.subr.mxu0 0.0
        %1137 = vmatpush1.msra.mxu0 0.0
        %1138 = vmatprep.subr.mxu0 0.0
        %1139 = vmatpush1.msra.mxu0 0.0
        %1140 = vmatprep.subr.mxu0 0.0
        %1141 = vmatpush1.msra.mxu0 0.0
        %1142 = vmatprep.subr.mxu0 0.0
        %1143 = vmatpush1.msra.mxu0 0.0
        %1144 = vmatprep.subr.mxu0 0.0
        %1145 = vmatpush1.msra.mxu0 0.0
        %1146 = vmatprep.subr.mxu0 0.0
        %1147 = vmatpush1.msra.mxu0 0.0
        %1148 = vmatprep.mubr.f32.mxu0 0.0
        %1149 = vmatmul.mubr.f32.gmra.mrb[0].mxu0 %v1082
        %v1150 = vpop.f32.mrb[0].mxu0
        %v1151 = vadd.f32 %v1079, %v1150
        %v1152 = vpop.f32.mrb[0].mxu0
        %1153 = vdwg.mxu0
        %v1154 = vmax.f32 %v1151, 0.0
        %v1155 = vld [vmem:[#allocation11] sm:$0xff]
        %v1156 = vld [vmem:[#allocation11 + $0x8] sm:$0xff]
        %v1157 = vld [vmem:[#allocation11 + $0x10] sm:$0xff]
        %v1158 = vld [vmem:[#allocation11 + $0x18] sm:$0xff]
        %v1159 = vld [vmem:[#allocation13] sm:$0x1]
        %v1161 = vlaneseq
        %v1162 = vshrl.u32 %v1161, 7
        %v1163 = vsub.s32 0, %v1162
        %v1164 = vrot.slane %v1159, %v1163
        %v1167 = vsel %vm957, %v1154, 0
        %1169 = vmatprep.subr.mxu0 0.0
        %1170 = vmatpush1.msra.mxu0 %v1155
        %1171 = vmatprep.subr.mxu0 0.0
        %1172 = vmatpush1.msra.mxu0 %v1156
        %1173 = vmatprep.subr.mxu0 0.0
        %1174 = vmatpush1.msra.mxu0 %v1157
        %1175 = vmatprep.subr.mxu0 0.0
        %1176 = vmatpush1.msra.mxu0 %v1158
        %1177 = vmatprep.subr.mxu0 0.0
        %1178 = vmatpush1.msra.mxu0 0.0
        %1179 = vmatprep.subr.mxu0 0.0
        %1180 = vmatpush1.msra.mxu0 0.0
        %1181 = vmatprep.subr.mxu0 0.0
        %1182 = vmatpush1.msra.mxu0 0.0
        %1183 = vmatprep.subr.mxu0 0.0
        %1184 = vmatpush1.msra.mxu0 0.0
        %1185 = vmatprep.subr.mxu0 0.0
        %1186 = vmatpush1.msra.mxu0 0.0
        %1187 = vmatprep.subr.mxu0 0.0
        %1188 = vmatpush1.msra.mxu0 0.0
        %1189 = vmatprep.subr.mxu0 0.0
        %1190 = vmatpush1.msra.mxu0 0.0
        %1191 = vmatprep.subr.mxu0 0.0
        %1192 = vmatpush1.msra.mxu0 0.0
        %1193 = vmatprep.subr.mxu0 0.0
        %1194 = vmatpush1.msra.mxu0 0.0
        %1195 = vmatprep.subr.mxu0 0.0
        %1196 = vmatpush1.msra.mxu0 0.0
        %1197 = vmatprep.subr.mxu0 0.0
        %1198 = vmatpush1.msra.mxu0 0.0
        %1199 = vmatprep.subr.mxu0 0.0
        %1200 = vmatpush1.msra.mxu0 0.0
        %1201 = vmatprep.subr.mxu0 0.0
        %1202 = vmatpush1.msra.mxu0 0.0
        %1203 = vmatprep.subr.mxu0 0.0
        %1204 = vmatpush1.msra.mxu0 0.0
        %1205 = vmatprep.subr.mxu0 0.0
        %1206 = vmatpush1.msra.mxu0 0.0
        %1207 = vmatprep.subr.mxu0 0.0
        %1208 = vmatpush1.msra.mxu0 0.0
        %1209 = vmatprep.subr.mxu0 0.0
        %1210 = vmatpush1.msra.mxu0 0.0
        %1211 = vmatprep.subr.mxu0 0.0
        %1212 = vmatpush1.msra.mxu0 0.0
        %1213 = vmatprep.subr.mxu0 0.0
        %1214 = vmatpush1.msra.mxu0 0.0
        %1215 = vmatprep.subr.mxu0 0.0
        %1216 = vmatpush1.msra.mxu0 0.0
        %1217 = vmatprep.subr.mxu0 0.0
        %1218 = vmatpush1.msra.mxu0 0.0
        %1219 = vmatprep.subr.mxu0 0.0
        %1220 = vmatpush1.msra.mxu0 0.0
        %1221 = vmatprep.subr.mxu0 0.0
        %1222 = vmatpush1.msra.mxu0 0.0
        %1223 = vmatprep.subr.mxu0 0.0
        %1224 = vmatpush1.msra.mxu0 0.0
        %1225 = vmatprep.subr.mxu0 0.0
        %1226 = vmatpush1.msra.mxu0 0.0
        %1227 = vmatprep.subr.mxu0 0.0
        %1228 = vmatpush1.msra.mxu0 0.0
        %1229 = vmatprep.subr.mxu0 0.0
        %1230 = vmatpush1.msra.mxu0 0.0
        %1231 = vmatprep.subr.mxu0 0.0
        %1232 = vmatpush1.msra.mxu0 0.0
        %1233 = vmatprep.mubr.f32.mxu0 0.0
        %1234 = vmatmul.mubr.f32.gmra.mrb[0].mxu0 %v1167
        %v1235 = vpop.f32.mrb[0].mxu0
        %v1236 = vadd.f32 %v1164, %v1235
        %v1237 = vpop.f32.mrb[0].mxu0
        %1238 = vdwg.mxu0
        %v1239 = vmax.f32 %v1236, 0.0
        %v1240 = vld [vmem:[#allocation14] sm:$0xff]
        %v1241 = vld [vmem:[#allocation14 + $0x8] sm:$0xff]
        %v1242 = vld [vmem:[#allocation14 + $0x10] sm:$0xff]
        %v1243 = vld [vmem:[#allocation14 + $0x18] sm:$0xff]
        %v1244 = vld [vmem:[#allocation16] sm:$0x1]
        %v1246 = vlaneseq
        %v1247 = vshrl.u32 %v1246, 7
        %v1248 = vsub.s32 0, %v1247
        %v1249 = vrot.slane %v1244, %v1248
        %1252 = vrot.lane.b32.xlu0 %v1239, 119
        %v1253 = vpop.permute.xlu0 %1252
        %v1254 = vsel %vm957, %v1253, 0
        %1256 = vmatprep.subr.mxu0 0.0
        %1257 = vmatpush1.msra.mxu0 %v1240
        %1258 = vmatprep.subr.mxu0 0.0
        %1259 = vmatpush1.msra.mxu0 %v1241
        %1260 = vmatprep.subr.mxu0 0.0
        %1261 = vmatpush1.msra.mxu0 %v1242
        %1262 = vmatprep.subr.mxu0 0.0
        %1263 = vmatpush1.msra.mxu0 %v1243
        %1264 = vmatprep.subr.mxu0 0.0
        %1265 = vmatpush1.msra.mxu0 0.0
        %1266 = vmatprep.subr.mxu0 0.0
        %1267 = vmatpush1.msra.mxu0 0.0
        %1268 = vmatprep.subr.mxu0 0.0
        %1269 = vmatpush1.msra.mxu0 0.0
        %1270 = vmatprep.subr.mxu0 0.0
        %1271 = vmatpush1.msra.mxu0 0.0
        %1272 = vmatprep.subr.mxu0 0.0
        %1273 = vmatpush1.msra.mxu0 0.0
        %1274 = vmatprep.subr.mxu0 0.0
        %1275 = vmatpush1.msra.mxu0 0.0
        %1276 = vmatprep.subr.mxu0 0.0
        %1277 = vmatpush1.msra.mxu0 0.0
        %1278 = vmatprep.subr.mxu0 0.0
        %1279 = vmatpush1.msra.mxu0 0.0
        %1280 = vmatprep.subr.mxu0 0.0
        %1281 = vmatpush1.msra.mxu0 0.0
        %1282 = vmatprep.subr.mxu0 0.0
        %1283 = vmatpush1.msra.mxu0 0.0
        %1284 = vmatprep.subr.mxu0 0.0
        %1285 = vmatpush1.msra.mxu0 0.0
        %1286 = vmatprep.subr.mxu0 0.0
        %1287 = vmatpush1.msra.mxu0 0.0
        %1288 = vmatprep.subr.mxu0 0.0
        %1289 = vmatpush1.msra.mxu0 0.0
        %1290 = vmatprep.subr.mxu0 0.0
        %1291 = vmatpush1.msra.mxu0 0.0
        %1292 = vmatprep.subr.mxu0 0.0
        %1293 = vmatpush1.msra.mxu0 0.0
        %1294 = vmatprep.subr.mxu0 0.0
        %1295 = vmatpush1.msra.mxu0 0.0
        %1296 = vmatprep.subr.mxu0 0.0
        %1297 = vmatpush1.msra.mxu0 0.0
        %1298 = vmatprep.subr.mxu0 0.0
        %1299 = vmatpush1.msra.mxu0 0.0
        %1300 = vmatprep.subr.mxu0 0.0
        %1301 = vmatpush1.msra.mxu0 0.0
        %1302 = vmatprep.subr.mxu0 0.0
        %1303 = vmatpush1.msra.mxu0 0.0
        %1304 = vmatprep.subr.mxu0 0.0
        %1305 = vmatpush1.msra.mxu0 0.0
        %1306 = vmatprep.subr.mxu0 0.0
        %1307 = vmatpush1.msra.mxu0 0.0
        %1308 = vmatprep.subr.mxu0 0.0
        %1309 = vmatpush1.msra.mxu0 0.0
        %1310 = vmatprep.subr.mxu0 0.0
        %1311 = vmatpush1.msra.mxu0 0.0
        %1312 = vmatprep.subr.mxu0 0.0
        %1313 = vmatpush1.msra.mxu0 0.0
        %1314 = vmatprep.subr.mxu0 0.0
        %1315 = vmatpush1.msra.mxu0 0.0
        %1316 = vmatprep.subr.mxu0 0.0
        %1317 = vmatpush1.msra.mxu0 0.0
        %1318 = vmatprep.subr.mxu0 0.0
        %1319 = vmatpush1.msra.mxu0 0.0
        %1320 = vmatprep.mubr.f32.mxu0 0.0
        %1321 = vmatmul.mubr.f32.gmra.mrb[0].mxu0 %v1254
        %v1322 = vpop.f32.mrb[0].mxu0
        %v1323 = vadd.f32 %v1249, %v1322
        %v1324 = vpop.f32.mrb[0].mxu0
        %1325 = vdwg.mxu0
        %v1326 = vmax.f32 %v1323, 0.0
        %v1327 = vld [vmem:[%s11] sm:$0xff]
        %v1328 = vld [vmem:[%s11 + $0x8] sm:$0xff]
        %v1329 = vld [vmem:[%s11 + $0x10] sm:$0xff]
        %v1330 = vld [vmem:[%s11 + $0x18] sm:$0xff]
        %v1331 = vld [vmem:[#allocation17] sm:$0x1]
        %v1333 = vlaneseq
        %v1334 = vshrl.u32 %v1333, 7
        %v1335 = vsub.s32 0, %v1334
        %v1336 = vrot.slane %v1331, %v1335
        %v1339 = vsel %vm957, %v1326, 0
        %1341 = vmatprep.subr.mxu0 0.0
        %1342 = vmatpush1.msra.mxu0 %v1327
        %1343 = vmatprep.subr.mxu0 0.0
        %1344 = vmatpush1.msra.mxu0 %v1328
        %1345 = vmatprep.subr.mxu0 0.0
        %1346 = vmatpush1.msra.mxu0 %v1329
        %1347 = vmatprep.subr.mxu0 0.0
        %1348 = vmatpush1.msra.mxu0 %v1330
        %1349 = vmatprep.subr.mxu0 0.0
        %1350 = vmatpush1.msra.mxu0 0.0
        %1351 = vmatprep.subr.mxu0 0.0
        %1352 = vmatpush1.msra.mxu0 0.0
        %1353 = vmatprep.subr.mxu0 0.0
        %1354 = vmatpush1.msra.mxu0 0.0
        %1355 = vmatprep.subr.mxu0 0.0
        %1356 = vmatpush1.msra.mxu0 0.0
        %1357 = vmatprep.subr.mxu0 0.0
        %1358 = vmatpush1.msra.mxu0 0.0
        %1359 = vmatprep.subr.mxu0 0.0
        %1360 = vmatpush1.msra.mxu0 0.0
        %1361 = vmatprep.subr.mxu0 0.0
        %1362 = vmatpush1.msra.mxu0 0.0
        %1363 = vmatprep.subr.mxu0 0.0
        %1364 = vmatpush1.msra.mxu0 0.0
        %1365 = vmatprep.subr.mxu0 0.0
        %1366 = vmatpush1.msra.mxu0 0.0
        %1367 = vmatprep.subr.mxu0 0.0
        %1368 = vmatpush1.msra.mxu0 0.0
        %1369 = vmatprep.subr.mxu0 0.0
        %1370 = vmatpush1.msra.mxu0 0.0
        %1371 = vmatprep.subr.mxu0 0.0
        %1372 = vmatpush1.msra.mxu0 0.0
        %1373 = vmatprep.subr.mxu0 0.0
        %1374 = vmatpush1.msra.mxu0 0.0
        %1375 = vmatprep.subr.mxu0 0.0
        %1376 = vmatpush1.msra.mxu0 0.0
        %1377 = vmatprep.subr.mxu0 0.0
        %1378 = vmatpush1.msra.mxu0 0.0
        %1379 = vmatprep.subr.mxu0 0.0
        %1380 = vmatpush1.msra.mxu0 0.0
        %1381 = vmatprep.subr.mxu0 0.0
        %1382 = vmatpush1.msra.mxu0 0.0
        %1383 = vmatprep.subr.mxu0 0.0
        %1384 = vmatpush1.msra.mxu0 0.0
        %1385 = vmatprep.subr.mxu0 0.0
        %1386 = vmatpush1.msra.mxu0 0.0
        %1387 = vmatprep.subr.mxu0 0.0
        %1388 = vmatpush1.msra.mxu0 0.0
        %1389 = vmatprep.subr.mxu0 0.0
        %1390 = vmatpush1.msra.mxu0 0.0
        %1391 = vmatprep.subr.mxu0 0.0
        %1392 = vmatpush1.msra.mxu0 0.0
        %1393 = vmatprep.subr.mxu0 0.0
        %1394 = vmatpush1.msra.mxu0 0.0
        %1395 = vmatprep.subr.mxu0 0.0
        %1396 = vmatpush1.msra.mxu0 0.0
        %1397 = vmatprep.subr.mxu0 0.0
        %1398 = vmatpush1.msra.mxu0 0.0
        %1399 = vmatprep.subr.mxu0 0.0
        %1400 = vmatpush1.msra.mxu0 0.0
        %1401 = vmatprep.subr.mxu0 0.0
        %1402 = vmatpush1.msra.mxu0 0.0
        %1403 = vmatprep.subr.mxu0 0.0
        %1404 = vmatpush1.msra.mxu0 0.0
        %1405 = vmatprep.mubr.f32.mxu0 0.0
        %1406 = vmatmul.mubr.f32.gmra.mrb[0].mxu0 %v1339
        %v1407 = vpop.f32.mrb[0].mxu0
        %v1408 = vadd.f32 %v1336, %v1407
        %v1409 = vpop.f32.mrb[0].mxu0
        %1410 = vdwg.mxu0
        %v1411 = vxor.u32 %v1408, 2147483648
        %v1412 = vmul.f32 %v1411, 1.442695
        %v1413 = vpow.pop %v1412
        %v1414 = vadd.f32 %v1413, 1.0
        %v1415 = vrcp.pop %v1414
        %v1416 = vmul.f32 1.0, %v1415
        %1418 = vrot.lane.b32.xlu0 %v1416, 9
        %v1419 = vpop.permute.xlu0 %1418
        %vm1421 = vcmask 72704
        %v1422 = vsel %vm1421, %v1236, %v1419
        %vm1423 = vcmask 105472
        %v1424 = vsel %vm1423, %v1422, 0.0
        %1425 = vst [vmem:[%s798] sm:$0xff] %v1424
        %1426 = vst [vmem:[#allocation2] sm:$0xff] 0.0
        %1427 = vst [vmem:[#allocation2 + $0x8] sm:$0x3] 0.0
        %1428 = vst [vmem:[#allocation2 + $0x10] sm:$0xff] 0.0
        %1429 = vst [vmem:[#allocation2 + $0x18] sm:$0x3] 0.0
        %1430 = vst [vmem:[#allocation2 + $0x20] sm:$0xff] 0.0
        %1431 = vst [vmem:[#allocation2 + $0x28] sm:$0x3] 0.0
        %1432 = vst [vmem:[#allocation2 + $0x30] sm:$0xff] 0.0
        %1433 = vst [vmem:[#allocation2 + $0x38] sm:$0x3] 0.0
        %1434 = vst [vmem:[#allocation2 + $0x40] sm:$0xff] 0.0
        %1435 = vst [vmem:[#allocation2 + $0x48] sm:$0x3] 0.0
        %1436 = vst [vmem:[#allocation2 + $0x50] sm:$0xff] 0.0
        %1437 = vst [vmem:[#allocation2 + $0x58] sm:$0x3] 0.0
        %1438 = vst [vmem:[#allocation2 + $0x60] sm:$0xff] 0.0
        %1439 = vst [vmem:[#allocation2 + $0x68] sm:$0x3] 0.0
        %1440 = vst [vmem:[#allocation2 + $0x70] sm:$0xff] 0.0
        %1441 = vst [vmem:[#allocation2 + $0x78] sm:$0x3] 0.0
        %1442 = vst [vmem:[#allocation2 + $0x80] sm:$0xff] 0.0
        %1443 = vst [vmem:[#allocation2 + $0x88] sm:$0x3] 0.0
        %1444 = vst [vmem:[#allocation2 + $0x90] sm:$0xff] 0.0
        %1445 = vst [vmem:[#allocation2 + $0x98] sm:$0x3] 0.0
        %s1446 = scalar_lea.vmem [#allocation2], 16
        %1447 = vst [vmem:[%s1446 + $0x1] sm:$0xff] %v805
        %1448 = vst [vmem:[%s1446 + $0x11] sm:$0xff] %v806
        %1449 = vst [vmem:[%s1446 + $0x21] sm:$0xff] %v807
        %1450 = vst [vmem:[%s1446 + $0x31] sm:$0xff] %v808
        %1451 = vst [vmem:[%s1446 + $0x41] sm:$0xff] %v809
        %1452 = vst [vmem:[%s1446 + $0x51] sm:$0xff] %v810
        %1453 = vst [vmem:[%s1446 + $0x61] sm:$0xff] %v811
        %1454 = vst [vmem:[%s1446 + $0x71] sm:$0xff] %v812
        %v1455 = vld [vmem:[#allocation2] sm:$0xff]
        %v1456 = vld [vmem:[#allocation2 + $0x8] sm:$0x3]
        %v1457 = vld [vmem:[#allocation2 + $0x10] sm:$0xff]
        %v1458 = vld [vmem:[#allocation2 + $0x18] sm:$0x3]
        %v1459 = vld [vmem:[#allocation2 + $0x20] sm:$0xff]
        %v1460 = vld [vmem:[#allocation2 + $0x28] sm:$0x3]
        %v1461 = vld [vmem:[#allocation2 + $0x30] sm:$0xff]
        %v1462 = vld [vmem:[#allocation2 + $0x38] sm:$0x3]
        %v1463 = vld [vmem:[#allocation2 + $0x40] sm:$0xff]
        %v1464 = vld [vmem:[#allocation2 + $0x48] sm:$0x3]
        %v1465 = vld [vmem:[#allocation2 + $0x50] sm:$0xff]
        %v1466 = vld [vmem:[#allocation2 + $0x58] sm:$0x3]
        %v1467 = vld [vmem:[#allocation2 + $0x60] sm:$0xff]
        %v1468 = vld [vmem:[#allocation2 + $0x68] sm:$0x3]
        %v1469 = vld [vmem:[#allocation2 + $0x70] sm:$0xff]
        %v1470 = vld [vmem:[#allocation2 + $0x78] sm:$0x3]
        %v1471 = vld [vmem:[#allocation2 + $0x80] sm:$0xff]
        %v1472 = vld [vmem:[#allocation2 + $0x88] sm:$0x3]
        %v1473 = vld [vmem:[#allocation2 + $0x90] sm:$0xff]
        %v1474 = vld [vmem:[#allocation2 + $0x98] sm:$0x3]
        %vm1491 = vcmask 1046528
        %v1492 = vrot.slane %v1455, 1
        %v1493 = vrot.slane %v1456, 1
        %v1494 = vsel %vm1491, %v1492, %v1493
        %v1495 = vrot.slane %v1457, 1
        %v1496 = vrot.slane %v1458, 1
        %v1497 = vsel %vm1491, %v1495, %v1496
        %v1498 = vrot.slane %v1459, 1
        %v1499 = vrot.slane %v1460, 1
        %v1500 = vsel %vm1491, %v1498, %v1499
        %v1501 = vrot.slane %v1461, 1
        %v1502 = vrot.slane %v1462, 1
        %v1503 = vsel %vm1491, %v1501, %v1502
        %v1504 = vrot.slane %v1463, 1
        %v1505 = vrot.slane %v1464, 1
        %v1506 = vsel %vm1491, %v1504, %v1505
        %v1507 = vrot.slane %v1465, 1
        %v1508 = vrot.slane %v1466, 1
        %v1509 = vsel %vm1491, %v1507, %v1508
        %v1510 = vrot.slane %v1467, 1
        %v1511 = vrot.slane %v1468, 1
        %v1512 = vsel %vm1491, %v1510, %v1511
        %v1513 = vrot.slane %v1469, 1
        %v1514 = vrot.slane %v1470, 1
        %v1515 = vsel %vm1491, %v1513, %v1514
        %vm1524 = vcmask 1045504
        %v1525 = vrot.slane %v1455, 2
        %v1526 = vrot.slane %v1456, 2
        %v1527 = vsel %vm1524, %v1525, %v1526
        %v1528 = vrot.slane %v1457, 2
        %v1529 = vrot.slane %v1458, 2
        %v1530 = vsel %vm1524, %v1528, %v1529
        %v1531 = vrot.slane %v1459, 2
        %v1532 = vrot.slane %v1460, 2
        %v1533 = vsel %vm1524, %v1531, %v1532
        %v1534 = vrot.slane %v1461, 2
        %v1535 = vrot.slane %v1462, 2
        %v1536 = vsel %vm1524, %v1534, %v1535
        %v1537 = vrot.slane %v1463, 2
        %v1538 = vrot.slane %v1464, 2
        %v1539 = vsel %vm1524, %v1537, %v1538
        %v1540 = vrot.slane %v1465, 2
        %v1541 = vrot.slane %v1466, 2
        %v1542 = vsel %vm1524, %v1540, %v1541
        %v1543 = vrot.slane %v1467, 2
        %v1544 = vrot.slane %v1468, 2
        %v1545 = vsel %vm1524, %v1543, %v1544
        %v1546 = vrot.slane %v1469, 2
        %v1547 = vrot.slane %v1470, 2
        %v1548 = vsel %vm1524, %v1546, %v1547
        %v1559 = vrot.slane %v1471, 1
        %v1560 = vrot.slane %v1472, 1
        %v1561 = vsel %vm1491, %v1559, %v1560
        %v1563 = vrot.slane %v1471, 2
        %v1564 = vrot.slane %v1472, 2
        %v1565 = vsel %vm1524, %v1563, %v1564
        %v1569 = vrot.slane %v1473, 1
        %v1570 = vrot.slane %v1474, 1
        %v1571 = vsel %vm1491, %v1569, %v1570
        %v1573 = vrot.slane %v1473, 2
        %v1574 = vrot.slane %v1474, 2
        %v1575 = vsel %vm1524, %v1573, %v1574
        %v1577 = vpack.c.bf16 %v1457, %v1455
        %v1578 = vpack.c.bf16 %v1497, %v1494
        %v1579 = vpack.c.bf16 %v1530, %v1527
        %v1580 = vpack.c.bf16 %v1459, %v1457
        %v1581 = vpack.c.bf16 %v1500, %v1497
        %v1582 = vpack.c.bf16 %v1533, %v1530
        %v1583 = vpack.c.bf16 %v1461, %v1459
        %v1584 = vpack.c.bf16 %v1503, %v1500
        %v1585 = vpack.c.bf16 %v1536, %v1533
        %v1586 = vpack.c.bf16 %v1463, %v1461
        %v1587 = vpack.c.bf16 %v1506, %v1503
        %v1588 = vpack.c.bf16 %v1539, %v1536
        %v1589 = vpack.c.bf16 %v1465, %v1463
        %v1590 = vpack.c.bf16 %v1509, %v1506
        %v1591 = vpack.c.bf16 %v1542, %v1539
        %v1592 = vpack.c.bf16 %v1467, %v1465
        %v1593 = vpack.c.bf16 %v1512, %v1509
        %v1594 = vpack.c.bf16 %v1545, %v1542
        %v1595 = vpack.c.bf16 %v1469, %v1467
        %v1596 = vpack.c.bf16 %v1515, %v1512
        %v1597 = vpack.c.bf16 %v1548, %v1545
        %v1598 = vpack.c.bf16 %v1471, %v1469
        %v1599 = vpack.c.bf16 %v1561, %v1515
        %v1600 = vpack.c.bf16 %v1565, %v1548
        %v1601 = vpack.c.bf16 %v1473, %v1471
        %v1602 = vpack.c.bf16 %v1571, %v1561
        %v1603 = vpack.c.bf16 %v1575, %v1565
        %v1604 = vld [vmem:[#allocation19] sm:$0xf]
        %v1605 = vld [vmem:[#allocation19 + $0x4] sm:$0xf]
        %v1606 = vld [vmem:[#allocation19 + $0x8] sm:$0xf]
        %v1607 = vld [vmem:[#allocation19 + $0xc] sm:$0xf]
        %v1608 = vld [vmem:[#allocation19 + $0x10] sm:$0xf]
        %v1609 = vld [vmem:[#allocation19 + $0x14] sm:$0xf]
        %v1610 = vld [vmem:[#allocation19 + $0x18] sm:$0xf]
        %v1611 = vld [vmem:[#allocation19 + $0x1c] sm:$0xf]
        %v1612 = vld [vmem:[#allocation19 + $0x20] sm:$0xf]
        %v1613 = vld [vmem:[#allocation19 + $0x24] sm:$0xf]
        %v1614 = vld [vmem:[#allocation19 + $0x28] sm:$0xf]
        %v1615 = vld [vmem:[#allocation19 + $0x2c] sm:$0xf]
        %v1616 = vld [vmem:[#allocation19 + $0x30] sm:$0xf]
        %v1617 = vld [vmem:[#allocation19 + $0x34] sm:$0xf]
        %v1618 = vld [vmem:[#allocation19 + $0x38] sm:$0xf]
        %v1619 = vld [vmem:[#allocation19 + $0x3c] sm:$0xf]
        %v1620 = vld [vmem:[#allocation19 + $0x40] sm:$0xf]
        %v1621 = vld [vmem:[#allocation19 + $0x44] sm:$0xf]
        %v1622 = vld [vmem:[#allocation19 + $0x48] sm:$0xf]
        %v1623 = vld [vmem:[#allocation19 + $0x4c] sm:$0xf]
        %v1624 = vld [vmem:[#allocation19 + $0x50] sm:$0xf]
        %v1625 = vld [vmem:[#allocation19 + $0x54] sm:$0xf]
        %v1626 = vld [vmem:[#allocation19 + $0x58] sm:$0xf]
        %v1627 = vld [vmem:[#allocation19 + $0x5c] sm:$0xf]
        %v1628 = vld [vmem:[#allocation19 + $0x60] sm:$0xf]
        %v1629 = vld [vmem:[#allocation19 + $0x64] sm:$0xf]
        %v1630 = vld [vmem:[#allocation19 + $0x68] sm:$0xf]
        %v1631 = vld [vmem:[#allocation19 + $0x6c] sm:$0xf]
        %v1632 = vld [vmem:[#allocation19 + $0x70] sm:$0xf]
        %v1633 = vld [vmem:[#allocation19 + $0x74] sm:$0xf]
        %v1634 = vld [vmem:[#allocation19 + $0x78] sm:$0xf]
        %v1635 = vld [vmem:[#allocation19 + $0x7c] sm:$0xf]
        %v1636 = vld [vmem:[#allocation19 + $0x80] sm:$0xf]
        %v1637 = vld [vmem:[#allocation19 + $0x84] sm:$0xf]
        %v1638 = vld [vmem:[#allocation19 + $0x88] sm:$0xf]
        %v1639 = vld [vmem:[#allocation19 + $0x8c] sm:$0xf]
        %v1640 = vld [vmem:[#allocation19 + $0x90] sm:$0xf]
        %v1641 = vld [vmem:[#allocation19 + $0x94] sm:$0xf]
        %v1642 = vld [vmem:[#allocation19 + $0x98] sm:$0xf]
        %v1643 = vld [vmem:[#allocation19 + $0x9c] sm:$0xf]
        %v1644 = vld [vmem:[#allocation19 + $0xa0] sm:$0xf]
        %v1645 = vld [vmem:[#allocation19 + $0xa4] sm:$0xf]
        %v1646 = vld [vmem:[#allocation19 + $0xa8] sm:$0xf]
        %v1647 = vld [vmem:[#allocation19 + $0xac] sm:$0xf]
        %v1648 = vld [vmem:[#allocation19 + $0xb0] sm:$0xf]
        %v1649 = vld [vmem:[#allocation19 + $0xb4] sm:$0xf]
        %v1650 = vld [vmem:[#allocation19 + $0xb8] sm:$0xf]
        %v1651 = vld [vmem:[#allocation19 + $0xbc] sm:$0xf]
        %v1652 = vld [vmem:[#allocation19 + $0xc0] sm:$0xf]
        %v1653 = vld [vmem:[#allocation19 + $0xc4] sm:$0xf]
        %v1654 = vld [vmem:[#allocation19 + $0xc8] sm:$0xf]
        %v1655 = vld [vmem:[#allocation19 + $0xcc] sm:$0xf]
        %v1656 = vld [vmem:[#allocation19 + $0xd0] sm:$0xf]
        %v1657 = vld [vmem:[#allocation19 + $0xd4] sm:$0xf]
        %v1658 = vld [vmem:[#allocation19 + $0xd8] sm:$0xf]
        %v1659 = vld [vmem:[#allocation19 + $0xdc] sm:$0xf]
        %v1660 = vld [vmem:[#allocation19 + $0xe0] sm:$0xf]
        %v1661 = vld [vmem:[#allocation19 + $0xe4] sm:$0xf]
        %v1662 = vld [vmem:[#allocation19 + $0xe8] sm:$0xf]
        %v1663 = vld [vmem:[#allocation19 + $0xec] sm:$0xf]
        %v1664 = vld [vmem:[#allocation19 + $0xf0] sm:$0xf]
        %v1665 = vld [vmem:[#allocation19 + $0xf4] sm:$0xf]
        %v1666 = vld [vmem:[#allocation19 + $0xf8] sm:$0xf]
        %v1667 = vld [vmem:[#allocation19 + $0xfc] sm:$0xf]
        %v1668 = vld [vmem:[#allocation19 + $0x100] sm:$0xf]
        %v1669 = vld [vmem:[#allocation19 + $0x104] sm:$0xf]
        %v1670 = vld [vmem:[#allocation19 + $0x108] sm:$0xf]
        %v1671 = vld [vmem:[#allocation19 + $0x10c] sm:$0xf]
        %v1672 = vld [vmem:[#allocation19 + $0x110] sm:$0xf]
        %v1673 = vld [vmem:[#allocation19 + $0x114] sm:$0xf]
        %v1674 = vld [vmem:[#allocation19 + $0x118] sm:$0xf]
        %v1675 = vld [vmem:[#allocation19 + $0x11c] sm:$0xf]
        %v1676 = vld [vmem:[#allocation19 + $0x120] sm:$0xf]
        %v1677 = vld [vmem:[#allocation19 + $0x124] sm:$0xf]
        %v1678 = vld [vmem:[#allocation19 + $0x128] sm:$0xf]
        %v1679 = vld [vmem:[#allocation19 + $0x12c] sm:$0xf]
        %v1680 = vld [vmem:[#allocation19 + $0x130] sm:$0xf]
        %v1681 = vld [vmem:[#allocation19 + $0x134] sm:$0xf]
        %v1682 = vld [vmem:[#allocation19 + $0x138] sm:$0xf]
        %v1683 = vld [vmem:[#allocation19 + $0x13c] sm:$0xf]
        %v1684 = vld [vmem:[#allocation19 + $0x140] sm:$0xf]
        %v1685 = vld [vmem:[#allocation19 + $0x144] sm:$0xf]
        %v1686 = vld [vmem:[#allocation19 + $0x148] sm:$0xf]
        %v1687 = vld [vmem:[#allocation19 + $0x14c] sm:$0xf]
        %v1688 = vld [vmem:[#allocation19 + $0x150] sm:$0xf]
        %v1689 = vld [vmem:[#allocation19 + $0x154] sm:$0xf]
        %v1690 = vld [vmem:[#allocation19 + $0x158] sm:$0xf]
        %v1691 = vld [vmem:[#allocation19 + $0x15c] sm:$0xf]
        %v1692 = vld [vmem:[#allocation19 + $0x160] sm:$0xf]
        %v1693 = vld [vmem:[#allocation19 + $0x164] sm:$0xf]
        %v1694 = vld [vmem:[#allocation19 + $0x168] sm:$0xf]
        %v1695 = vld [vmem:[#allocation19 + $0x16c] sm:$0xf]
        %v1696 = vld [vmem:[#allocation19 + $0x170] sm:$0xf]
        %v1697 = vld [vmem:[#allocation19 + $0x174] sm:$0xf]
        %v1698 = vld [vmem:[#allocation19 + $0x178] sm:$0xf]
        %v1699 = vld [vmem:[#allocation19 + $0x17c] sm:$0xf]
        %v1700 = vld [vmem:[#allocation19 + $0x180] sm:$0xf]
        %v1701 = vld [vmem:[#allocation19 + $0x184] sm:$0xf]
        %v1702 = vld [vmem:[#allocation19 + $0x188] sm:$0xf]
        %v1703 = vld [vmem:[#allocation19 + $0x18c] sm:$0xf]
        %v1704 = vld [vmem:[#allocation19 + $0x190] sm:$0xf]
        %v1705 = vld [vmem:[#allocation19 + $0x194] sm:$0xf]
        %v1706 = vld [vmem:[#allocation19 + $0x198] sm:$0xf]
        %v1707 = vld [vmem:[#allocation19 + $0x19c] sm:$0xf]
        %v1708 = vld [vmem:[#allocation19 + $0x1a0] sm:$0xf]
        %v1709 = vld [vmem:[#allocation19 + $0x1a4] sm:$0xf]
        %v1710 = vld [vmem:[#allocation19 + $0x1a8] sm:$0xf]
        %v1711 = vld [vmem:[#allocation19 + $0x1ac] sm:$0xf]
        %v1712 = vld [vmem:[#allocation19 + $0x1b0] sm:$0xf]
        %v1713 = vld [vmem:[#allocation19 + $0x1b4] sm:$0xf]
        %v1714 = vld [vmem:[#allocation19 + $0x1b8] sm:$0xf]
        %v1715 = vld [vmem:[#allocation19 + $0x1bc] sm:$0xf]
        %v1716 = vld [vmem:[#allocation19 + $0x1c0] sm:$0xf]
        %v1717 = vld [vmem:[#allocation19 + $0x1c4] sm:$0xf]
        %v1718 = vld [vmem:[#allocation19 + $0x1c8] sm:$0xf]
        %v1719 = vld [vmem:[#allocation19 + $0x1cc] sm:$0xf]
        %v1720 = vld [vmem:[#allocation19 + $0x1d0] sm:$0xf]
        %v1721 = vld [vmem:[#allocation19 + $0x1d4] sm:$0xf]
        %v1722 = vld [vmem:[#allocation19 + $0x1d8] sm:$0xf]
        %v1723 = vld [vmem:[#allocation19 + $0x1dc] sm:$0xf]
        %v1724 = vld [vmem:[#allocation19 + $0x1e0] sm:$0xf]
        %v1725 = vld [vmem:[#allocation19 + $0x1e4] sm:$0xf]
        %v1726 = vld [vmem:[#allocation19 + $0x1e8] sm:$0xf]
        %v1727 = vld [vmem:[#allocation19 + $0x1ec] sm:$0xf]
        %v1728 = vld [vmem:[#allocation19 + $0x1f0] sm:$0xf]
        %v1729 = vld [vmem:[#allocation19 + $0x1f4] sm:$0xf]
        %v1730 = vld [vmem:[#allocation19 + $0x1f8] sm:$0xf]
        %v1731 = vld [vmem:[#allocation19 + $0x1fc] sm:$0xf]
        %v1732 = vld [vmem:[#allocation19 + $0x200] sm:$0xf]
        %v1733 = vld [vmem:[#allocation19 + $0x204] sm:$0xf]
        %v1734 = vld [vmem:[#allocation19 + $0x208] sm:$0xf]
        %v1735 = vld [vmem:[#allocation19 + $0x20c] sm:$0xf]
        %v1736 = vld [vmem:[#allocation19 + $0x210] sm:$0xf]
        %v1737 = vld [vmem:[#allocation19 + $0x214] sm:$0xf]
        %v1738 = vld [vmem:[#allocation19 + $0x218] sm:$0xf]
        %v1739 = vld [vmem:[#allocation19 + $0x21c] sm:$0xf]
        %v1740 = vld [vmem:[#allocation19 + $0x220] sm:$0xf]
        %v1741 = vld [vmem:[#allocation19 + $0x224] sm:$0xf]
        %v1742 = vld [vmem:[#allocation19 + $0x228] sm:$0xf]
        %v1743 = vld [vmem:[#allocation19 + $0x22c] sm:$0xf]
        %v1744 = vld [vmem:[#allocation19 + $0x230] sm:$0xf]
        %v1745 = vld [vmem:[#allocation19 + $0x234] sm:$0xf]
        %v1746 = vld [vmem:[#allocation19 + $0x238] sm:$0xf]
        %v1747 = vld [vmem:[#allocation19 + $0x23c] sm:$0xf]
        %v1748 = vld [vmem:[#allocation20] sm:$0x1]
        %v1750 = vlaneseq
        %v1751 = vshrl.u32 %v1750, 7
        %v1752 = vsub.s32 0, %v1751
        %v1753 = vrot.slane %v1748, %v1752
        %v1899 = vunpack.c.l.b16 %v1604
        %v1900 = vunpack.c.l.b16 %v1605
        %v1901 = vunpack.c.l.b16 %v1606
        %v1902 = vunpack.c.l.b16 %v1607
        %v1903 = vunpack.c.l.b16 %v1608
        %v1904 = vunpack.c.l.b16 %v1609
        %v1905 = vunpack.c.l.b16 %v1610
        %v1906 = vunpack.c.l.b16 %v1611
        %v1907 = vunpack.c.l.b16 %v1612
        %v1908 = vunpack.c.l.b16 %v1613
        %v1909 = vunpack.c.l.b16 %v1614
        %v1910 = vunpack.c.l.b16 %v1615
        %v1911 = vunpack.c.l.b16 %v1616
        %v1912 = vunpack.c.l.b16 %v1617
        %v1913 = vunpack.c.l.b16 %v1618
        %v1914 = vunpack.c.l.b16 %v1619
        %v1915 = vunpack.c.l.b16 %v1620
        %v1916 = vunpack.c.l.b16 %v1621
        %v1917 = vunpack.c.l.b16 %v1622
        %v1918 = vunpack.c.l.b16 %v1623
        %v1919 = vunpack.c.l.b16 %v1624
        %v1920 = vunpack.c.l.b16 %v1625
        %v1921 = vunpack.c.l.b16 %v1626
        %v1922 = vunpack.c.l.b16 %v1627
        %v1923 = vunpack.c.l.b16 %v1628
        %v1924 = vunpack.c.l.b16 %v1629
        %v1925 = vunpack.c.l.b16 %v1630
        %v1926 = vunpack.c.l.b16 %v1631
        %v1927 = vunpack.c.l.b16 %v1632
        %v1928 = vunpack.c.l.b16 %v1633
        %v1929 = vunpack.c.l.b16 %v1634
        %v1930 = vunpack.c.l.b16 %v1635
        %v1931 = vunpack.c.l.b16 %v1636
        %v1932 = vunpack.c.l.b16 %v1637
        %v1933 = vunpack.c.l.b16 %v1638
        %v1934 = vunpack.c.l.b16 %v1639
        %v1935 = vunpack.c.l.b16 %v1640
        %v1936 = vunpack.c.l.b16 %v1641
        %v1937 = vunpack.c.l.b16 %v1642
        %v1938 = vunpack.c.l.b16 %v1643
        %v1939 = vunpack.c.l.b16 %v1644
        %v1940 = vunpack.c.l.b16 %v1645
        %v1941 = vunpack.c.l.b16 %v1646
        %v1942 = vunpack.c.l.b16 %v1647
        %v1943 = vunpack.c.l.b16 %v1648
        %v1944 = vunpack.c.l.b16 %v1649
        %v1945 = vunpack.c.l.b16 %v1650
        %v1946 = vunpack.c.l.b16 %v1651
        %v1947 = vunpack.c.l.b16 %v1652
        %v1948 = vunpack.c.l.b16 %v1653
        %v1949 = vunpack.c.l.b16 %v1654
        %v1950 = vunpack.c.l.b16 %v1655
        %v1951 = vunpack.c.l.b16 %v1656
        %v1952 = vunpack.c.l.b16 %v1657
        %v1953 = vunpack.c.l.b16 %v1658
        %v1954 = vunpack.c.l.b16 %v1659
        %v1955 = vunpack.c.l.b16 %v1660
        %v1956 = vunpack.c.l.b16 %v1661
        %v1957 = vunpack.c.l.b16 %v1662
        %v1958 = vunpack.c.l.b16 %v1663
        %v1959 = vunpack.c.l.b16 %v1664
        %v1960 = vunpack.c.l.b16 %v1665
        %v1961 = vunpack.c.l.b16 %v1666
        %v1962 = vunpack.c.l.b16 %v1667
        %v1963 = vunpack.c.l.b16 %v1668
        %v1964 = vunpack.c.l.b16 %v1669
        %v1965 = vunpack.c.l.b16 %v1670
        %v1966 = vunpack.c.l.b16 %v1671
        %v1967 = vunpack.c.l.b16 %v1672
        %v1968 = vunpack.c.l.b16 %v1673
        %v1969 = vunpack.c.l.b16 %v1674
        %v1970 = vunpack.c.l.b16 %v1675
        %v1971 = vunpack.c.l.b16 %v1676
        %v1972 = vunpack.c.l.b16 %v1677
        %v1973 = vunpack.c.l.b16 %v1678
        %v1974 = vunpack.c.l.b16 %v1679
        %v1975 = vunpack.c.l.b16 %v1680
        %v1976 = vunpack.c.l.b16 %v1681
        %v1977 = vunpack.c.l.b16 %v1682
        %v1978 = vunpack.c.l.b16 %v1683
        %v1979 = vunpack.c.l.b16 %v1684
        %v1980 = vunpack.c.l.b16 %v1685
        %v1981 = vunpack.c.l.b16 %v1686
        %v1982 = vunpack.c.l.b16 %v1687
        %v1983 = vunpack.c.l.b16 %v1688
        %v1984 = vunpack.c.l.b16 %v1689
        %v1985 = vunpack.c.l.b16 %v1690
        %v1986 = vunpack.c.l.b16 %v1691
        %v1987 = vunpack.c.l.b16 %v1692
        %v1988 = vunpack.c.l.b16 %v1693
        %v1989 = vunpack.c.l.b16 %v1694
        %v1990 = vunpack.c.l.b16 %v1695
        %v1991 = vunpack.c.l.b16 %v1696
        %v1992 = vunpack.c.l.b16 %v1697
        %v1993 = vunpack.c.l.b16 %v1698
        %v1994 = vunpack.c.l.b16 %v1699
        %v1995 = vunpack.c.l.b16 %v1700
        %v1996 = vunpack.c.l.b16 %v1701
        %v1997 = vunpack.c.l.b16 %v1702
        %v1998 = vunpack.c.l.b16 %v1703
        %v1999 = vunpack.c.l.b16 %v1704
        %v2000 = vunpack.c.l.b16 %v1705
        %v2001 = vunpack.c.l.b16 %v1706
        %v2002 = vunpack.c.l.b16 %v1707
        %v2003 = vunpack.c.l.b16 %v1708
        %v2004 = vunpack.c.l.b16 %v1709
        %v2005 = vunpack.c.l.b16 %v1710
        %v2006 = vunpack.c.l.b16 %v1711
        %v2007 = vunpack.c.l.b16 %v1712
        %v2008 = vunpack.c.l.b16 %v1713
        %v2009 = vunpack.c.l.b16 %v1714
        %v2010 = vunpack.c.l.b16 %v1715
        %v2011 = vunpack.c.l.b16 %v1716
        %v2012 = vunpack.c.l.b16 %v1717
        %v2013 = vunpack.c.l.b16 %v1718
        %v2014 = vunpack.c.l.b16 %v1719
        %v2015 = vunpack.c.l.b16 %v1720
        %v2016 = vunpack.c.l.b16 %v1721
        %v2017 = vunpack.c.l.b16 %v1722
        %v2018 = vunpack.c.l.b16 %v1723
        %v2019 = vunpack.c.l.b16 %v1724
        %v2020 = vunpack.c.l.b16 %v1725
        %v2021 = vunpack.c.l.b16 %v1726
        %v2022 = vunpack.c.l.b16 %v1727
        %v2023 = vunpack.c.l.b16 %v1728
        %v2024 = vunpack.c.l.b16 %v1729
        %v2025 = vunpack.c.l.b16 %v1730
        %v2026 = vunpack.c.l.b16 %v1731
        %v2027 = vunpack.c.l.b16 %v1732
        %v2028 = vunpack.c.l.b16 %v1733
        %v2029 = vunpack.c.l.b16 %v1734
        %v2030 = vunpack.c.l.b16 %v1735
        %v2031 = vunpack.c.l.b16 %v1736
        %v2032 = vunpack.c.l.b16 %v1737
        %v2033 = vunpack.c.l.b16 %v1738
        %v2034 = vunpack.c.l.b16 %v1739
        %v2035 = vunpack.c.l.b16 %v1740
        %v2036 = vunpack.c.l.b16 %v1741
        %v2037 = vunpack.c.l.b16 %v1742
        %v2038 = vunpack.c.l.b16 %v1743
        %v2039 = vunpack.c.l.b16 %v1744
        %v2040 = vunpack.c.l.b16 %v1745
        %v2041 = vunpack.c.l.b16 %v1746
        %v2042 = vunpack.c.l.b16 %v1747
        %v2043 = vpack.c.b16 %v1900, %v1899
        %v2044 = vpack.c.b16 %v1902, %v1901
        %v2045 = vpack.c.b16 %v1904, %v1903
        %v2046 = vpack.c.b16 %v1906, %v1905
        %v2047 = vpack.c.b16 %v1908, %v1907
        %v2048 = vpack.c.b16 %v1910, %v1909
        %v2049 = vpack.c.b16 %v1912, %v1911
        %v2050 = vpack.c.b16 %v1914, %v1913
        %v2051 = vpack.c.b16 %v1916, %v1915
        %v2052 = vpack.c.b16 %v1918, %v1917
        %v2053 = vpack.c.b16 %v1920, %v1919
        %v2054 = vpack.c.b16 %v1922, %v1921
        %v2055 = vpack.c.b16 %v1924, %v1923
        %v2056 = vpack.c.b16 %v1926, %v1925
        %v2057 = vpack.c.b16 %v1928, %v1927
        %v2058 = vpack.c.b16 %v1930, %v1929
        %v2059 = vpack.c.b16 %v1932, %v1931
        %v2060 = vpack.c.b16 %v1934, %v1933
        %v2061 = vpack.c.b16 %v1936, %v1935
        %v2062 = vpack.c.b16 %v1938, %v1937
        %v2063 = vpack.c.b16 %v1940, %v1939
        %v2064 = vpack.c.b16 %v1942, %v1941
        %v2065 = vpack.c.b16 %v1944, %v1943
        %v2066 = vpack.c.b16 %v1946, %v1945
        %v2067 = vpack.c.b16 %v1948, %v1947
        %v2068 = vpack.c.b16 %v1950, %v1949
        %v2069 = vpack.c.b16 %v1952, %v1951
        %v2070 = vpack.c.b16 %v1954, %v1953
        %v2071 = vpack.c.b16 %v1956, %v1955
        %v2072 = vpack.c.b16 %v1958, %v1957
        %v2073 = vpack.c.b16 %v1960, %v1959
        %v2074 = vpack.c.b16 %v1962, %v1961
        %v2075 = vpack.c.b16 %v1964, %v1963
        %v2076 = vpack.c.b16 %v1966, %v1965
        %v2077 = vpack.c.b16 %v1968, %v1967
        %v2078 = vpack.c.b16 %v1970, %v1969
        %v2079 = vpack.c.b16 %v1972, %v1971
        %v2080 = vpack.c.b16 %v1974, %v1973
        %v2081 = vpack.c.b16 %v1976, %v1975
        %v2082 = vpack.c.b16 %v1978, %v1977
        %v2083 = vpack.c.b16 %v1980, %v1979
        %v2084 = vpack.c.b16 %v1982, %v1981
        %v2085 = vpack.c.b16 %v1984, %v1983
        %v2086 = vpack.c.b16 %v1986, %v1985
        %v2087 = vpack.c.b16 %v1988, %v1987
        %v2088 = vpack.c.b16 %v1990, %v1989
        %v2089 = vpack.c.b16 %v1992, %v1991
        %v2090 = vpack.c.b16 %v1994, %v1993
        %v2091 = vpack.c.b16 %v1996, %v1995
        %v2092 = vpack.c.b16 %v1998, %v1997
        %v2093 = vpack.c.b16 %v2000, %v1999
        %v2094 = vpack.c.b16 %v2002, %v2001
        %v2095 = vpack.c.b16 %v2004, %v2003
        %v2096 = vpack.c.b16 %v2006, %v2005
        %v2097 = vpack.c.b16 %v2008, %v2007
        %v2098 = vpack.c.b16 %v2010, %v2009
        %v2099 = vpack.c.b16 %v2012, %v2011
        %v2100 = vpack.c.b16 %v2014, %v2013
        %v2101 = vpack.c.b16 %v2016, %v2015
        %v2102 = vpack.c.b16 %v2018, %v2017
        %v2103 = vpack.c.b16 %v2020, %v2019
        %v2104 = vpack.c.b16 %v2022, %v2021
        %v2105 = vpack.c.b16 %v2024, %v2023
        %v2106 = vpack.c.b16 %v2026, %v2025
        %v2107 = vpack.c.b16 %v2028, %v2027
        %v2108 = vpack.c.b16 %v2030, %v2029
        %v2109 = vpack.c.b16 %v2032, %v2031
        %v2110 = vpack.c.b16 %v2034, %v2033
        %v2111 = vpack.c.b16 %v2036, %v2035
        %v2112 = vpack.c.b16 %v2038, %v2037
        %v2113 = vpack.c.b16 %v2040, %v2039
        %v2114 = vpack.c.b16 %v2042, %v2041
        %2187 = vmatprep.subr.bf16.mxu0 0
        %2188 = vmatpush1.bf16.msra.mxu0 %v2043
        %2189 = vmatprep.subr.bf16.mxu0 0
        %2190 = vmatpush1.bf16.msra.mxu0 %v2044
        %2191 = vmatprep.subr.bf16.mxu0 0
        %2192 = vmatpush1.bf16.msra.mxu0 %v2045
        %2193 = vmatprep.subr.bf16.mxu0 0
        %2194 = vmatpush1.bf16.msra.mxu0 %v2046
        %2195 = vmatprep.subr.bf16.mxu0 0
        %2196 = vmatpush1.bf16.msra.mxu0 %v2047
        %2197 = vmatprep.subr.bf16.mxu0 0
        %2198 = vmatpush1.bf16.msra.mxu0 %v2048
        %2199 = vmatprep.subr.bf16.mxu0 0
        %2200 = vmatpush1.bf16.msra.mxu0 %v2049
        %2201 = vmatprep.subr.bf16.mxu0 0
        %2202 = vmatpush1.bf16.msra.mxu0 %v2050
        %2203 = vmatprep.subr.bf16.mxu0 0
        %2204 = vmatpush1.bf16.msra.mxu0 %v2051
        %2205 = vmatprep.subr.bf16.mxu0 0
        %2206 = vmatpush1.bf16.msra.mxu0 %v2052
        %2207 = vmatprep.subr.bf16.mxu0 0
        %2208 = vmatpush1.bf16.msra.mxu0 %v2053
        %2209 = vmatprep.subr.bf16.mxu0 0
        %2210 = vmatpush1.bf16.msra.mxu0 %v2054
        %2211 = vmatprep.subr.bf16.mxu0 0
        %2212 = vmatpush1.bf16.msra.mxu0 %v2055
        %2213 = vmatprep.subr.bf16.mxu0 0
        %2214 = vmatpush1.bf16.msra.mxu0 %v2056
        %2215 = vmatprep.subr.bf16.mxu0 0
        %2216 = vmatpush1.bf16.msra.mxu0 %v2057
        %2217 = vmatprep.subr.bf16.mxu0 0
        %2218 = vmatpush1.bf16.msra.mxu0 %v2058
        %2219 = vmatprep.mubr.bf16.mxu0 %v1578
        %2220 = vmatmul.mubr.bf16.gmra.mrb[0].mxu0 %v1577
        %v2221 = vpop.f32.mrb[0].mxu0
        %v2222 = vadd.f32 %v1753, %v2221
        %v2223 = vpop.f32.mrb[0].mxu0
        %v2224 = vpop.f32.mrb[0].mxu0
        %v2225 = vadd.f32 %v1753, %v2224
        %v2226 = vpop.f32.mrb[0].mxu0
        %2227 = vmatprep.mubr.bf16.mxu0 %v1584
        %2228 = vmatmul.mubr.bf16.gmra.mrb[0].mxu0 %v1583
        %v2229 = vpop.f32.mrb[0].mxu0
        %v2230 = vadd.f32 %v1753, %v2229
        %v2231 = vpop.f32.mrb[0].mxu0
        %v2232 = vpop.f32.mrb[0].mxu0
        %v2233 = vadd.f32 %v1753, %v2232
        %v2234 = vpop.f32.mrb[0].mxu0
        %2235 = vmatprep.mubr.bf16.mxu0 %v1590
        %2236 = vmatmul.mubr.bf16.gmra.mrb[0].mxu0 %v1589
        %v2237 = vpop.f32.mrb[0].mxu0
        %v2238 = vadd.f32 %v1753, %v2237
        %v2239 = vpop.f32.mrb[0].mxu0
        %v2240 = vpop.f32.mrb[0].mxu0
        %v2241 = vadd.f32 %v1753, %v2240
        %v2242 = vpop.f32.mrb[0].mxu0
        %2243 = vmatprep.mubr.bf16.mxu0 %v1596
        %2244 = vmatmul.mubr.bf16.gmra.mrb[0].mxu0 %v1595
        %v2245 = vpop.f32.mrb[0].mxu0
        %v2246 = vadd.f32 %v1753, %v2245
        %v2247 = vpop.f32.mrb[0].mxu0
        %v2248 = vpop.f32.mrb[0].mxu0
        %v2249 = vadd.f32 %v1753, %v2248
        %v2250 = vpop.f32.mrb[0].mxu0
        %2251 = vdwg.mxu0
        %2252 = vmatprep.subr.bf16.mxu0 0
        %2253 = vmatpush1.bf16.msra.mxu0 %v2059
        %2254 = vmatprep.subr.bf16.mxu0 0
        %2255 = vmatpush1.bf16.msra.mxu0 %v2060
        %2256 = vmatprep.subr.bf16.mxu0 0
        %2257 = vmatpush1.bf16.msra.mxu0 %v2061
        %2258 = vmatprep.subr.bf16.mxu0 0
        %2259 = vmatpush1.bf16.msra.mxu0 %v2062
        %2260 = vmatprep.subr.bf16.mxu0 0
        %2261 = vmatpush1.bf16.msra.mxu0 %v2063
        %2262 = vmatprep.subr.bf16.mxu0 0
        %2263 = vmatpush1.bf16.msra.mxu0 %v2064
        %2264 = vmatprep.subr.bf16.mxu0 0
        %2265 = vmatpush1.bf16.msra.mxu0 %v2065
        %2266 = vmatprep.subr.bf16.mxu0 0
        %2267 = vmatpush1.bf16.msra.mxu0 %v2066
        %2268 = vmatprep.subr.bf16.mxu0 0
        %2269 = vmatpush1.bf16.msra.mxu0 %v2067
        %2270 = vmatprep.subr.bf16.mxu0 0
        %2271 = vmatpush1.bf16.msra.mxu0 %v2068
        %2272 = vmatprep.subr.bf16.mxu0 0
        %2273 = vmatpush1.bf16.msra.mxu0 %v2069
        %2274 = vmatprep.subr.bf16.mxu0 0
        %2275 = vmatpush1.bf16.msra.mxu0 %v2070
        %2276 = vmatprep.subr.bf16.mxu0 0
        %2277 = vmatpush1.bf16.msra.mxu0 %v2071
        %2278 = vmatprep.subr.bf16.mxu0 0
        %2279 = vmatpush1.bf16.msra.mxu0 %v2072
        %2280 = vmatprep.subr.bf16.mxu0 0
        %2281 = vmatpush1.bf16.msra.mxu0 %v2073
        %2282 = vmatprep.subr.bf16.mxu0 0
        %2283 = vmatpush1.bf16.msra.mxu0 %v2074
        %2284 = vmatprep.mubr.bf16.mxu0 %v1580
        %2285 = vmatmul.mubr.bf16.gmra.mrb[0].mxu0 %v1579
        %v2286 = vpop.f32.mrb[0].mxu0
        %v2287 = vadd.f32 %v2222, %v2286
        %v2288 = vpop.f32.mrb[0].mxu0
        %v2289 = vpop.f32.mrb[0].mxu0
        %v2290 = vadd.f32 %v2225, %v2289
        %v2291 = vpop.f32.mrb[0].mxu0
        %2292 = vmatprep.mubr.bf16.mxu0 %v1586
        %2293 = vmatmul.mubr.bf16.gmra.mrb[0].mxu0 %v1585
        %v2294 = vpop.f32.mrb[0].mxu0
        %v2295 = vadd.f32 %v2230, %v2294
        %v2296 = vpop.f32.mrb[0].mxu0
        %v2297 = vpop.f32.mrb[0].mxu0
        %v2298 = vadd.f32 %v2233, %v2297
        %v2299 = vpop.f32.mrb[0].mxu0
        %2300 = vmatprep.mubr.bf16.mxu0 %v1592
        %2301 = vmatmul.mubr.bf16.gmra.mrb[0].mxu0 %v1591
        %v2302 = vpop.f32.mrb[0].mxu0
        %v2303 = vadd.f32 %v2238, %v2302
        %v2304 = vpop.f32.mrb[0].mxu0
        %v2305 = vpop.f32.mrb[0].mxu0
        %v2306 = vadd.f32 %v2241, %v2305
        %v2307 = vpop.f32.mrb[0].mxu0
        %2308 = vmatprep.mubr.bf16.mxu0 %v1598
        %2309 = vmatmul.mubr.bf16.gmra.mrb[0].mxu0 %v1597
        %v2310 = vpop.f32.mrb[0].mxu0
        %v2311 = vadd.f32 %v2246, %v2310
        %v2312 = vpop.f32.mrb[0].mxu0
        %v2313 = vpop.f32.mrb[0].mxu0
        %v2314 = vadd.f32 %v2249, %v2313
        %v2315 = vpop.f32.mrb[0].mxu0
        %2316 = vdwg.mxu0
        %2317 = vmatprep.subr.bf16.mxu0 0
        %2318 = vmatpush1.bf16.msra.mxu0 %v2075
        %2319 = vmatprep.subr.bf16.mxu0 0
        %2320 = vmatpush1.bf16.msra.mxu0 %v2076
        %2321 = vmatprep.subr.bf16.mxu0 0
        %2322 = vmatpush1.bf16.msra.mxu0 %v2077
        %2323 = vmatprep.subr.bf16.mxu0 0
        %2324 = vmatpush1.bf16.msra.mxu0 %v2078
        %2325 = vmatprep.subr.bf16.mxu0 0
        %2326 = vmatpush1.bf16.msra.mxu0 %v2079
        %2327 = vmatprep.subr.bf16.mxu0 0
        %2328 = vmatpush1.bf16.msra.mxu0 %v2080
        %2329 = vmatprep.subr.bf16.mxu0 0
        %2330 = vmatpush1.bf16.msra.mxu0 %v2081
        %2331 = vmatprep.subr.bf16.mxu0 0
        %2332 = vmatpush1.bf16.msra.mxu0 %v2082
        %2333 = vmatprep.subr.bf16.mxu0 0
        %2334 = vmatpush1.bf16.msra.mxu0 %v2083
        %2335 = vmatprep.subr.bf16.mxu0 0
        %2336 = vmatpush1.bf16.msra.mxu0 %v2084
        %2337 = vmatprep.subr.bf16.mxu0 0
        %2338 = vmatpush1.bf16.msra.mxu0 %v2085
        %2339 = vmatprep.subr.bf16.mxu0 0
        %2340 = vmatpush1.bf16.msra.mxu0 %v2086
        %2341 = vmatprep.subr.bf16.mxu0 0
        %2342 = vmatpush1.bf16.msra.mxu0 %v2087
        %2343 = vmatprep.subr.bf16.mxu0 0
        %2344 = vmatpush1.bf16.msra.mxu0 %v2088
        %2345 = vmatprep.subr.bf16.mxu0 0
        %2346 = vmatpush1.bf16.msra.mxu0 %v2089
        %2347 = vmatprep.subr.bf16.mxu0 0
        %2348 = vmatpush1.bf16.msra.mxu0 %v2090
        %2349 = vmatprep.mubr.bf16.mxu0 %v1582
        %2350 = vmatmul.mubr.bf16.gmra.mrb[0].mxu0 %v1581
        %v2351 = vpop.f32.mrb[0].mxu0
        %v2352 = vadd.f32 %v2287, %v2351
        %v2353 = vpop.f32.mrb[0].mxu0
        %v2354 = vpop.f32.mrb[0].mxu0
        %v2355 = vadd.f32 %v2290, %v2354
        %v2356 = vpop.f32.mrb[0].mxu0
        %2357 = vmatprep.mubr.bf16.mxu0 %v1588
        %2358 = vmatmul.mubr.bf16.gmra.mrb[0].mxu0 %v1587
        %v2359 = vpop.f32.mrb[0].mxu0
        %v2360 = vadd.f32 %v2295, %v2359
        %v2361 = vpop.f32.mrb[0].mxu0
        %v2362 = vpop.f32.mrb[0].mxu0
        %v2363 = vadd.f32 %v2298, %v2362
        %v2364 = vpop.f32.mrb[0].mxu0
        %2365 = vmatprep.mubr.bf16.mxu0 %v1594
        %2366 = vmatmul.mubr.bf16.gmra.mrb[0].mxu0 %v1593
        %v2367 = vpop.f32.mrb[0].mxu0
        %v2368 = vadd.f32 %v2303, %v2367
        %v2369 = vpop.f32.mrb[0].mxu0
        %v2370 = vpop.f32.mrb[0].mxu0
        %v2371 = vadd.f32 %v2306, %v2370
        %v2372 = vpop.f32.mrb[0].mxu0
        %2373 = vmatprep.mubr.bf16.mxu0 %v1600
        %2374 = vmatmul.mubr.bf16.gmra.mrb[0].mxu0 %v1599
        %v2375 = vpop.f32.mrb[0].mxu0
        %v2376 = vadd.f32 %v2311, %v2375
        %v2377 = vpop.f32.mrb[0].mxu0
        %v2378 = vpop.f32.mrb[0].mxu0
        %v2379 = vadd.f32 %v2314, %v2378
        %v2380 = vpop.f32.mrb[0].mxu0
        %2381 = vdwg.mxu0
        %2382 = vmatprep.subr.bf16.mxu0 0
        %2383 = vmatpush1.bf16.msra.mxu0 %v2091
        %2384 = vmatprep.subr.bf16.mxu0 0
        %2385 = vmatpush1.bf16.msra.mxu0 %v2092
        %2386 = vmatprep.subr.bf16.mxu0 0
        %2387 = vmatpush1.bf16.msra.mxu0 %v2093
        %2388 = vmatprep.subr.bf16.mxu0 0
        %2389 = vmatpush1.bf16.msra.mxu0 %v2094
        %2390 = vmatprep.subr.bf16.mxu0 0
        %2391 = vmatpush1.bf16.msra.mxu0 %v2095
        %2392 = vmatprep.subr.bf16.mxu0 0
        %2393 = vmatpush1.bf16.msra.mxu0 %v2096
        %2394 = vmatprep.subr.bf16.mxu0 0
        %2395 = vmatpush1.bf16.msra.mxu0 %v2097
        %2396 = vmatprep.subr.bf16.mxu0 0
        %2397 = vmatpush1.bf16.msra.mxu0 %v2098
        %2398 = vmatprep.subr.bf16.mxu0 0
        %2399 = vmatpush1.bf16.msra.mxu0 %v2099
        %2400 = vmatprep.subr.bf16.mxu0 0
        %2401 = vmatpush1.bf16.msra.mxu0 %v2100
        %2402 = vmatprep.subr.bf16.mxu0 0
        %2403 = vmatpush1.bf16.msra.mxu0 %v2101
        %2404 = vmatprep.subr.bf16.mxu0 0
        %2405 = vmatpush1.bf16.msra.mxu0 %v2102
        %2406 = vmatprep.subr.bf16.mxu0 0
        %2407 = vmatpush1.bf16.msra.mxu0 %v2103
        %2408 = vmatprep.subr.bf16.mxu0 0
        %2409 = vmatpush1.bf16.msra.mxu0 %v2104
        %2410 = vmatprep.subr.bf16.mxu0 0
        %2411 = vmatpush1.bf16.msra.mxu0 %v2105
        %2412 = vmatprep.subr.bf16.mxu0 0
        %2413 = vmatpush1.bf16.msra.mxu0 %v2106
        %2414 = vmatprep.mubr.bf16.mxu0 %v1584
        %2415 = vmatmul.mubr.bf16.gmra.mrb[0].mxu0 %v1583
        %v2416 = vpop.f32.mrb[0].mxu0
        %v2417 = vadd.f32 %v2352, %v2416
        %v2418 = vpop.f32.mrb[0].mxu0
        %v2419 = vpop.f32.mrb[0].mxu0
        %v2420 = vadd.f32 %v2355, %v2419
        %v2421 = vpop.f32.mrb[0].mxu0
        %2422 = vmatprep.mubr.bf16.mxu0 %v1590
        %2423 = vmatmul.mubr.bf16.gmra.mrb[0].mxu0 %v1589
        %v2424 = vpop.f32.mrb[0].mxu0
        %v2425 = vadd.f32 %v2360, %v2424
        %v2426 = vpop.f32.mrb[0].mxu0
        %v2427 = vpop.f32.mrb[0].mxu0
        %v2428 = vadd.f32 %v2363, %v2427
        %v2429 = vpop.f32.mrb[0].mxu0
        %2430 = vmatprep.mubr.bf16.mxu0 %v1596
        %2431 = vmatmul.mubr.bf16.gmra.mrb[0].mxu0 %v1595
        %v2432 = vpop.f32.mrb[0].mxu0
        %v2433 = vadd.f32 %v2368, %v2432
        %v2434 = vpop.f32.mrb[0].mxu0
        %v2435 = vpop.f32.mrb[0].mxu0
        %v2436 = vadd.f32 %v2371, %v2435
        %v2437 = vpop.f32.mrb[0].mxu0
        %2438 = vmatprep.mubr.bf16.mxu0 %v1602
        %2439 = vmatmul.mubr.bf16.gmra.mrb[0].mxu0 %v1601
        %v2440 = vpop.f32.mrb[0].mxu0
        %v2441 = vadd.f32 %v2376, %v2440
        %v2442 = vpop.f32.mrb[0].mxu0
        %v2443 = vpop.f32.mrb[0].mxu0
        %v2444 = vadd.f32 %v2379, %v2443
        %v2445 = vpop.f32.mrb[0].mxu0
        %2446 = vdwg.mxu0
        %2447 = vmatprep.subr.bf16.mxu0 0
        %2448 = vmatpush1.bf16.msra.mxu0 %v2107
        %2449 = vmatprep.subr.bf16.mxu0 0
        %2450 = vmatpush1.bf16.msra.mxu0 %v2108
        %2451 = vmatprep.subr.bf16.mxu0 0
        %2452 = vmatpush1.bf16.msra.mxu0 %v2109
        %2453 = vmatprep.subr.bf16.mxu0 0
        %2454 = vmatpush1.bf16.msra.mxu0 %v2110
        %2455 = vmatprep.subr.bf16.mxu0 0
        %2456 = vmatpush1.bf16.msra.mxu0 %v2111
        %2457 = vmatprep.subr.bf16.mxu0 0
        %2458 = vmatpush1.bf16.msra.mxu0 %v2112
        %2459 = vmatprep.subr.bf16.mxu0 0
        %2460 = vmatpush1.bf16.msra.mxu0 %v2113
        %2461 = vmatprep.subr.bf16.mxu0 0
        %2462 = vmatpush1.bf16.msra.mxu0 %v2114
        %2463 = vmatprep.subr.bf16.mxu0 0
        %2464 = vmatpush1.bf16.msra.mxu0 0
        %2465 = vmatprep.subr.bf16.mxu0 0
        %2466 = vmatpush1.bf16.msra.mxu0 0
        %2467 = vmatprep.subr.bf16.mxu0 0
        %2468 = vmatpush1.bf16.msra.mxu0 0
        %2469 = vmatprep.subr.bf16.mxu0 0
        %2470 = vmatpush1.bf16.msra.mxu0 0
        %2471 = vmatprep.subr.bf16.mxu0 0
        %2472 = vmatpush1.bf16.msra.mxu0 0
        %2473 = vmatprep.subr.bf16.mxu0 0
        %2474 = vmatpush1.bf16.msra.mxu0 0
        %2475 = vmatprep.subr.bf16.mxu0 0
        %2476 = vmatpush1.bf16.msra.mxu0 0
        %2477 = vmatprep.subr.bf16.mxu0 0
        %2478 = vmatpush1.bf16.msra.mxu0 0
        %2479 = vmatprep.mubr.bf16.mxu0 0
        %2480 = vmatmul.mubr.bf16.gmra.mrb[0].mxu0 %v1585
        %v2481 = vpop.f32.mrb[0].mxu0
        %v2482 = vadd.f32 %v2417, %v2481
        %v2483 = vpop.f32.mrb[0].mxu0
        %v2484 = vpop.f32.mrb[0].mxu0
        %v2485 = vadd.f32 %v2420, %v2484
        %v2486 = vpop.f32.mrb[0].mxu0
        %2487 = vmatprep.mubr.bf16.mxu0 0
        %2488 = vmatmul.mubr.bf16.gmra.mrb[0].mxu0 %v1591
        %v2489 = vpop.f32.mrb[0].mxu0
        %v2490 = vadd.f32 %v2425, %v2489
        %v2491 = vpop.f32.mrb[0].mxu0
        %v2492 = vpop.f32.mrb[0].mxu0
        %v2493 = vadd.f32 %v2428, %v2492
        %v2494 = vpop.f32.mrb[0].mxu0
        %2495 = vmatprep.mubr.bf16.mxu0 0
        %2496 = vmatmul.mubr.bf16.gmra.mrb[0].mxu0 %v1597
        %v2497 = vpop.f32.mrb[0].mxu0
        %v2498 = vadd.f32 %v2433, %v2497
        %v2499 = vpop.f32.mrb[0].mxu0
        %v2500 = vpop.f32.mrb[0].mxu0
        %v2501 = vadd.f32 %v2436, %v2500
        %v2502 = vpop.f32.mrb[0].mxu0
        %2503 = vmatprep.mubr.bf16.mxu0 0
        %2504 = vmatmul.mubr.bf16.gmra.mrb[0].mxu0 %v1603
        %v2505 = vpop.f32.mrb[0].mxu0
        %v2506 = vadd.f32 %v2441, %v2505
        %v2507 = vpop.f32.mrb[0].mxu0
        %v2508 = vpop.f32.mrb[0].mxu0
        %v2509 = vadd.f32 %v2444, %v2508
        %v2510 = vpop.f32.mrb[0].mxu0
        %2511 = vdwg.mxu0
        %v2512 = vmax.f32 %v2482, 0.0
        %v2513 = vmax.f32 %v2485, 0.0
        %v2514 = vmax.f32 %v2490, 0.0
        %v2515 = vmax.f32 %v2493, 0.0
        %v2516 = vmax.f32 %v2498, 0.0
        %v2517 = vmax.f32 %v2501, 0.0
        %v2518 = vmax.f32 %v2506, 0.0
        %v2519 = vmax.f32 %v2509, 0.0
        %2520 = vst [vmem:[%s1446 + $0x1] sm:$0xff] %v2512
        %2521 = vst [vmem:[%s1446 + $0x11] sm:$0xff] %v2513
        %2522 = vst [vmem:[%s1446 + $0x21] sm:$0xff] %v2514
        %2523 = vst [vmem:[%s1446 + $0x31] sm:$0xff] %v2515
        %2524 = vst [vmem:[%s1446 + $0x41] sm:$0xff] %v2516
        %2525 = vst [vmem:[%s1446 + $0x51] sm:$0xff] %v2517
        %2526 = vst [vmem:[%s1446 + $0x61] sm:$0xff] %v2518
        %2527 = vst [vmem:[%s1446 + $0x71] sm:$0xff] %v2519
        %v2528 = vld [vmem:[#allocation2] sm:$0xff]
        %v2529 = vld [vmem:[#allocation2 + $0x8] sm:$0x3]
        %v2530 = vld [vmem:[#allocation2 + $0x10] sm:$0xff]
        %v2531 = vld [vmem:[#allocation2 + $0x18] sm:$0x3]
        %v2532 = vld [vmem:[#allocation2 + $0x20] sm:$0xff]
        %v2533 = vld [vmem:[#allocation2 + $0x28] sm:$0x3]
        %v2534 = vld [vmem:[#allocation2 + $0x30] sm:$0xff]
        %v2535 = vld [vmem:[#allocation2 + $0x38] sm:$0x3]
        %v2536 = vld [vmem:[#allocation2 + $0x40] sm:$0xff]
        %v2537 = vld [vmem:[#allocation2 + $0x48] sm:$0x3]
        %v2538 = vld [vmem:[#allocation2 + $0x50] sm:$0xff]
        %v2539 = vld [vmem:[#allocation2 + $0x58] sm:$0x3]
        %v2540 = vld [vmem:[#allocation2 + $0x60] sm:$0xff]
        %v2541 = vld [vmem:[#allocation2 + $0x68] sm:$0x3]
        %v2542 = vld [vmem:[#allocation2 + $0x70] sm:$0xff]
        %v2543 = vld [vmem:[#allocation2 + $0x78] sm:$0x3]
        %v2544 = vld [vmem:[#allocation2 + $0x80] sm:$0xff]
        %v2545 = vld [vmem:[#allocation2 + $0x88] sm:$0x3]
        %v2546 = vld [vmem:[#allocation2 + $0x90] sm:$0xff]
        %v2547 = vld [vmem:[#allocation2 + $0x98] sm:$0x3]
        %v2564 = vrot.slane %v2528, 1
        %v2565 = vrot.slane %v2529, 1
        %v2566 = vsel %vm1491, %v2564, %v2565
        %v2567 = vrot.slane %v2530, 1
        %v2568 = vrot.slane %v2531, 1
        %v2569 = vsel %vm1491, %v2567, %v2568
        %v2570 = vrot.slane %v2532, 1
        %v2571 = vrot.slane %v2533, 1
        %v2572 = vsel %vm1491, %v2570, %v2571
        %v2573 = vrot.slane %v2534, 1
        %v2574 = vrot.slane %v2535, 1
        %v2575 = vsel %vm1491, %v2573, %v2574
        %v2576 = vrot.slane %v2536, 1
        %v2577 = vrot.slane %v2537, 1
        %v2578 = vsel %vm1491, %v2576, %v2577
        %v2579 = vrot.slane %v2538, 1
        %v2580 = vrot.slane %v2539, 1
        %v2581 = vsel %vm1491, %v2579, %v2580
        %v2582 = vrot.slane %v2540, 1
        %v2583 = vrot.slane %v2541, 1
        %v2584 = vsel %vm1491, %v2582, %v2583
        %v2585 = vrot.slane %v2542, 1
        %v2586 = vrot.slane %v2543, 1
        %v2587 = vsel %vm1491, %v2585, %v2586
        %v2596 = vrot.slane %v2528, 2
        %v2597 = vrot.slane %v2529, 2
        %v2598 = vsel %vm1524, %v2596, %v2597
        %v2599 = vrot.slane %v2530, 2
        %v2600 = vrot.slane %v2531, 2
        %v2601 = vsel %vm1524, %v2599, %v2600
        %v2602 = vrot.slane %v2532, 2
        %v2603 = vrot.slane %v2533, 2
        %v2604 = vsel %vm1524, %v2602, %v2603
        %v2605 = vrot.slane %v2534, 2
        %v2606 = vrot.slane %v2535, 2
        %v2607 = vsel %vm1524, %v2605, %v2606
        %v2608 = vrot.slane %v2536, 2
        %v2609 = vrot.slane %v2537, 2
        %v2610 = vsel %vm1524, %v2608, %v2609
        %v2611 = vrot.slane %v2538, 2
        %v2612 = vrot.slane %v2539, 2
        %v2613 = vsel %vm1524, %v2611, %v2612
        %v2614 = vrot.slane %v2540, 2
        %v2615 = vrot.slane %v2541, 2
        %v2616 = vsel %vm1524, %v2614, %v2615
        %v2617 = vrot.slane %v2542, 2
        %v2618 = vrot.slane %v2543, 2
        %v2619 = vsel %vm1524, %v2617, %v2618
        %v2630 = vrot.slane %v2544, 1
        %v2631 = vrot.slane %v2545, 1
        %v2632 = vsel %vm1491, %v2630, %v2631
        %v2634 = vrot.slane %v2544, 2
        %v2635 = vrot.slane %v2545, 2
        %v2636 = vsel %vm1524, %v2634, %v2635
        %v2640 = vrot.slane %v2546, 1
        %v2641 = vrot.slane %v2547, 1
        %v2642 = vsel %vm1491, %v2640, %v2641
        %v2644 = vrot.slane %v2546, 2
        %v2645 = vrot.slane %v2547, 2
        %v2646 = vsel %vm1524, %v2644, %v2645
        %v2648 = vpack.c.bf16 %v2530, %v2528
        %v2649 = vpack.c.bf16 %v2569, %v2566
        %v2650 = vpack.c.bf16 %v2601, %v2598
        %v2651 = vpack.c.bf16 %v2532, %v2530
        %v2652 = vpack.c.bf16 %v2572, %v2569
        %v2653 = vpack.c.bf16 %v2604, %v2601
        %v2654 = vpack.c.bf16 %v2534, %v2532
        %v2655 = vpack.c.bf16 %v2575, %v2572
        %v2656 = vpack.c.bf16 %v2607, %v2604
        %v2657 = vpack.c.bf16 %v2536, %v2534
        %v2658 = vpack.c.bf16 %v2578, %v2575
        %v2659 = vpack.c.bf16 %v2610, %v2607
        %v2660 = vpack.c.bf16 %v2538, %v2536
        %v2661 = vpack.c.bf16 %v2581, %v2578
        %v2662 = vpack.c.bf16 %v2613, %v2610
        %v2663 = vpack.c.bf16 %v2540, %v2538
        %v2664 = vpack.c.bf16 %v2584, %v2581
        %v2665 = vpack.c.bf16 %v2616, %v2613
        %v2666 = vpack.c.bf16 %v2542, %v2540
        %v2667 = vpack.c.bf16 %v2587, %v2584
        %v2668 = vpack.c.bf16 %v2619, %v2616
        %v2669 = vpack.c.bf16 %v2544, %v2542
        %v2670 = vpack.c.bf16 %v2632, %v2587
        %v2671 = vpack.c.bf16 %v2636, %v2619
        %v2672 = vpack.c.bf16 %v2546, %v2544
        %v2673 = vpack.c.bf16 %v2642, %v2632
        %v2674 = vpack.c.bf16 %v2646, %v2636
        %s2675 = scalar_lea.vmem [#allocation19], 576
        %v2676 = vld [vmem:[%s2675] sm:$0xf]
        %v2677 = vld [vmem:[%s2675 + $0x4] sm:$0xf]
        %v2678 = vld [vmem:[%s2675 + $0x8] sm:$0xf]
        %v2679 = vld [vmem:[%s2675 + $0xc] sm:$0xf]
        %v2680 = vld [vmem:[%s2675 + $0x10] sm:$0xf]
        %v2681 = vld [vmem:[%s2675 + $0x14] sm:$0xf]
        %v2682 = vld [vmem:[%s2675 + $0x18] sm:$0xf]
        %v2683 = vld [vmem:[%s2675 + $0x1c] sm:$0xf]
        %v2684 = vld [vmem:[%s2675 + $0x20] sm:$0xf]
        %v2685 = vld [vmem:[%s2675 + $0x24] sm:$0xf]
        %v2686 = vld [vmem:[%s2675 + $0x28] sm:$0xf]
        %v2687 = vld [vmem:[%s2675 + $0x2c] sm:$0xf]
        %v2688 = vld [vmem:[%s2675 + $0x30] sm:$0xf]
        %v2689 = vld [vmem:[%s2675 + $0x34] sm:$0xf]
        %v2690 = vld [vmem:[%s2675 + $0x38] sm:$0xf]
        %v2691 = vld [vmem:[%s2675 + $0x3c] sm:$0xf]
        %v2692 = vld [vmem:[%s2675 + $0x40] sm:$0xf]
        %v2693 = vld [vmem:[%s2675 + $0x44] sm:$0xf]
        %v2694 = vld [vmem:[%s2675 + $0x48] sm:$0xf]
        %v2695 = vld [vmem:[%s2675 + $0x4c] sm:$0xf]
        %v2696 = vld [vmem:[%s2675 + $0x50] sm:$0xf]
        %v2697 = vld [vmem:[%s2675 + $0x54] sm:$0xf]
        %v2698 = vld [vmem:[%s2675 + $0x58] sm:$0xf]
        %v2699 = vld [vmem:[%s2675 + $0x5c] sm:$0xf]
        %v2700 = vld [vmem:[%s2675 + $0x60] sm:$0xf]
        %v2701 = vld [vmem:[%s2675 + $0x64] sm:$0xf]
        %v2702 = vld [vmem:[%s2675 + $0x68] sm:$0xf]
        %v2703 = vld [vmem:[%s2675 + $0x6c] sm:$0xf]
        %v2704 = vld [vmem:[%s2675 + $0x70] sm:$0xf]
        %v2705 = vld [vmem:[%s2675 + $0x74] sm:$0xf]
        %v2706 = vld [vmem:[%s2675 + $0x78] sm:$0xf]
        %v2707 = vld [vmem:[%s2675 + $0x7c] sm:$0xf]
        %v2708 = vld [vmem:[%s2675 + $0x80] sm:$0xf]
        %v2709 = vld [vmem:[%s2675 + $0x84] sm:$0xf]
        %v2710 = vld [vmem:[%s2675 + $0x88] sm:$0xf]
        %v2711 = vld [vmem:[%s2675 + $0x8c] sm:$0xf]
        %v2712 = vld [vmem:[%s2675 + $0x90] sm:$0xf]
        %v2713 = vld [vmem:[%s2675 + $0x94] sm:$0xf]
        %v2714 = vld [vmem:[%s2675 + $0x98] sm:$0xf]
        %v2715 = vld [vmem:[%s2675 + $0x9c] sm:$0xf]
        %v2716 = vld [vmem:[%s2675 + $0xa0] sm:$0xf]
        %v2717 = vld [vmem:[%s2675 + $0xa4] sm:$0xf]
        %v2718 = vld [vmem:[%s2675 + $0xa8] sm:$0xf]
        %v2719 = vld [vmem:[%s2675 + $0xac] sm:$0xf]
        %v2720 = vld [vmem:[%s2675 + $0xb0] sm:$0xf]
        %v2721 = vld [vmem:[%s2675 + $0xb4] sm:$0xf]
        %v2722 = vld [vmem:[%s2675 + $0xb8] sm:$0xf]
        %v2723 = vld [vmem:[%s2675 + $0xbc] sm:$0xf]
        %v2724 = vld [vmem:[%s2675 + $0xc0] sm:$0xf]
        %v2725 = vld [vmem:[%s2675 + $0xc4] sm:$0xf]
        %v2726 = vld [vmem:[%s2675 + $0xc8] sm:$0xf]
        %v2727 = vld [vmem:[%s2675 + $0xcc] sm:$0xf]
        %v2728 = vld [vmem:[%s2675 + $0xd0] sm:$0xf]
        %v2729 = vld [vmem:[%s2675 + $0xd4] sm:$0xf]
        %v2730 = vld [vmem:[%s2675 + $0xd8] sm:$0xf]
        %v2731 = vld [vmem:[%s2675 + $0xdc] sm:$0xf]
        %v2732 = vld [vmem:[%s2675 + $0xe0] sm:$0xf]
        %v2733 = vld [vmem:[%s2675 + $0xe4] sm:$0xf]
        %v2734 = vld [vmem:[%s2675 + $0xe8] sm:$0xf]
        %v2735 = vld [vmem:[%s2675 + $0xec] sm:$0xf]
        %v2736 = vld [vmem:[%s2675 + $0xf0] sm:$0xf]
        %v2737 = vld [vmem:[%s2675 + $0xf4] sm:$0xf]
        %v2738 = vld [vmem:[%s2675 + $0xf8] sm:$0xf]
        %v2739 = vld [vmem:[%s2675 + $0xfc] sm:$0xf]
        %v2740 = vld [vmem:[%s2675 + $0x100] sm:$0xf]
        %v2741 = vld [vmem:[%s2675 + $0x104] sm:$0xf]
        %v2742 = vld [vmem:[%s2675 + $0x108] sm:$0xf]
        %v2743 = vld [vmem:[%s2675 + $0x10c] sm:$0xf]
        %v2744 = vld [vmem:[%s2675 + $0x110] sm:$0xf]
        %v2745 = vld [vmem:[%s2675 + $0x114] sm:$0xf]
        %v2746 = vld [vmem:[%s2675 + $0x118] sm:$0xf]
        %v2747 = vld [vmem:[%s2675 + $0x11c] sm:$0xf]
        %v2748 = vld [vmem:[%s2675 + $0x120] sm:$0xf]
        %v2749 = vld [vmem:[%s2675 + $0x124] sm:$0xf]
        %v2750 = vld [vmem:[%s2675 + $0x128] sm:$0xf]
        %v2751 = vld [vmem:[%s2675 + $0x12c] sm:$0xf]
        %v2752 = vld [vmem:[%s2675 + $0x130] sm:$0xf]
        %v2753 = vld [vmem:[%s2675 + $0x134] sm:$0xf]
        %v2754 = vld [vmem:[%s2675 + $0x138] sm:$0xf]
        %v2755 = vld [vmem:[%s2675 + $0x13c] sm:$0xf]
        %v2756 = vld [vmem:[%s2675 + $0x140] sm:$0xf]
        %v2757 = vld [vmem:[%s2675 + $0x144] sm:$0xf]
        %v2758 = vld [vmem:[%s2675 + $0x148] sm:$0xf]
        %v2759 = vld [vmem:[%s2675 + $0x14c] sm:$0xf]
        %v2760 = vld [vmem:[%s2675 + $0x150] sm:$0xf]
        %v2761 = vld [vmem:[%s2675 + $0x154] sm:$0xf]
        %v2762 = vld [vmem:[%s2675 + $0x158] sm:$0xf]
        %v2763 = vld [vmem:[%s2675 + $0x15c] sm:$0xf]
        %v2764 = vld [vmem:[%s2675 + $0x160] sm:$0xf]
        %v2765 = vld [vmem:[%s2675 + $0x164] sm:$0xf]
        %v2766 = vld [vmem:[%s2675 + $0x168] sm:$0xf]
        %v2767 = vld [vmem:[%s2675 + $0x16c] sm:$0xf]
        %v2768 = vld [vmem:[%s2675 + $0x170] sm:$0xf]
        %v2769 = vld [vmem:[%s2675 + $0x174] sm:$0xf]
        %v2770 = vld [vmem:[%s2675 + $0x178] sm:$0xf]
        %v2771 = vld [vmem:[%s2675 + $0x17c] sm:$0xf]
        %v2772 = vld [vmem:[%s2675 + $0x180] sm:$0xf]
        %v2773 = vld [vmem:[%s2675 + $0x184] sm:$0xf]
        %v2774 = vld [vmem:[%s2675 + $0x188] sm:$0xf]
        %v2775 = vld [vmem:[%s2675 + $0x18c] sm:$0xf]
        %v2776 = vld [vmem:[%s2675 + $0x190] sm:$0xf]
        %v2777 = vld [vmem:[%s2675 + $0x194] sm:$0xf]
        %v2778 = vld [vmem:[%s2675 + $0x198] sm:$0xf]
        %v2779 = vld [vmem:[%s2675 + $0x19c] sm:$0xf]
        %v2780 = vld [vmem:[%s2675 + $0x1a0] sm:$0xf]
        %v2781 = vld [vmem:[%s2675 + $0x1a4] sm:$0xf]
        %v2782 = vld [vmem:[%s2675 + $0x1a8] sm:$0xf]
        %v2783 = vld [vmem:[%s2675 + $0x1ac] sm:$0xf]
        %v2784 = vld [vmem:[%s2675 + $0x1b0] sm:$0xf]
        %v2785 = vld [vmem:[%s2675 + $0x1b4] sm:$0xf]
        %v2786 = vld [vmem:[%s2675 + $0x1b8] sm:$0xf]
        %v2787 = vld [vmem:[%s2675 + $0x1bc] sm:$0xf]
        %v2788 = vld [vmem:[%s2675 + $0x1c0] sm:$0xf]
        %v2789 = vld [vmem:[%s2675 + $0x1c4] sm:$0xf]
        %v2790 = vld [vmem:[%s2675 + $0x1c8] sm:$0xf]
        %v2791 = vld [vmem:[%s2675 + $0x1cc] sm:$0xf]
        %v2792 = vld [vmem:[%s2675 + $0x1d0] sm:$0xf]
        %v2793 = vld [vmem:[%s2675 + $0x1d4] sm:$0xf]
        %v2794 = vld [vmem:[%s2675 + $0x1d8] sm:$0xf]
        %v2795 = vld [vmem:[%s2675 + $0x1dc] sm:$0xf]
        %v2796 = vld [vmem:[%s2675 + $0x1e0] sm:$0xf]
        %v2797 = vld [vmem:[%s2675 + $0x1e4] sm:$0xf]
        %v2798 = vld [vmem:[%s2675 + $0x1e8] sm:$0xf]
        %v2799 = vld [vmem:[%s2675 + $0x1ec] sm:$0xf]
        %v2800 = vld [vmem:[%s2675 + $0x1f0] sm:$0xf]
        %v2801 = vld [vmem:[%s2675 + $0x1f4] sm:$0xf]
        %v2802 = vld [vmem:[%s2675 + $0x1f8] sm:$0xf]
        %v2803 = vld [vmem:[%s2675 + $0x1fc] sm:$0xf]
        %v2804 = vld [vmem:[%s2675 + $0x200] sm:$0xf]
        %v2805 = vld [vmem:[%s2675 + $0x204] sm:$0xf]
        %v2806 = vld [vmem:[%s2675 + $0x208] sm:$0xf]
        %v2807 = vld [vmem:[%s2675 + $0x20c] sm:$0xf]
        %v2808 = vld [vmem:[%s2675 + $0x210] sm:$0xf]
        %v2809 = vld [vmem:[%s2675 + $0x214] sm:$0xf]
        %v2810 = vld [vmem:[%s2675 + $0x218] sm:$0xf]
        %v2811 = vld [vmem:[%s2675 + $0x21c] sm:$0xf]
        %v2812 = vld [vmem:[%s2675 + $0x220] sm:$0xf]
        %v2813 = vld [vmem:[%s2675 + $0x224] sm:$0xf]
        %v2814 = vld [vmem:[%s2675 + $0x228] sm:$0xf]
        %v2815 = vld [vmem:[%s2675 + $0x22c] sm:$0xf]
        %v2816 = vld [vmem:[%s2675 + $0x230] sm:$0xf]
        %v2817 = vld [vmem:[%s2675 + $0x234] sm:$0xf]
        %v2818 = vld [vmem:[%s2675 + $0x238] sm:$0xf]
        %v2819 = vld [vmem:[%s2675 + $0x23c] sm:$0xf]
        %s2820 = scalar_lea.vmem [#allocation20], 1
        %v2821 = vld [vmem:[%s2820] sm:$0x1]
        %v2823 = vlaneseq
        %v2824 = vshrl.u32 %v2823, 7
        %v2825 = vsub.s32 0, %v2824
        %v2826 = vrot.slane %v2821, %v2825
        %v2972 = vunpack.c.l.b16 %v2676
        %v2973 = vunpack.c.l.b16 %v2677
        %v2974 = vunpack.c.l.b16 %v2678
        %v2975 = vunpack.c.l.b16 %v2679
        %v2976 = vunpack.c.l.b16 %v2680
        %v2977 = vunpack.c.l.b16 %v2681
        %v2978 = vunpack.c.l.b16 %v2682
        %v2979 = vunpack.c.l.b16 %v2683
        %v2980 = vunpack.c.l.b16 %v2684
        %v2981 = vunpack.c.l.b16 %v2685
        %v2982 = vunpack.c.l.b16 %v2686
        %v2983 = vunpack.c.l.b16 %v2687
        %v2984 = vunpack.c.l.b16 %v2688
        %v2985 = vunpack.c.l.b16 %v2689
        %v2986 = vunpack.c.l.b16 %v2690
        %v2987 = vunpack.c.l.b16 %v2691
        %v2988 = vunpack.c.l.b16 %v2692
        %v2989 = vunpack.c.l.b16 %v2693
        %v2990 = vunpack.c.l.b16 %v2694
        %v2991 = vunpack.c.l.b16 %v2695
        %v2992 = vunpack.c.l.b16 %v2696
        %v2993 = vunpack.c.l.b16 %v2697
        %v2994 = vunpack.c.l.b16 %v2698
        %v2995 = vunpack.c.l.b16 %v2699
        %v2996 = vunpack.c.l.b16 %v2700
        %v2997 = vunpack.c.l.b16 %v2701
        %v2998 = vunpack.c.l.b16 %v2702
        %v2999 = vunpack.c.l.b16 %v2703
        %v3000 = vunpack.c.l.b16 %v2704
        %v3001 = vunpack.c.l.b16 %v2705
        %v3002 = vunpack.c.l.b16 %v2706
        %v3003 = vunpack.c.l.b16 %v2707
        %v3004 = vunpack.c.l.b16 %v2708
        %v3005 = vunpack.c.l.b16 %v2709
        %v3006 = vunpack.c.l.b16 %v2710
        %v3007 = vunpack.c.l.b16 %v2711
        %v3008 = vunpack.c.l.b16 %v2712
        %v3009 = vunpack.c.l.b16 %v2713
        %v3010 = vunpack.c.l.b16 %v2714
        %v3011 = vunpack.c.l.b16 %v2715
        %v3012 = vunpack.c.l.b16 %v2716
        %v3013 = vunpack.c.l.b16 %v2717
        %v3014 = vunpack.c.l.b16 %v2718
        %v3015 = vunpack.c.l.b16 %v2719
        %v3016 = vunpack.c.l.b16 %v2720
        %v3017 = vunpack.c.l.b16 %v2721
        %v3018 = vunpack.c.l.b16 %v2722
        %v3019 = vunpack.c.l.b16 %v2723
        %v3020 = vunpack.c.l.b16 %v2724
        %v3021 = vunpack.c.l.b16 %v2725
        %v3022 = vunpack.c.l.b16 %v2726
        %v3023 = vunpack.c.l.b16 %v2727
        %v3024 = vunpack.c.l.b16 %v2728
        %v3025 = vunpack.c.l.b16 %v2729
        %v3026 = vunpack.c.l.b16 %v2730
        %v3027 = vunpack.c.l.b16 %v2731
        %v3028 = vunpack.c.l.b16 %v2732
        %v3029 = vunpack.c.l.b16 %v2733
        %v3030 = vunpack.c.l.b16 %v2734
        %v3031 = vunpack.c.l.b16 %v2735
        %v3032 = vunpack.c.l.b16 %v2736
        %v3033 = vunpack.c.l.b16 %v2737
        %v3034 = vunpack.c.l.b16 %v2738
        %v3035 = vunpack.c.l.b16 %v2739
        %v3036 = vunpack.c.l.b16 %v2740
        %v3037 = vunpack.c.l.b16 %v2741
        %v3038 = vunpack.c.l.b16 %v2742
        %v3039 = vunpack.c.l.b16 %v2743
        %v3040 = vunpack.c.l.b16 %v2744
        %v3041 = vunpack.c.l.b16 %v2745
        %v3042 = vunpack.c.l.b16 %v2746
        %v3043 = vunpack.c.l.b16 %v2747
        %v3044 = vunpack.c.l.b16 %v2748
        %v3045 = vunpack.c.l.b16 %v2749
        %v3046 = vunpack.c.l.b16 %v2750
        %v3047 = vunpack.c.l.b16 %v2751
        %v3048 = vunpack.c.l.b16 %v2752
        %v3049 = vunpack.c.l.b16 %v2753
        %v3050 = vunpack.c.l.b16 %v2754
        %v3051 = vunpack.c.l.b16 %v2755
        %v3052 = vunpack.c.l.b16 %v2756
        %v3053 = vunpack.c.l.b16 %v2757
        %v3054 = vunpack.c.l.b16 %v2758
        %v3055 = vunpack.c.l.b16 %v2759
        %v3056 = vunpack.c.l.b16 %v2760
        %v3057 = vunpack.c.l.b16 %v2761
        %v3058 = vunpack.c.l.b16 %v2762
        %v3059 = vunpack.c.l.b16 %v2763
        %v3060 = vunpack.c.l.b16 %v2764
        %v3061 = vunpack.c.l.b16 %v2765
        %v3062 = vunpack.c.l.b16 %v2766
        %v3063 = vunpack.c.l.b16 %v2767
        %v3064 = vunpack.c.l.b16 %v2768
        %v3065 = vunpack.c.l.b16 %v2769
        %v3066 = vunpack.c.l.b16 %v2770
        %v3067 = vunpack.c.l.b16 %v2771
        %v3068 = vunpack.c.l.b16 %v2772
        %v3069 = vunpack.c.l.b16 %v2773
        %v3070 = vunpack.c.l.b16 %v2774
        %v3071 = vunpack.c.l.b16 %v2775
        %v3072 = vunpack.c.l.b16 %v2776
        %v3073 = vunpack.c.l.b16 %v2777
        %v3074 = vunpack.c.l.b16 %v2778
        %v3075 = vunpack.c.l.b16 %v2779
        %v3076 = vunpack.c.l.b16 %v2780
        %v3077 = vunpack.c.l.b16 %v2781
        %v3078 = vunpack.c.l.b16 %v2782
        %v3079 = vunpack.c.l.b16 %v2783
        %v3080 = vunpack.c.l.b16 %v2784
        %v3081 = vunpack.c.l.b16 %v2785
        %v3082 = vunpack.c.l.b16 %v2786
        %v3083 = vunpack.c.l.b16 %v2787
        %v3084 = vunpack.c.l.b16 %v2788
        %v3085 = vunpack.c.l.b16 %v2789
        %v3086 = vunpack.c.l.b16 %v2790
        %v3087 = vunpack.c.l.b16 %v2791
        %v3088 = vunpack.c.l.b16 %v2792
        %v3089 = vunpack.c.l.b16 %v2793
        %v3090 = vunpack.c.l.b16 %v2794
        %v3091 = vunpack.c.l.b16 %v2795
        %v3092 = vunpack.c.l.b16 %v2796
        %v3093 = vunpack.c.l.b16 %v2797
        %v3094 = vunpack.c.l.b16 %v2798
        %v3095 = vunpack.c.l.b16 %v2799
        %v3096 = vunpack.c.l.b16 %v2800
        %v3097 = vunpack.c.l.b16 %v2801
        %v3098 = vunpack.c.l.b16 %v2802
        %v3099 = vunpack.c.l.b16 %v2803
        %v3100 = vunpack.c.l.b16 %v2804
        %v3101 = vunpack.c.l.b16 %v2805
        %v3102 = vunpack.c.l.b16 %v2806
        %v3103 = vunpack.c.l.b16 %v2807
        %v3104 = vunpack.c.l.b16 %v2808
        %v3105 = vunpack.c.l.b16 %v2809
        %v3106 = vunpack.c.l.b16 %v2810
        %v3107 = vunpack.c.l.b16 %v2811
        %v3108 = vunpack.c.l.b16 %v2812
        %v3109 = vunpack.c.l.b16 %v2813
        %v3110 = vunpack.c.l.b16 %v2814
        %v3111 = vunpack.c.l.b16 %v2815
        %v3112 = vunpack.c.l.b16 %v2816
        %v3113 = vunpack.c.l.b16 %v2817
        %v3114 = vunpack.c.l.b16 %v2818
        %v3115 = vunpack.c.l.b16 %v2819
        %v3116 = vpack.c.b16 %v2973, %v2972
        %v3117 = vpack.c.b16 %v2975, %v2974
        %v3118 = vpack.c.b16 %v2977, %v2976
        %v3119 = vpack.c.b16 %v2979, %v2978
        %v3120 = vpack.c.b16 %v2981, %v2980
        %v3121 = vpack.c.b16 %v2983, %v2982
        %v3122 = vpack.c.b16 %v2985, %v2984
        %v3123 = vpack.c.b16 %v2987, %v2986
        %v3124 = vpack.c.b16 %v2989, %v2988
        %v3125 = vpack.c.b16 %v2991, %v2990
        %v3126 = vpack.c.b16 %v2993, %v2992
        %v3127 = vpack.c.b16 %v2995, %v2994
        %v3128 = vpack.c.b16 %v2997, %v2996
        %v3129 = vpack.c.b16 %v2999, %v2998
        %v3130 = vpack.c.b16 %v3001, %v3000
        %v3131 = vpack.c.b16 %v3003, %v3002
        %v3132 = vpack.c.b16 %v3005, %v3004
        %v3133 = vpack.c.b16 %v3007, %v3006
        %v3134 = vpack.c.b16 %v3009, %v3008
        %v3135 = vpack.c.b16 %v3011, %v3010
        %v3136 = vpack.c.b16 %v3013, %v3012
        %v3137 = vpack.c.b16 %v3015, %v3014
        %v3138 = vpack.c.b16 %v3017, %v3016
        %v3139 = vpack.c.b16 %v3019, %v3018
        %v3140 = vpack.c.b16 %v3021, %v3020
        %v3141 = vpack.c.b16 %v3023, %v3022
        %v3142 = vpack.c.b16 %v3025, %v3024
        %v3143 = vpack.c.b16 %v3027, %v3026
        %v3144 = vpack.c.b16 %v3029, %v3028
        %v3145 = vpack.c.b16 %v3031, %v3030
        %v3146 = vpack.c.b16 %v3033, %v3032
        %v3147 = vpack.c.b16 %v3035, %v3034
        %v3148 = vpack.c.b16 %v3037, %v3036
        %v3149 = vpack.c.b16 %v3039, %v3038
        %v3150 = vpack.c.b16 %v3041, %v3040
        %v3151 = vpack.c.b16 %v3043, %v3042
        %v3152 = vpack.c.b16 %v3045, %v3044
        %v3153 = vpack.c.b16 %v3047, %v3046
        %v3154 = vpack.c.b16 %v3049, %v3048
        %v3155 = vpack.c.b16 %v3051, %v3050
        %v3156 = vpack.c.b16 %v3053, %v3052
        %v3157 = vpack.c.b16 %v3055, %v3054
        %v3158 = vpack.c.b16 %v3057, %v3056
        %v3159 = vpack.c.b16 %v3059, %v3058
        %v3160 = vpack.c.b16 %v3061, %v3060
        %v3161 = vpack.c.b16 %v3063, %v3062
        %v3162 = vpack.c.b16 %v3065, %v3064
        %v3163 = vpack.c.b16 %v3067, %v3066
        %v3164 = vpack.c.b16 %v3069, %v3068
        %v3165 = vpack.c.b16 %v3071, %v3070
        %v3166 = vpack.c.b16 %v3073, %v3072
        %v3167 = vpack.c.b16 %v3075, %v3074
        %v3168 = vpack.c.b16 %v3077, %v3076
        %v3169 = vpack.c.b16 %v3079, %v3078
        %v3170 = vpack.c.b16 %v3081, %v3080
        %v3171 = vpack.c.b16 %v3083, %v3082
        %v3172 = vpack.c.b16 %v3085, %v3084
        %v3173 = vpack.c.b16 %v3087, %v3086
        %v3174 = vpack.c.b16 %v3089, %v3088
        %v3175 = vpack.c.b16 %v3091, %v3090
        %v3176 = vpack.c.b16 %v3093, %v3092
        %v3177 = vpack.c.b16 %v3095, %v3094
        %v3178 = vpack.c.b16 %v3097, %v3096
        %v3179 = vpack.c.b16 %v3099, %v3098
        %v3180 = vpack.c.b16 %v3101, %v3100
        %v3181 = vpack.c.b16 %v3103, %v3102
        %v3182 = vpack.c.b16 %v3105, %v3104
        %v3183 = vpack.c.b16 %v3107, %v3106
        %v3184 = vpack.c.b16 %v3109, %v3108
        %v3185 = vpack.c.b16 %v3111, %v3110
        %v3186 = vpack.c.b16 %v3113, %v3112
        %v3187 = vpack.c.b16 %v3115, %v3114
        %3260 = vmatprep.subr.bf16.mxu0 0
        %3261 = vmatpush1.bf16.msra.mxu0 %v3116
        %3262 = vmatprep.subr.bf16.mxu0 0
        %3263 = vmatpush1.bf16.msra.mxu0 %v3117
        %3264 = vmatprep.subr.bf16.mxu0 0
        %3265 = vmatpush1.bf16.msra.mxu0 %v3118
        %3266 = vmatprep.subr.bf16.mxu0 0
        %3267 = vmatpush1.bf16.msra.mxu0 %v3119
        %3268 = vmatprep.subr.bf16.mxu0 0
        %3269 = vmatpush1.bf16.msra.mxu0 %v3120
        %3270 = vmatprep.subr.bf16.mxu0 0
        %3271 = vmatpush1.bf16.msra.mxu0 %v3121
        %3272 = vmatprep.subr.bf16.mxu0 0
        %3273 = vmatpush1.bf16.msra.mxu0 %v3122
        %3274 = vmatprep.subr.bf16.mxu0 0
        %3275 = vmatpush1.bf16.msra.mxu0 %v3123
        %3276 = vmatprep.subr.bf16.mxu0 0
        %3277 = vmatpush1.bf16.msra.mxu0 %v3124
        %3278 = vmatprep.subr.bf16.mxu0 0
        %3279 = vmatpush1.bf16.msra.mxu0 %v3125
        %3280 = vmatprep.subr.bf16.mxu0 0
        %3281 = vmatpush1.bf16.msra.mxu0 %v3126
        %3282 = vmatprep.subr.bf16.mxu0 0
        %3283 = vmatpush1.bf16.msra.mxu0 %v3127
        %3284 = vmatprep.subr.bf16.mxu0 0
        %3285 = vmatpush1.bf16.msra.mxu0 %v3128
        %3286 = vmatprep.subr.bf16.mxu0 0
        %3287 = vmatpush1.bf16.msra.mxu0 %v3129
        %3288 = vmatprep.subr.bf16.mxu0 0
        %3289 = vmatpush1.bf16.msra.mxu0 %v3130
        %3290 = vmatprep.subr.bf16.mxu0 0
        %3291 = vmatpush1.bf16.msra.mxu0 %v3131
        %3292 = vmatprep.mubr.bf16.mxu0 %v2649
        %3293 = vmatmul.mubr.bf16.gmra.mrb[0].mxu0 %v2648
        %v3294 = vpop.f32.mrb[0].mxu0
        %v3295 = vadd.f32 %v2826, %v3294
        %v3296 = vpop.f32.mrb[0].mxu0
        %v3297 = vpop.f32.mrb[0].mxu0
        %v3298 = vadd.f32 %v2826, %v3297
        %v3299 = vpop.f32.mrb[0].mxu0
        %3300 = vmatprep.mubr.bf16.mxu0 %v2655
        %3301 = vmatmul.mubr.bf16.gmra.mrb[0].mxu0 %v2654
        %v3302 = vpop.f32.mrb[0].mxu0
        %v3303 = vadd.f32 %v2826, %v3302
        %v3304 = vpop.f32.mrb[0].mxu0
        %v3305 = vpop.f32.mrb[0].mxu0
        %v3306 = vadd.f32 %v2826, %v3305
        %v3307 = vpop.f32.mrb[0].mxu0
        %3308 = vmatprep.mubr.bf16.mxu0 %v2661
        %3309 = vmatmul.mubr.bf16.gmra.mrb[0].mxu0 %v2660
        %v3310 = vpop.f32.mrb[0].mxu0
        %v3311 = vadd.f32 %v2826, %v3310
        %v3312 = vpop.f32.mrb[0].mxu0
        %v3313 = vpop.f32.mrb[0].mxu0
        %v3314 = vadd.f32 %v2826, %v3313
        %v3315 = vpop.f32.mrb[0].mxu0
        %3316 = vmatprep.mubr.bf16.mxu0 %v2667
        %3317 = vmatmul.mubr.bf16.gmra.mrb[0].mxu0 %v2666
        %v3318 = vpop.f32.mrb[0].mxu0
        %v3319 = vadd.f32 %v2826, %v3318
        %v3320 = vpop.f32.mrb[0].mxu0
        %v3321 = vpop.f32.mrb[0].mxu0
        %v3322 = vadd.f32 %v2826, %v3321
        %v3323 = vpop.f32.mrb[0].mxu0
        %3324 = vdwg.mxu0
        %3325 = vmatprep.subr.bf16.mxu0 0
        %3326 = vmatpush1.bf16.msra.mxu0 %v3132
        %3327 = vmatprep.subr.bf16.mxu0 0
        %3328 = vmatpush1.bf16.msra.mxu0 %v3133
        %3329 = vmatprep.subr.bf16.mxu0 0
        %3330 = vmatpush1.bf16.msra.mxu0 %v3134
        %3331 = vmatprep.subr.bf16.mxu0 0
        %3332 = vmatpush1.bf16.msra.mxu0 %v3135
        %3333 = vmatprep.subr.bf16.mxu0 0
        %3334 = vmatpush1.bf16.msra.mxu0 %v3136
        %3335 = vmatprep.subr.bf16.mxu0 0
        %3336 = vmatpush1.bf16.msra.mxu0 %v3137
        %3337 = vmatprep.subr.bf16.mxu0 0
        %3338 = vmatpush1.bf16.msra.mxu0 %v3138
        %3339 = vmatprep.subr.bf16.mxu0 0
        %3340 = vmatpush1.bf16.msra.mxu0 %v3139
        %3341 = vmatprep.subr.bf16.mxu0 0
        %3342 = vmatpush1.bf16.msra.mxu0 %v3140
        %3343 = vmatprep.subr.bf16.mxu0 0
        %3344 = vmatpush1.bf16.msra.mxu0 %v3141
        %3345 = vmatprep.subr.bf16.mxu0 0
        %3346 = vmatpush1.bf16.msra.mxu0 %v3142
        %3347 = vmatprep.subr.bf16.mxu0 0
        %3348 = vmatpush1.bf16.msra.mxu0 %v3143
        %3349 = vmatprep.subr.bf16.mxu0 0
        %3350 = vmatpush1.bf16.msra.mxu0 %v3144
        %3351 = vmatprep.subr.bf16.mxu0 0
        %3352 = vmatpush1.bf16.msra.mxu0 %v3145
        %3353 = vmatprep.subr.bf16.mxu0 0
        %3354 = vmatpush1.bf16.msra.mxu0 %v3146
        %3355 = vmatprep.subr.bf16.mxu0 0
        %3356 = vmatpush1.bf16.msra.mxu0 %v3147
        %3357 = vmatprep.mubr.bf16.mxu0 %v2651
        %3358 = vmatmul.mubr.bf16.gmra.mrb[0].mxu0 %v2650
        %v3359 = vpop.f32.mrb[0].mxu0
        %v3360 = vadd.f32 %v3295, %v3359
        %v3361 = vpop.f32.mrb[0].mxu0
        %v3362 = vpop.f32.mrb[0].mxu0
        %v3363 = vadd.f32 %v3298, %v3362
        %v3364 = vpop.f32.mrb[0].mxu0
        %3365 = vmatprep.mubr.bf16.mxu0 %v2657
        %3366 = vmatmul.mubr.bf16.gmra.mrb[0].mxu0 %v2656
        %v3367 = vpop.f32.mrb[0].mxu0
        %v3368 = vadd.f32 %v3303, %v3367
        %v3369 = vpop.f32.mrb[0].mxu0
        %v3370 = vpop.f32.mrb[0].mxu0
        %v3371 = vadd.f32 %v3306, %v3370
        %v3372 = vpop.f32.mrb[0].mxu0
        %3373 = vmatprep.mubr.bf16.mxu0 %v2663
        %3374 = vmatmul.mubr.bf16.gmra.mrb[0].mxu0 %v2662
        %v3375 = vpop.f32.mrb[0].mxu0
        %v3376 = vadd.f32 %v3311, %v3375
        %v3377 = vpop.f32.mrb[0].mxu0
        %v3378 = vpop.f32.mrb[0].mxu0
        %v3379 = vadd.f32 %v3314, %v3378
        %v3380 = vpop.f32.mrb[0].mxu0
        %3381 = vmatprep.mubr.bf16.mxu0 %v2669
        %3382 = vmatmul.mubr.bf16.gmra.mrb[0].mxu0 %v2668
        %v3383 = vpop.f32.mrb[0].mxu0
        %v3384 = vadd.f32 %v3319, %v3383
        %v3385 = vpop.f32.mrb[0].mxu0
        %v3386 = vpop.f32.mrb[0].mxu0
        %v3387 = vadd.f32 %v3322, %v3386
        %v3388 = vpop.f32.mrb[0].mxu0
        %3389 = vdwg.mxu0
        %3390 = vmatprep.subr.bf16.mxu0 0
        %3391 = vmatpush1.bf16.msra.mxu0 %v3148
        %3392 = vmatprep.subr.bf16.mxu0 0
        %3393 = vmatpush1.bf16.msra.mxu0 %v3149
        %3394 = vmatprep.subr.bf16.mxu0 0
        %3395 = vmatpush1.bf16.msra.mxu0 %v3150
        %3396 = vmatprep.subr.bf16.mxu0 0
        %3397 = vmatpush1.bf16.msra.mxu0 %v3151
        %3398 = vmatprep.subr.bf16.mxu0 0
        %3399 = vmatpush1.bf16.msra.mxu0 %v3152
        %3400 = vmatprep.subr.bf16.mxu0 0
        %3401 = vmatpush1.bf16.msra.mxu0 %v3153
        %3402 = vmatprep.subr.bf16.mxu0 0
        %3403 = vmatpush1.bf16.msra.mxu0 %v3154
        %3404 = vmatprep.subr.bf16.mxu0 0
        %3405 = vmatpush1.bf16.msra.mxu0 %v3155
        %3406 = vmatprep.subr.bf16.mxu0 0
        %3407 = vmatpush1.bf16.msra.mxu0 %v3156
        %3408 = vmatprep.subr.bf16.mxu0 0
        %3409 = vmatpush1.bf16.msra.mxu0 %v3157
        %3410 = vmatprep.subr.bf16.mxu0 0
        %3411 = vmatpush1.bf16.msra.mxu0 %v3158
        %3412 = vmatprep.subr.bf16.mxu0 0
        %3413 = vmatpush1.bf16.msra.mxu0 %v3159
        %3414 = vmatprep.subr.bf16.mxu0 0
        %3415 = vmatpush1.bf16.msra.mxu0 %v3160
        %3416 = vmatprep.subr.bf16.mxu0 0
        %3417 = vmatpush1.bf16.msra.mxu0 %v3161
        %3418 = vmatprep.subr.bf16.mxu0 0
        %3419 = vmatpush1.bf16.msra.mxu0 %v3162
        %3420 = vmatprep.subr.bf16.mxu0 0
        %3421 = vmatpush1.bf16.msra.mxu0 %v3163
        %3422 = vmatprep.mubr.bf16.mxu0 %v2653
        %3423 = vmatmul.mubr.bf16.gmra.mrb[0].mxu0 %v2652
        %v3424 = vpop.f32.mrb[0].mxu0
        %v3425 = vadd.f32 %v3360, %v3424
        %v3426 = vpop.f32.mrb[0].mxu0
        %v3427 = vpop.f32.mrb[0].mxu0
        %v3428 = vadd.f32 %v3363, %v3427
        %v3429 = vpop.f32.mrb[0].mxu0
        %3430 = vmatprep.mubr.bf16.mxu0 %v2659
        %3431 = vmatmul.mubr.bf16.gmra.mrb[0].mxu0 %v2658
        %v3432 = vpop.f32.mrb[0].mxu0
        %v3433 = vadd.f32 %v3368, %v3432
        %v3434 = vpop.f32.mrb[0].mxu0
        %v3435 = vpop.f32.mrb[0].mxu0
        %v3436 = vadd.f32 %v3371, %v3435
        %v3437 = vpop.f32.mrb[0].mxu0
        %3438 = vmatprep.mubr.bf16.mxu0 %v2665
        %3439 = vmatmul.mubr.bf16.gmra.mrb[0].mxu0 %v2664
        %v3440 = vpop.f32.mrb[0].mxu0
        %v3441 = vadd.f32 %v3376, %v3440
        %v3442 = vpop.f32.mrb[0].mxu0
        %v3443 = vpop.f32.mrb[0].mxu0
        %v3444 = vadd.f32 %v3379, %v3443
        %v3445 = vpop.f32.mrb[0].mxu0
        %3446 = vmatprep.mubr.bf16.mxu0 %v2671
        %3447 = vmatmul.mubr.bf16.gmra.mrb[0].mxu0 %v2670
        %v3448 = vpop.f32.mrb[0].mxu0
        %v3449 = vadd.f32 %v3384, %v3448
        %v3450 = vpop.f32.mrb[0].mxu0
        %v3451 = vpop.f32.mrb[0].mxu0
        %v3452 = vadd.f32 %v3387, %v3451
        %v3453 = vpop.f32.mrb[0].mxu0
        %3454 = vdwg.mxu0
        %3455 = vmatprep.subr.bf16.mxu0 0
        %3456 = vmatpush1.bf16.msra.mxu0 %v3164
        %3457 = vmatprep.subr.bf16.mxu0 0
        %3458 = vmatpush1.bf16.msra.mxu0 %v3165
        %3459 = vmatprep.subr.bf16.mxu0 0
        %3460 = vmatpush1.bf16.msra.mxu0 %v3166
        %3461 = vmatprep.subr.bf16.mxu0 0
        %3462 = vmatpush1.bf16.msra.mxu0 %v3167
        %3463 = vmatprep.subr.bf16.mxu0 0
        %3464 = vmatpush1.bf16.msra.mxu0 %v3168
        %3465 = vmatprep.subr.bf16.mxu0 0
        %3466 = vmatpush1.bf16.msra.mxu0 %v3169
        %3467 = vmatprep.subr.bf16.mxu0 0
        %3468 = vmatpush1.bf16.msra.mxu0 %v3170
        %3469 = vmatprep.subr.bf16.mxu0 0
        %3470 = vmatpush1.bf16.msra.mxu0 %v3171
        %3471 = vmatprep.subr.bf16.mxu0 0
        %3472 = vmatpush1.bf16.msra.mxu0 %v3172
        %3473 = vmatprep.subr.bf16.mxu0 0
        %3474 = vmatpush1.bf16.msra.mxu0 %v3173
        %3475 = vmatprep.subr.bf16.mxu0 0
        %3476 = vmatpush1.bf16.msra.mxu0 %v3174
        %3477 = vmatprep.subr.bf16.mxu0 0
        %3478 = vmatpush1.bf16.msra.mxu0 %v3175
        %3479 = vmatprep.subr.bf16.mxu0 0
        %3480 = vmatpush1.bf16.msra.mxu0 %v3176
        %3481 = vmatprep.subr.bf16.mxu0 0
        %3482 = vmatpush1.bf16.msra.mxu0 %v3177
        %3483 = vmatprep.subr.bf16.mxu0 0
        %3484 = vmatpush1.bf16.msra.mxu0 %v3178
        %3485 = vmatprep.subr.bf16.mxu0 0
        %3486 = vmatpush1.bf16.msra.mxu0 %v3179
        %3487 = vmatprep.mubr.bf16.mxu0 %v2655
        %3488 = vmatmul.mubr.bf16.gmra.mrb[0].mxu0 %v2654
        %v3489 = vpop.f32.mrb[0].mxu0
        %v3490 = vadd.f32 %v3425, %v3489
        %v3491 = vpop.f32.mrb[0].mxu0
        %v3492 = vpop.f32.mrb[0].mxu0
        %v3493 = vadd.f32 %v3428, %v3492
        %v3494 = vpop.f32.mrb[0].mxu0
        %3495 = vmatprep.mubr.bf16.mxu0 %v2661
        %3496 = vmatmul.mubr.bf16.gmra.mrb[0].mxu0 %v2660
        %v3497 = vpop.f32.mrb[0].mxu0
        %v3498 = vadd.f32 %v3433, %v3497
        %v3499 = vpop.f32.mrb[0].mxu0
        %v3500 = vpop.f32.mrb[0].mxu0
        %v3501 = vadd.f32 %v3436, %v3500
        %v3502 = vpop.f32.mrb[0].mxu0
        %3503 = vmatprep.mubr.bf16.mxu0 %v2667
        %3504 = vmatmul.mubr.bf16.gmra.mrb[0].mxu0 %v2666
        %v3505 = vpop.f32.mrb[0].mxu0
        %v3506 = vadd.f32 %v3441, %v3505
        %v3507 = vpop.f32.mrb[0].mxu0
        %v3508 = vpop.f32.mrb[0].mxu0
        %v3509 = vadd.f32 %v3444, %v3508
        %v3510 = vpop.f32.mrb[0].mxu0
        %3511 = vmatprep.mubr.bf16.mxu0 %v2673
        %3512 = vmatmul.mubr.bf16.gmra.mrb[0].mxu0 %v2672
        %v3513 = vpop.f32.mrb[0].mxu0
        %v3514 = vadd.f32 %v3449, %v3513
        %v3515 = vpop.f32.mrb[0].mxu0
        %v3516 = vpop.f32.mrb[0].mxu0
        %v3517 = vadd.f32 %v3452, %v3516
        %v3518 = vpop.f32.mrb[0].mxu0
        %3519 = vdwg.mxu0
        %3520 = vmatprep.subr.bf16.mxu0 0
        %3521 = vmatpush1.bf16.msra.mxu0 %v3180
        %3522 = vmatprep.subr.bf16.mxu0 0
        %3523 = vmatpush1.bf16.msra.mxu0 %v3181
        %3524 = vmatprep.subr.bf16.mxu0 0
        %3525 = vmatpush1.bf16.msra.mxu0 %v3182
        %3526 = vmatprep.subr.bf16.mxu0 0
        %3527 = vmatpush1.bf16.msra.mxu0 %v3183
        %3528 = vmatprep.subr.bf16.mxu0 0
        %3529 = vmatpush1.bf16.msra.mxu0 %v3184
        %3530 = vmatprep.subr.bf16.mxu0 0
        %3531 = vmatpush1.bf16.msra.mxu0 %v3185
        %3532 = vmatprep.subr.bf16.mxu0 0
        %3533 = vmatpush1.bf16.msra.mxu0 %v3186
        %3534 = vmatprep.subr.bf16.mxu0 0
        %3535 = vmatpush1.bf16.msra.mxu0 %v3187
        %3536 = vmatprep.subr.bf16.mxu0 0
        %3537 = vmatpush1.bf16.msra.mxu0 0
        %3538 = vmatprep.subr.bf16.mxu0 0
        %3539 = vmatpush1.bf16.msra.mxu0 0
        %3540 = vmatprep.subr.bf16.mxu0 0
        %3541 = vmatpush1.bf16.msra.mxu0 0
        %3542 = vmatprep.subr.bf16.mxu0 0
        %3543 = vmatpush1.bf16.msra.mxu0 0
        %3544 = vmatprep.subr.bf16.mxu0 0
        %3545 = vmatpush1.bf16.msra.mxu0 0
        %3546 = vmatprep.subr.bf16.mxu0 0
        %3547 = vmatpush1.bf16.msra.mxu0 0
        %3548 = vmatprep.subr.bf16.mxu0 0
        %3549 = vmatpush1.bf16.msra.mxu0 0
        %3550 = vmatprep.subr.bf16.mxu0 0
        %3551 = vmatpush1.bf16.msra.mxu0 0
        %3552 = vmatprep.mubr.bf16.mxu0 0
        %3553 = vmatmul.mubr.bf16.gmra.mrb[0].mxu0 %v2656
        %v3554 = vpop.f32.mrb[0].mxu0
        %v3555 = vadd.f32 %v3490, %v3554
        %v3556 = vpop.f32.mrb[0].mxu0
        %v3557 = vpop.f32.mrb[0].mxu0
        %v3558 = vadd.f32 %v3493, %v3557
        %v3559 = vpop.f32.mrb[0].mxu0
        %3560 = vmatprep.mubr.bf16.mxu0 0
        %3561 = vmatmul.mubr.bf16.gmra.mrb[0].mxu0 %v2662
        %v3562 = vpop.f32.mrb[0].mxu0
        %v3563 = vadd.f32 %v3498, %v3562
        %v3564 = vpop.f32.mrb[0].mxu0
        %v3565 = vpop.f32.mrb[0].mxu0
        %v3566 = vadd.f32 %v3501, %v3565
        %v3567 = vpop.f32.mrb[0].mxu0
        %3568 = vmatprep.mubr.bf16.mxu0 0
        %3569 = vmatmul.mubr.bf16.gmra.mrb[0].mxu0 %v2668
        %v3570 = vpop.f32.mrb[0].mxu0
        %v3571 = vadd.f32 %v3506, %v3570
        %v3572 = vpop.f32.mrb[0].mxu0
        %v3573 = vpop.f32.mrb[0].mxu0
        %v3574 = vadd.f32 %v3509, %v3573
        %v3575 = vpop.f32.mrb[0].mxu0
        %3576 = vmatprep.mubr.bf16.mxu0 0
        %3577 = vmatmul.mubr.bf16.gmra.mrb[0].mxu0 %v2674
        %v3578 = vpop.f32.mrb[0].mxu0
        %v3579 = vadd.f32 %v3514, %v3578
        %v3580 = vpop.f32.mrb[0].mxu0
        %v3581 = vpop.f32.mrb[0].mxu0
        %v3582 = vadd.f32 %v3517, %v3581
        %v3583 = vpop.f32.mrb[0].mxu0
        %3584 = vdwg.mxu0
        %v3585 = vmax.f32 %v3555, 0.0
        %v3586 = vmax.f32 %v3558, 0.0
        %v3587 = vmax.f32 %v3563, 0.0
        %v3588 = vmax.f32 %v3566, 0.0
        %v3589 = vmax.f32 %v3571, 0.0
        %v3590 = vmax.f32 %v3574, 0.0
        %v3591 = vmax.f32 %v3579, 0.0
        %v3592 = vmax.f32 %v3582, 0.0
        %3593 = vst [vmem:[%s1446 + $0x1] sm:$0xff] %v3585
        %3594 = vst [vmem:[%s1446 + $0x11] sm:$0xff] %v3586
        %3595 = vst [vmem:[%s1446 + $0x21] sm:$0xff] %v3587
        %3596 = vst [vmem:[%s1446 + $0x31] sm:$0xff] %v3588
        %3597 = vst [vmem:[%s1446 + $0x41] sm:$0xff] %v3589
        %3598 = vst [vmem:[%s1446 + $0x51] sm:$0xff] %v3590
        %3599 = vst [vmem:[%s1446 + $0x61] sm:$0xff] %v3591
        %3600 = vst [vmem:[%s1446 + $0x71] sm:$0xff] %v3592
        %v3601 = vld [vmem:[#allocation2] sm:$0xff]
        %v3602 = vld [vmem:[#allocation2 + $0x8] sm:$0x3]
        %v3603 = vld [vmem:[#allocation2 + $0x10] sm:$0xff]
        %v3604 = vld [vmem:[#allocation2 + $0x18] sm:$0x3]
        %v3605 = vld [vmem:[#allocation2 + $0x20] sm:$0xff]
        %v3606 = vld [vmem:[#allocation2 + $0x28] sm:$0x3]
        %v3607 = vld [vmem:[#allocation2 + $0x30] sm:$0xff]
        %v3608 = vld [vmem:[#allocation2 + $0x38] sm:$0x3]
        %v3609 = vld [vmem:[#allocation2 + $0x40] sm:$0xff]
        %v3610 = vld [vmem:[#allocation2 + $0x48] sm:$0x3]
        %v3611 = vld [vmem:[#allocation2 + $0x50] sm:$0xff]
        %v3612 = vld [vmem:[#allocation2 + $0x58] sm:$0x3]
        %v3613 = vld [vmem:[#allocation2 + $0x60] sm:$0xff]
        %v3614 = vld [vmem:[#allocation2 + $0x68] sm:$0x3]
        %v3615 = vld [vmem:[#allocation2 + $0x70] sm:$0xff]
        %v3616 = vld [vmem:[#allocation2 + $0x78] sm:$0x3]
        %v3617 = vld [vmem:[#allocation2 + $0x80] sm:$0xff]
        %v3618 = vld [vmem:[#allocation2 + $0x88] sm:$0x3]
        %v3619 = vld [vmem:[#allocation2 + $0x90] sm:$0xff]
        %v3620 = vld [vmem:[#allocation2 + $0x98] sm:$0x3]
        %v3637 = vrot.slane %v3601, 1
        %v3638 = vrot.slane %v3602, 1
        %v3639 = vsel %vm1491, %v3637, %v3638
        %v3640 = vrot.slane %v3603, 1
        %v3641 = vrot.slane %v3604, 1
        %v3642 = vsel %vm1491, %v3640, %v3641
        %v3643 = vrot.slane %v3605, 1
        %v3644 = vrot.slane %v3606, 1
        %v3645 = vsel %vm1491, %v3643, %v3644
        %v3646 = vrot.slane %v3607, 1
        %v3647 = vrot.slane %v3608, 1
        %v3648 = vsel %vm1491, %v3646, %v3647
        %v3649 = vrot.slane %v3609, 1
        %v3650 = vrot.slane %v3610, 1
        %v3651 = vsel %vm1491, %v3649, %v3650
        %v3652 = vrot.slane %v3611, 1
        %v3653 = vrot.slane %v3612, 1
        %v3654 = vsel %vm1491, %v3652, %v3653
        %v3655 = vrot.slane %v3613, 1
        %v3656 = vrot.slane %v3614, 1
        %v3657 = vsel %vm1491, %v3655, %v3656
        %v3658 = vrot.slane %v3615, 1
        %v3659 = vrot.slane %v3616, 1
        %v3660 = vsel %vm1491, %v3658, %v3659
        %v3669 = vrot.slane %v3601, 2
        %v3670 = vrot.slane %v3602, 2
        %v3671 = vsel %vm1524, %v3669, %v3670
        %v3672 = vrot.slane %v3603, 2
        %v3673 = vrot.slane %v3604, 2
        %v3674 = vsel %vm1524, %v3672, %v3673
        %v3675 = vrot.slane %v3605, 2
        %v3676 = vrot.slane %v3606, 2
        %v3677 = vsel %vm1524, %v3675, %v3676
        %v3678 = vrot.slane %v3607, 2
        %v3679 = vrot.slane %v3608, 2
        %v3680 = vsel %vm1524, %v3678, %v3679
        %v3681 = vrot.slane %v3609, 2
        %v3682 = vrot.slane %v3610, 2
        %v3683 = vsel %vm1524, %v3681, %v3682
        %v3684 = vrot.slane %v3611, 2
        %v3685 = vrot.slane %v3612, 2
        %v3686 = vsel %vm1524, %v3684, %v3685
        %v3687 = vrot.slane %v3613, 2
        %v3688 = vrot.slane %v3614, 2
        %v3689 = vsel %vm1524, %v3687, %v3688
        %v3690 = vrot.slane %v3615, 2
        %v3691 = vrot.slane %v3616, 2
        %v3692 = vsel %vm1524, %v3690, %v3691
        %v3703 = vrot.slane %v3617, 1
        %v3704 = vrot.slane %v3618, 1
        %v3705 = vsel %vm1491, %v3703, %v3704
        %v3707 = vrot.slane %v3617, 2
        %v3708 = vrot.slane %v3618, 2
        %v3709 = vsel %vm1524, %v3707, %v3708
        %v3713 = vrot.slane %v3619, 1
        %v3714 = vrot.slane %v3620, 1
        %v3715 = vsel %vm1491, %v3713, %v3714
        %v3717 = vrot.slane %v3619, 2
        %v3718 = vrot.slane %v3620, 2
        %v3719 = vsel %vm1524, %v3717, %v3718
        %v3721 = vpack.c.bf16 %v3603, %v3601
        %v3722 = vpack.c.bf16 %v3642, %v3639
        %v3723 = vpack.c.bf16 %v3674, %v3671
        %v3724 = vpack.c.bf16 %v3605, %v3603
        %v3725 = vpack.c.bf16 %v3645, %v3642
        %v3726 = vpack.c.bf16 %v3677, %v3674
        %v3727 = vpack.c.bf16 %v3607, %v3605
        %v3728 = vpack.c.bf16 %v3648, %v3645
        %v3729 = vpack.c.bf16 %v3680, %v3677
        %v3730 = vpack.c.bf16 %v3609, %v3607
        %v3731 = vpack.c.bf16 %v3651, %v3648
        %v3732 = vpack.c.bf16 %v3683, %v3680
        %v3733 = vpack.c.bf16 %v3611, %v3609
        %v3734 = vpack.c.bf16 %v3654, %v3651
        %v3735 = vpack.c.bf16 %v3686, %v3683
        %v3736 = vpack.c.bf16 %v3613, %v3611
        %v3737 = vpack.c.bf16 %v3657, %v3654
        %v3738 = vpack.c.bf16 %v3689, %v3686
        %v3739 = vpack.c.bf16 %v3615, %v3613
        %v3740 = vpack.c.bf16 %v3660, %v3657
        %v3741 = vpack.c.bf16 %v3692, %v3689
        %v3742 = vpack.c.bf16 %v3617, %v3615
        %v3743 = vpack.c.bf16 %v3705, %v3660
        %v3744 = vpack.c.bf16 %v3709, %v3692
        %v3745 = vpack.c.bf16 %v3619, %v3617
        %v3746 = vpack.c.bf16 %v3715, %v3705
        %v3747 = vpack.c.bf16 %v3719, %v3709
        %s3748 = scalar_lea.vmem [#allocation19], 1152
        %v3749 = vld [vmem:[%s3748] sm:$0xf]
        %v3750 = vld [vmem:[%s3748 + $0x4] sm:$0xf]
        %v3751 = vld [vmem:[%s3748 + $0x8] sm:$0xf]
        %v3752 = vld [vmem:[%s3748 + $0xc] sm:$0xf]
        %v3753 = vld [vmem:[%s3748 + $0x10] sm:$0xf]
        %v3754 = vld [vmem:[%s3748 + $0x14] sm:$0xf]
        %v3755 = vld [vmem:[%s3748 + $0x18] sm:$0xf]
        %v3756 = vld [vmem:[%s3748 + $0x1c] sm:$0xf]
        %v3757 = vld [vmem:[%s3748 + $0x20] sm:$0xf]
        %v3758 = vld [vmem:[%s3748 + $0x24] sm:$0xf]
        %v3759 = vld [vmem:[%s3748 + $0x28] sm:$0xf]
        %v3760 = vld [vmem:[%s3748 + $0x2c] sm:$0xf]
        %v3761 = vld [vmem:[%s3748 + $0x30] sm:$0xf]
        %v3762 = vld [vmem:[%s3748 + $0x34] sm:$0xf]
        %v3763 = vld [vmem:[%s3748 + $0x38] sm:$0xf]
        %v3764 = vld [vmem:[%s3748 + $0x3c] sm:$0xf]
        %v3765 = vld [vmem:[%s3748 + $0x40] sm:$0xf]
        %v3766 = vld [vmem:[%s3748 + $0x44] sm:$0xf]
        %v3767 = vld [vmem:[%s3748 + $0x48] sm:$0xf]
        %v3768 = vld [vmem:[%s3748 + $0x4c] sm:$0xf]
        %v3769 = vld [vmem:[%s3748 + $0x50] sm:$0xf]
        %v3770 = vld [vmem:[%s3748 + $0x54] sm:$0xf]
        %v3771 = vld [vmem:[%s3748 + $0x58] sm:$0xf]
        %v3772 = vld [vmem:[%s3748 + $0x5c] sm:$0xf]
        %v3773 = vld [vmem:[%s3748 + $0x60] sm:$0xf]
        %v3774 = vld [vmem:[%s3748 + $0x64] sm:$0xf]
        %v3775 = vld [vmem:[%s3748 + $0x68] sm:$0xf]
        %v3776 = vld [vmem:[%s3748 + $0x6c] sm:$0xf]
        %v3777 = vld [vmem:[%s3748 + $0x70] sm:$0xf]
        %v3778 = vld [vmem:[%s3748 + $0x74] sm:$0xf]
        %v3779 = vld [vmem:[%s3748 + $0x78] sm:$0xf]
        %v3780 = vld [vmem:[%s3748 + $0x7c] sm:$0xf]
        %v3781 = vld [vmem:[%s3748 + $0x80] sm:$0xf]
        %v3782 = vld [vmem:[%s3748 + $0x84] sm:$0xf]
        %v3783 = vld [vmem:[%s3748 + $0x88] sm:$0xf]
        %v3784 = vld [vmem:[%s3748 + $0x8c] sm:$0xf]
        %v3785 = vld [vmem:[%s3748 + $0x90] sm:$0xf]
        %v3786 = vld [vmem:[%s3748 + $0x94] sm:$0xf]
        %v3787 = vld [vmem:[%s3748 + $0x98] sm:$0xf]
        %v3788 = vld [vmem:[%s3748 + $0x9c] sm:$0xf]
        %v3789 = vld [vmem:[%s3748 + $0xa0] sm:$0xf]
        %v3790 = vld [vmem:[%s3748 + $0xa4] sm:$0xf]
        %v3791 = vld [vmem:[%s3748 + $0xa8] sm:$0xf]
        %v3792 = vld [vmem:[%s3748 + $0xac] sm:$0xf]
        %v3793 = vld [vmem:[%s3748 + $0xb0] sm:$0xf]
        %v3794 = vld [vmem:[%s3748 + $0xb4] sm:$0xf]
        %v3795 = vld [vmem:[%s3748 + $0xb8] sm:$0xf]
        %v3796 = vld [vmem:[%s3748 + $0xbc] sm:$0xf]
        %v3797 = vld [vmem:[%s3748 + $0xc0] sm:$0xf]
        %v3798 = vld [vmem:[%s3748 + $0xc4] sm:$0xf]
        %v3799 = vld [vmem:[%s3748 + $0xc8] sm:$0xf]
        %v3800 = vld [vmem:[%s3748 + $0xcc] sm:$0xf]
        %v3801 = vld [vmem:[%s3748 + $0xd0] sm:$0xf]
        %v3802 = vld [vmem:[%s3748 + $0xd4] sm:$0xf]
        %v3803 = vld [vmem:[%s3748 + $0xd8] sm:$0xf]
        %v3804 = vld [vmem:[%s3748 + $0xdc] sm:$0xf]
        %v3805 = vld [vmem:[%s3748 + $0xe0] sm:$0xf]
        %v3806 = vld [vmem:[%s3748 + $0xe4] sm:$0xf]
        %v3807 = vld [vmem:[%s3748 + $0xe8] sm:$0xf]
        %v3808 = vld [vmem:[%s3748 + $0xec] sm:$0xf]
        %v3809 = vld [vmem:[%s3748 + $0xf0] sm:$0xf]
        %v3810 = vld [vmem:[%s3748 + $0xf4] sm:$0xf]
        %v3811 = vld [vmem:[%s3748 + $0xf8] sm:$0xf]
        %v3812 = vld [vmem:[%s3748 + $0xfc] sm:$0xf]
        %v3813 = vld [vmem:[%s3748 + $0x100] sm:$0xf]
        %v3814 = vld [vmem:[%s3748 + $0x104] sm:$0xf]
        %v3815 = vld [vmem:[%s3748 + $0x108] sm:$0xf]
        %v3816 = vld [vmem:[%s3748 + $0x10c] sm:$0xf]
        %v3817 = vld [vmem:[%s3748 + $0x110] sm:$0xf]
        %v3818 = vld [vmem:[%s3748 + $0x114] sm:$0xf]
        %v3819 = vld [vmem:[%s3748 + $0x118] sm:$0xf]
        %v3820 = vld [vmem:[%s3748 + $0x11c] sm:$0xf]
        %v3821 = vld [vmem:[%s3748 + $0x120] sm:$0xf]
        %v3822 = vld [vmem:[%s3748 + $0x124] sm:$0xf]
        %v3823 = vld [vmem:[%s3748 + $0x128] sm:$0xf]
        %v3824 = vld [vmem:[%s3748 + $0x12c] sm:$0xf]
        %v3825 = vld [vmem:[%s3748 + $0x130] sm:$0xf]
        %v3826 = vld [vmem:[%s3748 + $0x134] sm:$0xf]
        %v3827 = vld [vmem:[%s3748 + $0x138] sm:$0xf]
        %v3828 = vld [vmem:[%s3748 + $0x13c] sm:$0xf]
        %v3829 = vld [vmem:[%s3748 + $0x140] sm:$0xf]
        %v3830 = vld [vmem:[%s3748 + $0x144] sm:$0xf]
        %v3831 = vld [vmem:[%s3748 + $0x148] sm:$0xf]
        %v3832 = vld [vmem:[%s3748 + $0x14c] sm:$0xf]
        %v3833 = vld [vmem:[%s3748 + $0x150] sm:$0xf]
        %v3834 = vld [vmem:[%s3748 + $0x154] sm:$0xf]
        %v3835 = vld [vmem:[%s3748 + $0x158] sm:$0xf]
        %v3836 = vld [vmem:[%s3748 + $0x15c] sm:$0xf]
        %v3837 = vld [vmem:[%s3748 + $0x160] sm:$0xf]
        %v3838 = vld [vmem:[%s3748 + $0x164] sm:$0xf]
        %v3839 = vld [vmem:[%s3748 + $0x168] sm:$0xf]
        %v3840 = vld [vmem:[%s3748 + $0x16c] sm:$0xf]
        %v3841 = vld [vmem:[%s3748 + $0x170] sm:$0xf]
        %v3842 = vld [vmem:[%s3748 + $0x174] sm:$0xf]
        %v3843 = vld [vmem:[%s3748 + $0x178] sm:$0xf]
        %v3844 = vld [vmem:[%s3748 + $0x17c] sm:$0xf]
        %v3845 = vld [vmem:[%s3748 + $0x180] sm:$0xf]
        %v3846 = vld [vmem:[%s3748 + $0x184] sm:$0xf]
        %v3847 = vld [vmem:[%s3748 + $0x188] sm:$0xf]
        %v3848 = vld [vmem:[%s3748 + $0x18c] sm:$0xf]
        %v3849 = vld [vmem:[%s3748 + $0x190] sm:$0xf]
        %v3850 = vld [vmem:[%s3748 + $0x194] sm:$0xf]
        %v3851 = vld [vmem:[%s3748 + $0x198] sm:$0xf]
        %v3852 = vld [vmem:[%s3748 + $0x19c] sm:$0xf]
        %v3853 = vld [vmem:[%s3748 + $0x1a0] sm:$0xf]
        %v3854 = vld [vmem:[%s3748 + $0x1a4] sm:$0xf]
        %v3855 = vld [vmem:[%s3748 + $0x1a8] sm:$0xf]
        %v3856 = vld [vmem:[%s3748 + $0x1ac] sm:$0xf]
        %v3857 = vld [vmem:[%s3748 + $0x1b0] sm:$0xf]
        %v3858 = vld [vmem:[%s3748 + $0x1b4] sm:$0xf]
        %v3859 = vld [vmem:[%s3748 + $0x1b8] sm:$0xf]
        %v3860 = vld [vmem:[%s3748 + $0x1bc] sm:$0xf]
        %v3861 = vld [vmem:[%s3748 + $0x1c0] sm:$0xf]
        %v3862 = vld [vmem:[%s3748 + $0x1c4] sm:$0xf]
        %v3863 = vld [vmem:[%s3748 + $0x1c8] sm:$0xf]
        %v3864 = vld [vmem:[%s3748 + $0x1cc] sm:$0xf]
        %v3865 = vld [vmem:[%s3748 + $0x1d0] sm:$0xf]
        %v3866 = vld [vmem:[%s3748 + $0x1d4] sm:$0xf]
        %v3867 = vld [vmem:[%s3748 + $0x1d8] sm:$0xf]
        %v3868 = vld [vmem:[%s3748 + $0x1dc] sm:$0xf]
        %v3869 = vld [vmem:[%s3748 + $0x1e0] sm:$0xf]
        %v3870 = vld [vmem:[%s3748 + $0x1e4] sm:$0xf]
        %v3871 = vld [vmem:[%s3748 + $0x1e8] sm:$0xf]
        %v3872 = vld [vmem:[%s3748 + $0x1ec] sm:$0xf]
        %v3873 = vld [vmem:[%s3748 + $0x1f0] sm:$0xf]
        %v3874 = vld [vmem:[%s3748 + $0x1f4] sm:$0xf]
        %v3875 = vld [vmem:[%s3748 + $0x1f8] sm:$0xf]
        %v3876 = vld [vmem:[%s3748 + $0x1fc] sm:$0xf]
        %v3877 = vld [vmem:[%s3748 + $0x200] sm:$0xf]
        %v3878 = vld [vmem:[%s3748 + $0x204] sm:$0xf]
        %v3879 = vld [vmem:[%s3748 + $0x208] sm:$0xf]
        %v3880 = vld [vmem:[%s3748 + $0x20c] sm:$0xf]
        %v3881 = vld [vmem:[%s3748 + $0x210] sm:$0xf]
        %v3882 = vld [vmem:[%s3748 + $0x214] sm:$0xf]
        %v3883 = vld [vmem:[%s3748 + $0x218] sm:$0xf]
        %v3884 = vld [vmem:[%s3748 + $0x21c] sm:$0xf]
        %v3885 = vld [vmem:[%s3748 + $0x220] sm:$0xf]
        %v3886 = vld [vmem:[%s3748 + $0x224] sm:$0xf]
        %v3887 = vld [vmem:[%s3748 + $0x228] sm:$0xf]
        %v3888 = vld [vmem:[%s3748 + $0x22c] sm:$0xf]
        %v3889 = vld [vmem:[%s3748 + $0x230] sm:$0xf]
        %v3890 = vld [vmem:[%s3748 + $0x234] sm:$0xf]
        %v3891 = vld [vmem:[%s3748 + $0x238] sm:$0xf]
        %v3892 = vld [vmem:[%s3748 + $0x23c] sm:$0xf]
        %s3893 = scalar_lea.vmem [#allocation20], 2
        %v3894 = vld [vmem:[%s3893] sm:$0x1]
        %v3896 = vlaneseq
        %v3897 = vshrl.u32 %v3896, 7
        %v3898 = vsub.s32 0, %v3897
        %v3899 = vrot.slane %v3894, %v3898
        %v4045 = vunpack.c.l.b16 %v3749
        %v4046 = vunpack.c.l.b16 %v3750
        %v4047 = vunpack.c.l.b16 %v3751
        %v4048 = vunpack.c.l.b16 %v3752
        %v4049 = vunpack.c.l.b16 %v3753
        %v4050 = vunpack.c.l.b16 %v3754
        %v4051 = vunpack.c.l.b16 %v3755
        %v4052 = vunpack.c.l.b16 %v3756
        %v4053 = vunpack.c.l.b16 %v3757
        %v4054 = vunpack.c.l.b16 %v3758
        %v4055 = vunpack.c.l.b16 %v3759
        %v4056 = vunpack.c.l.b16 %v3760
        %v4057 = vunpack.c.l.b16 %v3761
        %v4058 = vunpack.c.l.b16 %v3762
        %v4059 = vunpack.c.l.b16 %v3763
        %v4060 = vunpack.c.l.b16 %v3764
        %v4061 = vunpack.c.l.b16 %v3765
        %v4062 = vunpack.c.l.b16 %v3766
        %v4063 = vunpack.c.l.b16 %v3767
        %v4064 = vunpack.c.l.b16 %v3768
        %v4065 = vunpack.c.l.b16 %v3769
        %v4066 = vunpack.c.l.b16 %v3770
        %v4067 = vunpack.c.l.b16 %v3771
        %v4068 = vunpack.c.l.b16 %v3772
        %v4069 = vunpack.c.l.b16 %v3773
        %v4070 = vunpack.c.l.b16 %v3774
        %v4071 = vunpack.c.l.b16 %v3775
        %v4072 = vunpack.c.l.b16 %v3776
        %v4073 = vunpack.c.l.b16 %v3777
        %v4074 = vunpack.c.l.b16 %v3778
        %v4075 = vunpack.c.l.b16 %v3779
        %v4076 = vunpack.c.l.b16 %v3780
        %v4077 = vunpack.c.l.b16 %v3781
        %v4078 = vunpack.c.l.b16 %v3782
        %v4079 = vunpack.c.l.b16 %v3783
        %v4080 = vunpack.c.l.b16 %v3784
        %v4081 = vunpack.c.l.b16 %v3785
        %v4082 = vunpack.c.l.b16 %v3786
        %v4083 = vunpack.c.l.b16 %v3787
        %v4084 = vunpack.c.l.b16 %v3788
        %v4085 = vunpack.c.l.b16 %v3789
        %v4086 = vunpack.c.l.b16 %v3790
        %v4087 = vunpack.c.l.b16 %v3791
        %v4088 = vunpack.c.l.b16 %v3792
        %v4089 = vunpack.c.l.b16 %v3793
        %v4090 = vunpack.c.l.b16 %v3794
        %v4091 = vunpack.c.l.b16 %v3795
        %v4092 = vunpack.c.l.b16 %v3796
        %v4093 = vunpack.c.l.b16 %v3797
        %v4094 = vunpack.c.l.b16 %v3798
        %v4095 = vunpack.c.l.b16 %v3799
        %v4096 = vunpack.c.l.b16 %v3800
        %v4097 = vunpack.c.l.b16 %v3801
        %v4098 = vunpack.c.l.b16 %v3802
        %v4099 = vunpack.c.l.b16 %v3803
        %v4100 = vunpack.c.l.b16 %v3804
        %v4101 = vunpack.c.l.b16 %v3805
        %v4102 = vunpack.c.l.b16 %v3806
        %v4103 = vunpack.c.l.b16 %v3807
        %v4104 = vunpack.c.l.b16 %v3808
        %v4105 = vunpack.c.l.b16 %v3809
        %v4106 = vunpack.c.l.b16 %v3810
        %v4107 = vunpack.c.l.b16 %v3811
        %v4108 = vunpack.c.l.b16 %v3812
        %v4109 = vunpack.c.l.b16 %v3813
        %v4110 = vunpack.c.l.b16 %v3814
        %v4111 = vunpack.c.l.b16 %v3815
        %v4112 = vunpack.c.l.b16 %v3816
        %v4113 = vunpack.c.l.b16 %v3817
        %v4114 = vunpack.c.l.b16 %v3818
        %v4115 = vunpack.c.l.b16 %v3819
        %v4116 = vunpack.c.l.b16 %v3820
        %v4117 = vunpack.c.l.b16 %v3821
        %v4118 = vunpack.c.l.b16 %v3822
        %v4119 = vunpack.c.l.b16 %v3823
        %v4120 = vunpack.c.l.b16 %v3824
        %v4121 = vunpack.c.l.b16 %v3825
        %v4122 = vunpack.c.l.b16 %v3826
        %v4123 = vunpack.c.l.b16 %v3827
        %v4124 = vunpack.c.l.b16 %v3828
        %v4125 = vunpack.c.l.b16 %v3829
        %v4126 = vunpack.c.l.b16 %v3830
        %v4127 = vunpack.c.l.b16 %v3831
        %v4128 = vunpack.c.l.b16 %v3832
        %v4129 = vunpack.c.l.b16 %v3833
        %v4130 = vunpack.c.l.b16 %v3834
        %v4131 = vunpack.c.l.b16 %v3835
        %v4132 = vunpack.c.l.b16 %v3836
        %v4133 = vunpack.c.l.b16 %v3837
        %v4134 = vunpack.c.l.b16 %v3838
        %v4135 = vunpack.c.l.b16 %v3839
        %v4136 = vunpack.c.l.b16 %v3840
        %v4137 = vunpack.c.l.b16 %v3841
        %v4138 = vunpack.c.l.b16 %v3842
        %v4139 = vunpack.c.l.b16 %v3843
        %v4140 = vunpack.c.l.b16 %v3844
        %v4141 = vunpack.c.l.b16 %v3845
        %v4142 = vunpack.c.l.b16 %v3846
        %v4143 = vunpack.c.l.b16 %v3847
        %v4144 = vunpack.c.l.b16 %v3848
        %v4145 = vunpack.c.l.b16 %v3849
        %v4146 = vunpack.c.l.b16 %v3850
        %v4147 = vunpack.c.l.b16 %v3851
        %v4148 = vunpack.c.l.b16 %v3852
        %v4149 = vunpack.c.l.b16 %v3853
        %v4150 = vunpack.c.l.b16 %v3854
        %v4151 = vunpack.c.l.b16 %v3855
        %v4152 = vunpack.c.l.b16 %v3856
        %v4153 = vunpack.c.l.b16 %v3857
        %v4154 = vunpack.c.l.b16 %v3858
        %v4155 = vunpack.c.l.b16 %v3859
        %v4156 = vunpack.c.l.b16 %v3860
        %v4157 = vunpack.c.l.b16 %v3861
        %v4158 = vunpack.c.l.b16 %v3862
        %v4159 = vunpack.c.l.b16 %v3863
        %v4160 = vunpack.c.l.b16 %v3864
        %v4161 = vunpack.c.l.b16 %v3865
        %v4162 = vunpack.c.l.b16 %v3866
        %v4163 = vunpack.c.l.b16 %v3867
        %v4164 = vunpack.c.l.b16 %v3868
        %v4165 = vunpack.c.l.b16 %v3869
        %v4166 = vunpack.c.l.b16 %v3870
        %v4167 = vunpack.c.l.b16 %v3871
        %v4168 = vunpack.c.l.b16 %v3872
        %v4169 = vunpack.c.l.b16 %v3873
        %v4170 = vunpack.c.l.b16 %v3874
        %v4171 = vunpack.c.l.b16 %v3875
        %v4172 = vunpack.c.l.b16 %v3876
        %v4173 = vunpack.c.l.b16 %v3877
        %v4174 = vunpack.c.l.b16 %v3878
        %v4175 = vunpack.c.l.b16 %v3879
        %v4176 = vunpack.c.l.b16 %v3880
        %v4177 = vunpack.c.l.b16 %v3881
        %v4178 = vunpack.c.l.b16 %v3882
        %v4179 = vunpack.c.l.b16 %v3883
        %v4180 = vunpack.c.l.b16 %v3884
        %v4181 = vunpack.c.l.b16 %v3885
        %v4182 = vunpack.c.l.b16 %v3886
        %v4183 = vunpack.c.l.b16 %v3887
        %v4184 = vunpack.c.l.b16 %v3888
        %v4185 = vunpack.c.l.b16 %v3889
        %v4186 = vunpack.c.l.b16 %v3890
        %v4187 = vunpack.c.l.b16 %v3891
        %v4188 = vunpack.c.l.b16 %v3892
        %v4189 = vpack.c.b16 %v4046, %v4045
        %v4190 = vpack.c.b16 %v4048, %v4047
        %v4191 = vpack.c.b16 %v4050, %v4049
        %v4192 = vpack.c.b16 %v4052, %v4051
        %v4193 = vpack.c.b16 %v4054, %v4053
        %v4194 = vpack.c.b16 %v4056, %v4055
        %v4195 = vpack.c.b16 %v4058, %v4057
        %v4196 = vpack.c.b16 %v4060, %v4059
        %v4197 = vpack.c.b16 %v4062, %v4061
        %v4198 = vpack.c.b16 %v4064, %v4063
        %v4199 = vpack.c.b16 %v4066, %v4065
        %v4200 = vpack.c.b16 %v4068, %v4067
        %v4201 = vpack.c.b16 %v4070, %v4069
        %v4202 = vpack.c.b16 %v4072, %v4071
        %v4203 = vpack.c.b16 %v4074, %v4073
        %v4204 = vpack.c.b16 %v4076, %v4075
        %v4205 = vpack.c.b16 %v4078, %v4077
        %v4206 = vpack.c.b16 %v4080, %v4079
        %v4207 = vpack.c.b16 %v4082, %v4081
        %v4208 = vpack.c.b16 %v4084, %v4083
        %v4209 = vpack.c.b16 %v4086, %v4085
        %v4210 = vpack.c.b16 %v4088, %v4087
        %v4211 = vpack.c.b16 %v4090, %v4089
        %v4212 = vpack.c.b16 %v4092, %v4091
        %v4213 = vpack.c.b16 %v4094, %v4093
        %v4214 = vpack.c.b16 %v4096, %v4095
        %v4215 = vpack.c.b16 %v4098, %v4097
        %v4216 = vpack.c.b16 %v4100, %v4099
        %v4217 = vpack.c.b16 %v4102, %v4101
        %v4218 = vpack.c.b16 %v4104, %v4103
        %v4219 = vpack.c.b16 %v4106, %v4105
        %v4220 = vpack.c.b16 %v4108, %v4107
        %v4221 = vpack.c.b16 %v4110, %v4109
        %v4222 = vpack.c.b16 %v4112, %v4111
        %v4223 = vpack.c.b16 %v4114, %v4113
        %v4224 = vpack.c.b16 %v4116, %v4115
        %v4225 = vpack.c.b16 %v4118, %v4117
        %v4226 = vpack.c.b16 %v4120, %v4119
        %v4227 = vpack.c.b16 %v4122, %v4121
        %v4228 = vpack.c.b16 %v4124, %v4123
        %v4229 = vpack.c.b16 %v4126, %v4125
        %v4230 = vpack.c.b16 %v4128, %v4127
        %v4231 = vpack.c.b16 %v4130, %v4129
        %v4232 = vpack.c.b16 %v4132, %v4131
        %v4233 = vpack.c.b16 %v4134, %v4133
        %v4234 = vpack.c.b16 %v4136, %v4135
        %v4235 = vpack.c.b16 %v4138, %v4137
        %v4236 = vpack.c.b16 %v4140, %v4139
        %v4237 = vpack.c.b16 %v4142, %v4141
        %v4238 = vpack.c.b16 %v4144, %v4143
        %v4239 = vpack.c.b16 %v4146, %v4145
        %v4240 = vpack.c.b16 %v4148, %v4147
        %v4241 = vpack.c.b16 %v4150, %v4149
        %v4242 = vpack.c.b16 %v4152, %v4151
        %v4243 = vpack.c.b16 %v4154, %v4153
        %v4244 = vpack.c.b16 %v4156, %v4155
        %v4245 = vpack.c.b16 %v4158, %v4157
        %v4246 = vpack.c.b16 %v4160, %v4159
        %v4247 = vpack.c.b16 %v4162, %v4161
        %v4248 = vpack.c.b16 %v4164, %v4163
        %v4249 = vpack.c.b16 %v4166, %v4165
        %v4250 = vpack.c.b16 %v4168, %v4167
        %v4251 = vpack.c.b16 %v4170, %v4169
        %v4252 = vpack.c.b16 %v4172, %v4171
        %v4253 = vpack.c.b16 %v4174, %v4173
        %v4254 = vpack.c.b16 %v4176, %v4175
        %v4255 = vpack.c.b16 %v4178, %v4177
        %v4256 = vpack.c.b16 %v4180, %v4179
        %v4257 = vpack.c.b16 %v4182, %v4181
        %v4258 = vpack.c.b16 %v4184, %v4183
        %v4259 = vpack.c.b16 %v4186, %v4185
        %v4260 = vpack.c.b16 %v4188, %v4187
        %4333 = vmatprep.subr.bf16.mxu0 0
        %4334 = vmatpush1.bf16.msra.mxu0 %v4189
        %4335 = vmatprep.subr.bf16.mxu0 0
        %4336 = vmatpush1.bf16.msra.mxu0 %v4190
        %4337 = vmatprep.subr.bf16.mxu0 0
        %4338 = vmatpush1.bf16.msra.mxu0 %v4191
        %4339 = vmatprep.subr.bf16.mxu0 0
        %4340 = vmatpush1.bf16.msra.mxu0 %v4192
        %4341 = vmatprep.subr.bf16.mxu0 0
        %4342 = vmatpush1.bf16.msra.mxu0 %v4193
        %4343 = vmatprep.subr.bf16.mxu0 0
        %4344 = vmatpush1.bf16.msra.mxu0 %v4194
        %4345 = vmatprep.subr.bf16.mxu0 0
        %4346 = vmatpush1.bf16.msra.mxu0 %v4195
        %4347 = vmatprep.subr.bf16.mxu0 0
        %4348 = vmatpush1.bf16.msra.mxu0 %v4196
        %4349 = vmatprep.subr.bf16.mxu0 0
        %4350 = vmatpush1.bf16.msra.mxu0 %v4197
        %4351 = vmatprep.subr.bf16.mxu0 0
        %4352 = vmatpush1.bf16.msra.mxu0 %v4198
        %4353 = vmatprep.subr.bf16.mxu0 0
        %4354 = vmatpush1.bf16.msra.mxu0 %v4199
        %4355 = vmatprep.subr.bf16.mxu0 0
        %4356 = vmatpush1.bf16.msra.mxu0 %v4200
        %4357 = vmatprep.subr.bf16.mxu0 0
        %4358 = vmatpush1.bf16.msra.mxu0 %v4201
        %4359 = vmatprep.subr.bf16.mxu0 0
        %4360 = vmatpush1.bf16.msra.mxu0 %v4202
        %4361 = vmatprep.subr.bf16.mxu0 0
        %4362 = vmatpush1.bf16.msra.mxu0 %v4203
        %4363 = vmatprep.subr.bf16.mxu0 0
        %4364 = vmatpush1.bf16.msra.mxu0 %v4204
        %4365 = vmatprep.mubr.bf16.mxu0 %v3722
        %4366 = vmatmul.mubr.bf16.gmra.mrb[0].mxu0 %v3721
        %v4367 = vpop.f32.mrb[0].mxu0
        %v4368 = vadd.f32 %v3899, %v4367
        %v4369 = vpop.f32.mrb[0].mxu0
        %v4370 = vpop.f32.mrb[0].mxu0
        %v4371 = vadd.f32 %v3899, %v4370
        %v4372 = vpop.f32.mrb[0].mxu0
        %4373 = vmatprep.mubr.bf16.mxu0 %v3728
        %4374 = vmatmul.mubr.bf16.gmra.mrb[0].mxu0 %v3727
        %v4375 = vpop.f32.mrb[0].mxu0
        %v4376 = vadd.f32 %v3899, %v4375
        %v4377 = vpop.f32.mrb[0].mxu0
        %v4378 = vpop.f32.mrb[0].mxu0
        %v4379 = vadd.f32 %v3899, %v4378
        %v4380 = vpop.f32.mrb[0].mxu0
        %4381 = vmatprep.mubr.bf16.mxu0 %v3734
        %4382 = vmatmul.mubr.bf16.gmra.mrb[0].mxu0 %v3733
        %v4383 = vpop.f32.mrb[0].mxu0
        %v4384 = vadd.f32 %v3899, %v4383
        %v4385 = vpop.f32.mrb[0].mxu0
        %v4386 = vpop.f32.mrb[0].mxu0
        %v4387 = vadd.f32 %v3899, %v4386
        %v4388 = vpop.f32.mrb[0].mxu0
        %4389 = vmatprep.mubr.bf16.mxu0 %v3740
        %4390 = vmatmul.mubr.bf16.gmra.mrb[0].mxu0 %v3739
        %v4391 = vpop.f32.mrb[0].mxu0
        %v4392 = vadd.f32 %v3899, %v4391
        %v4393 = vpop.f32.mrb[0].mxu0
        %v4394 = vpop.f32.mrb[0].mxu0
        %v4395 = vadd.f32 %v3899, %v4394
        %v4396 = vpop.f32.mrb[0].mxu0
        %4397 = vdwg.mxu0
        %4398 = vmatprep.subr.bf16.mxu0 0
        %4399 = vmatpush1.bf16.msra.mxu0 %v4205
        %4400 = vmatprep.subr.bf16.mxu0 0
        %4401 = vmatpush1.bf16.msra.mxu0 %v4206
        %4402 = vmatprep.subr.bf16.mxu0 0
        %4403 = vmatpush1.bf16.msra.mxu0 %v4207
        %4404 = vmatprep.subr.bf16.mxu0 0
        %4405 = vmatpush1.bf16.msra.mxu0 %v4208
        %4406 = vmatprep.subr.bf16.mxu0 0
        %4407 = vmatpush1.bf16.msra.mxu0 %v4209
        %4408 = vmatprep.subr.bf16.mxu0 0
        %4409 = vmatpush1.bf16.msra.mxu0 %v4210
        %4410 = vmatprep.subr.bf16.mxu0 0
        %4411 = vmatpush1.bf16.msra.mxu0 %v4211
        %4412 = vmatprep.subr.bf16.mxu0 0
        %4413 = vmatpush1.bf16.msra.mxu0 %v4212
        %4414 = vmatprep.subr.bf16.mxu0 0
        %4415 = vmatpush1.bf16.msra.mxu0 %v4213
        %4416 = vmatprep.subr.bf16.mxu0 0
        %4417 = vmatpush1.bf16.msra.mxu0 %v4214
        %4418 = vmatprep.subr.bf16.mxu0 0
        %4419 = vmatpush1.bf16.msra.mxu0 %v4215
        %4420 = vmatprep.subr.bf16.mxu0 0
        %4421 = vmatpush1.bf16.msra.mxu0 %v4216
        %4422 = vmatprep.subr.bf16.mxu0 0
        %4423 = vmatpush1.bf16.msra.mxu0 %v4217
        %4424 = vmatprep.subr.bf16.mxu0 0
        %4425 = vmatpush1.bf16.msra.mxu0 %v4218
        %4426 = vmatprep.subr.bf16.mxu0 0
        %4427 = vmatpush1.bf16.msra.mxu0 %v4219
        %4428 = vmatprep.subr.bf16.mxu0 0
        %4429 = vmatpush1.bf16.msra.mxu0 %v4220
        %4430 = vmatprep.mubr.bf16.mxu0 %v3724
        %4431 = vmatmul.mubr.bf16.gmra.mrb[0].mxu0 %v3723
        %v4432 = vpop.f32.mrb[0].mxu0
        %v4433 = vadd.f32 %v4368, %v4432
        %v4434 = vpop.f32.mrb[0].mxu0
        %v4435 = vpop.f32.mrb[0].mxu0
        %v4436 = vadd.f32 %v4371, %v4435
        %v4437 = vpop.f32.mrb[0].mxu0
        %4438 = vmatprep.mubr.bf16.mxu0 %v3730
        %4439 = vmatmul.mubr.bf16.gmra.mrb[0].mxu0 %v3729
        %v4440 = vpop.f32.mrb[0].mxu0
        %v4441 = vadd.f32 %v4376, %v4440
        %v4442 = vpop.f32.mrb[0].mxu0
        %v4443 = vpop.f32.mrb[0].mxu0
        %v4444 = vadd.f32 %v4379, %v4443
        %v4445 = vpop.f32.mrb[0].mxu0
        %4446 = vmatprep.mubr.bf16.mxu0 %v3736
        %4447 = vmatmul.mubr.bf16.gmra.mrb[0].mxu0 %v3735
        %v4448 = vpop.f32.mrb[0].mxu0
        %v4449 = vadd.f32 %v4384, %v4448
        %v4450 = vpop.f32.mrb[0].mxu0
        %v4451 = vpop.f32.mrb[0].mxu0
        %v4452 = vadd.f32 %v4387, %v4451
        %v4453 = vpop.f32.mrb[0].mxu0
        %4454 = vmatprep.mubr.bf16.mxu0 %v3742
        %4455 = vmatmul.mubr.bf16.gmra.mrb[0].mxu0 %v3741
        %v4456 = vpop.f32.mrb[0].mxu0
        %v4457 = vadd.f32 %v4392, %v4456
        %v4458 = vpop.f32.mrb[0].mxu0
        %v4459 = vpop.f32.mrb[0].mxu0
        %v4460 = vadd.f32 %v4395, %v4459
        %v4461 = vpop.f32.mrb[0].mxu0
        %4462 = vdwg.mxu0
        %4463 = vmatprep.subr.bf16.mxu0 0
        %4464 = vmatpush1.bf16.msra.mxu0 %v4221
        %4465 = vmatprep.subr.bf16.mxu0 0
        %4466 = vmatpush1.bf16.msra.mxu0 %v4222
        %4467 = vmatprep.subr.bf16.mxu0 0
        %4468 = vmatpush1.bf16.msra.mxu0 %v4223
        %4469 = vmatprep.subr.bf16.mxu0 0
        %4470 = vmatpush1.bf16.msra.mxu0 %v4224
        %4471 = vmatprep.subr.bf16.mxu0 0
        %4472 = vmatpush1.bf16.msra.mxu0 %v4225
        %4473 = vmatprep.subr.bf16.mxu0 0
        %4474 = vmatpush1.bf16.msra.mxu0 %v4226
        %4475 = vmatprep.subr.bf16.mxu0 0
        %4476 = vmatpush1.bf16.msra.mxu0 %v4227
        %4477 = vmatprep.subr.bf16.mxu0 0
        %4478 = vmatpush1.bf16.msra.mxu0 %v4228
        %4479 = vmatprep.subr.bf16.mxu0 0
        %4480 = vmatpush1.bf16.msra.mxu0 %v4229
        %4481 = vmatprep.subr.bf16.mxu0 0
        %4482 = vmatpush1.bf16.msra.mxu0 %v4230
        %4483 = vmatprep.subr.bf16.mxu0 0
        %4484 = vmatpush1.bf16.msra.mxu0 %v4231
        %4485 = vmatprep.subr.bf16.mxu0 0
        %4486 = vmatpush1.bf16.msra.mxu0 %v4232
        %4487 = vmatprep.subr.bf16.mxu0 0
        %4488 = vmatpush1.bf16.msra.mxu0 %v4233
        %4489 = vmatprep.subr.bf16.mxu0 0
        %4490 = vmatpush1.bf16.msra.mxu0 %v4234
        %4491 = vmatprep.subr.bf16.mxu0 0
        %4492 = vmatpush1.bf16.msra.mxu0 %v4235
        %4493 = vmatprep.subr.bf16.mxu0 0
        %4494 = vmatpush1.bf16.msra.mxu0 %v4236
        %4495 = vmatprep.mubr.bf16.mxu0 %v3726
        %4496 = vmatmul.mubr.bf16.gmra.mrb[0].mxu0 %v3725
        %v4497 = vpop.f32.mrb[0].mxu0
        %v4498 = vadd.f32 %v4433, %v4497
        %v4499 = vpop.f32.mrb[0].mxu0
        %v4500 = vpop.f32.mrb[0].mxu0
        %v4501 = vadd.f32 %v4436, %v4500
        %v4502 = vpop.f32.mrb[0].mxu0
        %4503 = vmatprep.mubr.bf16.mxu0 %v3732
        %4504 = vmatmul.mubr.bf16.gmra.mrb[0].mxu0 %v3731
        %v4505 = vpop.f32.mrb[0].mxu0
        %v4506 = vadd.f32 %v4441, %v4505
        %v4507 = vpop.f32.mrb[0].mxu0
        %v4508 = vpop.f32.mrb[0].mxu0
        %v4509 = vadd.f32 %v4444, %v4508
        %v4510 = vpop.f32.mrb[0].mxu0
        %4511 = vmatprep.mubr.bf16.mxu0 %v3738
        %4512 = vmatmul.mubr.bf16.gmra.mrb[0].mxu0 %v3737
        %v4513 = vpop.f32.mrb[0].mxu0
        %v4514 = vadd.f32 %v4449, %v4513
        %v4515 = vpop.f32.mrb[0].mxu0
        %v4516 = vpop.f32.mrb[0].mxu0
        %v4517 = vadd.f32 %v4452, %v4516
        %v4518 = vpop.f32.mrb[0].mxu0
        %4519 = vmatprep.mubr.bf16.mxu0 %v3744
        %4520 = vmatmul.mubr.bf16.gmra.mrb[0].mxu0 %v3743
        %v4521 = vpop.f32.mrb[0].mxu0
        %v4522 = vadd.f32 %v4457, %v4521
        %v4523 = vpop.f32.mrb[0].mxu0
        %v4524 = vpop.f32.mrb[0].mxu0
        %v4525 = vadd.f32 %v4460, %v4524
        %v4526 = vpop.f32.mrb[0].mxu0
        %4527 = vdwg.mxu0
        %4528 = vmatprep.subr.bf16.mxu0 0
        %4529 = vmatpush1.bf16.msra.mxu0 %v4237
        %4530 = vmatprep.subr.bf16.mxu0 0
        %4531 = vmatpush1.bf16.msra.mxu0 %v4238
        %4532 = vmatprep.subr.bf16.mxu0 0
        %4533 = vmatpush1.bf16.msra.mxu0 %v4239
        %4534 = vmatprep.subr.bf16.mxu0 0
        %4535 = vmatpush1.bf16.msra.mxu0 %v4240
        %4536 = vmatprep.subr.bf16.mxu0 0
        %4537 = vmatpush1.bf16.msra.mxu0 %v4241
        %4538 = vmatprep.subr.bf16.mxu0 0
        %4539 = vmatpush1.bf16.msra.mxu0 %v4242
        %4540 = vmatprep.subr.bf16.mxu0 0
        %4541 = vmatpush1.bf16.msra.mxu0 %v4243
        %4542 = vmatprep.subr.bf16.mxu0 0
        %4543 = vmatpush1.bf16.msra.mxu0 %v4244
        %4544 = vmatprep.subr.bf16.mxu0 0
        %4545 = vmatpush1.bf16.msra.mxu0 %v4245
        %4546 = vmatprep.subr.bf16.mxu0 0
        %4547 = vmatpush1.bf16.msra.mxu0 %v4246
        %4548 = vmatprep.subr.bf16.mxu0 0
        %4549 = vmatpush1.bf16.msra.mxu0 %v4247
        %4550 = vmatprep.subr.bf16.mxu0 0
        %4551 = vmatpush1.bf16.msra.mxu0 %v4248
        %4552 = vmatprep.subr.bf16.mxu0 0
        %4553 = vmatpush1.bf16.msra.mxu0 %v4249
        %4554 = vmatprep.subr.bf16.mxu0 0
        %4555 = vmatpush1.bf16.msra.mxu0 %v4250
        %4556 = vmatprep.subr.bf16.mxu0 0
        %4557 = vmatpush1.bf16.msra.mxu0 %v4251
        %4558 = vmatprep.subr.bf16.mxu0 0
        %4559 = vmatpush1.bf16.msra.mxu0 %v4252
        %4560 = vmatprep.mubr.bf16.mxu0 %v3728
        %4561 = vmatmul.mubr.bf16.gmra.mrb[0].mxu0 %v3727
        %v4562 = vpop.f32.mrb[0].mxu0
        %v4563 = vadd.f32 %v4498, %v4562
        %v4564 = vpop.f32.mrb[0].mxu0
        %v4565 = vpop.f32.mrb[0].mxu0
        %v4566 = vadd.f32 %v4501, %v4565
        %v4567 = vpop.f32.mrb[0].mxu0
        %4568 = vmatprep.mubr.bf16.mxu0 %v3734
        %4569 = vmatmul.mubr.bf16.gmra.mrb[0].mxu0 %v3733
        %v4570 = vpop.f32.mrb[0].mxu0
        %v4571 = vadd.f32 %v4506, %v4570
        %v4572 = vpop.f32.mrb[0].mxu0
        %v4573 = vpop.f32.mrb[0].mxu0
        %v4574 = vadd.f32 %v4509, %v4573
        %v4575 = vpop.f32.mrb[0].mxu0
        %4576 = vmatprep.mubr.bf16.mxu0 %v3740
        %4577 = vmatmul.mubr.bf16.gmra.mrb[0].mxu0 %v3739
        %v4578 = vpop.f32.mrb[0].mxu0
        %v4579 = vadd.f32 %v4514, %v4578
        %v4580 = vpop.f32.mrb[0].mxu0
        %v4581 = vpop.f32.mrb[0].mxu0
        %v4582 = vadd.f32 %v4517, %v4581
        %v4583 = vpop.f32.mrb[0].mxu0
        %4584 = vmatprep.mubr.bf16.mxu0 %v3746
        %4585 = vmatmul.mubr.bf16.gmra.mrb[0].mxu0 %v3745
        %v4586 = vpop.f32.mrb[0].mxu0
        %v4587 = vadd.f32 %v4522, %v4586
        %v4588 = vpop.f32.mrb[0].mxu0
        %v4589 = vpop.f32.mrb[0].mxu0
        %v4590 = vadd.f32 %v4525, %v4589
        %v4591 = vpop.f32.mrb[0].mxu0
        %4592 = vdwg.mxu0
        %4593 = vmatprep.subr.bf16.mxu0 0
        %4594 = vmatpush1.bf16.msra.mxu0 %v4253
        %4595 = vmatprep.subr.bf16.mxu0 0
        %4596 = vmatpush1.bf16.msra.mxu0 %v4254
        %4597 = vmatprep.subr.bf16.mxu0 0
        %4598 = vmatpush1.bf16.msra.mxu0 %v4255
        %4599 = vmatprep.subr.bf16.mxu0 0
        %4600 = vmatpush1.bf16.msra.mxu0 %v4256
        %4601 = vmatprep.subr.bf16.mxu0 0
        %4602 = vmatpush1.bf16.msra.mxu0 %v4257
        %4603 = vmatprep.subr.bf16.mxu0 0
        %4604 = vmatpush1.bf16.msra.mxu0 %v4258
        %4605 = vmatprep.subr.bf16.mxu0 0
        %4606 = vmatpush1.bf16.msra.mxu0 %v4259
        %4607 = vmatprep.subr.bf16.mxu0 0
        %4608 = vmatpush1.bf16.msra.mxu0 %v4260
        %4609 = vmatprep.subr.bf16.mxu0 0
        %4610 = vmatpush1.bf16.msra.mxu0 0
        %4611 = vmatprep.subr.bf16.mxu0 0
        %4612 = vmatpush1.bf16.msra.mxu0 0
        %4613 = vmatprep.subr.bf16.mxu0 0
        %4614 = vmatpush1.bf16.msra.mxu0 0
        %4615 = vmatprep.subr.bf16.mxu0 0
        %4616 = vmatpush1.bf16.msra.mxu0 0
        %4617 = vmatprep.subr.bf16.mxu0 0
        %4618 = vmatpush1.bf16.msra.mxu0 0
        %4619 = vmatprep.subr.bf16.mxu0 0
        %4620 = vmatpush1.bf16.msra.mxu0 0
        %4621 = vmatprep.subr.bf16.mxu0 0
        %4622 = vmatpush1.bf16.msra.mxu0 0
        %4623 = vmatprep.subr.bf16.mxu0 0
        %4624 = vmatpush1.bf16.msra.mxu0 0
        %4625 = vmatprep.mubr.bf16.mxu0 0
        %4626 = vmatmul.mubr.bf16.gmra.mrb[0].mxu0 %v3729
        %v4627 = vpop.f32.mrb[0].mxu0
        %v4628 = vadd.f32 %v4563, %v4627
        %v4629 = vpop.f32.mrb[0].mxu0
        %v4630 = vpop.f32.mrb[0].mxu0
        %v4631 = vadd.f32 %v4566, %v4630
        %v4632 = vpop.f32.mrb[0].mxu0
        %4633 = vmatprep.mubr.bf16.mxu0 0
        %4634 = vmatmul.mubr.bf16.gmra.mrb[0].mxu0 %v3735
        %v4635 = vpop.f32.mrb[0].mxu0
        %v4636 = vadd.f32 %v4571, %v4635
        %v4637 = vpop.f32.mrb[0].mxu0
        %v4638 = vpop.f32.mrb[0].mxu0
        %v4639 = vadd.f32 %v4574, %v4638
        %v4640 = vpop.f32.mrb[0].mxu0
        %4641 = vmatprep.mubr.bf16.mxu0 0
        %4642 = vmatmul.mubr.bf16.gmra.mrb[0].mxu0 %v3741
        %v4643 = vpop.f32.mrb[0].mxu0
        %v4644 = vadd.f32 %v4579, %v4643
        %v4645 = vpop.f32.mrb[0].mxu0
        %v4646 = vpop.f32.mrb[0].mxu0
        %v4647 = vadd.f32 %v4582, %v4646
        %v4648 = vpop.f32.mrb[0].mxu0
        %4649 = vmatprep.mubr.bf16.mxu0 0
        %4650 = vmatmul.mubr.bf16.gmra.mrb[0].mxu0 %v3747
        %v4651 = vpop.f32.mrb[0].mxu0
        %v4652 = vadd.f32 %v4587, %v4651
        %v4653 = vpop.f32.mrb[0].mxu0
        %v4654 = vpop.f32.mrb[0].mxu0
        %v4655 = vadd.f32 %v4590, %v4654
        %v4656 = vpop.f32.mrb[0].mxu0
        %4657 = vdwg.mxu0
        %v4658 = vmax.f32 %v4628, 0.0
        %v4659 = vmax.f32 %v4631, 0.0
        %v4660 = vmax.f32 %v4636, 0.0
        %v4661 = vmax.f32 %v4639, 0.0
        %v4662 = vmax.f32 %v4644, 0.0
        %v4663 = vmax.f32 %v4647, 0.0
        %v4664 = vmax.f32 %v4652, 0.0
        %v4665 = vmax.f32 %v4655, 0.0
        %4666 = vst [vmem:[%s1446 + $0x1] sm:$0xff] %v4658
        %4667 = vst [vmem:[%s1446 + $0x11] sm:$0xff] %v4659
        %4668 = vst [vmem:[%s1446 + $0x21] sm:$0xff] %v4660
        %4669 = vst [vmem:[%s1446 + $0x31] sm:$0xff] %v4661
        %4670 = vst [vmem:[%s1446 + $0x41] sm:$0xff] %v4662
        %4671 = vst [vmem:[%s1446 + $0x51] sm:$0xff] %v4663
        %4672 = vst [vmem:[%s1446 + $0x61] sm:$0xff] %v4664
        %4673 = vst [vmem:[%s1446 + $0x71] sm:$0xff] %v4665
        %v4674 = vld [vmem:[#allocation2] sm:$0xff]
        %v4675 = vld [vmem:[#allocation2 + $0x8] sm:$0x3]
        %v4676 = vld [vmem:[#allocation2 + $0x10] sm:$0xff]
        %v4677 = vld [vmem:[#allocation2 + $0x18] sm:$0x3]
        %v4678 = vld [vmem:[#allocation2 + $0x20] sm:$0xff]
        %v4679 = vld [vmem:[#allocation2 + $0x28] sm:$0x3]
        %v4680 = vld [vmem:[#allocation2 + $0x30] sm:$0xff]
        %v4681 = vld [vmem:[#allocation2 + $0x38] sm:$0x3]
        %v4682 = vld [vmem:[#allocation2 + $0x40] sm:$0xff]
        %v4683 = vld [vmem:[#allocation2 + $0x48] sm:$0x3]
        %v4684 = vld [vmem:[#allocation2 + $0x50] sm:$0xff]
        %v4685 = vld [vmem:[#allocation2 + $0x58] sm:$0x3]
        %v4686 = vld [vmem:[#allocation2 + $0x60] sm:$0xff]
        %v4687 = vld [vmem:[#allocation2 + $0x68] sm:$0x3]
        %v4688 = vld [vmem:[#allocation2 + $0x70] sm:$0xff]
        %v4689 = vld [vmem:[#allocation2 + $0x78] sm:$0x3]
        %v4690 = vld [vmem:[#allocation2 + $0x80] sm:$0xff]
        %v4691 = vld [vmem:[#allocation2 + $0x88] sm:$0x3]
        %v4692 = vld [vmem:[#allocation2 + $0x90] sm:$0xff]
        %v4693 = vld [vmem:[#allocation2 + $0x98] sm:$0x3]
        %v4710 = vrot.slane %v4674, 1
        %v4711 = vrot.slane %v4675, 1
        %v4712 = vsel %vm1491, %v4710, %v4711
        %v4713 = vrot.slane %v4676, 1
        %v4714 = vrot.slane %v4677, 1
        %v4715 = vsel %vm1491, %v4713, %v4714
        %v4716 = vrot.slane %v4678, 1
        %v4717 = vrot.slane %v4679, 1
        %v4718 = vsel %vm1491, %v4716, %v4717
        %v4719 = vrot.slane %v4680, 1
        %v4720 = vrot.slane %v4681, 1
        %v4721 = vsel %vm1491, %v4719, %v4720
        %v4722 = vrot.slane %v4682, 1
        %v4723 = vrot.slane %v4683, 1
        %v4724 = vsel %vm1491, %v4722, %v4723
        %v4725 = vrot.slane %v4684, 1
        %v4726 = vrot.slane %v4685, 1
        %v4727 = vsel %vm1491, %v4725, %v4726
        %v4728 = vrot.slane %v4686, 1
        %v4729 = vrot.slane %v4687, 1
        %v4730 = vsel %vm1491, %v4728, %v4729
        %v4731 = vrot.slane %v4688, 1
        %v4732 = vrot.slane %v4689, 1
        %v4733 = vsel %vm1491, %v4731, %v4732
        %v4742 = vrot.slane %v4674, 2
        %v4743 = vrot.slane %v4675, 2
        %v4744 = vsel %vm1524, %v4742, %v4743
        %v4745 = vrot.slane %v4676, 2
        %v4746 = vrot.slane %v4677, 2
        %v4747 = vsel %vm1524, %v4745, %v4746
        %v4748 = vrot.slane %v4678, 2
        %v4749 = vrot.slane %v4679, 2
        %v4750 = vsel %vm1524, %v4748, %v4749
        %v4751 = vrot.slane %v4680, 2
        %v4752 = vrot.slane %v4681, 2
        %v4753 = vsel %vm1524, %v4751, %v4752
        %v4754 = vrot.slane %v4682, 2
        %v4755 = vrot.slane %v4683, 2
        %v4756 = vsel %vm1524, %v4754, %v4755
        %v4757 = vrot.slane %v4684, 2
        %v4758 = vrot.slane %v4685, 2
        %v4759 = vsel %vm1524, %v4757, %v4758
        %v4760 = vrot.slane %v4686, 2
        %v4761 = vrot.slane %v4687, 2
        %v4762 = vsel %vm1524, %v4760, %v4761
        %v4763 = vrot.slane %v4688, 2
        %v4764 = vrot.slane %v4689, 2
        %v4765 = vsel %vm1524, %v4763, %v4764
        %v4776 = vrot.slane %v4690, 1
        %v4777 = vrot.slane %v4691, 1
        %v4778 = vsel %vm1491, %v4776, %v4777
        %v4780 = vrot.slane %v4690, 2
        %v4781 = vrot.slane %v4691, 2
        %v4782 = vsel %vm1524, %v4780, %v4781
        %v4786 = vrot.slane %v4692, 1
        %v4787 = vrot.slane %v4693, 1
        %v4788 = vsel %vm1491, %v4786, %v4787
        %v4790 = vrot.slane %v4692, 2
        %v4791 = vrot.slane %v4693, 2
        %v4792 = vsel %vm1524, %v4790, %v4791
        %v4794 = vpack.c.bf16 %v4676, %v4674
        %v4795 = vpack.c.bf16 %v4715, %v4712
        %v4796 = vpack.c.bf16 %v4747, %v4744
        %v4797 = vpack.c.bf16 %v4678, %v4676
        %v4798 = vpack.c.bf16 %v4718, %v4715
        %v4799 = vpack.c.bf16 %v4750, %v4747
        %v4800 = vpack.c.bf16 %v4680, %v4678
        %v4801 = vpack.c.bf16 %v4721, %v4718
        %v4802 = vpack.c.bf16 %v4753, %v4750
        %v4803 = vpack.c.bf16 %v4682, %v4680
        %v4804 = vpack.c.bf16 %v4724, %v4721
        %v4805 = vpack.c.bf16 %v4756, %v4753
        %v4806 = vpack.c.bf16 %v4684, %v4682
        %v4807 = vpack.c.bf16 %v4727, %v4724
        %v4808 = vpack.c.bf16 %v4759, %v4756
        %v4809 = vpack.c.bf16 %v4686, %v4684
        %v4810 = vpack.c.bf16 %v4730, %v4727
        %v4811 = vpack.c.bf16 %v4762, %v4759
        %v4812 = vpack.c.bf16 %v4688, %v4686
        %v4813 = vpack.c.bf16 %v4733, %v4730
        %v4814 = vpack.c.bf16 %v4765, %v4762
        %v4815 = vpack.c.bf16 %v4690, %v4688
        %v4816 = vpack.c.bf16 %v4778, %v4733
        %v4817 = vpack.c.bf16 %v4782, %v4765
        %v4818 = vpack.c.bf16 %v4692, %v4690
        %v4819 = vpack.c.bf16 %v4788, %v4778
        %v4820 = vpack.c.bf16 %v4792, %v4782
        %s4821 = scalar_lea.vmem [#allocation19], 1728
        %v4822 = vld [vmem:[%s4821] sm:$0xf]
        %v4823 = vld [vmem:[%s4821 + $0x4] sm:$0xf]
        %v4824 = vld [vmem:[%s4821 + $0x8] sm:$0xf]
        %v4825 = vld [vmem:[%s4821 + $0xc] sm:$0xf]
        %v4826 = vld [vmem:[%s4821 + $0x10] sm:$0xf]
        %v4827 = vld [vmem:[%s4821 + $0x14] sm:$0xf]
        %v4828 = vld [vmem:[%s4821 + $0x18] sm:$0xf]
        %v4829 = vld [vmem:[%s4821 + $0x1c] sm:$0xf]
        %v4830 = vld [vmem:[%s4821 + $0x20] sm:$0xf]
        %v4831 = vld [vmem:[%s4821 + $0x24] sm:$0xf]
        %v4832 = vld [vmem:[%s4821 + $0x28] sm:$0xf]
        %v4833 = vld [vmem:[%s4821 + $0x2c] sm:$0xf]
        %v4834 = vld [vmem:[%s4821 + $0x30] sm:$0xf]
        %v4835 = vld [vmem:[%s4821 + $0x34] sm:$0xf]
        %v4836 = vld [vmem:[%s4821 + $0x38] sm:$0xf]
        %v4837 = vld [vmem:[%s4821 + $0x3c] sm:$0xf]
        %v4838 = vld [vmem:[%s4821 + $0x40] sm:$0xf]
        %v4839 = vld [vmem:[%s4821 + $0x44] sm:$0xf]
        %v4840 = vld [vmem:[%s4821 + $0x48] sm:$0xf]
        %v4841 = vld [vmem:[%s4821 + $0x4c] sm:$0xf]
        %v4842 = vld [vmem:[%s4821 + $0x50] sm:$0xf]
        %v4843 = vld [vmem:[%s4821 + $0x54] sm:$0xf]
        %v4844 = vld [vmem:[%s4821 + $0x58] sm:$0xf]
        %v4845 = vld [vmem:[%s4821 + $0x5c] sm:$0xf]
        %v4846 = vld [vmem:[%s4821 + $0x60] sm:$0xf]
        %v4847 = vld [vmem:[%s4821 + $0x64] sm:$0xf]
        %v4848 = vld [vmem:[%s4821 + $0x68] sm:$0xf]
        %v4849 = vld [vmem:[%s4821 + $0x6c] sm:$0xf]
        %v4850 = vld [vmem:[%s4821 + $0x70] sm:$0xf]
        %v4851 = vld [vmem:[%s4821 + $0x74] sm:$0xf]
        %v4852 = vld [vmem:[%s4821 + $0x78] sm:$0xf]
        %v4853 = vld [vmem:[%s4821 + $0x7c] sm:$0xf]
        %v4854 = vld [vmem:[%s4821 + $0x80] sm:$0xf]
        %v4855 = vld [vmem:[%s4821 + $0x84] sm:$0xf]
        %v4856 = vld [vmem:[%s4821 + $0x88] sm:$0xf]
        %v4857 = vld [vmem:[%s4821 + $0x8c] sm:$0xf]
        %v4858 = vld [vmem:[%s4821 + $0x90] sm:$0xf]
        %v4859 = vld [vmem:[%s4821 + $0x94] sm:$0xf]
        %v4860 = vld [vmem:[%s4821 + $0x98] sm:$0xf]
        %v4861 = vld [vmem:[%s4821 + $0x9c] sm:$0xf]
        %v4862 = vld [vmem:[%s4821 + $0xa0] sm:$0xf]
        %v4863 = vld [vmem:[%s4821 + $0xa4] sm:$0xf]
        %v4864 = vld [vmem:[%s4821 + $0xa8] sm:$0xf]
        %v4865 = vld [vmem:[%s4821 + $0xac] sm:$0xf]
        %v4866 = vld [vmem:[%s4821 + $0xb0] sm:$0xf]
        %v4867 = vld [vmem:[%s4821 + $0xb4] sm:$0xf]
        %v4868 = vld [vmem:[%s4821 + $0xb8] sm:$0xf]
        %v4869 = vld [vmem:[%s4821 + $0xbc] sm:$0xf]
        %v4870 = vld [vmem:[%s4821 + $0xc0] sm:$0xf]
        %v4871 = vld [vmem:[%s4821 + $0xc4] sm:$0xf]
        %v4872 = vld [vmem:[%s4821 + $0xc8] sm:$0xf]
        %v4873 = vld [vmem:[%s4821 + $0xcc] sm:$0xf]
        %v4874 = vld [vmem:[%s4821 + $0xd0] sm:$0xf]
        %v4875 = vld [vmem:[%s4821 + $0xd4] sm:$0xf]
        %v4876 = vld [vmem:[%s4821 + $0xd8] sm:$0xf]
        %v4877 = vld [vmem:[%s4821 + $0xdc] sm:$0xf]
        %v4878 = vld [vmem:[%s4821 + $0xe0] sm:$0xf]
        %v4879 = vld [vmem:[%s4821 + $0xe4] sm:$0xf]
        %v4880 = vld [vmem:[%s4821 + $0xe8] sm:$0xf]
        %v4881 = vld [vmem:[%s4821 + $0xec] sm:$0xf]
        %v4882 = vld [vmem:[%s4821 + $0xf0] sm:$0xf]
        %v4883 = vld [vmem:[%s4821 + $0xf4] sm:$0xf]
        %v4884 = vld [vmem:[%s4821 + $0xf8] sm:$0xf]
        %v4885 = vld [vmem:[%s4821 + $0xfc] sm:$0xf]
        %v4886 = vld [vmem:[%s4821 + $0x100] sm:$0xf]
        %v4887 = vld [vmem:[%s4821 + $0x104] sm:$0xf]
        %v4888 = vld [vmem:[%s4821 + $0x108] sm:$0xf]
        %v4889 = vld [vmem:[%s4821 + $0x10c] sm:$0xf]
        %v4890 = vld [vmem:[%s4821 + $0x110] sm:$0xf]
        %v4891 = vld [vmem:[%s4821 + $0x114] sm:$0xf]
        %v4892 = vld [vmem:[%s4821 + $0x118] sm:$0xf]
        %v4893 = vld [vmem:[%s4821 + $0x11c] sm:$0xf]
        %v4894 = vld [vmem:[%s4821 + $0x120] sm:$0xf]
        %v4895 = vld [vmem:[%s4821 + $0x124] sm:$0xf]
        %v4896 = vld [vmem:[%s4821 + $0x128] sm:$0xf]
        %v4897 = vld [vmem:[%s4821 + $0x12c] sm:$0xf]
        %v4898 = vld [vmem:[%s4821 + $0x130] sm:$0xf]
        %v4899 = vld [vmem:[%s4821 + $0x134] sm:$0xf]
        %v4900 = vld [vmem:[%s4821 + $0x138] sm:$0xf]
        %v4901 = vld [vmem:[%s4821 + $0x13c] sm:$0xf]
        %v4902 = vld [vmem:[%s4821 + $0x140] sm:$0xf]
        %v4903 = vld [vmem:[%s4821 + $0x144] sm:$0xf]
        %v4904 = vld [vmem:[%s4821 + $0x148] sm:$0xf]
        %v4905 = vld [vmem:[%s4821 + $0x14c] sm:$0xf]
        %v4906 = vld [vmem:[%s4821 + $0x150] sm:$0xf]
        %v4907 = vld [vmem:[%s4821 + $0x154] sm:$0xf]
        %v4908 = vld [vmem:[%s4821 + $0x158] sm:$0xf]
        %v4909 = vld [vmem:[%s4821 + $0x15c] sm:$0xf]
        %v4910 = vld [vmem:[%s4821 + $0x160] sm:$0xf]
        %v4911 = vld [vmem:[%s4821 + $0x164] sm:$0xf]
        %v4912 = vld [vmem:[%s4821 + $0x168] sm:$0xf]
        %v4913 = vld [vmem:[%s4821 + $0x16c] sm:$0xf]
        %v4914 = vld [vmem:[%s4821 + $0x170] sm:$0xf]
        %v4915 = vld [vmem:[%s4821 + $0x174] sm:$0xf]
        %v4916 = vld [vmem:[%s4821 + $0x178] sm:$0xf]
        %v4917 = vld [vmem:[%s4821 + $0x17c] sm:$0xf]
        %v4918 = vld [vmem:[%s4821 + $0x180] sm:$0xf]
        %v4919 = vld [vmem:[%s4821 + $0x184] sm:$0xf]
        %v4920 = vld [vmem:[%s4821 + $0x188] sm:$0xf]
        %v4921 = vld [vmem:[%s4821 + $0x18c] sm:$0xf]
        %v4922 = vld [vmem:[%s4821 + $0x190] sm:$0xf]
        %v4923 = vld [vmem:[%s4821 + $0x194] sm:$0xf]
        %v4924 = vld [vmem:[%s4821 + $0x198] sm:$0xf]
        %v4925 = vld [vmem:[%s4821 + $0x19c] sm:$0xf]
        %v4926 = vld [vmem:[%s4821 + $0x1a0] sm:$0xf]
        %v4927 = vld [vmem:[%s4821 + $0x1a4] sm:$0xf]
        %v4928 = vld [vmem:[%s4821 + $0x1a8] sm:$0xf]
        %v4929 = vld [vmem:[%s4821 + $0x1ac] sm:$0xf]
        %v4930 = vld [vmem:[%s4821 + $0x1b0] sm:$0xf]
        %v4931 = vld [vmem:[%s4821 + $0x1b4] sm:$0xf]
        %v4932 = vld [vmem:[%s4821 + $0x1b8] sm:$0xf]
        %v4933 = vld [vmem:[%s4821 + $0x1bc] sm:$0xf]
        %v4934 = vld [vmem:[%s4821 + $0x1c0] sm:$0xf]
        %v4935 = vld [vmem:[%s4821 + $0x1c4] sm:$0xf]
        %v4936 = vld [vmem:[%s4821 + $0x1c8] sm:$0xf]
        %v4937 = vld [vmem:[%s4821 + $0x1cc] sm:$0xf]
        %v4938 = vld [vmem:[%s4821 + $0x1d0] sm:$0xf]
        %v4939 = vld [vmem:[%s4821 + $0x1d4] sm:$0xf]
        %v4940 = vld [vmem:[%s4821 + $0x1d8] sm:$0xf]
        %v4941 = vld [vmem:[%s4821 + $0x1dc] sm:$0xf]
        %v4942 = vld [vmem:[%s4821 + $0x1e0] sm:$0xf]
        %v4943 = vld [vmem:[%s4821 + $0x1e4] sm:$0xf]
        %v4944 = vld [vmem:[%s4821 + $0x1e8] sm:$0xf]
        %v4945 = vld [vmem:[%s4821 + $0x1ec] sm:$0xf]
        %v4946 = vld [vmem:[%s4821 + $0x1f0] sm:$0xf]
        %v4947 = vld [vmem:[%s4821 + $0x1f4] sm:$0xf]
        %v4948 = vld [vmem:[%s4821 + $0x1f8] sm:$0xf]
        %v4949 = vld [vmem:[%s4821 + $0x1fc] sm:$0xf]
        %v4950 = vld [vmem:[%s4821 + $0x200] sm:$0xf]
        %v4951 = vld [vmem:[%s4821 + $0x204] sm:$0xf]
        %v4952 = vld [vmem:[%s4821 + $0x208] sm:$0xf]
        %v4953 = vld [vmem:[%s4821 + $0x20c] sm:$0xf]
        %v4954 = vld [vmem:[%s4821 + $0x210] sm:$0xf]
        %v4955 = vld [vmem:[%s4821 + $0x214] sm:$0xf]
        %v4956 = vld [vmem:[%s4821 + $0x218] sm:$0xf]
        %v4957 = vld [vmem:[%s4821 + $0x21c] sm:$0xf]
        %v4958 = vld [vmem:[%s4821 + $0x220] sm:$0xf]
        %v4959 = vld [vmem:[%s4821 + $0x224] sm:$0xf]
        %v4960 = vld [vmem:[%s4821 + $0x228] sm:$0xf]
        %v4961 = vld [vmem:[%s4821 + $0x22c] sm:$0xf]
        %v4962 = vld [vmem:[%s4821 + $0x230] sm:$0xf]
        %v4963 = vld [vmem:[%s4821 + $0x234] sm:$0xf]
        %v4964 = vld [vmem:[%s4821 + $0x238] sm:$0xf]
        %v4965 = vld [vmem:[%s4821 + $0x23c] sm:$0xf]
        %s4966 = scalar_lea.vmem [#allocation20], 3
        %v4967 = vld [vmem:[%s4966] sm:$0x1]
        %v4969 = vlaneseq
        %v4970 = vshrl.u32 %v4969, 7
        %v4971 = vsub.s32 0, %v4970
        %v4972 = vrot.slane %v4967, %v4971
        %v5118 = vunpack.c.l.b16 %v4822
        %v5119 = vunpack.c.l.b16 %v4823
        %v5120 = vunpack.c.l.b16 %v4824
        %v5121 = vunpack.c.l.b16 %v4825
        %v5122 = vunpack.c.l.b16 %v4826
        %v5123 = vunpack.c.l.b16 %v4827
        %v5124 = vunpack.c.l.b16 %v4828
        %v5125 = vunpack.c.l.b16 %v4829
        %v5126 = vunpack.c.l.b16 %v4830
        %v5127 = vunpack.c.l.b16 %v4831
        %v5128 = vunpack.c.l.b16 %v4832
        %v5129 = vunpack.c.l.b16 %v4833
        %v5130 = vunpack.c.l.b16 %v4834
        %v5131 = vunpack.c.l.b16 %v4835
        %v5132 = vunpack.c.l.b16 %v4836
        %v5133 = vunpack.c.l.b16 %v4837
        %v5134 = vunpack.c.l.b16 %v4838
        %v5135 = vunpack.c.l.b16 %v4839
        %v5136 = vunpack.c.l.b16 %v4840
        %v5137 = vunpack.c.l.b16 %v4841
        %v5138 = vunpack.c.l.b16 %v4842
        %v5139 = vunpack.c.l.b16 %v4843
        %v5140 = vunpack.c.l.b16 %v4844
        %v5141 = vunpack.c.l.b16 %v4845
        %v5142 = vunpack.c.l.b16 %v4846
        %v5143 = vunpack.c.l.b16 %v4847
        %v5144 = vunpack.c.l.b16 %v4848
        %v5145 = vunpack.c.l.b16 %v4849
        %v5146 = vunpack.c.l.b16 %v4850
        %v5147 = vunpack.c.l.b16 %v4851
        %v5148 = vunpack.c.l.b16 %v4852
        %v5149 = vunpack.c.l.b16 %v4853
        %v5150 = vunpack.c.l.b16 %v4854
        %v5151 = vunpack.c.l.b16 %v4855
        %v5152 = vunpack.c.l.b16 %v4856
        %v5153 = vunpack.c.l.b16 %v4857
        %v5154 = vunpack.c.l.b16 %v4858
        %v5155 = vunpack.c.l.b16 %v4859
        %v5156 = vunpack.c.l.b16 %v4860
        %v5157 = vunpack.c.l.b16 %v4861
        %v5158 = vunpack.c.l.b16 %v4862
        %v5159 = vunpack.c.l.b16 %v4863
        %v5160 = vunpack.c.l.b16 %v4864
        %v5161 = vunpack.c.l.b16 %v4865
        %v5162 = vunpack.c.l.b16 %v4866
        %v5163 = vunpack.c.l.b16 %v4867
        %v5164 = vunpack.c.l.b16 %v4868
        %v5165 = vunpack.c.l.b16 %v4869
        %v5166 = vunpack.c.l.b16 %v4870
        %v5167 = vunpack.c.l.b16 %v4871
        %v5168 = vunpack.c.l.b16 %v4872
        %v5169 = vunpack.c.l.b16 %v4873
        %v5170 = vunpack.c.l.b16 %v4874
        %v5171 = vunpack.c.l.b16 %v4875
        %v5172 = vunpack.c.l.b16 %v4876
        %v5173 = vunpack.c.l.b16 %v4877
        %v5174 = vunpack.c.l.b16 %v4878
        %v5175 = vunpack.c.l.b16 %v4879
        %v5176 = vunpack.c.l.b16 %v4880
        %v5177 = vunpack.c.l.b16 %v4881
        %v5178 = vunpack.c.l.b16 %v4882
        %v5179 = vunpack.c.l.b16 %v4883
        %v5180 = vunpack.c.l.b16 %v4884
        %v5181 = vunpack.c.l.b16 %v4885
        %v5182 = vunpack.c.l.b16 %v4886
        %v5183 = vunpack.c.l.b16 %v4887
        %v5184 = vunpack.c.l.b16 %v4888
        %v5185 = vunpack.c.l.b16 %v4889
        %v5186 = vunpack.c.l.b16 %v4890
        %v5187 = vunpack.c.l.b16 %v4891
        %v5188 = vunpack.c.l.b16 %v4892
        %v5189 = vunpack.c.l.b16 %v4893
        %v5190 = vunpack.c.l.b16 %v4894
        %v5191 = vunpack.c.l.b16 %v4895
        %v5192 = vunpack.c.l.b16 %v4896
        %v5193 = vunpack.c.l.b16 %v4897
        %v5194 = vunpack.c.l.b16 %v4898
        %v5195 = vunpack.c.l.b16 %v4899
        %v5196 = vunpack.c.l.b16 %v4900
        %v5197 = vunpack.c.l.b16 %v4901
        %v5198 = vunpack.c.l.b16 %v4902
        %v5199 = vunpack.c.l.b16 %v4903
        %v5200 = vunpack.c.l.b16 %v4904
        %v5201 = vunpack.c.l.b16 %v4905
        %v5202 = vunpack.c.l.b16 %v4906
        %v5203 = vunpack.c.l.b16 %v4907
        %v5204 = vunpack.c.l.b16 %v4908
        %v5205 = vunpack.c.l.b16 %v4909
        %v5206 = vunpack.c.l.b16 %v4910
        %v5207 = vunpack.c.l.b16 %v4911
        %v5208 = vunpack.c.l.b16 %v4912
        %v5209 = vunpack.c.l.b16 %v4913
        %v5210 = vunpack.c.l.b16 %v4914
        %v5211 = vunpack.c.l.b16 %v4915
        %v5212 = vunpack.c.l.b16 %v4916
        %v5213 = vunpack.c.l.b16 %v4917
        %v5214 = vunpack.c.l.b16 %v4918
        %v5215 = vunpack.c.l.b16 %v4919
        %v5216 = vunpack.c.l.b16 %v4920
        %v5217 = vunpack.c.l.b16 %v4921
        %v5218 = vunpack.c.l.b16 %v4922
        %v5219 = vunpack.c.l.b16 %v4923
        %v5220 = vunpack.c.l.b16 %v4924
        %v5221 = vunpack.c.l.b16 %v4925
        %v5222 = vunpack.c.l.b16 %v4926
        %v5223 = vunpack.c.l.b16 %v4927
        %v5224 = vunpack.c.l.b16 %v4928
        %v5225 = vunpack.c.l.b16 %v4929
        %v5226 = vunpack.c.l.b16 %v4930
        %v5227 = vunpack.c.l.b16 %v4931
        %v5228 = vunpack.c.l.b16 %v4932
        %v5229 = vunpack.c.l.b16 %v4933
        %v5230 = vunpack.c.l.b16 %v4934
        %v5231 = vunpack.c.l.b16 %v4935
        %v5232 = vunpack.c.l.b16 %v4936
        %v5233 = vunpack.c.l.b16 %v4937
        %v5234 = vunpack.c.l.b16 %v4938
        %v5235 = vunpack.c.l.b16 %v4939
        %v5236 = vunpack.c.l.b16 %v4940
        %v5237 = vunpack.c.l.b16 %v4941
        %v5238 = vunpack.c.l.b16 %v4942
        %v5239 = vunpack.c.l.b16 %v4943
        %v5240 = vunpack.c.l.b16 %v4944
        %v5241 = vunpack.c.l.b16 %v4945
        %v5242 = vunpack.c.l.b16 %v4946
        %v5243 = vunpack.c.l.b16 %v4947
        %v5244 = vunpack.c.l.b16 %v4948
        %v5245 = vunpack.c.l.b16 %v4949
        %v5246 = vunpack.c.l.b16 %v4950
        %v5247 = vunpack.c.l.b16 %v4951
        %v5248 = vunpack.c.l.b16 %v4952
        %v5249 = vunpack.c.l.b16 %v4953
        %v5250 = vunpack.c.l.b16 %v4954
        %v5251 = vunpack.c.l.b16 %v4955
        %v5252 = vunpack.c.l.b16 %v4956
        %v5253 = vunpack.c.l.b16 %v4957
        %v5254 = vunpack.c.l.b16 %v4958
        %v5255 = vunpack.c.l.b16 %v4959
        %v5256 = vunpack.c.l.b16 %v4960
        %v5257 = vunpack.c.l.b16 %v4961
        %v5258 = vunpack.c.l.b16 %v4962
        %v5259 = vunpack.c.l.b16 %v4963
        %v5260 = vunpack.c.l.b16 %v4964
        %v5261 = vunpack.c.l.b16 %v4965
        %v5262 = vpack.c.b16 %v5119, %v5118
        %v5263 = vpack.c.b16 %v5121, %v5120
        %v5264 = vpack.c.b16 %v5123, %v5122
        %v5265 = vpack.c.b16 %v5125, %v5124
        %v5266 = vpack.c.b16 %v5127, %v5126
        %v5267 = vpack.c.b16 %v5129, %v5128
        %v5268 = vpack.c.b16 %v5131, %v5130
        %v5269 = vpack.c.b16 %v5133, %v5132
        %v5270 = vpack.c.b16 %v5135, %v5134
        %v5271 = vpack.c.b16 %v5137, %v5136
        %v5272 = vpack.c.b16 %v5139, %v5138
        %v5273 = vpack.c.b16 %v5141, %v5140
        %v5274 = vpack.c.b16 %v5143, %v5142
        %v5275 = vpack.c.b16 %v5145, %v5144
        %v5276 = vpack.c.b16 %v5147, %v5146
        %v5277 = vpack.c.b16 %v5149, %v5148
        %v5278 = vpack.c.b16 %v5151, %v5150
        %v5279 = vpack.c.b16 %v5153, %v5152
        %v5280 = vpack.c.b16 %v5155, %v5154
        %v5281 = vpack.c.b16 %v5157, %v5156
        %v5282 = vpack.c.b16 %v5159, %v5158
        %v5283 = vpack.c.b16 %v5161, %v5160
        %v5284 = vpack.c.b16 %v5163, %v5162
        %v5285 = vpack.c.b16 %v5165, %v5164
        %v5286 = vpack.c.b16 %v5167, %v5166
        %v5287 = vpack.c.b16 %v5169, %v5168
        %v5288 = vpack.c.b16 %v5171, %v5170
        %v5289 = vpack.c.b16 %v5173, %v5172
        %v5290 = vpack.c.b16 %v5175, %v5174
        %v5291 = vpack.c.b16 %v5177, %v5176
        %v5292 = vpack.c.b16 %v5179, %v5178
        %v5293 = vpack.c.b16 %v5181, %v5180
        %v5294 = vpack.c.b16 %v5183, %v5182
        %v5295 = vpack.c.b16 %v5185, %v5184
        %v5296 = vpack.c.b16 %v5187, %v5186
        %v5297 = vpack.c.b16 %v5189, %v5188
        %v5298 = vpack.c.b16 %v5191, %v5190
        %v5299 = vpack.c.b16 %v5193, %v5192
        %v5300 = vpack.c.b16 %v5195, %v5194
        %v5301 = vpack.c.b16 %v5197, %v5196
        %v5302 = vpack.c.b16 %v5199, %v5198
        %v5303 = vpack.c.b16 %v5201, %v5200
        %v5304 = vpack.c.b16 %v5203, %v5202
        %v5305 = vpack.c.b16 %v5205, %v5204
        %v5306 = vpack.c.b16 %v5207, %v5206
        %v5307 = vpack.c.b16 %v5209, %v5208
        %v5308 = vpack.c.b16 %v5211, %v5210
        %v5309 = vpack.c.b16 %v5213, %v5212
        %v5310 = vpack.c.b16 %v5215, %v5214
        %v5311 = vpack.c.b16 %v5217, %v5216
        %v5312 = vpack.c.b16 %v5219, %v5218
        %v5313 = vpack.c.b16 %v5221, %v5220
        %v5314 = vpack.c.b16 %v5223, %v5222
        %v5315 = vpack.c.b16 %v5225, %v5224
        %v5316 = vpack.c.b16 %v5227, %v5226
        %v5317 = vpack.c.b16 %v5229, %v5228
        %v5318 = vpack.c.b16 %v5231, %v5230
        %v5319 = vpack.c.b16 %v5233, %v5232
        %v5320 = vpack.c.b16 %v5235, %v5234
        %v5321 = vpack.c.b16 %v5237, %v5236
        %v5322 = vpack.c.b16 %v5239, %v5238
        %v5323 = vpack.c.b16 %v5241, %v5240
        %v5324 = vpack.c.b16 %v5243, %v5242
        %v5325 = vpack.c.b16 %v5245, %v5244
        %v5326 = vpack.c.b16 %v5247, %v5246
        %v5327 = vpack.c.b16 %v5249, %v5248
        %v5328 = vpack.c.b16 %v5251, %v5250
        %v5329 = vpack.c.b16 %v5253, %v5252
        %v5330 = vpack.c.b16 %v5255, %v5254
        %v5331 = vpack.c.b16 %v5257, %v5256
        %v5332 = vpack.c.b16 %v5259, %v5258
        %v5333 = vpack.c.b16 %v5261, %v5260
        %5406 = vmatprep.subr.bf16.mxu0 0
        %5407 = vmatpush1.bf16.msra.mxu0 %v5262
        %5408 = vmatprep.subr.bf16.mxu0 0
        %5409 = vmatpush1.bf16.msra.mxu0 %v5263
        %5410 = vmatprep.subr.bf16.mxu0 0
        %5411 = vmatpush1.bf16.msra.mxu0 %v5264
        %5412 = vmatprep.subr.bf16.mxu0 0
        %5413 = vmatpush1.bf16.msra.mxu0 %v5265
        %5414 = vmatprep.subr.bf16.mxu0 0
        %5415 = vmatpush1.bf16.msra.mxu0 %v5266
        %5416 = vmatprep.subr.bf16.mxu0 0
        %5417 = vmatpush1.bf16.msra.mxu0 %v5267
        %5418 = vmatprep.subr.bf16.mxu0 0
        %5419 = vmatpush1.bf16.msra.mxu0 %v5268
        %5420 = vmatprep.subr.bf16.mxu0 0
        %5421 = vmatpush1.bf16.msra.mxu0 %v5269
        %5422 = vmatprep.subr.bf16.mxu0 0
        %5423 = vmatpush1.bf16.msra.mxu0 %v5270
        %5424 = vmatprep.subr.bf16.mxu0 0
        %5425 = vmatpush1.bf16.msra.mxu0 %v5271
        %5426 = vmatprep.subr.bf16.mxu0 0
        %5427 = vmatpush1.bf16.msra.mxu0 %v5272
        %5428 = vmatprep.subr.bf16.mxu0 0
        %5429 = vmatpush1.bf16.msra.mxu0 %v5273
        %5430 = vmatprep.subr.bf16.mxu0 0
        %5431 = vmatpush1.bf16.msra.mxu0 %v5274
        %5432 = vmatprep.subr.bf16.mxu0 0
        %5433 = vmatpush1.bf16.msra.mxu0 %v5275
        %5434 = vmatprep.subr.bf16.mxu0 0
        %5435 = vmatpush1.bf16.msra.mxu0 %v5276
        %5436 = vmatprep.subr.bf16.mxu0 0
        %5437 = vmatpush1.bf16.msra.mxu0 %v5277
        %5438 = vmatprep.mubr.bf16.mxu0 %v4795
        %5439 = vmatmul.mubr.bf16.gmra.mrb[0].mxu0 %v4794
        %v5440 = vpop.f32.mrb[0].mxu0
        %v5441 = vadd.f32 %v4972, %v5440
        %v5442 = vpop.f32.mrb[0].mxu0
        %v5443 = vpop.f32.mrb[0].mxu0
        %v5444 = vadd.f32 %v4972, %v5443
        %v5445 = vpop.f32.mrb[0].mxu0
        %5446 = vmatprep.mubr.bf16.mxu0 %v4801
        %5447 = vmatmul.mubr.bf16.gmra.mrb[0].mxu0 %v4800
        %v5448 = vpop.f32.mrb[0].mxu0
        %v5449 = vadd.f32 %v4972, %v5448
        %v5450 = vpop.f32.mrb[0].mxu0
        %v5451 = vpop.f32.mrb[0].mxu0
        %v5452 = vadd.f32 %v4972, %v5451
        %v5453 = vpop.f32.mrb[0].mxu0
        %5454 = vmatprep.mubr.bf16.mxu0 %v4807
        %5455 = vmatmul.mubr.bf16.gmra.mrb[0].mxu0 %v4806
        %v5456 = vpop.f32.mrb[0].mxu0
        %v5457 = vadd.f32 %v4972, %v5456
        %v5458 = vpop.f32.mrb[0].mxu0
        %v5459 = vpop.f32.mrb[0].mxu0
        %v5460 = vadd.f32 %v4972, %v5459
        %v5461 = vpop.f32.mrb[0].mxu0
        %5462 = vmatprep.mubr.bf16.mxu0 %v4813
        %5463 = vmatmul.mubr.bf16.gmra.mrb[0].mxu0 %v4812
        %v5464 = vpop.f32.mrb[0].mxu0
        %v5465 = vadd.f32 %v4972, %v5464
        %v5466 = vpop.f32.mrb[0].mxu0
        %v5467 = vpop.f32.mrb[0].mxu0
        %v5468 = vadd.f32 %v4972, %v5467
        %v5469 = vpop.f32.mrb[0].mxu0
        %5470 = vdwg.mxu0
        %5471 = vmatprep.subr.bf16.mxu0 0
        %5472 = vmatpush1.bf16.msra.mxu0 %v5278
        %5473 = vmatprep.subr.bf16.mxu0 0
        %5474 = vmatpush1.bf16.msra.mxu0 %v5279
        %5475 = vmatprep.subr.bf16.mxu0 0
        %5476 = vmatpush1.bf16.msra.mxu0 %v5280
        %5477 = vmatprep.subr.bf16.mxu0 0
        %5478 = vmatpush1.bf16.msra.mxu0 %v5281
        %5479 = vmatprep.subr.bf16.mxu0 0
        %5480 = vmatpush1.bf16.msra.mxu0 %v5282
        %5481 = vmatprep.subr.bf16.mxu0 0
        %5482 = vmatpush1.bf16.msra.mxu0 %v5283
        %5483 = vmatprep.subr.bf16.mxu0 0
        %5484 = vmatpush1.bf16.msra.mxu0 %v5284
        %5485 = vmatprep.subr.bf16.mxu0 0
        %5486 = vmatpush1.bf16.msra.mxu0 %v5285
        %5487 = vmatprep.subr.bf16.mxu0 0
        %5488 = vmatpush1.bf16.msra.mxu0 %v5286
        %5489 = vmatprep.subr.bf16.mxu0 0
        %5490 = vmatpush1.bf16.msra.mxu0 %v5287
        %5491 = vmatprep.subr.bf16.mxu0 0
        %5492 = vmatpush1.bf16.msra.mxu0 %v5288
        %5493 = vmatprep.subr.bf16.mxu0 0
        %5494 = vmatpush1.bf16.msra.mxu0 %v5289
        %5495 = vmatprep.subr.bf16.mxu0 0
        %5496 = vmatpush1.bf16.msra.mxu0 %v5290
        %5497 = vmatprep.subr.bf16.mxu0 0
        %5498 = vmatpush1.bf16.msra.mxu0 %v5291
        %5499 = vmatprep.subr.bf16.mxu0 0
        %5500 = vmatpush1.bf16.msra.mxu0 %v5292
        %5501 = vmatprep.subr.bf16.mxu0 0
        %5502 = vmatpush1.bf16.msra.mxu0 %v5293
        %5503 = vmatprep.mubr.bf16.mxu0 %v4797
        %5504 = vmatmul.mubr.bf16.gmra.mrb[0].mxu0 %v4796
        %v5505 = vpop.f32.mrb[0].mxu0
        %v5506 = vadd.f32 %v5441, %v5505
        %v5507 = vpop.f32.mrb[0].mxu0
        %v5508 = vpop.f32.mrb[0].mxu0
        %v5509 = vadd.f32 %v5444, %v5508
        %v5510 = vpop.f32.mrb[0].mxu0
        %5511 = vmatprep.mubr.bf16.mxu0 %v4803
        %5512 = vmatmul.mubr.bf16.gmra.mrb[0].mxu0 %v4802
        %v5513 = vpop.f32.mrb[0].mxu0
        %v5514 = vadd.f32 %v5449, %v5513
        %v5515 = vpop.f32.mrb[0].mxu0
        %v5516 = vpop.f32.mrb[0].mxu0
        %v5517 = vadd.f32 %v5452, %v5516
        %v5518 = vpop.f32.mrb[0].mxu0
        %5519 = vmatprep.mubr.bf16.mxu0 %v4809
        %5520 = vmatmul.mubr.bf16.gmra.mrb[0].mxu0 %v4808
        %v5521 = vpop.f32.mrb[0].mxu0
        %v5522 = vadd.f32 %v5457, %v5521
        %v5523 = vpop.f32.mrb[0].mxu0
        %v5524 = vpop.f32.mrb[0].mxu0
        %v5525 = vadd.f32 %v5460, %v5524
        %v5526 = vpop.f32.mrb[0].mxu0
        %5527 = vmatprep.mubr.bf16.mxu0 %v4815
        %5528 = vmatmul.mubr.bf16.gmra.mrb[0].mxu0 %v4814
        %v5529 = vpop.f32.mrb[0].mxu0
        %v5530 = vadd.f32 %v5465, %v5529
        %v5531 = vpop.f32.mrb[0].mxu0
        %v5532 = vpop.f32.mrb[0].mxu0
        %v5533 = vadd.f32 %v5468, %v5532
        %v5534 = vpop.f32.mrb[0].mxu0
        %5535 = vdwg.mxu0
        %5536 = vmatprep.subr.bf16.mxu0 0
        %5537 = vmatpush1.bf16.msra.mxu0 %v5294
        %5538 = vmatprep.subr.bf16.mxu0 0
        %5539 = vmatpush1.bf16.msra.mxu0 %v5295
        %5540 = vmatprep.subr.bf16.mxu0 0
        %5541 = vmatpush1.bf16.msra.mxu0 %v5296
        %5542 = vmatprep.subr.bf16.mxu0 0
        %5543 = vmatpush1.bf16.msra.mxu0 %v5297
        %5544 = vmatprep.subr.bf16.mxu0 0
        %5545 = vmatpush1.bf16.msra.mxu0 %v5298
        %5546 = vmatprep.subr.bf16.mxu0 0
        %5547 = vmatpush1.bf16.msra.mxu0 %v5299
        %5548 = vmatprep.subr.bf16.mxu0 0
        %5549 = vmatpush1.bf16.msra.mxu0 %v5300
        %5550 = vmatprep.subr.bf16.mxu0 0
        %5551 = vmatpush1.bf16.msra.mxu0 %v5301
        %5552 = vmatprep.subr.bf16.mxu0 0
        %5553 = vmatpush1.bf16.msra.mxu0 %v5302
        %5554 = vmatprep.subr.bf16.mxu0 0
        %5555 = vmatpush1.bf16.msra.mxu0 %v5303
        %5556 = vmatprep.subr.bf16.mxu0 0
        %5557 = vmatpush1.bf16.msra.mxu0 %v5304
        %5558 = vmatprep.subr.bf16.mxu0 0
        %5559 = vmatpush1.bf16.msra.mxu0 %v5305
        %5560 = vmatprep.subr.bf16.mxu0 0
        %5561 = vmatpush1.bf16.msra.mxu0 %v5306
        %5562 = vmatprep.subr.bf16.mxu0 0
        %5563 = vmatpush1.bf16.msra.mxu0 %v5307
        %5564 = vmatprep.subr.bf16.mxu0 0
        %5565 = vmatpush1.bf16.msra.mxu0 %v5308
        %5566 = vmatprep.subr.bf16.mxu0 0
        %5567 = vmatpush1.bf16.msra.mxu0 %v5309
        %5568 = vmatprep.mubr.bf16.mxu0 %v4799
        %5569 = vmatmul.mubr.bf16.gmra.mrb[0].mxu0 %v4798
        %v5570 = vpop.f32.mrb[0].mxu0
        %v5571 = vadd.f32 %v5506, %v5570
        %v5572 = vpop.f32.mrb[0].mxu0
        %v5573 = vpop.f32.mrb[0].mxu0
        %v5574 = vadd.f32 %v5509, %v5573
        %v5575 = vpop.f32.mrb[0].mxu0
        %5576 = vmatprep.mubr.bf16.mxu0 %v4805
        %5577 = vmatmul.mubr.bf16.gmra.mrb[0].mxu0 %v4804
        %v5578 = vpop.f32.mrb[0].mxu0
        %v5579 = vadd.f32 %v5514, %v5578
        %v5580 = vpop.f32.mrb[0].mxu0
        %v5581 = vpop.f32.mrb[0].mxu0
        %v5582 = vadd.f32 %v5517, %v5581
        %v5583 = vpop.f32.mrb[0].mxu0
        %5584 = vmatprep.mubr.bf16.mxu0 %v4811
        %5585 = vmatmul.mubr.bf16.gmra.mrb[0].mxu0 %v4810
        %v5586 = vpop.f32.mrb[0].mxu0
        %v5587 = vadd.f32 %v5522, %v5586
        %v5588 = vpop.f32.mrb[0].mxu0
        %v5589 = vpop.f32.mrb[0].mxu0
        %v5590 = vadd.f32 %v5525, %v5589
        %v5591 = vpop.f32.mrb[0].mxu0
        %5592 = vmatprep.mubr.bf16.mxu0 %v4817
        %5593 = vmatmul.mubr.bf16.gmra.mrb[0].mxu0 %v4816
        %v5594 = vpop.f32.mrb[0].mxu0
        %v5595 = vadd.f32 %v5530, %v5594
        %v5596 = vpop.f32.mrb[0].mxu0
        %v5597 = vpop.f32.mrb[0].mxu0
        %v5598 = vadd.f32 %v5533, %v5597
        %v5599 = vpop.f32.mrb[0].mxu0
        %5600 = vdwg.mxu0
        %5601 = vmatprep.subr.bf16.mxu0 0
        %5602 = vmatpush1.bf16.msra.mxu0 %v5310
        %5603 = vmatprep.subr.bf16.mxu0 0
        %5604 = vmatpush1.bf16.msra.mxu0 %v5311
        %5605 = vmatprep.subr.bf16.mxu0 0
        %5606 = vmatpush1.bf16.msra.mxu0 %v5312
        %5607 = vmatprep.subr.bf16.mxu0 0
        %5608 = vmatpush1.bf16.msra.mxu0 %v5313
        %5609 = vmatprep.subr.bf16.mxu0 0
        %5610 = vmatpush1.bf16.msra.mxu0 %v5314
        %5611 = vmatprep.subr.bf16.mxu0 0
        %5612 = vmatpush1.bf16.msra.mxu0 %v5315
        %5613 = vmatprep.subr.bf16.mxu0 0
        %5614 = vmatpush1.bf16.msra.mxu0 %v5316
        %5615 = vmatprep.subr.bf16.mxu0 0
        %5616 = vmatpush1.bf16.msra.mxu0 %v5317
        %5617 = vmatprep.subr.bf16.mxu0 0
        %5618 = vmatpush1.bf16.msra.mxu0 %v5318
        %5619 = vmatprep.subr.bf16.mxu0 0
        %5620 = vmatpush1.bf16.msra.mxu0 %v5319
        %5621 = vmatprep.subr.bf16.mxu0 0
        %5622 = vmatpush1.bf16.msra.mxu0 %v5320
        %5623 = vmatprep.subr.bf16.mxu0 0
        %5624 = vmatpush1.bf16.msra.mxu0 %v5321
        %5625 = vmatprep.subr.bf16.mxu0 0
        %5626 = vmatpush1.bf16.msra.mxu0 %v5322
        %5627 = vmatprep.subr.bf16.mxu0 0
        %5628 = vmatpush1.bf16.msra.mxu0 %v5323
        %5629 = vmatprep.subr.bf16.mxu0 0
        %5630 = vmatpush1.bf16.msra.mxu0 %v5324
        %5631 = vmatprep.subr.bf16.mxu0 0
        %5632 = vmatpush1.bf16.msra.mxu0 %v5325
        %5633 = vmatprep.mubr.bf16.mxu0 %v4801
        %5634 = vmatmul.mubr.bf16.gmra.mrb[0].mxu0 %v4800
        %v5635 = vpop.f32.mrb[0].mxu0
        %v5636 = vadd.f32 %v5571, %v5635
        %v5637 = vpop.f32.mrb[0].mxu0
        %v5638 = vpop.f32.mrb[0].mxu0
        %v5639 = vadd.f32 %v5574, %v5638
        %v5640 = vpop.f32.mrb[0].mxu0
        %5641 = vmatprep.mubr.bf16.mxu0 %v4807
        %5642 = vmatmul.mubr.bf16.gmra.mrb[0].mxu0 %v4806
        %v5643 = vpop.f32.mrb[0].mxu0
        %v5644 = vadd.f32 %v5579, %v5643
        %v5645 = vpop.f32.mrb[0].mxu0
        %v5646 = vpop.f32.mrb[0].mxu0
        %v5647 = vadd.f32 %v5582, %v5646
        %v5648 = vpop.f32.mrb[0].mxu0
        %5649 = vmatprep.mubr.bf16.mxu0 %v4813
        %5650 = vmatmul.mubr.bf16.gmra.mrb[0].mxu0 %v4812
        %v5651 = vpop.f32.mrb[0].mxu0
        %v5652 = vadd.f32 %v5587, %v5651
        %v5653 = vpop.f32.mrb[0].mxu0
        %v5654 = vpop.f32.mrb[0].mxu0
        %v5655 = vadd.f32 %v5590, %v5654
        %v5656 = vpop.f32.mrb[0].mxu0
        %5657 = vmatprep.mubr.bf16.mxu0 %v4819
        %5658 = vmatmul.mubr.bf16.gmra.mrb[0].mxu0 %v4818
        %v5659 = vpop.f32.mrb[0].mxu0
        %v5660 = vadd.f32 %v5595, %v5659
        %v5661 = vpop.f32.mrb[0].mxu0
        %v5662 = vpop.f32.mrb[0].mxu0
        %v5663 = vadd.f32 %v5598, %v5662
        %v5664 = vpop.f32.mrb[0].mxu0
        %5665 = vdwg.mxu0
        %5666 = vmatprep.subr.bf16.mxu0 0
        %5667 = vmatpush1.bf16.msra.mxu0 %v5326
        %5668 = vmatprep.subr.bf16.mxu0 0
        %5669 = vmatpush1.bf16.msra.mxu0 %v5327
        %5670 = vmatprep.subr.bf16.mxu0 0
        %5671 = vmatpush1.bf16.msra.mxu0 %v5328
        %5672 = vmatprep.subr.bf16.mxu0 0
        %5673 = vmatpush1.bf16.msra.mxu0 %v5329
        %5674 = vmatprep.subr.bf16.mxu0 0
        %5675 = vmatpush1.bf16.msra.mxu0 %v5330
        %5676 = vmatprep.subr.bf16.mxu0 0
        %5677 = vmatpush1.bf16.msra.mxu0 %v5331
        %5678 = vmatprep.subr.bf16.mxu0 0
        %5679 = vmatpush1.bf16.msra.mxu0 %v5332
        %5680 = vmatprep.subr.bf16.mxu0 0
        %5681 = vmatpush1.bf16.msra.mxu0 %v5333
        %5682 = vmatprep.subr.bf16.mxu0 0
        %5683 = vmatpush1.bf16.msra.mxu0 0
        %5684 = vmatprep.subr.bf16.mxu0 0
        %5685 = vmatpush1.bf16.msra.mxu0 0
        %5686 = vmatprep.subr.bf16.mxu0 0
        %5687 = vmatpush1.bf16.msra.mxu0 0
        %5688 = vmatprep.subr.bf16.mxu0 0
        %5689 = vmatpush1.bf16.msra.mxu0 0
        %5690 = vmatprep.subr.bf16.mxu0 0
        %5691 = vmatpush1.bf16.msra.mxu0 0
        %5692 = vmatprep.subr.bf16.mxu0 0
        %5693 = vmatpush1.bf16.msra.mxu0 0
        %5694 = vmatprep.subr.bf16.mxu0 0
        %5695 = vmatpush1.bf16.msra.mxu0 0
        %5696 = vmatprep.subr.bf16.mxu0 0
        %5697 = vmatpush1.bf16.msra.mxu0 0
        %5698 = vmatprep.mubr.bf16.mxu0 0
        %5699 = vmatmul.mubr.bf16.gmra.mrb[0].mxu0 %v4802
        %v5700 = vpop.f32.mrb[0].mxu0
        %v5701 = vadd.f32 %v5636, %v5700
        %v5702 = vpop.f32.mrb[0].mxu0
        %v5703 = vpop.f32.mrb[0].mxu0
        %v5704 = vadd.f32 %v5639, %v5703
        %v5705 = vpop.f32.mrb[0].mxu0
        %5706 = vmatprep.mubr.bf16.mxu0 0
        %5707 = vmatmul.mubr.bf16.gmra.mrb[0].mxu0 %v4808
        %v5708 = vpop.f32.mrb[0].mxu0
        %v5709 = vadd.f32 %v5644, %v5708
        %v5710 = vpop.f32.mrb[0].mxu0
        %v5711 = vpop.f32.mrb[0].mxu0
        %v5712 = vadd.f32 %v5647, %v5711
        %v5713 = vpop.f32.mrb[0].mxu0
        %5714 = vmatprep.mubr.bf16.mxu0 0
        %5715 = vmatmul.mubr.bf16.gmra.mrb[0].mxu0 %v4814
        %v5716 = vpop.f32.mrb[0].mxu0
        %v5717 = vadd.f32 %v5652, %v5716
        %v5718 = vpop.f32.mrb[0].mxu0
        %v5719 = vpop.f32.mrb[0].mxu0
        %v5720 = vadd.f32 %v5655, %v5719
        %v5721 = vpop.f32.mrb[0].mxu0
        %5722 = vmatprep.mubr.bf16.mxu0 0
        %5723 = vmatmul.mubr.bf16.gmra.mrb[0].mxu0 %v4820
        %v5724 = vpop.f32.mrb[0].mxu0
        %v5725 = vadd.f32 %v5660, %v5724
        %v5726 = vpop.f32.mrb[0].mxu0
        %v5727 = vpop.f32.mrb[0].mxu0
        %v5728 = vadd.f32 %v5663, %v5727
        %v5729 = vpop.f32.mrb[0].mxu0
        %5730 = vdwg.mxu0
        %v5731 = vmax.f32 %v5701, 0.0
        %v5732 = vmax.f32 %v5704, 0.0
        %v5733 = vmax.f32 %v5709, 0.0
        %v5734 = vmax.f32 %v5712, 0.0
        %v5735 = vmax.f32 %v5717, 0.0
        %v5736 = vmax.f32 %v5720, 0.0
        %v5737 = vmax.f32 %v5725, 0.0
        %v5738 = vmax.f32 %v5728, 0.0
        %5739 = vst [vmem:[%s1446 + $0x1] sm:$0xff] %v5731
        %5740 = vst [vmem:[%s1446 + $0x11] sm:$0xff] %v5732
        %5741 = vst [vmem:[%s1446 + $0x21] sm:$0xff] %v5733
        %5742 = vst [vmem:[%s1446 + $0x31] sm:$0xff] %v5734
        %5743 = vst [vmem:[%s1446 + $0x41] sm:$0xff] %v5735
        %5744 = vst [vmem:[%s1446 + $0x51] sm:$0xff] %v5736
        %5745 = vst [vmem:[%s1446 + $0x61] sm:$0xff] %v5737
        %5746 = vst [vmem:[%s1446 + $0x71] sm:$0xff] %v5738
        %v5747 = vld [vmem:[#allocation2] sm:$0xff]
        %v5748 = vld [vmem:[#allocation2 + $0x8] sm:$0x3]
        %v5749 = vld [vmem:[#allocation2 + $0x10] sm:$0xff]
        %v5750 = vld [vmem:[#allocation2 + $0x18] sm:$0x3]
        %v5751 = vld [vmem:[#allocation2 + $0x20] sm:$0xff]
        %v5752 = vld [vmem:[#allocation2 + $0x28] sm:$0x3]
        %v5753 = vld [vmem:[#allocation2 + $0x30] sm:$0xff]
        %v5754 = vld [vmem:[#allocation2 + $0x38] sm:$0x3]
        %v5755 = vld [vmem:[#allocation2 + $0x40] sm:$0xff]
        %v5756 = vld [vmem:[#allocation2 + $0x48] sm:$0x3]
        %v5757 = vld [vmem:[#allocation2 + $0x50] sm:$0xff]
        %v5758 = vld [vmem:[#allocation2 + $0x58] sm:$0x3]
        %v5759 = vld [vmem:[#allocation2 + $0x60] sm:$0xff]
        %v5760 = vld [vmem:[#allocation2 + $0x68] sm:$0x3]
        %v5761 = vld [vmem:[#allocation2 + $0x70] sm:$0xff]
        %v5762 = vld [vmem:[#allocation2 + $0x78] sm:$0x3]
        %v5763 = vld [vmem:[#allocation2 + $0x80] sm:$0xff]
        %v5764 = vld [vmem:[#allocation2 + $0x88] sm:$0x3]
        %v5765 = vld [vmem:[#allocation2 + $0x90] sm:$0xff]
        %v5766 = vld [vmem:[#allocation2 + $0x98] sm:$0x3]
        %v5783 = vrot.slane %v5747, 1
        %v5784 = vrot.slane %v5748, 1
        %v5785 = vsel %vm1491, %v5783, %v5784
        %v5786 = vrot.slane %v5749, 1
        %v5787 = vrot.slane %v5750, 1
        %v5788 = vsel %vm1491, %v5786, %v5787
        %v5789 = vrot.slane %v5751, 1
        %v5790 = vrot.slane %v5752, 1
        %v5791 = vsel %vm1491, %v5789, %v5790
        %v5792 = vrot.slane %v5753, 1
        %v5793 = vrot.slane %v5754, 1
        %v5794 = vsel %vm1491, %v5792, %v5793
        %v5795 = vrot.slane %v5755, 1
        %v5796 = vrot.slane %v5756, 1
        %v5797 = vsel %vm1491, %v5795, %v5796
        %v5798 = vrot.slane %v5757, 1
        %v5799 = vrot.slane %v5758, 1
        %v5800 = vsel %vm1491, %v5798, %v5799
        %v5801 = vrot.slane %v5759, 1
        %v5802 = vrot.slane %v5760, 1
        %v5803 = vsel %vm1491, %v5801, %v5802
        %v5804 = vrot.slane %v5761, 1
        %v5805 = vrot.slane %v5762, 1
        %v5806 = vsel %vm1491, %v5804, %v5805
        %v5815 = vrot.slane %v5747, 2
        %v5816 = vrot.slane %v5748, 2
        %v5817 = vsel %vm1524, %v5815, %v5816
        %v5818 = vrot.slane %v5749, 2
        %v5819 = vrot.slane %v5750, 2
        %v5820 = vsel %vm1524, %v5818, %v5819
        %v5821 = vrot.slane %v5751, 2
        %v5822 = vrot.slane %v5752, 2
        %v5823 = vsel %vm1524, %v5821, %v5822
        %v5824 = vrot.slane %v5753, 2
        %v5825 = vrot.slane %v5754, 2
        %v5826 = vsel %vm1524, %v5824, %v5825
        %v5827 = vrot.slane %v5755, 2
        %v5828 = vrot.slane %v5756, 2
        %v5829 = vsel %vm1524, %v5827, %v5828
        %v5830 = vrot.slane %v5757, 2
        %v5831 = vrot.slane %v5758, 2
        %v5832 = vsel %vm1524, %v5830, %v5831
        %v5833 = vrot.slane %v5759, 2
        %v5834 = vrot.slane %v5760, 2
        %v5835 = vsel %vm1524, %v5833, %v5834
        %v5836 = vrot.slane %v5761, 2
        %v5837 = vrot.slane %v5762, 2
        %v5838 = vsel %vm1524, %v5836, %v5837
        %v5849 = vrot.slane %v5763, 1
        %v5850 = vrot.slane %v5764, 1
        %v5851 = vsel %vm1491, %v5849, %v5850
        %v5853 = vrot.slane %v5763, 2
        %v5854 = vrot.slane %v5764, 2
        %v5855 = vsel %vm1524, %v5853, %v5854
        %v5859 = vrot.slane %v5765, 1
        %v5860 = vrot.slane %v5766, 1
        %v5861 = vsel %vm1491, %v5859, %v5860
        %v5863 = vrot.slane %v5765, 2
        %v5864 = vrot.slane %v5766, 2
        %v5865 = vsel %vm1524, %v5863, %v5864
        %v5867 = vpack.c.bf16 %v5749, %v5747
        %v5868 = vpack.c.bf16 %v5788, %v5785
        %v5869 = vpack.c.bf16 %v5820, %v5817
        %v5870 = vpack.c.bf16 %v5751, %v5749
        %v5871 = vpack.c.bf16 %v5791, %v5788
        %v5872 = vpack.c.bf16 %v5823, %v5820
        %v5873 = vpack.c.bf16 %v5753, %v5751
        %v5874 = vpack.c.bf16 %v5794, %v5791
        %v5875 = vpack.c.bf16 %v5826, %v5823
        %v5876 = vpack.c.bf16 %v5755, %v5753
        %v5877 = vpack.c.bf16 %v5797, %v5794
        %v5878 = vpack.c.bf16 %v5829, %v5826
        %v5879 = vpack.c.bf16 %v5757, %v5755
        %v5880 = vpack.c.bf16 %v5800, %v5797
        %v5881 = vpack.c.bf16 %v5832, %v5829
        %v5882 = vpack.c.bf16 %v5759, %v5757
        %v5883 = vpack.c.bf16 %v5803, %v5800
        %v5884 = vpack.c.bf16 %v5835, %v5832
        %v5885 = vpack.c.bf16 %v5761, %v5759
        %v5886 = vpack.c.bf16 %v5806, %v5803
        %v5887 = vpack.c.bf16 %v5838, %v5835
        %v5888 = vpack.c.bf16 %v5763, %v5761
        %v5889 = vpack.c.bf16 %v5851, %v5806
        %v5890 = vpack.c.bf16 %v5855, %v5838
        %v5891 = vpack.c.bf16 %v5765, %v5763
        %v5892 = vpack.c.bf16 %v5861, %v5851
        %v5893 = vpack.c.bf16 %v5865, %v5855
        %v5894 = vld [vmem:[#allocation22] sm:$0xf]
        %v5895 = vld [vmem:[#allocation22 + $0x4] sm:$0xf]
        %v5896 = vld [vmem:[#allocation22 + $0x8] sm:$0xf]
        %v5897 = vld [vmem:[#allocation22 + $0xc] sm:$0xf]
        %v5898 = vld [vmem:[#allocation22 + $0x10] sm:$0xf]
        %v5899 = vld [vmem:[#allocation22 + $0x14] sm:$0xf]
        %v5900 = vld [vmem:[#allocation22 + $0x18] sm:$0xf]
        %v5901 = vld [vmem:[#allocation22 + $0x1c] sm:$0xf]
        %v5902 = vld [vmem:[#allocation22 + $0x20] sm:$0xf]
        %v5903 = vld [vmem:[#allocation22 + $0x24] sm:$0xf]
        %v5904 = vld [vmem:[#allocation22 + $0x28] sm:$0xf]
        %v5905 = vld [vmem:[#allocation22 + $0x2c] sm:$0xf]
        %v5906 = vld [vmem:[#allocation22 + $0x30] sm:$0xf]
        %v5907 = vld [vmem:[#allocation22 + $0x34] sm:$0xf]
        %v5908 = vld [vmem:[#allocation22 + $0x38] sm:$0xf]
        %v5909 = vld [vmem:[#allocation22 + $0x3c] sm:$0xf]
        %v5910 = vld [vmem:[#allocation22 + $0x40] sm:$0xf]
        %v5911 = vld [vmem:[#allocation22 + $0x44] sm:$0xf]
        %v5912 = vld [vmem:[#allocation22 + $0x48] sm:$0xf]
        %v5913 = vld [vmem:[#allocation22 + $0x4c] sm:$0xf]
        %v5914 = vld [vmem:[#allocation22 + $0x50] sm:$0xf]
        %v5915 = vld [vmem:[#allocation22 + $0x54] sm:$0xf]
        %v5916 = vld [vmem:[#allocation22 + $0x58] sm:$0xf]
        %v5917 = vld [vmem:[#allocation22 + $0x5c] sm:$0xf]
        %v5918 = vld [vmem:[#allocation22 + $0x60] sm:$0xf]
        %v5919 = vld [vmem:[#allocation22 + $0x64] sm:$0xf]
        %v5920 = vld [vmem:[#allocation22 + $0x68] sm:$0xf]
        %v5921 = vld [vmem:[#allocation22 + $0x6c] sm:$0xf]
        %v5922 = vld [vmem:[#allocation22 + $0x70] sm:$0xf]
        %v5923 = vld [vmem:[#allocation22 + $0x74] sm:$0xf]
        %v5924 = vld [vmem:[#allocation22 + $0x78] sm:$0xf]
        %v5925 = vld [vmem:[#allocation22 + $0x7c] sm:$0xf]
        %v5926 = vld [vmem:[#allocation22 + $0x80] sm:$0xf]
        %v5927 = vld [vmem:[#allocation22 + $0x84] sm:$0xf]
        %v5928 = vld [vmem:[#allocation22 + $0x88] sm:$0xf]
        %v5929 = vld [vmem:[#allocation22 + $0x8c] sm:$0xf]
        %v5930 = vld [vmem:[#allocation22 + $0x90] sm:$0xf]
        %v5931 = vld [vmem:[#allocation22 + $0x94] sm:$0xf]
        %v5932 = vld [vmem:[#allocation22 + $0x98] sm:$0xf]
        %v5933 = vld [vmem:[#allocation22 + $0x9c] sm:$0xf]
        %v5934 = vld [vmem:[#allocation22 + $0xa0] sm:$0xf]
        %v5935 = vld [vmem:[#allocation22 + $0xa4] sm:$0xf]
        %v5936 = vld [vmem:[#allocation22 + $0xa8] sm:$0xf]
        %v5937 = vld [vmem:[#allocation22 + $0xac] sm:$0xf]
        %v5938 = vld [vmem:[#allocation22 + $0xb0] sm:$0xf]
        %v5939 = vld [vmem:[#allocation22 + $0xb4] sm:$0xf]
        %v5940 = vld [vmem:[#allocation22 + $0xb8] sm:$0xf]
        %v5941 = vld [vmem:[#allocation22 + $0xbc] sm:$0xf]
        %v5942 = vld [vmem:[#allocation22 + $0xc0] sm:$0xf]
        %v5943 = vld [vmem:[#allocation22 + $0xc4] sm:$0xf]
        %v5944 = vld [vmem:[#allocation22 + $0xc8] sm:$0xf]
        %v5945 = vld [vmem:[#allocation22 + $0xcc] sm:$0xf]
        %v5946 = vld [vmem:[#allocation22 + $0xd0] sm:$0xf]
        %v5947 = vld [vmem:[#allocation22 + $0xd4] sm:$0xf]
        %v5948 = vld [vmem:[#allocation22 + $0xd8] sm:$0xf]
        %v5949 = vld [vmem:[#allocation22 + $0xdc] sm:$0xf]
        %v5950 = vld [vmem:[#allocation22 + $0xe0] sm:$0xf]
        %v5951 = vld [vmem:[#allocation22 + $0xe4] sm:$0xf]
        %v5952 = vld [vmem:[#allocation22 + $0xe8] sm:$0xf]
        %v5953 = vld [vmem:[#allocation22 + $0xec] sm:$0xf]
        %v5954 = vld [vmem:[#allocation22 + $0xf0] sm:$0xf]
        %v5955 = vld [vmem:[#allocation22 + $0xf4] sm:$0xf]
        %v5956 = vld [vmem:[#allocation22 + $0xf8] sm:$0xf]
        %v5957 = vld [vmem:[#allocation22 + $0xfc] sm:$0xf]
        %v5958 = vld [vmem:[#allocation22 + $0x100] sm:$0xf]
        %v5959 = vld [vmem:[#allocation22 + $0x104] sm:$0xf]
        %v5960 = vld [vmem:[#allocation22 + $0x108] sm:$0xf]
        %v5961 = vld [vmem:[#allocation22 + $0x10c] sm:$0xf]
        %v5962 = vld [vmem:[#allocation22 + $0x110] sm:$0xf]
        %v5963 = vld [vmem:[#allocation22 + $0x114] sm:$0xf]
        %v5964 = vld [vmem:[#allocation22 + $0x118] sm:$0xf]
        %v5965 = vld [vmem:[#allocation22 + $0x11c] sm:$0xf]
        %v5966 = vld [vmem:[#allocation22 + $0x120] sm:$0xf]
        %v5967 = vld [vmem:[#allocation22 + $0x124] sm:$0xf]
        %v5968 = vld [vmem:[#allocation22 + $0x128] sm:$0xf]
        %v5969 = vld [vmem:[#allocation22 + $0x12c] sm:$0xf]
        %v5970 = vld [vmem:[#allocation22 + $0x130] sm:$0xf]
        %v5971 = vld [vmem:[#allocation22 + $0x134] sm:$0xf]
        %v5972 = vld [vmem:[#allocation22 + $0x138] sm:$0xf]
        %v5973 = vld [vmem:[#allocation22 + $0x13c] sm:$0xf]
        %v5974 = vld [vmem:[#allocation22 + $0x140] sm:$0xf]
        %v5975 = vld [vmem:[#allocation22 + $0x144] sm:$0xf]
        %v5976 = vld [vmem:[#allocation22 + $0x148] sm:$0xf]
        %v5977 = vld [vmem:[#allocation22 + $0x14c] sm:$0xf]
        %v5978 = vld [vmem:[#allocation22 + $0x150] sm:$0xf]
        %v5979 = vld [vmem:[#allocation22 + $0x154] sm:$0xf]
        %v5980 = vld [vmem:[#allocation22 + $0x158] sm:$0xf]
        %v5981 = vld [vmem:[#allocation22 + $0x15c] sm:$0xf]
        %v5982 = vld [vmem:[#allocation22 + $0x160] sm:$0xf]
        %v5983 = vld [vmem:[#allocation22 + $0x164] sm:$0xf]
        %v5984 = vld [vmem:[#allocation22 + $0x168] sm:$0xf]
        %v5985 = vld [vmem:[#allocation22 + $0x16c] sm:$0xf]
        %v5986 = vld [vmem:[#allocation22 + $0x170] sm:$0xf]
        %v5987 = vld [vmem:[#allocation22 + $0x174] sm:$0xf]
        %v5988 = vld [vmem:[#allocation22 + $0x178] sm:$0xf]
        %v5989 = vld [vmem:[#allocation22 + $0x17c] sm:$0xf]
        %v5990 = vld [vmem:[#allocation22 + $0x180] sm:$0xf]
        %v5991 = vld [vmem:[#allocation22 + $0x184] sm:$0xf]
        %v5992 = vld [vmem:[#allocation22 + $0x188] sm:$0xf]
        %v5993 = vld [vmem:[#allocation22 + $0x18c] sm:$0xf]
        %v5994 = vld [vmem:[#allocation22 + $0x190] sm:$0xf]
        %v5995 = vld [vmem:[#allocation22 + $0x194] sm:$0xf]
        %v5996 = vld [vmem:[#allocation22 + $0x198] sm:$0xf]
        %v5997 = vld [vmem:[#allocation22 + $0x19c] sm:$0xf]
        %v5998 = vld [vmem:[#allocation22 + $0x1a0] sm:$0xf]
        %v5999 = vld [vmem:[#allocation22 + $0x1a4] sm:$0xf]
        %v6000 = vld [vmem:[#allocation22 + $0x1a8] sm:$0xf]
        %v6001 = vld [vmem:[#allocation22 + $0x1ac] sm:$0xf]
        %v6002 = vld [vmem:[#allocation22 + $0x1b0] sm:$0xf]
        %v6003 = vld [vmem:[#allocation22 + $0x1b4] sm:$0xf]
        %v6004 = vld [vmem:[#allocation22 + $0x1b8] sm:$0xf]
        %v6005 = vld [vmem:[#allocation22 + $0x1bc] sm:$0xf]
        %v6006 = vld [vmem:[#allocation22 + $0x1c0] sm:$0xf]
        %v6007 = vld [vmem:[#allocation22 + $0x1c4] sm:$0xf]
        %v6008 = vld [vmem:[#allocation22 + $0x1c8] sm:$0xf]
        %v6009 = vld [vmem:[#allocation22 + $0x1cc] sm:$0xf]
        %v6010 = vld [vmem:[#allocation22 + $0x1d0] sm:$0xf]
        %v6011 = vld [vmem:[#allocation22 + $0x1d4] sm:$0xf]
        %v6012 = vld [vmem:[#allocation22 + $0x1d8] sm:$0xf]
        %v6013 = vld [vmem:[#allocation22 + $0x1dc] sm:$0xf]
        %v6014 = vld [vmem:[#allocation22 + $0x1e0] sm:$0xf]
        %v6015 = vld [vmem:[#allocation22 + $0x1e4] sm:$0xf]
        %v6016 = vld [vmem:[#allocation22 + $0x1e8] sm:$0xf]
        %v6017 = vld [vmem:[#allocation22 + $0x1ec] sm:$0xf]
        %v6018 = vld [vmem:[#allocation22 + $0x1f0] sm:$0xf]
        %v6019 = vld [vmem:[#allocation22 + $0x1f4] sm:$0xf]
        %v6020 = vld [vmem:[#allocation22 + $0x1f8] sm:$0xf]
        %v6021 = vld [vmem:[#allocation22 + $0x1fc] sm:$0xf]
        %v6022 = vld [vmem:[#allocation22 + $0x200] sm:$0xf]
        %v6023 = vld [vmem:[#allocation22 + $0x204] sm:$0xf]
        %v6024 = vld [vmem:[#allocation22 + $0x208] sm:$0xf]
        %v6025 = vld [vmem:[#allocation22 + $0x20c] sm:$0xf]
        %v6026 = vld [vmem:[#allocation22 + $0x210] sm:$0xf]
        %v6027 = vld [vmem:[#allocation22 + $0x214] sm:$0xf]
        %v6028 = vld [vmem:[#allocation22 + $0x218] sm:$0xf]
        %v6029 = vld [vmem:[#allocation22 + $0x21c] sm:$0xf]
        %v6030 = vld [vmem:[#allocation22 + $0x220] sm:$0xf]
        %v6031 = vld [vmem:[#allocation22 + $0x224] sm:$0xf]
        %v6032 = vld [vmem:[#allocation22 + $0x228] sm:$0xf]
        %v6033 = vld [vmem:[#allocation22 + $0x22c] sm:$0xf]
        %v6034 = vld [vmem:[#allocation22 + $0x230] sm:$0xf]
        %v6035 = vld [vmem:[#allocation22 + $0x234] sm:$0xf]
        %v6036 = vld [vmem:[#allocation22 + $0x238] sm:$0xf]
        %v6037 = vld [vmem:[#allocation22 + $0x23c] sm:$0xf]
        %v6038 = vld [vmem:[#allocation23] sm:$0x1]
        %v6040 = vlaneseq
        %v6041 = vshrl.u32 %v6040, 7
        %v6042 = vsub.s32 0, %v6041
        %v6043 = vrot.slane %v6038, %v6042
        %v6189 = vunpack.c.l.b16 %v5894
        %v6190 = vunpack.c.l.b16 %v5895
        %v6191 = vunpack.c.l.b16 %v5896
        %v6192 = vunpack.c.l.b16 %v5897
        %v6193 = vunpack.c.l.b16 %v5898
        %v6194 = vunpack.c.l.b16 %v5899
        %v6195 = vunpack.c.l.b16 %v5900
        %v6196 = vunpack.c.l.b16 %v5901
        %v6197 = vunpack.c.l.b16 %v5902
        %v6198 = vunpack.c.l.b16 %v5903
        %v6199 = vunpack.c.l.b16 %v5904
        %v6200 = vunpack.c.l.b16 %v5905
        %v6201 = vunpack.c.l.b16 %v5906
        %v6202 = vunpack.c.l.b16 %v5907
        %v6203 = vunpack.c.l.b16 %v5908
        %v6204 = vunpack.c.l.b16 %v5909
        %v6205 = vunpack.c.l.b16 %v5910
        %v6206 = vunpack.c.l.b16 %v5911
        %v6207 = vunpack.c.l.b16 %v5912
        %v6208 = vunpack.c.l.b16 %v5913
        %v6209 = vunpack.c.l.b16 %v5914
        %v6210 = vunpack.c.l.b16 %v5915
        %v6211 = vunpack.c.l.b16 %v5916
        %v6212 = vunpack.c.l.b16 %v5917
        %v6213 = vunpack.c.l.b16 %v5918
        %v6214 = vunpack.c.l.b16 %v5919
        %v6215 = vunpack.c.l.b16 %v5920
        %v6216 = vunpack.c.l.b16 %v5921
        %v6217 = vunpack.c.l.b16 %v5922
        %v6218 = vunpack.c.l.b16 %v5923
        %v6219 = vunpack.c.l.b16 %v5924
        %v6220 = vunpack.c.l.b16 %v5925
        %v6221 = vunpack.c.l.b16 %v5926
        %v6222 = vunpack.c.l.b16 %v5927
        %v6223 = vunpack.c.l.b16 %v5928
        %v6224 = vunpack.c.l.b16 %v5929
        %v6225 = vunpack.c.l.b16 %v5930
        %v6226 = vunpack.c.l.b16 %v5931
        %v6227 = vunpack.c.l.b16 %v5932
        %v6228 = vunpack.c.l.b16 %v5933
        %v6229 = vunpack.c.l.b16 %v5934
        %v6230 = vunpack.c.l.b16 %v5935
        %v6231 = vunpack.c.l.b16 %v5936
        %v6232 = vunpack.c.l.b16 %v5937
        %v6233 = vunpack.c.l.b16 %v5938
        %v6234 = vunpack.c.l.b16 %v5939
        %v6235 = vunpack.c.l.b16 %v5940
        %v6236 = vunpack.c.l.b16 %v5941
        %v6237 = vunpack.c.l.b16 %v5942
        %v6238 = vunpack.c.l.b16 %v5943
        %v6239 = vunpack.c.l.b16 %v5944
        %v6240 = vunpack.c.l.b16 %v5945
        %v6241 = vunpack.c.l.b16 %v5946
        %v6242 = vunpack.c.l.b16 %v5947
        %v6243 = vunpack.c.l.b16 %v5948
        %v6244 = vunpack.c.l.b16 %v5949
        %v6245 = vunpack.c.l.b16 %v5950
        %v6246 = vunpack.c.l.b16 %v5951
        %v6247 = vunpack.c.l.b16 %v5952
        %v6248 = vunpack.c.l.b16 %v5953
        %v6249 = vunpack.c.l.b16 %v5954
        %v6250 = vunpack.c.l.b16 %v5955
        %v6251 = vunpack.c.l.b16 %v5956
        %v6252 = vunpack.c.l.b16 %v5957
        %v6253 = vunpack.c.l.b16 %v5958
        %v6254 = vunpack.c.l.b16 %v5959
        %v6255 = vunpack.c.l.b16 %v5960
        %v6256 = vunpack.c.l.b16 %v5961
        %v6257 = vunpack.c.l.b16 %v5962
        %v6258 = vunpack.c.l.b16 %v5963
        %v6259 = vunpack.c.l.b16 %v5964
        %v6260 = vunpack.c.l.b16 %v5965
        %v6261 = vunpack.c.l.b16 %v5966
        %v6262 = vunpack.c.l.b16 %v5967
        %v6263 = vunpack.c.l.b16 %v5968
        %v6264 = vunpack.c.l.b16 %v5969
        %v6265 = vunpack.c.l.b16 %v5970
        %v6266 = vunpack.c.l.b16 %v5971
        %v6267 = vunpack.c.l.b16 %v5972
        %v6268 = vunpack.c.l.b16 %v5973
        %v6269 = vunpack.c.l.b16 %v5974
        %v6270 = vunpack.c.l.b16 %v5975
        %v6271 = vunpack.c.l.b16 %v5976
        %v6272 = vunpack.c.l.b16 %v5977
        %v6273 = vunpack.c.l.b16 %v5978
        %v6274 = vunpack.c.l.b16 %v5979
        %v6275 = vunpack.c.l.b16 %v5980
        %v6276 = vunpack.c.l.b16 %v5981
        %v6277 = vunpack.c.l.b16 %v5982
        %v6278 = vunpack.c.l.b16 %v5983
        %v6279 = vunpack.c.l.b16 %v5984
        %v6280 = vunpack.c.l.b16 %v5985
        %v6281 = vunpack.c.l.b16 %v5986
        %v6282 = vunpack.c.l.b16 %v5987
        %v6283 = vunpack.c.l.b16 %v5988
        %v6284 = vunpack.c.l.b16 %v5989
        %v6285 = vunpack.c.l.b16 %v5990
        %v6286 = vunpack.c.l.b16 %v5991
        %v6287 = vunpack.c.l.b16 %v5992
        %v6288 = vunpack.c.l.b16 %v5993
        %v6289 = vunpack.c.l.b16 %v5994
        %v6290 = vunpack.c.l.b16 %v5995
        %v6291 = vunpack.c.l.b16 %v5996
        %v6292 = vunpack.c.l.b16 %v5997
        %v6293 = vunpack.c.l.b16 %v5998
        %v6294 = vunpack.c.l.b16 %v5999
        %v6295 = vunpack.c.l.b16 %v6000
        %v6296 = vunpack.c.l.b16 %v6001
        %v6297 = vunpack.c.l.b16 %v6002
        %v6298 = vunpack.c.l.b16 %v6003
        %v6299 = vunpack.c.l.b16 %v6004
        %v6300 = vunpack.c.l.b16 %v6005
        %v6301 = vunpack.c.l.b16 %v6006
        %v6302 = vunpack.c.l.b16 %v6007
        %v6303 = vunpack.c.l.b16 %v6008
        %v6304 = vunpack.c.l.b16 %v6009
        %v6305 = vunpack.c.l.b16 %v6010
        %v6306 = vunpack.c.l.b16 %v6011
        %v6307 = vunpack.c.l.b16 %v6012
        %v6308 = vunpack.c.l.b16 %v6013
        %v6309 = vunpack.c.l.b16 %v6014
        %v6310 = vunpack.c.l.b16 %v6015
        %v6311 = vunpack.c.l.b16 %v6016
        %v6312 = vunpack.c.l.b16 %v6017
        %v6313 = vunpack.c.l.b16 %v6018
        %v6314 = vunpack.c.l.b16 %v6019
        %v6315 = vunpack.c.l.b16 %v6020
        %v6316 = vunpack.c.l.b16 %v6021
        %v6317 = vunpack.c.l.b16 %v6022
        %v6318 = vunpack.c.l.b16 %v6023
        %v6319 = vunpack.c.l.b16 %v6024
        %v6320 = vunpack.c.l.b16 %v6025
        %v6321 = vunpack.c.l.b16 %v6026
        %v6322 = vunpack.c.l.b16 %v6027
        %v6323 = vunpack.c.l.b16 %v6028
        %v6324 = vunpack.c.l.b16 %v6029
        %v6325 = vunpack.c.l.b16 %v6030
        %v6326 = vunpack.c.l.b16 %v6031
        %v6327 = vunpack.c.l.b16 %v6032
        %v6328 = vunpack.c.l.b16 %v6033
        %v6329 = vunpack.c.l.b16 %v6034
        %v6330 = vunpack.c.l.b16 %v6035
        %v6331 = vunpack.c.l.b16 %v6036
        %v6332 = vunpack.c.l.b16 %v6037
        %v6333 = vpack.c.b16 %v6190, %v6189
        %v6334 = vpack.c.b16 %v6192, %v6191
        %v6335 = vpack.c.b16 %v6194, %v6193
        %v6336 = vpack.c.b16 %v6196, %v6195
        %v6337 = vpack.c.b16 %v6198, %v6197
        %v6338 = vpack.c.b16 %v6200, %v6199
        %v6339 = vpack.c.b16 %v6202, %v6201
        %v6340 = vpack.c.b16 %v6204, %v6203
        %v6341 = vpack.c.b16 %v6206, %v6205
        %v6342 = vpack.c.b16 %v6208, %v6207
        %v6343 = vpack.c.b16 %v6210, %v6209
        %v6344 = vpack.c.b16 %v6212, %v6211
        %v6345 = vpack.c.b16 %v6214, %v6213
        %v6346 = vpack.c.b16 %v6216, %v6215
        %v6347 = vpack.c.b16 %v6218, %v6217
        %v6348 = vpack.c.b16 %v6220, %v6219
        %v6349 = vpack.c.b16 %v6222, %v6221
        %v6350 = vpack.c.b16 %v6224, %v6223
        %v6351 = vpack.c.b16 %v6226, %v6225
        %v6352 = vpack.c.b16 %v6228, %v6227
        %v6353 = vpack.c.b16 %v6230, %v6229
        %v6354 = vpack.c.b16 %v6232, %v6231
        %v6355 = vpack.c.b16 %v6234, %v6233
        %v6356 = vpack.c.b16 %v6236, %v6235
        %v6357 = vpack.c.b16 %v6238, %v6237
        %v6358 = vpack.c.b16 %v6240, %v6239
        %v6359 = vpack.c.b16 %v6242, %v6241
        %v6360 = vpack.c.b16 %v6244, %v6243
        %v6361 = vpack.c.b16 %v6246, %v6245
        %v6362 = vpack.c.b16 %v6248, %v6247
        %v6363 = vpack.c.b16 %v6250, %v6249
        %v6364 = vpack.c.b16 %v6252, %v6251
        %v6365 = vpack.c.b16 %v6254, %v6253
        %v6366 = vpack.c.b16 %v6256, %v6255
        %v6367 = vpack.c.b16 %v6258, %v6257
        %v6368 = vpack.c.b16 %v6260, %v6259
        %v6369 = vpack.c.b16 %v6262, %v6261
        %v6370 = vpack.c.b16 %v6264, %v6263
        %v6371 = vpack.c.b16 %v6266, %v6265
        %v6372 = vpack.c.b16 %v6268, %v6267
        %v6373 = vpack.c.b16 %v6270, %v6269
        %v6374 = vpack.c.b16 %v6272, %v6271
        %v6375 = vpack.c.b16 %v6274, %v6273
        %v6376 = vpack.c.b16 %v6276, %v6275
        %v6377 = vpack.c.b16 %v6278, %v6277
        %v6378 = vpack.c.b16 %v6280, %v6279
        %v6379 = vpack.c.b16 %v6282, %v6281
        %v6380 = vpack.c.b16 %v6284, %v6283
        %v6381 = vpack.c.b16 %v6286, %v6285
        %v6382 = vpack.c.b16 %v6288, %v6287
        %v6383 = vpack.c.b16 %v6290, %v6289
        %v6384 = vpack.c.b16 %v6292, %v6291
        %v6385 = vpack.c.b16 %v6294, %v6293
        %v6386 = vpack.c.b16 %v6296, %v6295
        %v6387 = vpack.c.b16 %v6298, %v6297
        %v6388 = vpack.c.b16 %v6300, %v6299
        %v6389 = vpack.c.b16 %v6302, %v6301
        %v6390 = vpack.c.b16 %v6304, %v6303
        %v6391 = vpack.c.b16 %v6306, %v6305
        %v6392 = vpack.c.b16 %v6308, %v6307
        %v6393 = vpack.c.b16 %v6310, %v6309
        %v6394 = vpack.c.b16 %v6312, %v6311
        %v6395 = vpack.c.b16 %v6314, %v6313
        %v6396 = vpack.c.b16 %v6316, %v6315
        %v6397 = vpack.c.b16 %v6318, %v6317
        %v6398 = vpack.c.b16 %v6320, %v6319
        %v6399 = vpack.c.b16 %v6322, %v6321
        %v6400 = vpack.c.b16 %v6324, %v6323
        %v6401 = vpack.c.b16 %v6326, %v6325
        %v6402 = vpack.c.b16 %v6328, %v6327
        %v6403 = vpack.c.b16 %v6330, %v6329
        %v6404 = vpack.c.b16 %v6332, %v6331
        %6477 = vmatprep.subr.bf16.mxu0 0
        %6478 = vmatpush1.bf16.msra.mxu0 %v6333
        %6479 = vmatprep.subr.bf16.mxu0 0
        %6480 = vmatpush1.bf16.msra.mxu0 %v6334
        %6481 = vmatprep.subr.bf16.mxu0 0
        %6482 = vmatpush1.bf16.msra.mxu0 %v6335
        %6483 = vmatprep.subr.bf16.mxu0 0
        %6484 = vmatpush1.bf16.msra.mxu0 %v6336
        %6485 = vmatprep.subr.bf16.mxu0 0
        %6486 = vmatpush1.bf16.msra.mxu0 %v6337
        %6487 = vmatprep.subr.bf16.mxu0 0
        %6488 = vmatpush1.bf16.msra.mxu0 %v6338
        %6489 = vmatprep.subr.bf16.mxu0 0
        %6490 = vmatpush1.bf16.msra.mxu0 %v6339
        %6491 = vmatprep.subr.bf16.mxu0 0
        %6492 = vmatpush1.bf16.msra.mxu0 %v6340
        %6493 = vmatprep.subr.bf16.mxu0 0
        %6494 = vmatpush1.bf16.msra.mxu0 %v6341
        %6495 = vmatprep.subr.bf16.mxu0 0
        %6496 = vmatpush1.bf16.msra.mxu0 %v6342
        %6497 = vmatprep.subr.bf16.mxu0 0
        %6498 = vmatpush1.bf16.msra.mxu0 %v6343
        %6499 = vmatprep.subr.bf16.mxu0 0
        %6500 = vmatpush1.bf16.msra.mxu0 %v6344
        %6501 = vmatprep.subr.bf16.mxu0 0
        %6502 = vmatpush1.bf16.msra.mxu0 %v6345
        %6503 = vmatprep.subr.bf16.mxu0 0
        %6504 = vmatpush1.bf16.msra.mxu0 %v6346
        %6505 = vmatprep.subr.bf16.mxu0 0
        %6506 = vmatpush1.bf16.msra.mxu0 %v6347
        %6507 = vmatprep.subr.bf16.mxu0 0
        %6508 = vmatpush1.bf16.msra.mxu0 %v6348
        %6509 = vmatprep.mubr.bf16.mxu0 %v5868
        %6510 = vmatmul.mubr.bf16.gmra.mrb[0].mxu0 %v5867
        %v6511 = vpop.f32.mrb[0].mxu0
        %v6512 = vadd.f32 %v6043, %v6511
        %v6513 = vpop.f32.mrb[0].mxu0
        %v6514 = vpop.f32.mrb[0].mxu0
        %v6515 = vadd.f32 %v6043, %v6514
        %v6516 = vpop.f32.mrb[0].mxu0
        %6517 = vmatprep.mubr.bf16.mxu0 %v5874
        %6518 = vmatmul.mubr.bf16.gmra.mrb[0].mxu0 %v5873
        %v6519 = vpop.f32.mrb[0].mxu0
        %v6520 = vadd.f32 %v6043, %v6519
        %v6521 = vpop.f32.mrb[0].mxu0
        %v6522 = vpop.f32.mrb[0].mxu0
        %v6523 = vadd.f32 %v6043, %v6522
        %v6524 = vpop.f32.mrb[0].mxu0
        %6525 = vmatprep.mubr.bf16.mxu0 %v5880
        %6526 = vmatmul.mubr.bf16.gmra.mrb[0].mxu0 %v5879
        %v6527 = vpop.f32.mrb[0].mxu0
        %v6528 = vadd.f32 %v6043, %v6527
        %v6529 = vpop.f32.mrb[0].mxu0
        %v6530 = vpop.f32.mrb[0].mxu0
        %v6531 = vadd.f32 %v6043, %v6530
        %v6532 = vpop.f32.mrb[0].mxu0
        %6533 = vmatprep.mubr.bf16.mxu0 %v5886
        %6534 = vmatmul.mubr.bf16.gmra.mrb[0].mxu0 %v5885
        %v6535 = vpop.f32.mrb[0].mxu0
        %v6536 = vadd.f32 %v6043, %v6535
        %v6537 = vpop.f32.mrb[0].mxu0
        %v6538 = vpop.f32.mrb[0].mxu0
        %v6539 = vadd.f32 %v6043, %v6538
        %v6540 = vpop.f32.mrb[0].mxu0
        %6541 = vdwg.mxu0
        %6542 = vmatprep.subr.bf16.mxu0 0
        %6543 = vmatpush1.bf16.msra.mxu0 %v6349
        %6544 = vmatprep.subr.bf16.mxu0 0
        %6545 = vmatpush1.bf16.msra.mxu0 %v6350
        %6546 = vmatprep.subr.bf16.mxu0 0
        %6547 = vmatpush1.bf16.msra.mxu0 %v6351
        %6548 = vmatprep.subr.bf16.mxu0 0
        %6549 = vmatpush1.bf16.msra.mxu0 %v6352
        %6550 = vmatprep.subr.bf16.mxu0 0
        %6551 = vmatpush1.bf16.msra.mxu0 %v6353
        %6552 = vmatprep.subr.bf16.mxu0 0
        %6553 = vmatpush1.bf16.msra.mxu0 %v6354
        %6554 = vmatprep.subr.bf16.mxu0 0
        %6555 = vmatpush1.bf16.msra.mxu0 %v6355
        %6556 = vmatprep.subr.bf16.mxu0 0
        %6557 = vmatpush1.bf16.msra.mxu0 %v6356
        %6558 = vmatprep.subr.bf16.mxu0 0
        %6559 = vmatpush1.bf16.msra.mxu0 %v6357
        %6560 = vmatprep.subr.bf16.mxu0 0
        %6561 = vmatpush1.bf16.msra.mxu0 %v6358
        %6562 = vmatprep.subr.bf16.mxu0 0
        %6563 = vmatpush1.bf16.msra.mxu0 %v6359
        %6564 = vmatprep.subr.bf16.mxu0 0
        %6565 = vmatpush1.bf16.msra.mxu0 %v6360
        %6566 = vmatprep.subr.bf16.mxu0 0
        %6567 = vmatpush1.bf16.msra.mxu0 %v6361
        %6568 = vmatprep.subr.bf16.mxu0 0
        %6569 = vmatpush1.bf16.msra.mxu0 %v6362
        %6570 = vmatprep.subr.bf16.mxu0 0
        %6571 = vmatpush1.bf16.msra.mxu0 %v6363
        %6572 = vmatprep.subr.bf16.mxu0 0
        %6573 = vmatpush1.bf16.msra.mxu0 %v6364
        %6574 = vmatprep.mubr.bf16.mxu0 %v5870
        %6575 = vmatmul.mubr.bf16.gmra.mrb[0].mxu0 %v5869
        %v6576 = vpop.f32.mrb[0].mxu0
        %v6577 = vadd.f32 %v6512, %v6576
        %v6578 = vpop.f32.mrb[0].mxu0
        %v6579 = vpop.f32.mrb[0].mxu0
        %v6580 = vadd.f32 %v6515, %v6579
        %v6581 = vpop.f32.mrb[0].mxu0
        %6582 = vmatprep.mubr.bf16.mxu0 %v5876
        %6583 = vmatmul.mubr.bf16.gmra.mrb[0].mxu0 %v5875
        %v6584 = vpop.f32.mrb[0].mxu0
        %v6585 = vadd.f32 %v6520, %v6584
        %v6586 = vpop.f32.mrb[0].mxu0
        %v6587 = vpop.f32.mrb[0].mxu0
        %v6588 = vadd.f32 %v6523, %v6587
        %v6589 = vpop.f32.mrb[0].mxu0
        %6590 = vmatprep.mubr.bf16.mxu0 %v5882
        %6591 = vmatmul.mubr.bf16.gmra.mrb[0].mxu0 %v5881
        %v6592 = vpop.f32.mrb[0].mxu0
        %v6593 = vadd.f32 %v6528, %v6592
        %v6594 = vpop.f32.mrb[0].mxu0
        %v6595 = vpop.f32.mrb[0].mxu0
        %v6596 = vadd.f32 %v6531, %v6595
        %v6597 = vpop.f32.mrb[0].mxu0
        %6598 = vmatprep.mubr.bf16.mxu0 %v5888
        %6599 = vmatmul.mubr.bf16.gmra.mrb[0].mxu0 %v5887
        %v6600 = vpop.f32.mrb[0].mxu0
        %v6601 = vadd.f32 %v6536, %v6600
        %v6602 = vpop.f32.mrb[0].mxu0
        %v6603 = vpop.f32.mrb[0].mxu0
        %v6604 = vadd.f32 %v6539, %v6603
        %v6605 = vpop.f32.mrb[0].mxu0
        %6606 = vdwg.mxu0
        %6607 = vmatprep.subr.bf16.mxu0 0
        %6608 = vmatpush1.bf16.msra.mxu0 %v6365
        %6609 = vmatprep.subr.bf16.mxu0 0
        %6610 = vmatpush1.bf16.msra.mxu0 %v6366
        %6611 = vmatprep.subr.bf16.mxu0 0
        %6612 = vmatpush1.bf16.msra.mxu0 %v6367
        %6613 = vmatprep.subr.bf16.mxu0 0
        %6614 = vmatpush1.bf16.msra.mxu0 %v6368
        %6615 = vmatprep.subr.bf16.mxu0 0
        %6616 = vmatpush1.bf16.msra.mxu0 %v6369
        %6617 = vmatprep.subr.bf16.mxu0 0
        %6618 = vmatpush1.bf16.msra.mxu0 %v6370
        %6619 = vmatprep.subr.bf16.mxu0 0
        %6620 = vmatpush1.bf16.msra.mxu0 %v6371
        %6621 = vmatprep.subr.bf16.mxu0 0
        %6622 = vmatpush1.bf16.msra.mxu0 %v6372
        %6623 = vmatprep.subr.bf16.mxu0 0
        %6624 = vmatpush1.bf16.msra.mxu0 %v6373
        %6625 = vmatprep.subr.bf16.mxu0 0
        %6626 = vmatpush1.bf16.msra.mxu0 %v6374
        %6627 = vmatprep.subr.bf16.mxu0 0
        %6628 = vmatpush1.bf16.msra.mxu0 %v6375
        %6629 = vmatprep.subr.bf16.mxu0 0
        %6630 = vmatpush1.bf16.msra.mxu0 %v6376
        %6631 = vmatprep.subr.bf16.mxu0 0
        %6632 = vmatpush1.bf16.msra.mxu0 %v6377
        %6633 = vmatprep.subr.bf16.mxu0 0
        %6634 = vmatpush1.bf16.msra.mxu0 %v6378
        %6635 = vmatprep.subr.bf16.mxu0 0
        %6636 = vmatpush1.bf16.msra.mxu0 %v6379
        %6637 = vmatprep.subr.bf16.mxu0 0
        %6638 = vmatpush1.bf16.msra.mxu0 %v6380
        %6639 = vmatprep.mubr.bf16.mxu0 %v5872
        %6640 = vmatmul.mubr.bf16.gmra.mrb[0].mxu0 %v5871
        %v6641 = vpop.f32.mrb[0].mxu0
        %v6642 = vadd.f32 %v6577, %v6641
        %v6643 = vpop.f32.mrb[0].mxu0
        %v6644 = vpop.f32.mrb[0].mxu0
        %v6645 = vadd.f32 %v6580, %v6644
        %v6646 = vpop.f32.mrb[0].mxu0
        %6647 = vmatprep.mubr.bf16.mxu0 %v5878
        %6648 = vmatmul.mubr.bf16.gmra.mrb[0].mxu0 %v5877
        %v6649 = vpop.f32.mrb[0].mxu0
        %v6650 = vadd.f32 %v6585, %v6649
        %v6651 = vpop.f32.mrb[0].mxu0
        %v6652 = vpop.f32.mrb[0].mxu0
        %v6653 = vadd.f32 %v6588, %v6652
        %v6654 = vpop.f32.mrb[0].mxu0
        %6655 = vmatprep.mubr.bf16.mxu0 %v5884
        %6656 = vmatmul.mubr.bf16.gmra.mrb[0].mxu0 %v5883
        %v6657 = vpop.f32.mrb[0].mxu0
        %v6658 = vadd.f32 %v6593, %v6657
        %v6659 = vpop.f32.mrb[0].mxu0
        %v6660 = vpop.f32.mrb[0].mxu0
        %v6661 = vadd.f32 %v6596, %v6660
        %v6662 = vpop.f32.mrb[0].mxu0
        %6663 = vmatprep.mubr.bf16.mxu0 %v5890
        %6664 = vmatmul.mubr.bf16.gmra.mrb[0].mxu0 %v5889
        %v6665 = vpop.f32.mrb[0].mxu0
        %v6666 = vadd.f32 %v6601, %v6665
        %v6667 = vpop.f32.mrb[0].mxu0
        %v6668 = vpop.f32.mrb[0].mxu0
        %v6669 = vadd.f32 %v6604, %v6668
        %v6670 = vpop.f32.mrb[0].mxu0
        %6671 = vdwg.mxu0
        %6672 = vmatprep.subr.bf16.mxu0 0
        %6673 = vmatpush1.bf16.msra.mxu0 %v6381
        %6674 = vmatprep.subr.bf16.mxu0 0
        %6675 = vmatpush1.bf16.msra.mxu0 %v6382
        %6676 = vmatprep.subr.bf16.mxu0 0
        %6677 = vmatpush1.bf16.msra.mxu0 %v6383
        %6678 = vmatprep.subr.bf16.mxu0 0
        %6679 = vmatpush1.bf16.msra.mxu0 %v6384
        %6680 = vmatprep.subr.bf16.mxu0 0
        %6681 = vmatpush1.bf16.msra.mxu0 %v6385
        %6682 = vmatprep.subr.bf16.mxu0 0
        %6683 = vmatpush1.bf16.msra.mxu0 %v6386
        %6684 = vmatprep.subr.bf16.mxu0 0
        %6685 = vmatpush1.bf16.msra.mxu0 %v6387
        %6686 = vmatprep.subr.bf16.mxu0 0
        %6687 = vmatpush1.bf16.msra.mxu0 %v6388
        %6688 = vmatprep.subr.bf16.mxu0 0
        %6689 = vmatpush1.bf16.msra.mxu0 %v6389
        %6690 = vmatprep.subr.bf16.mxu0 0
        %6691 = vmatpush1.bf16.msra.mxu0 %v6390
        %6692 = vmatprep.subr.bf16.mxu0 0
        %6693 = vmatpush1.bf16.msra.mxu0 %v6391
        %6694 = vmatprep.subr.bf16.mxu0 0
        %6695 = vmatpush1.bf16.msra.mxu0 %v6392
        %6696 = vmatprep.subr.bf16.mxu0 0
        %6697 = vmatpush1.bf16.msra.mxu0 %v6393
        %6698 = vmatprep.subr.bf16.mxu0 0
        %6699 = vmatpush1.bf16.msra.mxu0 %v6394
        %6700 = vmatprep.subr.bf16.mxu0 0
        %6701 = vmatpush1.bf16.msra.mxu0 %v6395
        %6702 = vmatprep.subr.bf16.mxu0 0
        %6703 = vmatpush1.bf16.msra.mxu0 %v6396
        %6704 = vmatprep.mubr.bf16.mxu0 %v5874
        %6705 = vmatmul.mubr.bf16.gmra.mrb[0].mxu0 %v5873
        %v6706 = vpop.f32.mrb[0].mxu0
        %v6707 = vadd.f32 %v6642, %v6706
        %v6708 = vpop.f32.mrb[0].mxu0
        %v6709 = vpop.f32.mrb[0].mxu0
        %v6710 = vadd.f32 %v6645, %v6709
        %v6711 = vpop.f32.mrb[0].mxu0
        %6712 = vmatprep.mubr.bf16.mxu0 %v5880
        %6713 = vmatmul.mubr.bf16.gmra.mrb[0].mxu0 %v5879
        %v6714 = vpop.f32.mrb[0].mxu0
        %v6715 = vadd.f32 %v6650, %v6714
        %v6716 = vpop.f32.mrb[0].mxu0
        %v6717 = vpop.f32.mrb[0].mxu0
        %v6718 = vadd.f32 %v6653, %v6717
        %v6719 = vpop.f32.mrb[0].mxu0
        %6720 = vmatprep.mubr.bf16.mxu0 %v5886
        %6721 = vmatmul.mubr.bf16.gmra.mrb[0].mxu0 %v5885
        %v6722 = vpop.f32.mrb[0].mxu0
        %v6723 = vadd.f32 %v6658, %v6722
        %v6724 = vpop.f32.mrb[0].mxu0
        %v6725 = vpop.f32.mrb[0].mxu0
        %v6726 = vadd.f32 %v6661, %v6725
        %v6727 = vpop.f32.mrb[0].mxu0
        %6728 = vmatprep.mubr.bf16.mxu0 %v5892
        %6729 = vmatmul.mubr.bf16.gmra.mrb[0].mxu0 %v5891
        %v6730 = vpop.f32.mrb[0].mxu0
        %v6731 = vadd.f32 %v6666, %v6730
        %v6732 = vpop.f32.mrb[0].mxu0
        %v6733 = vpop.f32.mrb[0].mxu0
        %v6734 = vadd.f32 %v6669, %v6733
        %v6735 = vpop.f32.mrb[0].mxu0
        %6736 = vdwg.mxu0
        %6737 = vmatprep.subr.bf16.mxu0 0
        %6738 = vmatpush1.bf16.msra.mxu0 %v6397
        %6739 = vmatprep.subr.bf16.mxu0 0
        %6740 = vmatpush1.bf16.msra.mxu0 %v6398
        %6741 = vmatprep.subr.bf16.mxu0 0
        %6742 = vmatpush1.bf16.msra.mxu0 %v6399
        %6743 = vmatprep.subr.bf16.mxu0 0
        %6744 = vmatpush1.bf16.msra.mxu0 %v6400
        %6745 = vmatprep.subr.bf16.mxu0 0
        %6746 = vmatpush1.bf16.msra.mxu0 %v6401
        %6747 = vmatprep.subr.bf16.mxu0 0
        %6748 = vmatpush1.bf16.msra.mxu0 %v6402
        %6749 = vmatprep.subr.bf16.mxu0 0
        %6750 = vmatpush1.bf16.msra.mxu0 %v6403
        %6751 = vmatprep.subr.bf16.mxu0 0
        %6752 = vmatpush1.bf16.msra.mxu0 %v6404
        %6753 = vmatprep.subr.bf16.mxu0 0
        %6754 = vmatpush1.bf16.msra.mxu0 0
        %6755 = vmatprep.subr.bf16.mxu0 0
        %6756 = vmatpush1.bf16.msra.mxu0 0
        %6757 = vmatprep.subr.bf16.mxu0 0
        %6758 = vmatpush1.bf16.msra.mxu0 0
        %6759 = vmatprep.subr.bf16.mxu0 0
        %6760 = vmatpush1.bf16.msra.mxu0 0
        %6761 = vmatprep.subr.bf16.mxu0 0
        %6762 = vmatpush1.bf16.msra.mxu0 0
        %6763 = vmatprep.subr.bf16.mxu0 0
        %6764 = vmatpush1.bf16.msra.mxu0 0
        %6765 = vmatprep.subr.bf16.mxu0 0
        %6766 = vmatpush1.bf16.msra.mxu0 0
        %6767 = vmatprep.subr.bf16.mxu0 0
        %6768 = vmatpush1.bf16.msra.mxu0 0
        %6769 = vmatprep.mubr.bf16.mxu0 0
        %6770 = vmatmul.mubr.bf16.gmra.mrb[0].mxu0 %v5875
        %v6771 = vpop.f32.mrb[0].mxu0
        %v6772 = vadd.f32 %v6707, %v6771
        %v6773 = vpop.f32.mrb[0].mxu0
        %v6774 = vpop.f32.mrb[0].mxu0
        %v6775 = vadd.f32 %v6710, %v6774
        %v6776 = vpop.f32.mrb[0].mxu0
        %6777 = vmatprep.mubr.bf16.mxu0 0
        %6778 = vmatmul.mubr.bf16.gmra.mrb[0].mxu0 %v5881
        %v6779 = vpop.f32.mrb[0].mxu0
        %v6780 = vadd.f32 %v6715, %v6779
        %v6781 = vpop.f32.mrb[0].mxu0
        %v6782 = vpop.f32.mrb[0].mxu0
        %v6783 = vadd.f32 %v6718, %v6782
        %v6784 = vpop.f32.mrb[0].mxu0
        %6785 = vmatprep.mubr.bf16.mxu0 0
        %6786 = vmatmul.mubr.bf16.gmra.mrb[0].mxu0 %v5887
        %v6787 = vpop.f32.mrb[0].mxu0
        %v6788 = vadd.f32 %v6723, %v6787
        %v6789 = vpop.f32.mrb[0].mxu0
        %v6790 = vpop.f32.mrb[0].mxu0
        %v6791 = vadd.f32 %v6726, %v6790
        %v6792 = vpop.f32.mrb[0].mxu0
        %6793 = vmatprep.mubr.bf16.mxu0 0
        %6794 = vmatmul.mubr.bf16.gmra.mrb[0].mxu0 %v5893
        %v6795 = vpop.f32.mrb[0].mxu0
        %v6796 = vadd.f32 %v6731, %v6795
        %v6797 = vpop.f32.mrb[0].mxu0
        %v6798 = vpop.f32.mrb[0].mxu0
        %v6799 = vadd.f32 %v6734, %v6798
        %v6800 = vpop.f32.mrb[0].mxu0
        %6801 = vdwg.mxu0
        %v6802 = vlaneseq
        %v6803 = vand.u32 %v6802, 127
        %vm6804 = vcmp.ge.s32.totalorder %v6803, 8
        %v6805 = vmax.f32 %v6772, 0.0
        %v6806 = vmax.f32 %v6775, 0.0
        %v6807 = vmax.f32 %v6780, 0.0
        %v6808 = vmax.f32 %v6783, 0.0
        %v6809 = vmax.f32 %v6788, 0.0
        %v6810 = vmax.f32 %v6791, 0.0
        %v6811 = vmax.f32 %v6796, 0.0
        %v6812 = vmax.f32 %v6799, 0.0
        %v6813 = vsel %vm6804, %v6805, %v6772
        %v6814 = vsel %vm6804, %v6806, %v6775
        %v6815 = vsel %vm6804, %v6807, %v6780
        %v6816 = vsel %vm6804, %v6808, %v6783
        %v6817 = vsel %vm6804, %v6809, %v6788
        %v6818 = vsel %vm6804, %v6810, %v6791
        %v6819 = vsel %vm6804, %v6811, %v6796
        %v6820 = vsel %vm6804, %v6812, %v6799
        %6821 = vst [vmem:[%s803] sm:$0xff] %v6813
        %6822 = vst [vmem:[%s803 + $0x8] sm:$0xff] %v6814
        %6823 = vst [vmem:[%s803 + $0x10] sm:$0xff] %v6815
        %6824 = vst [vmem:[%s803 + $0x18] sm:$0xff] %v6816
        %6825 = vst [vmem:[%s803 + $0x20] sm:$0xff] %v6817
        %6826 = vst [vmem:[%s803 + $0x28] sm:$0xff] %v6818
        %6827 = vst [vmem:[%s803 + $0x30] sm:$0xff] %v6819
        %6828 = vst [vmem:[%s803 + $0x38] sm:$0xff] %v6820
        %p6829 = scmp.lt.s32.totalorder %s40, 1
        %s6830 = scalar_select %p6829, %s40, 1
        %s6831 = smul.addr %s6830, 8
        %s6832 = scalar_lea.vmem %s17, %s6831
        %p6833 = scmp.lt.s32.totalorder %s40, 1
        %s6834 = scalar_select %p6833, %s40, 1
        %s6835 = smul.addr %s6834, 8
        %s6836 = smul.addr %s6835, 8
        %s6837 = scalar_lea.vmem %s18, %s6836
        // Predicated region
        $region145: #{detr_forward.1} parent=87 // pred_check
          %p6838 = pneg %p425
        $region146: #{detr_forward.1} parent=87 // pred_check_branch
          %6840 = sbr.rel (%p6838) target = $region148
        $region147: #{detr_forward.1} parent=87 // pred_region
          _
        $region148: #{detr_forward.1} parent=87 // pred_fallthru
          _
        // Predicated region
        $region149: #{detr_forward.1} parent=87 // pred_check
          %p6841 = pneg %p451
        $region150: #{detr_forward.1} parent=87 // pred_check_branch
          %6843 = sbr.rel (%p6841) target = $region152
        $region151: #{detr_forward.1} parent=87 // pred_region
          _
        $region152: #{detr_forward.1} parent=87 // pred_fallthru
          _
      $region88: #{detr_forward.1} parent=5 // pred_fallthru
        _
      %p6844 = scmp.le.s32.totalorder 2, %s35
      // Predicated region
      $region153: #{detr_forward.1} parent=5 // pred_check
        %p6845 = pneg %p6844
      $region154: #{detr_forward.1} parent=5 // pred_check_branch
        %6847 = sbr.rel (%p6845) target = $region156
      $region155: #{detr_forward.1} parent=5 // pred_region
        %s6848 = ssub.s32 %s35, 2
        // Predicated region
        $region157: #{detr_forward.1} parent=155 // pred_check
          %p6849 = pneg %p431
        $region158: #{detr_forward.1} parent=155 // pred_check_branch
          %6851 = sbr.rel (%p6849) target = $region160
        $region159: #{detr_forward.1} parent=155 // pred_region
          %p6852 = scmp.lt.s32.totalorder %s41, 1
          %s6853 = scalar_select %p6852, %s41, 1
          %s6854 = smul.addr %s6853, 8
          %s6855 = scalar_lea.vmem %s17, %s6854
        $region160: #{detr_forward.1} parent=155 // pred_fallthru
          _
        // Predicated region
        $region161: #{detr_forward.1} parent=155 // pred_check
          %p6856 = pneg %p457
        $region162: #{detr_forward.1} parent=155 // pred_check_branch
          %6858 = sbr.rel (%p6856) target = $region164
        $region163: #{detr_forward.1} parent=155 // pred_region
          %p6859 = scmp.lt.s32.totalorder %s41, 1
          %s6860 = scalar_select %p6859, %s41, 1
          %s6861 = smul.addr %s6860, 8
          %s6862 = smul.addr %s6861, 8
          %s6863 = scalar_lea.vmem %s18, %s6862
        $region164: #{detr_forward.1} parent=155 // pred_fallthru
          _
      $region156: #{detr_forward.1} parent=5 // pred_fallthru
        _
    $region6: #{detr_forward.1} parent=1 // loop_footer
      %s39 = sadd.s32 1, %s35
    $region7: #{detr_forward.1} parent=1 // loop_footer_branch
      %34 = sbr.rel target = $region3
    $region8: #{detr_forward.1} parent=1 // loop_exit
      _
    %6864 = vsyncpa [#allocation4], 1
    %s6865 = scalar_lea.sflag [#allocation4], 1
    %6866 = vsyncpa %s6865, 1
    %6867 = vsyncpa [#allocation6], 1
    %6868 = vsyncpa [#allocation9], 1
    %6869 = vsyncpa [#allocation12], 1
    %6870 = vsyncpa [#allocation15], 1
    %6871 = vsyncpa [#allocation18], 1
    %6872 = vsyncpa [#allocation21], 1
    %6873 = vsyncpa [#allocation24], 1

</llo_original>
